<compile_context>
chip_gen: v6e
topology: v6e:2x2x1
jax: 0.10.0
libtpu: 0.0.40
codegen_flags: <defaults>
</compile_context>

<pallas_src>
import functools

import jax
import jax.numpy as jnp
from jax.experimental import pallas as pl
from jax.experimental.pallas import tpu as pltpu


N_MEL = 1
N_CHANNELS = [64, 128, 512, 128, 1]
KERNEL_SIZES = [128, 32, 15, 5, 3]
STRIDES = [32, 4, 6, 1, 1]
PADDINGS = [65, 33, 14, 0, 0]


# ----------------------------------------------------------------------------
# Pallas kernels
# ----------------------------------------------------------------------------
def _sigmoid(y):
    # == sigmoid(y), expressed via tanh: single EUP op, no inf intermediate.
    return 0.5 * (jnp.tanh(0.5 * y) + 1.0)


def _apply_act(y, act):
    if act == "leaky_relu":
        return jnp.where(y >= 0.0, y, 0.2 * y)          # F.leaky_relu(y, 0.2)
    if act == "silu":
        return y * _sigmoid(y)
    return y


def _mm_bias_act_kernel(x_ref, w_ref, b_ref, o_ref, *, act):
    y = jnp.dot(x_ref[...], w_ref[...], preferred_element_type=jnp.float32)
    y = y + b_ref[...]                                   # [1,N] broadcast over rows
    o_ref[...] = _apply_act(y, act).astype(o_ref.dtype)


def _mm_bias_rowadd_act_kernel(x_ref, w_ref, b_ref, r_ref, o_ref, *, act):
    y = jnp.dot(x_ref[...], w_ref[...], preferred_element_type=jnp.float32)
    y = y + b_ref[...] + r_ref[...]                      # per-row conditioning add
    o_ref[...] = _apply_act(y, act).astype(o_ref.dtype)


def _diffusion_emb_kernel(e_ref, w1_ref, b1_ref, w2_ref, b2_ref, wd_ref, o_ref):
    # silu(silu(emb @ W1 + b1) @ W2 + b2) @ Wd   -- all fused in one kernel.
    h = jnp.dot(e_ref[...], w1_ref[...], preferred_element_type=jnp.float32)
    h = h + b1_ref[...]
    h = h * _sigmoid(h)
    d = jnp.dot(h.astype(w2_ref.dtype), w2_ref[...], preferred_element_type=jnp.float32)
    d = d + b2_ref[...]
    d = d * _sigmoid(d)
    o_ref[...] = jnp.dot(d.astype(wd_ref.dtype), wd_ref[...],
                         preferred_element_type=jnp.float32)


# ----------------------------------------------------------------------------
# Pallas wrappers
# ----------------------------------------------------------------------------
def matmul_bias_act(x, w, b, act="none", row_add=None, block_m=512):
    """act(x @ w + b [+ row_add]) as a Pallas TPU kernel.
    x:[M,K] (cast to bf16), w:[K,N] bf16, b:[1,N] f32, row_add:[M,N] f32 -> f32 [M,N]."""
    M, K = x.shape
    Kw, N = w.shape
    assert K == Kw and b.shape == (1, N)
    Mp = ((M + 7) // 8) * 8                              # pad rows to 8 sublanes
    if Mp <= block_m:
        bm = Mp                                          # single full-extent block
    else:
        bm = block_m
        Mp = pl.cdiv(M, bm) * bm
    if Mp != M:
        x = jnp.pad(x, ((0, Mp - M), (0, 0)))
        if row_add is not None:
            row_add = jnp.pad(row_add, ((0, Mp - M), (0, 0)))
    x = x.astype(jnp.bfloat16)
    w = w.astype(jnp.bfloat16)
    b = b.astype(jnp.float32)

    in_specs = [
        pl.BlockSpec((bm, K), lambda i: (i, 0)),
        pl.BlockSpec((K, N), lambda i: (0, 0)),
        pl.BlockSpec((1, N), lambda i: (0, 0)),
    ]
    if row_add is None:
        kernel = functools.partial(_mm_bias_act_kernel, act=act)
        args = (x, w, b)
    else:
        kernel = functools.partial(_mm_bias_rowadd_act_kernel, act=act)
        in_specs.append(pl.BlockSpec((bm, N), lambda i: (i, 0)))
        args = (x, w, b, row_add.astype(jnp.float32))

    out = pl.pallas_call(
        kernel,
        out_shape=jax.ShapeDtypeStruct((Mp, N), jnp.float32),
        grid=(Mp // bm,),
        in_specs=in_specs,
        out_specs=pl.BlockSpec((bm, N), lambda i: (i, 0)),
        compiler_params=pltpu.CompilerParams(dimension_semantics=("parallel",)),
    )(*args)
    return out[:M]


def diffusion_corr(emb, pp):
    """Fused DiffusionEmbedding -> per-(batch, cond0-channel) linear correction."""
    B = emb.shape[0]
    Bp = ((B + 7) // 8) * 8
    e = jnp.pad(emb, ((0, Bp - B), (0, 0))).astype(jnp.bfloat16)
    out = pl.pallas_call(
        _diffusion_emb_kernel,
        out_shape=jax.ShapeDtypeStruct((Bp, 128), jnp.float32),
        grid=(1,),
        in_specs=[
            pl.BlockSpec((Bp, 128), lambda i: (0, 0)),
            pl.BlockSpec((128, 512), lambda i: (0, 0)),
            pl.BlockSpec((1, 512), lambda i: (0, 0)),
            pl.BlockSpec((512, 512), lambda i: (0, 0)),
            pl.BlockSpec((1, 512), lambda i: (0, 0)),
            pl.BlockSpec((512, 128), lambda i: (0, 0)),
        ],
        out_specs=pl.BlockSpec((Bp, 128), lambda i: (0, 0)),
        compiler_params=pltpu.CompilerParams(dimension_semantics=("arbitrary",)),
    )(e, pp["proj1_wm"], pp["proj1_b"], pp["proj2_wm"], pp["proj2_b"], pp["wd"])
    return out[:B]


# ----------------------------------------------------------------------------
# im2col glue (channels-last, row gathers only)
# ----------------------------------------------------------------------------
# TODO(synk): im2col is XLA glue (gather + reshape); a fully VMEM-resident
# whole-network kernel with in-kernel pl.ds strided reads would remove the
# remaining HBM round trips between the 6 pallas_calls.
def _im2col_cl(x, kernel_size, stride, padding):
    # x: [B, L, Cin] channels-last -> patches [B, Lout, K*Cin] (k-major, cin-minor)
    B, L, Cin = x.shape
    xp = jnp.pad(x, ((0, 0), (padding, padding), (0, 0)))
    Lout = (L + 2 * padding - kernel_size) // stride + 1
    idx = jnp.arange(Lout)[:, None] * stride + jnp.arange(kernel_size)[None, :]
    patches = xp[:, idx, :]                              # [B, Lout, K, Cin]
    return patches.reshape(B, Lout, kernel_size * Cin), Lout


# ----------------------------------------------------------------------------
# Parameters (PyTorch layout) + one-time kernel-ready preparation
# ----------------------------------------------------------------------------
def build_embedding_table(max_steps):
    steps = jnp.arange(max_steps, dtype=jnp.float32)[:, None]          # [T, 1]
    dims = jnp.arange(64, dtype=jnp.float32)[None, :]                  # [1, 64]
    table = steps * 10.0 ** (dims * 4.0 / 63.0)                        # [T, 64]
    return jnp.concatenate([jnp.sin(table), jnp.cos(table)], axis=1)   # [T, 128]


def init_params(key, max_steps):
    ks = list(jax.random.split(key, 32))
    nxt = ks.pop
    p = {}
    # LinearNorm(2, 2, bias=False): xavier_uniform weight [out, in]
    lim = (6.0 / (2 + 2)) ** 0.5
    p["in_proj_w"] = jax.random.uniform(nxt(), (2, 2), jnp.float32, -lim, lim)
    # DiffusionEmbedding: table [T,128], Linear(128,512), Linear(512,512)
    p["emb_table"] = build_embedding_table(max_steps)
    p["proj1_w"] = jax.random.normal(nxt(), (512, 128), jnp.float32) / jnp.sqrt(128.0)
    p["proj1_b"] = 0.01 * jax.random.normal(nxt(), (512,), jnp.float32)
    p["proj2_w"] = jax.random.normal(nxt(), (512, 512), jnp.float32) / jnp.sqrt(512.0)
    p["proj2_b"] = 0.01 * jax.random.normal(nxt(), (512,), jnp.float32)

    def conv_params(name, cin, cout, k):
        # weights_init: ConvNorm weights ~ N(0, 0.02); conv bias small.
        p[name + "_w"] = 0.02 * jax.random.normal(nxt(), (cout, cin, k), jnp.float32)
        p[name + "_b"] = 0.01 * jax.random.normal(nxt(), (cout,), jnp.float32)

    chans = [2 * N_MEL] + N_CHANNELS
    for i in range(3):                                   # shared conv_block
        conv_params(f"conv{i}", chans[i], chans[i + 1], KERNEL_SIZES[i])
    for j in range(2):                                   # cond / uncond branches
        i = 3 + j
        conv_params(f"cond{j}", chans[i], chans[i + 1], KERNEL_SIZES[i])
        conv_params(f"uncond{j}", chans[i], chans[i + 1], KERNEL_SIZES[i])
    return p


def _conv_w_to_mat(w):
    # [Cout, Cin, K] -> [K*Cin, Cout]  (k-major, cin-minor; matches _im2col_cl), bf16
    Cout, Cin, K = w.shape
    return jnp.transpose(w, (2, 1, 0)).reshape(K * Cin, Cout).astype(jnp.bfloat16)


def prepare_params(p):
    """One-time conversion to kernel-ready layouts (done outside the forward)."""
    pp = {"emb_table": p["emb_table"]}
    pp["proj1_wm"] = jnp.transpose(p["proj1_w"]).astype(jnp.bfloat16)    # [128,512]
    pp["proj1_b"] = p["proj1_b"][None, :]
    pp["proj2_wm"] = jnp.transpose(p["proj2_w"]).astype(jnp.bfloat16)    # [512,512]
    pp["proj2_b"] = p["proj2_b"][None, :]
    # Wd[cin,co] = sum_k W_cond0[co,cin,k]  ->  corr = d @ Wd  (exact, cond0 pad=0)
    pp["wd"] = jnp.transpose(jnp.sum(p["cond0_w"], axis=2)).astype(jnp.bfloat16)

    # Fold input_projection into conv0: W0'[co,d,k] = sum_j W0[co,j,k] * W_in[j,d]
    w0 = jnp.einsum("cjk,jd->cdk", p["conv0_w"], p["in_proj_w"])
    pp["conv0_wm"] = _conv_w_to_mat(w0)
    pp["conv0_b"] = p["conv0_b"][None, :]
    for i in (1, 2):
        pp[f"conv{i}_wm"] = _conv_w_to_mat(p[f"conv{i}_w"])
        pp[f"conv{i}_b"] = p[f"conv{i}_b"][None, :]
    # Merge cond/uncond branch layers along the output-channel (lane) axis.
    for j in (0, 1):
        pp[f"branch{j}_wm"] = jnp.concatenate(
            [_conv_w_to_mat(p[f"cond{j}_w"]), _conv_w_to_mat(p[f"uncond{j}_w"])], axis=1)
        pp[f"branch{j}_b"] = jnp.concatenate(
            [p[f"cond{j}_b"], p[f"uncond{j}_b"]])[None, :]
    return pp


# ----------------------------------------------------------------------------
# Forward pass
# ----------------------------------------------------------------------------
def jcu_discriminator_forward(pp, x_ts, x_t_prevs, t):
    """Returns (cond_feats, uncond_feats): lists of [B, C_i, L_i] float32 (NCW)."""
    B, C, L = x_ts.shape                                  # C == n_mel == 1
    # torch: cat([x_t_prevs.T, x_ts.T], -1) -> [B, L, 2]; in_proj is folded into conv0.
    x = jnp.concatenate(
        [jnp.transpose(x_t_prevs, (0, 2, 1)), jnp.transpose(x_ts, (0, 2, 1))],
        axis=-1)                                          # [B, L, 2] channels-last

    # DiffusionEmbedding + projection onto cond0 channels, one fused Pallas kernel.
    emb = pp["emb_table"][t]                              # [B, 128]
    corr = diffusion_corr(emb, pp)                        # [B, 128]

    feats_cl = []
    for i in range(3):                                    # shared conv block
        patches, Lout = _im2col_cl(x, KERNEL_SIZES[i], STRIDES[i], PADDINGS[i])
        y = matmul_bias_act(patches.reshape(B * Lout, -1),
                            pp[f"conv{i}_wm"], pp[f"conv{i}_b"], act="leaky_relu")
        x = y.reshape(B, Lout, -1)                        # stay channels-last
        feats_cl.append(x)

    cond_feats = [jnp.transpose(f, (0, 2, 1)) for f in feats_cl]   # NCW outputs
    uncond_feats = list(cond_feats)

    # Branch layer 0 (cond & uncond fused): shared patches, N = 128+128 = 256;
    # the `x + d` conditioning is the exact per-row linear correction `corr`.
    patches, Lout = _im2col_cl(x, KERNEL_SIZES[3], STRIDES[3], PADDINGS[3])
    M = B * Lout
    corr_rows = jnp.concatenate(
        [jnp.repeat(corr, Lout, axis=0),                  # cond half
         jnp.zeros((M, corr.shape[1]), jnp.float32)],     # uncond half
        axis=1)                                           # [M, 256]
    y = matmul_bias_act(patches.reshape(M, -1), pp["branch0_wm"], pp["branch0_b"],
                        act="leaky_relu", row_add=corr_rows)
    y = y.reshape(B, Lout, -1)
    n0 = N_CHANNELS[3]
    x_cond, x_uncond = y[..., :n0], y[..., n0:]
    cond_feats.append(jnp.transpose(x_cond, (0, 2, 1)))
    uncond_feats.append(jnp.transpose(x_uncond, (0, 2, 1)))

    # Branch layer 1 (cond & uncond fused by row-stacking; keep diagonal blocks).
    pc, Lo = _im2col_cl(x_cond, KERNEL_SIZES[4], STRIDES[4], PADDINGS[4])
    pu, _ = _im2col_cl(x_uncond, KERNEL_SIZES[4], STRIDES[4], PADDINGS[4])
    rows = jnp.concatenate([pc.reshape(B * Lo, -1), pu.reshape(B * Lo, -1)], axis=0)
    y2 = matmul_bias_act(rows, pp["branch1_wm"], pp["branch1_b"], act="leaky_relu")
    n1 = N_CHANNELS[4]
    yc = y2[:B * Lo, :n1].reshape(B, Lo, n1)
    yu = y2[B * Lo:, n1:].reshape(B, Lo, n1)
    cond_feats.append(jnp.transpose(yc, (0, 2, 1)))
    uncond_feats.append(jnp.transpose(yu, (0, 2, 1)))
    return cond_feats, uncond_feats


if __name__ == "__main__":
    key = jax.random.PRNGKey(0)
    T_STEPS = 8      # DiffusionEmbedding max_steps (== residual_channels == T)
    B = 2
    L = 1696         # smallest nice length that survives all strided convs

    pkey, k1, k2, k3 = jax.random.split(key, 4)
    params = init_params(pkey, T_STEPS)
    pp = prepare_params(params)          # one-time fold / reshape / bf16 cast

    x_ts = jax.random.normal(k1, (B, 1, L), jnp.float32)
    x_t_prevs = jax.random.normal(k2, (B, 1, L), jnp.float32)
    t = jax.random.randint(k3, (B,), 0, T_STEPS, dtype=jnp.int32)

    fwd = jax.jit(jcu_discriminator_forward)
    cond_feats, uncond_feats = fwd(pp, x_ts, x_t_prevs, t)
    for f in cond_feats + uncond_feats:
        jax.block_until_ready(f)

    expected = [(B, 64, 54), (B, 128, 23), (B, 512, 7), (B, 128, 3), (B, 1, 1)]
    assert [f.shape for f in cond_feats] == expected, [f.shape for f in cond_feats]
    assert [f.shape for f in uncond_feats] == expected, [f.shape for f in uncond_feats]
    print("KERNEL_OK")
</pallas_src>

<mosaic_0001>
module attributes {stable_mosaic.version = 11 : i64} {
  func.func @_mm_bias_act_kernel(%arg0: i32, %arg1: memref<112x256xbf16, #tpu.memory_space<vmem>>, %arg2: memref<256x64xbf16, #tpu.memory_space<vmem>>, %arg3: memref<1x64xf32, #tpu.memory_space<vmem>>, %arg4: memref<112x64xf32, #tpu.memory_space<vmem>>) attributes {dimension_semantics = [#tpu.dimension_semantics<parallel>], iteration_bounds = array<i64: 1>, scalar_prefetch = 0 : i64, scratch_operands = 0 : i64, tpu.core_type = #tpu.core_type<tc>, window_params = [{transform_indices = @transform_0, window_bounds = array<i64: 112, 256>}, {pipeline_mode = #tpu.pipeline_mode<synchronous>, transform_indices = @transform_1, window_bounds = array<i64: 256, 64>}, {pipeline_mode = #tpu.pipeline_mode<synchronous>, transform_indices = @transform_2, window_bounds = array<i64: 1, 64>}, {transform_indices = @transform_3, window_bounds = array<i64: 112, 64>}]} {
    %c0 = arith.constant 0 : index
    %c0_0 = arith.constant 0 : index
    %0 = vector.load %arg1[%c0, %c0_0] : memref<112x256xbf16, #tpu.memory_space<vmem>>, vector<112x256xbf16>
    %c0_1 = arith.constant 0 : index
    %c0_2 = arith.constant 0 : index
    %1 = vector.load %arg2[%c0_1, %c0_2] : memref<256x64xbf16, #tpu.memory_space<vmem>>, vector<256x64xbf16>
    %cst = arith.constant dense<0.000000e+00> : vector<112x64xf32>
    %2 = tpu.matmul %0, %1, %cst {dimension_numbers = #tpu.dot_dimension_numbers<[1], [0], [0], [1], [0, 0, 1, 1], [], []>} : vector<112x256xbf16>, vector<256x64xbf16>, vector<112x64xf32> -> vector<112x64xf32>
    %c0_3 = arith.constant 0 : index
    %c0_4 = arith.constant 0 : index
    %3 = vector.load %arg3[%c0_3, %c0_4] : memref<1x64xf32, #tpu.memory_space<vmem>>, vector<1x64xf32>
    %4 = vector.broadcast %3 : vector<1x64xf32> to vector<112x64xf32>
    %5 = arith.addf %2, %4 : vector<112x64xf32>
    %cst_5 = arith.constant 0.000000e+00 : f32
    %6 = vector.broadcast %cst_5 : f32 to vector<112x64xf32>
    %7 = arith.cmpf oge, %5, %6 : vector<112x64xf32>
    %cst_6 = arith.constant 2.000000e-01 : f32
    %8 = vector.broadcast %cst_6 : f32 to vector<112x64xf32>
    %9 = arith.mulf %8, %5 : vector<112x64xf32>
    %10 = arith.select %7, %5, %9 : vector<112x64xi1>, vector<112x64xf32>
    %c0_7 = arith.constant 0 : index
    %c0_8 = arith.constant 0 : index
    %11 = vector.load %arg4[%c0_7, %c0_8] : memref<112x64xf32, #tpu.memory_space<vmem>>, vector<112x64xf32>
    tpu.vector_store %arg4[%c0_7, %c0_8], %10 {strides = array<i32>} : memref<112x64xf32, #tpu.memory_space<vmem>>, vector<112x64xf32>,
    return
  }
  func.func @transform_0(%arg0: i32) -> (i32, i32) {
    %c0_i32 = arith.constant 0 : i32
    %c0_i32_0 = arith.constant 0 : i32
    return %arg0, %c0_i32 : i32, i32
  }
  func.func @transform_1(%arg0: i32) -> (i32, i32) {
    %c0_i32 = arith.constant 0 : i32
    %c0_i32_0 = arith.constant 0 : i32
    %c0_i32_1 = arith.constant 0 : i32
    return %c0_i32, %c0_i32_0 : i32, i32
  }
  func.func @transform_2(%arg0: i32) -> (i32, i32) {
    %c0_i32 = arith.constant 0 : i32
    %c0_i32_0 = arith.constant 0 : i32
    %c0_i32_1 = arith.constant 0 : i32
    return %c0_i32, %c0_i32_0 : i32, i32
  }
  func.func @transform_3(%arg0: i32) -> (i32, i32) {
    %c0_i32 = arith.constant 0 : i32
    %c0_i32_0 = arith.constant 0 : i32
    return %arg0, %c0_i32 : i32, i32
  }
}

module attributes {stable_mosaic.version = 11 : i64} {
  func.func @_mm_bias_act_kernel(%arg0: i32, %arg1: memref<48x2048xbf16, #tpu.memory_space<vmem>>, %arg2: memref<2048x128xbf16, #tpu.memory_space<vmem>>, %arg3: memref<1x128xf32, #tpu.memory_space<vmem>>, %arg4: memref<48x128xf32, #tpu.memory_space<vmem>>) attributes {dimension_semantics = [#tpu.dimension_semantics<parallel>], iteration_bounds = array<i64: 1>, scalar_prefetch = 0 : i64, scratch_operands = 0 : i64, tpu.core_type = #tpu.core_type<tc>, window_params = [{transform_indices = @transform_0, window_bounds = array<i64: 48, 2048>}, {pipeline_mode = #tpu.pipeline_mode<synchronous>, transform_indices = @transform_1, window_bounds = array<i64: 2048, 128>}, {pipeline_mode = #tpu.pipeline_mode<synchronous>, transform_indices = @transform_2, window_bounds = array<i64: 1, 128>}, {transform_indices = @transform_3, window_bounds = array<i64: 48, 128>}]} {
    %c0 = arith.constant 0 : index
    %c0_0 = arith.constant 0 : index
    %0 = vector.load %arg1[%c0, %c0_0] : memref<48x2048xbf16, #tpu.memory_space<vmem>>, vector<48x2048xbf16>
    %c0_1 = arith.constant 0 : index
    %c0_2 = arith.constant 0 : index
    %1 = vector.load %arg2[%c0_1, %c0_2] : memref<2048x128xbf16, #tpu.memory_space<vmem>>, vector<2048x128xbf16>
    %cst = arith.constant dense<0.000000e+00> : vector<48x128xf32>
    %2 = tpu.matmul %0, %1, %cst {dimension_numbers = #tpu.dot_dimension_numbers<[1], [0], [0], [1], [0, 0, 1, 1], [], []>} : vector<48x2048xbf16>, vector<2048x128xbf16>, vector<48x128xf32> -> vector<48x128xf32>
    %c0_3 = arith.constant 0 : index
    %c0_4 = arith.constant 0 : index
    %3 = vector.load %arg3[%c0_3, %c0_4] : memref<1x128xf32, #tpu.memory_space<vmem>>, vector<1x128xf32>
    %4 = vector.broadcast %3 : vector<1x128xf32> to vector<48x128xf32>
    %5 = arith.addf %2, %4 : vector<48x128xf32>
    %cst_5 = arith.constant 0.000000e+00 : f32
    %6 = vector.broadcast %cst_5 : f32 to vector<48x128xf32>
    %7 = arith.cmpf oge, %5, %6 : vector<48x128xf32>
    %cst_6 = arith.constant 2.000000e-01 : f32
    %8 = vector.broadcast %cst_6 : f32 to vector<48x128xf32>
    %9 = arith.mulf %8, %5 : vector<48x128xf32>
    %10 = arith.select %7, %5, %9 : vector<48x128xi1>, vector<48x128xf32>
    %c0_7 = arith.constant 0 : index
    %c0_8 = arith.constant 0 : index
    %11 = vector.load %arg4[%c0_7, %c0_8] : memref<48x128xf32, #tpu.memory_space<vmem>>, vector<48x128xf32>
    tpu.vector_store %arg4[%c0_7, %c0_8], %10 {strides = array<i32>} : memref<48x128xf32, #tpu.memory_space<vmem>>, vector<48x128xf32>,
    return
  }
  func.func @transform_0(%arg0: i32) -> (i32, i32) {
    %c0_i32 = arith.constant 0 : i32
    %c0_i32_0 = arith.constant 0 : i32
    return %arg0, %c0_i32 : i32, i32
  }
  func.func @transform_1(%arg0: i32) -> (i32, i32) {
    %c0_i32 = arith.constant 0 : i32
    %c0_i32_0 = arith.constant 0 : i32
    %c0_i32_1 = arith.constant 0 : i32
    return %c0_i32, %c0_i32_0 : i32, i32
  }
  func.func @transform_2(%arg0: i32) -> (i32, i32) {
    %c0_i32 = arith.constant 0 : i32
    %c0_i32_0 = arith.constant 0 : i32
    %c0_i32_1 = arith.constant 0 : i32
    return %c0_i32, %c0_i32_0 : i32, i32
  }
  func.func @transform_3(%arg0: i32) -> (i32, i32) {
    %c0_i32 = arith.constant 0 : i32
    %c0_i32_0 = arith.constant 0 : i32
    return %arg0, %c0_i32 : i32, i32
  }
}

module attributes {stable_mosaic.version = 11 : i64} {
  func.func @_mm_bias_act_kernel(%arg0: i32, %arg1: memref<16x1920xbf16, #tpu.memory_space<vmem>>, %arg2: memref<1920x512xbf16, #tpu.memory_space<vmem>>, %arg3: memref<1x512xf32, #tpu.memory_space<vmem>>, %arg4: memref<16x512xf32, #tpu.memory_space<vmem>>) attributes {dimension_semantics = [#tpu.dimension_semantics<parallel>], iteration_bounds = array<i64: 1>, scalar_prefetch = 0 : i64, scratch_operands = 0 : i64, tpu.core_type = #tpu.core_type<tc>, window_params = [{transform_indices = @transform_0, window_bounds = array<i64: 16, 1920>}, {pipeline_mode = #tpu.pipeline_mode<synchronous>, transform_indices = @transform_1, window_bounds = array<i64: 1920, 512>}, {pipeline_mode = #tpu.pipeline_mode<synchronous>, transform_indices = @transform_2, window_bounds = array<i64: 1, 512>}, {transform_indices = @transform_3, window_bounds = array<i64: 16, 512>}]} {
    %c0 = arith.constant 0 : index
    %c0_0 = arith.constant 0 : index
    %0 = vector.load %arg1[%c0, %c0_0] : memref<16x1920xbf16, #tpu.memory_space<vmem>>, vector<16x1920xbf16>
    %c0_1 = arith.constant 0 : index
    %c0_2 = arith.constant 0 : index
    %1 = vector.load %arg2[%c0_1, %c0_2] : memref<1920x512xbf16, #tpu.memory_space<vmem>>, vector<1920x512xbf16>
    %cst = arith.constant dense<0.000000e+00> : vector<16x512xf32>
    %2 = tpu.matmul %0, %1, %cst {dimension_numbers = #tpu.dot_dimension_numbers<[1], [0], [0], [1], [0, 0, 1, 1], [], []>} : vector<16x1920xbf16>, vector<1920x512xbf16>, vector<16x512xf32> -> vector<16x512xf32>
    %c0_3 = arith.constant 0 : index
    %c0_4 = arith.constant 0 : index
    %3 = vector.load %arg3[%c0_3, %c0_4] : memref<1x512xf32, #tpu.memory_space<vmem>>, vector<1x512xf32>
    %4 = vector.broadcast %3 : vector<1x512xf32> to vector<16x512xf32>
    %5 = arith.addf %2, %4 : vector<16x512xf32>
    %cst_5 = arith.constant 0.000000e+00 : f32
    %6 = vector.broadcast %cst_5 : f32 to vector<16x512xf32>
    %7 = arith.cmpf oge, %5, %6 : vector<16x512xf32>
    %cst_6 = arith.constant 2.000000e-01 : f32
    %8 = vector.broadcast %cst_6 : f32 to vector<16x512xf32>
    %9 = arith.mulf %8, %5 : vector<16x512xf32>
    %10 = arith.select %7, %5, %9 : vector<16x512xi1>, vector<16x512xf32>
    %c0_7 = arith.constant 0 : index
    %c0_8 = arith.constant 0 : index
    %11 = vector.load %arg4[%c0_7, %c0_8] : memref<16x512xf32, #tpu.memory_space<vmem>>, vector<16x512xf32>
    tpu.vector_store %arg4[%c0_7, %c0_8], %10 {strides = array<i32>} : memref<16x512xf32, #tpu.memory_space<vmem>>, vector<16x512xf32>,
    return
  }
  func.func @transform_0(%arg0: i32) -> (i32, i32) {
    %c0_i32 = arith.constant 0 : i32
    %c0_i32_0 = arith.constant 0 : i32
    return %arg0, %c0_i32 : i32, i32
  }
  func.func @transform_1(%arg0: i32) -> (i32, i32) {
    %c0_i32 = arith.constant 0 : i32
    %c0_i32_0 = arith.constant 0 : i32
    %c0_i32_1 = arith.constant 0 : i32
    return %c0_i32, %c0_i32_0 : i32, i32
  }
  func.func @transform_2(%arg0: i32) -> (i32, i32) {
    %c0_i32 = arith.constant 0 : i32
    %c0_i32_0 = arith.constant 0 : i32
    %c0_i32_1 = arith.constant 0 : i32
    return %c0_i32, %c0_i32_0 : i32, i32
  }
  func.func @transform_3(%arg0: i32) -> (i32, i32) {
    %c0_i32 = arith.constant 0 : i32
    %c0_i32_0 = arith.constant 0 : i32
    return %arg0, %c0_i32 : i32, i32
  }
}

module attributes {stable_mosaic.version = 11 : i64} {
  func.func @_diffusion_emb_kernel(%arg0: i32, %arg1: memref<8x128xbf16, #tpu.memory_space<vmem>>, %arg2: memref<128x512xbf16, #tpu.memory_space<vmem>>, %arg3: memref<1x512xf32, #tpu.memory_space<vmem>>, %arg4: memref<512x512xbf16, #tpu.memory_space<vmem>>, %arg5: memref<1x512xf32, #tpu.memory_space<vmem>>, %arg6: memref<512x128xbf16, #tpu.memory_space<vmem>>, %arg7: memref<8x128xf32, #tpu.memory_space<vmem>>) attributes {dimension_semantics = [#tpu.dimension_semantics<arbitrary>], iteration_bounds = array<i64: 1>, scalar_prefetch = 0 : i64, scratch_operands = 0 : i64, tpu.core_type = #tpu.core_type<tc>, window_params = [{pipeline_mode = #tpu.pipeline_mode<synchronous>, transform_indices = @transform_0, window_bounds = array<i64: 8, 128>}, {pipeline_mode = #tpu.pipeline_mode<synchronous>, transform_indices = @transform_1, window_bounds = array<i64: 128, 512>}, {pipeline_mode = #tpu.pipeline_mode<synchronous>, transform_indices = @transform_2, window_bounds = array<i64: 1, 512>}, {pipeline_mode = #tpu.pipeline_mode<synchronous>, transform_indices = @transform_3, window_bounds = array<i64: 512, 512>}, {pipeline_mode = #tpu.pipeline_mode<synchronous>, transform_indices = @transform_4, window_bounds = array<i64: 1, 512>}, {pipeline_mode = #tpu.pipeline_mode<synchronous>, transform_indices = @transform_5, window_bounds = array<i64: 512, 128>}, {pipeline_mode = #tpu.pipeline_mode<synchronous>, transform_indices = @transform_6, window_bounds = array<i64: 8, 128>}]} {
    %c0 = arith.constant 0 : index
    %c0_0 = arith.constant 0 : index
    %0 = vector.load %arg1[%c0, %c0_0] : memref<8x128xbf16, #tpu.memory_space<vmem>>, vector<8x128xbf16>
    %c0_1 = arith.constant 0 : index
    %c0_2 = arith.constant 0 : index
    %1 = vector.load %arg2[%c0_1, %c0_2] : memref<128x512xbf16, #tpu.memory_space<vmem>>, vector<128x512xbf16>
    %cst = arith.constant dense<0.000000e+00> : vector<8x512xf32>
    %2 = tpu.matmul %0, %1, %cst {dimension_numbers = #tpu.dot_dimension_numbers<[1], [0], [0], [1], [0, 0, 1, 1], [], []>} : vector<8x128xbf16>, vector<128x512xbf16>, vector<8x512xf32> -> vector<8x512xf32>
    %c0_3 = arith.constant 0 : index
    %c0_4 = arith.constant 0 : index
    %3 = vector.load %arg3[%c0_3, %c0_4] : memref<1x512xf32, #tpu.memory_space<vmem>>, vector<1x512xf32>
    %4 = vector.broadcast %3 : vector<1x512xf32> to vector<8x512xf32>
    %5 = arith.addf %2, %4 : vector<8x512xf32>
    %cst_5 = arith.constant 5.000000e-01 : f32
    %6 = vector.broadcast %cst_5 : f32 to vector<8x512xf32>
    %7 = arith.mulf %6, %5 : vector<8x512xf32>
    %8 = math.tanh %7 : vector<8x512xf32>
    %cst_6 = arith.constant 1.000000e+00 : f32
    %9 = vector.broadcast %cst_6 : f32 to vector<8x512xf32>
    %10 = arith.addf %8, %9 : vector<8x512xf32>
    %cst_7 = arith.constant 5.000000e-01 : f32
    %11 = vector.broadcast %cst_7 : f32 to vector<8x512xf32>
    %12 = arith.mulf %11, %10 : vector<8x512xf32>
    %13 = arith.mulf %5, %12 : vector<8x512xf32>
    %14 = arith.truncf %13 : vector<8x512xf32> to vector<8x512xbf16>
    %c0_8 = arith.constant 0 : index
    %c0_9 = arith.constant 0 : index
    %15 = vector.load %arg4[%c0_8, %c0_9] : memref<512x512xbf16, #tpu.memory_space<vmem>>, vector<512x512xbf16>
    %cst_10 = arith.constant dense<0.000000e+00> : vector<8x512xf32>
    %16 = tpu.matmul %14, %15, %cst_10 {dimension_numbers = #tpu.dot_dimension_numbers<[1], [0], [0], [1], [0, 0, 1, 1], [], []>} : vector<8x512xbf16>, vector<512x512xbf16>, vector<8x512xf32> -> vector<8x512xf32>
    %c0_11 = arith.constant 0 : index
    %c0_12 = arith.constant 0 : index
    %17 = vector.load %arg5[%c0_11, %c0_12] : memref<1x512xf32, #tpu.memory_space<vmem>>, vector<1x512xf32>
    %18 = vector.broadcast %17 : vector<1x512xf32> to vector<8x512xf32>
    %19 = arith.addf %16, %18 : vector<8x512xf32>
    %cst_13 = arith.constant 5.000000e-01 : f32
    %20 = vector.broadcast %cst_13 : f32 to vector<8x512xf32>
    %21 = arith.mulf %20, %19 : vector<8x512xf32>
    %22 = math.tanh %21 : vector<8x512xf32>
    %cst_14 = arith.constant 1.000000e+00 : f32
    %23 = vector.broadcast %cst_14 : f32 to vector<8x512xf32>
    %24 = arith.addf %22, %23 : vector<8x512xf32>
    %cst_15 = arith.constant 5.000000e-01 : f32
    %25 = vector.broadcast %cst_15 : f32 to vector<8x512xf32>
    %26 = arith.mulf %25, %24 : vector<8x512xf32>
    %27 = arith.mulf %19, %26 : vector<8x512xf32>
    %28 = arith.truncf %27 : vector<8x512xf32> to vector<8x512xbf16>
    %c0_16 = arith.constant 0 : index
    %c0_17 = arith.constant 0 : index
    %29 = vector.load %arg6[%c0_16, %c0_17] : memref<512x128xbf16, #tpu.memory_space<vmem>>, vector<512x128xbf16>
    %cst_18 = arith.constant dense<0.000000e+00> : vector<8x128xf32>
    %30 = tpu.matmul %28, %29, %cst_18 {dimension_numbers = #tpu.dot_dimension_numbers<[1], [0], [0], [1], [0, 0, 1, 1], [], []>} : vector<8x512xbf16>, vector<512x128xbf16>, vector<8x128xf32> -> vector<8x128xf32>
    %c0_19 = arith.constant 0 : index
    %c0_20 = arith.constant 0 : index
    %31 = vector.load %arg7[%c0_19, %c0_20] : memref<8x128xf32, #tpu.memory_space<vmem>>, vector<8x128xf32>
    tpu.vector_store %arg7[%c0_19, %c0_20], %30 {strides = array<i32>} : memref<8x128xf32, #tpu.memory_space<vmem>>, vector<8x128xf32>,
    return
  }
  func.func @transform_0(%arg0: i32) -> (i32, i32) {
    %c0_i32 = arith.constant 0 : i32
    %c0_i32_0 = arith.constant 0 : i32
    %c0_i32_1 = arith.constant 0 : i32
    return %c0_i32, %c0_i32_0 : i32, i32
  }
  func.func @transform_1(%arg0: i32) -> (i32, i32) {
    %c0_i32 = arith.constant 0 : i32
    %c0_i32_0 = arith.constant 0 : i32
    %c0_i32_1 = arith.constant 0 : i32
    return %c0_i32, %c0_i32_0 : i32, i32
  }
  func.func @transform_2(%arg0: i32) -> (i32, i32) {
    %c0_i32 = arith.constant 0 : i32
    %c0_i32_0 = arith.constant 0 : i32
    %c0_i32_1 = arith.constant 0 : i32
    return %c0_i32, %c0_i32_0 : i32, i32
  }
  func.func @transform_3(%arg0: i32) -> (i32, i32) {
    %c0_i32 = arith.constant 0 : i32
    %c0_i32_0 = arith.constant 0 : i32
    %c0_i32_1 = arith.constant 0 : i32
    return %c0_i32, %c0_i32_0 : i32, i32
  }
  func.func @transform_4(%arg0: i32) -> (i32, i32) {
    %c0_i32 = arith.constant 0 : i32
    %c0_i32_0 = arith.constant 0 : i32
    %c0_i32_1 = arith.constant 0 : i32
    return %c0_i32, %c0_i32_0 : i32, i32
  }
  func.func @transform_5(%arg0: i32) -> (i32, i32) {
    %c0_i32 = arith.constant 0 : i32
    %c0_i32_0 = arith.constant 0 : i32
    %c0_i32_1 = arith.constant 0 : i32
    return %c0_i32, %c0_i32_0 : i32, i32
  }
  func.func @transform_6(%arg0: i32) -> (i32, i32) {
    %c0_i32 = arith.constant 0 : i32
    %c0_i32_0 = arith.constant 0 : i32
    %c0_i32_1 = arith.constant 0 : i32
    return %c0_i32, %c0_i32_0 : i32, i32
  }
}

module attributes {stable_mosaic.version = 11 : i64} {
  func.func @_mm_bias_rowadd_act_kernel(%arg0: i32, %arg1: memref<8x2560xbf16, #tpu.memory_space<vmem>>, %arg2: memref<2560x256xbf16, #tpu.memory_space<vmem>>, %arg3: memref<1x256xf32, #tpu.memory_space<vmem>>, %arg4: memref<8x256xf32, #tpu.memory_space<vmem>>, %arg5: memref<8x256xf32, #tpu.memory_space<vmem>>) attributes {dimension_semantics = [#tpu.dimension_semantics<parallel>], iteration_bounds = array<i64: 1>, scalar_prefetch = 0 : i64, scratch_operands = 0 : i64, tpu.core_type = #tpu.core_type<tc>, window_params = [{transform_indices = @transform_0, window_bounds = array<i64: 8, 2560>}, {pipeline_mode = #tpu.pipeline_mode<synchronous>, transform_indices = @transform_1, window_bounds = array<i64: 2560, 256>}, {pipeline_mode = #tpu.pipeline_mode<synchronous>, transform_indices = @transform_2, window_bounds = array<i64: 1, 256>}, {transform_indices = @transform_3, window_bounds = array<i64: 8, 256>}, {transform_indices = @transform_4, window_bounds = array<i64: 8, 256>}]} {
    %c0 = arith.constant 0 : index
    %c0_0 = arith.constant 0 : index
    %0 = vector.load %arg1[%c0, %c0_0] : memref<8x2560xbf16, #tpu.memory_space<vmem>>, vector<8x2560xbf16>
    %c0_1 = arith.constant 0 : index
    %c0_2 = arith.constant 0 : index
    %1 = vector.load %arg2[%c0_1, %c0_2] : memref<2560x256xbf16, #tpu.memory_space<vmem>>, vector<2560x256xbf16>
    %cst = arith.constant dense<0.000000e+00> : vector<8x256xf32>
    %2 = tpu.matmul %0, %1, %cst {dimension_numbers = #tpu.dot_dimension_numbers<[1], [0], [0], [1], [0, 0, 1, 1], [], []>} : vector<8x2560xbf16>, vector<2560x256xbf16>, vector<8x256xf32> -> vector<8x256xf32>
    %c0_3 = arith.constant 0 : index
    %c0_4 = arith.constant 0 : index
    %3 = vector.load %arg3[%c0_3, %c0_4] : memref<1x256xf32, #tpu.memory_space<vmem>>, vector<1x256xf32>
    %4 = vector.broadcast %3 : vector<1x256xf32> to vector<8x256xf32>
    %5 = arith.addf %2, %4 : vector<8x256xf32>
    %c0_5 = arith.constant 0 : index
    %c0_6 = arith.constant 0 : index
    %6 = vector.load %arg4[%c0_5, %c0_6] : memref<8x256xf32, #tpu.memory_space<vmem>>, vector<8x256xf32>
    %7 = arith.addf %5, %6 : vector<8x256xf32>
    %cst_7 = arith.constant 0.000000e+00 : f32
    %8 = vector.broadcast %cst_7 : f32 to vector<8x256xf32>
    %9 = arith.cmpf oge, %7, %8 : vector<8x256xf32>
    %cst_8 = arith.constant 2.000000e-01 : f32
    %10 = vector.broadcast %cst_8 : f32 to vector<8x256xf32>
    %11 = arith.mulf %10, %7 : vector<8x256xf32>
    %12 = arith.select %9, %7, %11 : vector<8x256xi1>, vector<8x256xf32>
    %c0_9 = arith.constant 0 : index
    %c0_10 = arith.constant 0 : index
    %13 = vector.load %arg5[%c0_9, %c0_10] : memref<8x256xf32, #tpu.memory_space<vmem>>, vector<8x256xf32>
    tpu.vector_store %arg5[%c0_9, %c0_10], %12 {strides = array<i32>} : memref<8x256xf32, #tpu.memory_space<vmem>>, vector<8x256xf32>,
    return
  }
  func.func @transform_0(%arg0: i32) -> (i32, i32) {
    %c0_i32 = arith.constant 0 : i32
    %c0_i32_0 = arith.constant 0 : i32
    return %arg0, %c0_i32 : i32, i32
  }
  func.func @transform_1(%arg0: i32) -> (i32, i32) {
    %c0_i32 = arith.constant 0 : i32
    %c0_i32_0 = arith.constant 0 : i32
    %c0_i32_1 = arith.constant 0 : i32
    return %c0_i32, %c0_i32_0 : i32, i32
  }
  func.func @transform_2(%arg0: i32) -> (i32, i32) {
    %c0_i32 = arith.constant 0 : i32
    %c0_i32_0 = arith.constant 0 : i32
    %c0_i32_1 = arith.constant 0 : i32
    return %c0_i32, %c0_i32_0 : i32, i32
  }
  func.func @transform_3(%arg0: i32) -> (i32, i32) {
    %c0_i32 = arith.constant 0 : i32
    %c0_i32_0 = arith.constant 0 : i32
    return %arg0, %c0_i32 : i32, i32
  }
  func.func @transform_4(%arg0: i32) -> (i32, i32) {
    %c0_i32 = arith.constant 0 : i32
    %c0_i32_0 = arith.constant 0 : i32
    return %arg0, %c0_i32 : i32, i32
  }
}

module attributes {stable_mosaic.version = 11 : i64} {
  func.func @_mm_bias_act_kernel(%arg0: i32, %arg1: memref<8x384xbf16, #tpu.memory_space<vmem>>, %arg2: memref<384x2xbf16, #tpu.memory_space<vmem>>, %arg3: memref<1x2xf32, #tpu.memory_space<vmem>>, %arg4: memref<8x2xf32, #tpu.memory_space<vmem>>) attributes {dimension_semantics = [#tpu.dimension_semantics<parallel>], iteration_bounds = array<i64: 1>, scalar_prefetch = 0 : i64, scratch_operands = 0 : i64, tpu.core_type = #tpu.core_type<tc>, window_params = [{transform_indices = @transform_0, window_bounds = array<i64: 8, 384>}, {pipeline_mode = #tpu.pipeline_mode<synchronous>, transform_indices = @transform_1, window_bounds = array<i64: 384, 2>}, {pipeline_mode = #tpu.pipeline_mode<synchronous>, transform_indices = @transform_2, window_bounds = array<i64: 1, 2>}, {transform_indices = @transform_3, window_bounds = array<i64: 8, 2>}]} {
    %c0 = arith.constant 0 : index
    %c0_0 = arith.constant 0 : index
    %0 = vector.load %arg1[%c0, %c0_0] : memref<8x384xbf16, #tpu.memory_space<vmem>>, vector<8x384xbf16>
    %c0_1 = arith.constant 0 : index
    %c0_2 = arith.constant 0 : index
    %1 = vector.load %arg2[%c0_1, %c0_2] : memref<384x2xbf16, #tpu.memory_space<vmem>>, vector<384x2xbf16>
    %cst = arith.constant dense<0.000000e+00> : vector<8x2xf32>
    %2 = tpu.matmul %0, %1, %cst {dimension_numbers = #tpu.dot_dimension_numbers<[1], [0], [0], [1], [0, 0, 1, 1], [], []>} : vector<8x384xbf16>, vector<384x2xbf16>, vector<8x2xf32> -> vector<8x2xf32>
    %c0_3 = arith.constant 0 : index
    %c0_4 = arith.constant 0 : index
    %3 = vector.load %arg3[%c0_3, %c0_4] : memref<1x2xf32, #tpu.memory_space<vmem>>, vector<1x2xf32>
    %4 = vector.broadcast %3 : vector<1x2xf32> to vector<8x2xf32>
    %5 = arith.addf %2, %4 : vector<8x2xf32>
    %cst_5 = arith.constant 0.000000e+00 : f32
    %6 = vector.broadcast %cst_5 : f32 to vector<8x2xf32>
    %7 = arith.cmpf oge, %5, %6 : vector<8x2xf32>
    %cst_6 = arith.constant 2.000000e-01 : f32
    %8 = vector.broadcast %cst_6 : f32 to vector<8x2xf32>
    %9 = arith.mulf %8, %5 : vector<8x2xf32>
    %10 = arith.select %7, %5, %9 : vector<8x2xi1>, vector<8x2xf32>
    %c0_7 = arith.constant 0 : index
    %c0_8 = arith.constant 0 : index
    %11 = vector.load %arg4[%c0_7, %c0_8] : memref<8x2xf32, #tpu.memory_space<vmem>>, vector<8x2xf32>
    tpu.vector_store %arg4[%c0_7, %c0_8], %10 {strides = array<i32>} : memref<8x2xf32, #tpu.memory_space<vmem>>, vector<8x2xf32>,
    return
  }
  func.func @transform_0(%arg0: i32) -> (i32, i32) {
    %c0_i32 = arith.constant 0 : i32
    %c0_i32_0 = arith.constant 0 : i32
    return %arg0, %c0_i32 : i32, i32
  }
  func.func @transform_1(%arg0: i32) -> (i32, i32) {
    %c0_i32 = arith.constant 0 : i32
    %c0_i32_0 = arith.constant 0 : i32
    %c0_i32_1 = arith.constant 0 : i32
    return %c0_i32, %c0_i32_0 : i32, i32
  }
  func.func @transform_2(%arg0: i32) -> (i32, i32) {
    %c0_i32 = arith.constant 0 : i32
    %c0_i32_0 = arith.constant 0 : i32
    %c0_i32_1 = arith.constant 0 : i32
    return %c0_i32, %c0_i32_0 : i32, i32
  }
  func.func @transform_3(%arg0: i32) -> (i32, i32) {
    %c0_i32 = arith.constant 0 : i32
    %c0_i32_0 = arith.constant 0 : i32
    return %arg0, %c0_i32 : i32, i32
  }
}

</mosaic_0001>

<llo_original>
// kernel: jcu_discriminator_forward.7
$region0: #{jcu_discriminator_forward.7}
  #allocation0 [shape = 'u32[]', space=smem, size = 0x4, offset = 0x4, fixed_abs, tag = 'smem constant byte address 0x4 - core index']
  #allocation1 [shape = 'u32[144,128]{1,0:T(1,128)}', space=vmem, size = 0x12000, scoped, tag = 'internal scratch']
  %s0 = inlined_call_operand.vmem [shape: bf16[112,256], index: 0, kind: input, shape index: {}]
  %s1 = inlined_call_operand.vmem [shape: bf16[256,64], index: 1, kind: input, shape index: {}]
  %s2 = inlined_call_operand.vmem [shape: f32[1,64], index: 2, kind: input, shape index: {}]
  %s3 = inlined_call_operand.vmem [shape: f32[112,64], index: 3, kind: output, shape index: {}]
  %s4 = sld [smem:[#allocation0]]
  $region22: #{jcu_discriminator_forward.7} parent=0
    _
  %s6 = ssub.s32 1, %s4
  %s7 = scalar_select 0, %s6, %s4
  // Predicated region
  $region2: #{jcu_discriminator_forward.7} parent=0 // pred_check
    _
  $region3: #{jcu_discriminator_forward.7} parent=0 // pred_check_branch
    %9 = sbr.rel (0) target = $region5
  $region4: #{jcu_discriminator_forward.7} parent=0 // pred_region
    _
  $region5: #{jcu_discriminator_forward.7} parent=0 // pred_fallthru
    _
  // Predicated region
  $region6: #{jcu_discriminator_forward.7} parent=0 // pred_check
    _
  $region7: #{jcu_discriminator_forward.7} parent=0 // pred_check_branch
    %11 = sbr.rel (0) target = $region9
  $region8: #{jcu_discriminator_forward.7} parent=0 // pred_region
    _
  $region9: #{jcu_discriminator_forward.7} parent=0 // pred_fallthru
    _
  // Predicated region
  $region10: #{jcu_discriminator_forward.7} parent=0 // pred_check
    _
  $region11: #{jcu_discriminator_forward.7} parent=0 // pred_check_branch
    %13 = sbr.rel (0) target = $region13
  $region12: #{jcu_discriminator_forward.7} parent=0 // pred_region
    _
  $region13: #{jcu_discriminator_forward.7} parent=0 // pred_fallthru
    _
  %v15 = vld [vmem:[%s0] sm:$0xff]
  %v16 = vld [vmem:[%s0 + $0x8] sm:$0xff]
  %v17 = vld [vmem:[%s0 + $0x10] sm:$0xff]
  %v18 = vld [vmem:[%s0 + $0x18] sm:$0xff]
  %v19 = vld [vmem:[%s0 + $0x20] sm:$0xff]
  %v20 = vld [vmem:[%s0 + $0x28] sm:$0xff]
  %v21 = vld [vmem:[%s0 + $0x30] sm:$0xff]
  %v22 = vld [vmem:[%s0 + $0x38] sm:$0xff]
  %v23 = vld [vmem:[%s0 + $0x40] sm:$0xff]
  %v24 = vld [vmem:[%s0 + $0x48] sm:$0xff]
  %v25 = vld [vmem:[%s0 + $0x50] sm:$0xff]
  %v26 = vld [vmem:[%s0 + $0x58] sm:$0xff]
  %v27 = vld [vmem:[%s0 + $0x60] sm:$0xff]
  %v28 = vld [vmem:[%s0 + $0x68] sm:$0xff]
  %v29 = vld [vmem:[%s1] sm:$0xf]
  %v30 = vld [vmem:[%s1 + $0x4] sm:$0xf]
  %v31 = vld [vmem:[%s1 + $0x8] sm:$0xf]
  %v32 = vld [vmem:[%s1 + $0xc] sm:$0xf]
  %v33 = vld [vmem:[%s1 + $0x10] sm:$0xf]
  %v34 = vld [vmem:[%s1 + $0x14] sm:$0xf]
  %v35 = vld [vmem:[%s1 + $0x18] sm:$0xf]
  %v36 = vld [vmem:[%s1 + $0x1c] sm:$0xf]
  %v37 = vld [vmem:[%s1 + $0x20] sm:$0xf]
  %v38 = vld [vmem:[%s1 + $0x24] sm:$0xf]
  %v39 = vld [vmem:[%s1 + $0x28] sm:$0xf]
  %v40 = vld [vmem:[%s1 + $0x2c] sm:$0xf]
  %v41 = vld [vmem:[%s1 + $0x30] sm:$0xf]
  %v42 = vld [vmem:[%s1 + $0x34] sm:$0xf]
  %v43 = vld [vmem:[%s1 + $0x38] sm:$0xf]
  %v44 = vld [vmem:[%s1 + $0x3c] sm:$0xf]
  %v45 = vld [vmem:[%s1 + $0x40] sm:$0xf]
  %v46 = vld [vmem:[%s1 + $0x44] sm:$0xf]
  %v47 = vld [vmem:[%s1 + $0x48] sm:$0xf]
  %v48 = vld [vmem:[%s1 + $0x4c] sm:$0xf]
  %v49 = vld [vmem:[%s1 + $0x50] sm:$0xf]
  %v50 = vld [vmem:[%s1 + $0x54] sm:$0xf]
  %v51 = vld [vmem:[%s1 + $0x58] sm:$0xf]
  %v52 = vld [vmem:[%s1 + $0x5c] sm:$0xf]
  %v53 = vld [vmem:[%s1 + $0x60] sm:$0xf]
  %v54 = vld [vmem:[%s1 + $0x64] sm:$0xf]
  %v55 = vld [vmem:[%s1 + $0x68] sm:$0xf]
  %v56 = vld [vmem:[%s1 + $0x6c] sm:$0xf]
  %v57 = vld [vmem:[%s1 + $0x70] sm:$0xf]
  %v58 = vld [vmem:[%s1 + $0x74] sm:$0xf]
  %v59 = vld [vmem:[%s1 + $0x78] sm:$0xf]
  %v60 = vld [vmem:[%s1 + $0x7c] sm:$0xf]
  %v61 = vld [vmem:[%s2] sm:$0x1]
  %v63 = vlaneseq
  %v64 = vshrl.u32 %v63, 7
  %v65 = vsub.s32 0, %v64
  %v66 = vrot.slane %v61, %v65
  %v82 = vunpack.c.l.b16 %v15
  %v83 = vunpack.c.h.b16 %v15
  %v84 = vunpack.c.l.b16 %v16
  %v85 = vunpack.c.h.b16 %v16
  %v86 = vunpack.c.l.b16 %v17
  %v87 = vunpack.c.h.b16 %v17
  %v88 = vunpack.c.l.b16 %v18
  %v89 = vunpack.c.h.b16 %v18
  %v90 = vunpack.c.l.b16 %v19
  %v91 = vunpack.c.h.b16 %v19
  %v92 = vunpack.c.l.b16 %v20
  %v93 = vunpack.c.h.b16 %v20
  %v94 = vunpack.c.l.b16 %v21
  %v95 = vunpack.c.h.b16 %v21
  %v96 = vunpack.c.l.b16 %v22
  %v97 = vunpack.c.h.b16 %v22
  %v98 = vunpack.c.l.b16 %v23
  %v99 = vunpack.c.h.b16 %v23
  %v100 = vunpack.c.l.b16 %v24
  %v101 = vunpack.c.h.b16 %v24
  %v102 = vunpack.c.l.b16 %v25
  %v103 = vunpack.c.h.b16 %v25
  %v104 = vunpack.c.l.b16 %v26
  %v105 = vunpack.c.h.b16 %v26
  %v106 = vunpack.c.l.b16 %v27
  %v107 = vunpack.c.h.b16 %v27
  %v108 = vunpack.c.l.b16 %v28
  %v109 = vunpack.c.h.b16 %v28
  %v110 = vpack.c.b16 %v84, %v82
  %v111 = vpack.c.b16 %v85, %v83
  %v112 = vpack.c.b16 %v88, %v86
  %v113 = vpack.c.b16 %v89, %v87
  %v114 = vpack.c.b16 %v92, %v90
  %v115 = vpack.c.b16 %v93, %v91
  %v116 = vpack.c.b16 %v96, %v94
  %v117 = vpack.c.b16 %v97, %v95
  %v118 = vpack.c.b16 %v100, %v98
  %v119 = vpack.c.b16 %v101, %v99
  %v120 = vpack.c.b16 %v104, %v102
  %v121 = vpack.c.b16 %v105, %v103
  %v122 = vpack.c.b16 %v108, %v106
  %v123 = vpack.c.b16 %v109, %v107
  %v170 = vunpack.c.l.b16 %v29
  %v171 = vunpack.c.l.b16 %v30
  %v172 = vunpack.c.l.b16 %v31
  %v173 = vunpack.c.l.b16 %v32
  %v174 = vunpack.c.l.b16 %v33
  %v175 = vunpack.c.l.b16 %v34
  %v176 = vunpack.c.l.b16 %v35
  %v177 = vunpack.c.l.b16 %v36
  %v178 = vunpack.c.l.b16 %v37
  %v179 = vunpack.c.l.b16 %v38
  %v180 = vunpack.c.l.b16 %v39
  %v181 = vunpack.c.l.b16 %v40
  %v182 = vunpack.c.l.b16 %v41
  %v183 = vunpack.c.l.b16 %v42
  %v184 = vunpack.c.l.b16 %v43
  %v185 = vunpack.c.l.b16 %v44
  %v186 = vunpack.c.l.b16 %v45
  %v187 = vunpack.c.l.b16 %v46
  %v188 = vunpack.c.l.b16 %v47
  %v189 = vunpack.c.l.b16 %v48
  %v190 = vunpack.c.l.b16 %v49
  %v191 = vunpack.c.l.b16 %v50
  %v192 = vunpack.c.l.b16 %v51
  %v193 = vunpack.c.l.b16 %v52
  %v194 = vunpack.c.l.b16 %v53
  %v195 = vunpack.c.l.b16 %v54
  %v196 = vunpack.c.l.b16 %v55
  %v197 = vunpack.c.l.b16 %v56
  %v198 = vunpack.c.l.b16 %v57
  %v199 = vunpack.c.l.b16 %v58
  %v200 = vunpack.c.l.b16 %v59
  %v201 = vunpack.c.l.b16 %v60
  %v202 = vpack.c.b16 %v171, %v170
  %v203 = vpack.c.b16 %v173, %v172
  %v204 = vpack.c.b16 %v175, %v174
  %v205 = vpack.c.b16 %v177, %v176
  %v206 = vpack.c.b16 %v179, %v178
  %v207 = vpack.c.b16 %v181, %v180
  %v208 = vpack.c.b16 %v183, %v182
  %v209 = vpack.c.b16 %v185, %v184
  %v210 = vpack.c.b16 %v187, %v186
  %v211 = vpack.c.b16 %v189, %v188
  %v212 = vpack.c.b16 %v191, %v190
  %v213 = vpack.c.b16 %v193, %v192
  %v214 = vpack.c.b16 %v195, %v194
  %v215 = vpack.c.b16 %v197, %v196
  %v216 = vpack.c.b16 %v199, %v198
  %v217 = vpack.c.b16 %v201, %v200
  %234 = vmatprep.subr.bf16.mxu0 0
  %235 = vmatpush1.bf16.msra.mxu0 %v209
  %236 = vmatprep.subr.bf16.mxu0 0
  %237 = vmatpush1.bf16.msra.mxu0 %v208
  %238 = vmatprep.subr.bf16.mxu0 0
  %239 = vmatpush1.bf16.msra.mxu0 %v207
  %240 = vmatprep.subr.bf16.mxu0 0
  %241 = vmatpush1.bf16.msra.mxu0 %v206
  %242 = vmatprep.subr.bf16.mxu0 0
  %243 = vmatpush1.bf16.msra.mxu0 %v205
  %244 = vmatprep.subr.bf16.mxu0 0
  %245 = vmatpush1.bf16.msra.mxu0 %v204
  %246 = vmatprep.subr.bf16.mxu0 0
  %247 = vmatpush1.bf16.msra.mxu0 %v203
  %248 = vmatprep.subr.bf16.mxu0 0
  %249 = vmatpush1.bf16.msra.mxu0 %v202
  %250 = vmatprep.subr.bf16.mxu0 0
  %251 = vmatpush2.bf16.msra.mxu0 %v217
  %252 = vmatprep.subr.bf16.mxu0 0
  %253 = vmatpush2.bf16.msra.mxu0 %v216
  %254 = vmatprep.subr.bf16.mxu0 0
  %255 = vmatpush2.bf16.msra.mxu0 %v215
  %256 = vmatprep.subr.bf16.mxu0 0
  %257 = vmatpush2.bf16.msra.mxu0 %v214
  %258 = vmatprep.subr.bf16.mxu0 0
  %259 = vmatpush2.bf16.msra.mxu0 %v213
  %260 = vmatprep.subr.bf16.mxu0 0
  %261 = vmatpush2.bf16.msra.mxu0 %v212
  %262 = vmatprep.subr.bf16.mxu0 0
  %263 = vmatpush2.bf16.msra.mxu0 %v211
  %264 = vmatprep.subr.bf16.mxu0 0
  %265 = vmatpush2.bf16.msra.mxu0 %v210
  %266 = vmatprep.mubr.bf16.mxu0 %v111
  %267 = vmatmul.mubr.bf16.gmra.mxu0 %v110
  %v268 = vpop.f32.mrf.mxu0
  %v269 = vadd.f32 %v66, %v268
  %v270 = vpop.f32.mrf.mxu0
  %v271 = vpop.f32.mrf.mxu0
  %v272 = vadd.f32 %v66, %v271
  %v273 = vpop.f32.mrf.mxu0
  %274 = vmatprep.mubr.bf16.mxu0 %v113
  %275 = vmatmul.mubr.bf16.gmra.mxu0 %v112
  %v276 = vpop.f32.mrf.mxu0
  %v277 = vadd.f32 %v66, %v276
  %v278 = vpop.f32.mrf.mxu0
  %v279 = vpop.f32.mrf.mxu0
  %v280 = vadd.f32 %v66, %v279
  %v281 = vpop.f32.mrf.mxu0
  %282 = vmatprep.mubr.bf16.mxu0 %v115
  %283 = vmatmul.mubr.bf16.gmra.mxu0 %v114
  %v284 = vpop.f32.mrf.mxu0
  %v285 = vadd.f32 %v66, %v284
  %v286 = vpop.f32.mrf.mxu0
  %v287 = vpop.f32.mrf.mxu0
  %v288 = vadd.f32 %v66, %v287
  %v289 = vpop.f32.mrf.mxu0
  %290 = vmatprep.mubr.bf16.mxu0 %v117
  %291 = vmatmul.mubr.bf16.gmra.mxu0 %v116
  %v292 = vpop.f32.mrf.mxu0
  %v293 = vadd.f32 %v66, %v292
  %v294 = vpop.f32.mrf.mxu0
  %v295 = vpop.f32.mrf.mxu0
  %v296 = vadd.f32 %v66, %v295
  %v297 = vpop.f32.mrf.mxu0
  %298 = vmatprep.mubr.bf16.mxu0 %v119
  %299 = vmatmul.mubr.bf16.gmra.mxu0 %v118
  %v300 = vpop.f32.mrf.mxu0
  %v301 = vadd.f32 %v66, %v300
  %v302 = vpop.f32.mrf.mxu0
  %v303 = vpop.f32.mrf.mxu0
  %v304 = vadd.f32 %v66, %v303
  %v305 = vpop.f32.mrf.mxu0
  %306 = vmatprep.mubr.bf16.mxu0 %v121
  %307 = vmatmul.mubr.bf16.gmra.mxu0 %v120
  %v308 = vpop.f32.mrf.mxu0
  %v309 = vadd.f32 %v66, %v308
  %v310 = vpop.f32.mrf.mxu0
  %v311 = vpop.f32.mrf.mxu0
  %v312 = vadd.f32 %v66, %v311
  %v313 = vpop.f32.mrf.mxu0
  %314 = vmatprep.mubr.bf16.mxu0 %v123
  %315 = vmatmul.mubr.bf16.gmra.mxu0 %v122
  %v316 = vpop.f32.mrf.mxu0
  %v317 = vadd.f32 %v66, %v316
  %v318 = vpop.f32.mrf.mxu0
  %v319 = vpop.f32.mrf.mxu0
  %v320 = vadd.f32 %v66, %v319
  %v321 = vpop.f32.mrf.mxu0
  %322 = vdwg.mxu0
  %vm323 = vcmp.ge.f32.partialorder %v269, 0.0
  %vm324 = vcmp.ge.f32.partialorder %v272, 0.0
  %vm325 = vcmp.ge.f32.partialorder %v277, 0.0
  %vm326 = vcmp.ge.f32.partialorder %v280, 0.0
  %vm327 = vcmp.ge.f32.partialorder %v285, 0.0
  %vm328 = vcmp.ge.f32.partialorder %v288, 0.0
  %vm329 = vcmp.ge.f32.partialorder %v293, 0.0
  %vm330 = vcmp.ge.f32.partialorder %v296, 0.0
  %vm331 = vcmp.ge.f32.partialorder %v301, 0.0
  %vm332 = vcmp.ge.f32.partialorder %v304, 0.0
  %vm333 = vcmp.ge.f32.partialorder %v309, 0.0
  %vm334 = vcmp.ge.f32.partialorder %v312, 0.0
  %vm335 = vcmp.ge.f32.partialorder %v317, 0.0
  %vm336 = vcmp.ge.f32.partialorder %v320, 0.0
  %v337 = vmul.f32 %v269, 0.2
  %v338 = vmul.f32 %v272, 0.2
  %v339 = vmul.f32 %v277, 0.2
  %v340 = vmul.f32 %v280, 0.2
  %v341 = vmul.f32 %v285, 0.2
  %v342 = vmul.f32 %v288, 0.2
  %v343 = vmul.f32 %v293, 0.2
  %v344 = vmul.f32 %v296, 0.2
  %v345 = vmul.f32 %v301, 0.2
  %v346 = vmul.f32 %v304, 0.2
  %v347 = vmul.f32 %v309, 0.2
  %v348 = vmul.f32 %v312, 0.2
  %v349 = vmul.f32 %v317, 0.2
  %v350 = vmul.f32 %v320, 0.2
  %v351 = vsel %vm323, %v269, %v337
  %v352 = vsel %vm324, %v272, %v338
  %v353 = vsel %vm325, %v277, %v339
  %v354 = vsel %vm326, %v280, %v340
  %v355 = vsel %vm327, %v285, %v341
  %v356 = vsel %vm328, %v288, %v342
  %v357 = vsel %vm329, %v293, %v343
  %v358 = vsel %vm330, %v296, %v344
  %v359 = vsel %vm331, %v301, %v345
  %v360 = vsel %vm332, %v304, %v346
  %v361 = vsel %vm333, %v309, %v347
  %v362 = vsel %vm334, %v312, %v348
  %v363 = vsel %vm335, %v317, %v349
  %v364 = vsel %vm336, %v320, %v350
  %vm365 = vcmask 523264
  %366 = vst.msk [vmem:[%s3] sm:$0xff] %vm365, %v351
  %367 = vst.msk [vmem:[%s3 + $0x8] sm:$0xff] %vm365, %v352
  %368 = vst.msk [vmem:[%s3 + $0x10] sm:$0xff] %vm365, %v353
  %369 = vst.msk [vmem:[%s3 + $0x18] sm:$0xff] %vm365, %v354
  %370 = vst.msk [vmem:[%s3 + $0x20] sm:$0xff] %vm365, %v355
  %371 = vst.msk [vmem:[%s3 + $0x28] sm:$0xff] %vm365, %v356
  %372 = vst.msk [vmem:[%s3 + $0x30] sm:$0xff] %vm365, %v357
  %373 = vst.msk [vmem:[%s3 + $0x38] sm:$0xff] %vm365, %v358
  %374 = vst.msk [vmem:[%s3 + $0x40] sm:$0xff] %vm365, %v359
  %375 = vst.msk [vmem:[%s3 + $0x48] sm:$0xff] %vm365, %v360
  %376 = vst.msk [vmem:[%s3 + $0x50] sm:$0xff] %vm365, %v361
  %377 = vst.msk [vmem:[%s3 + $0x58] sm:$0xff] %vm365, %v362
  %378 = vst.msk [vmem:[%s3 + $0x60] sm:$0xff] %vm365, %v363
  %379 = vst.msk [vmem:[%s3 + $0x68] sm:$0xff] %vm365, %v364
  // Predicated region
  $region14: #{jcu_discriminator_forward.7} parent=0 // pred_check
    _
  $region15: #{jcu_discriminator_forward.7} parent=0 // pred_check_branch
    %381 = sbr.rel (0) target = $region17
  $region16: #{jcu_discriminator_forward.7} parent=0 // pred_region
    _
  $region17: #{jcu_discriminator_forward.7} parent=0 // pred_fallthru
    _
  // Predicated region
  $region18: #{jcu_discriminator_forward.7} parent=0 // pred_check
    _
  $region19: #{jcu_discriminator_forward.7} parent=0 // pred_check_branch
    %383 = sbr.rel (0) target = $region21
  $region20: #{jcu_discriminator_forward.7} parent=0 // pred_region
    _
  $region21: #{jcu_discriminator_forward.7} parent=0 // pred_fallthru
    _

// kernel: jcu_discriminator_forward.8
$region0: #{jcu_discriminator_forward.8}
  #allocation0 [shape = 'u32[]', space=smem, size = 0x4, offset = 0x4, fixed_abs, tag = 'smem constant byte address 0x4 - core index']
  #allocation1 [shape = 'u32[144,128]{1,0:T(1,128)}', space=vmem, size = 0x12000, scoped, tag = 'internal scratch']
  %s0 = inlined_call_operand.vmem [shape: bf16[48,2048], index: 0, kind: input, shape index: {}]
  %s1 = inlined_call_operand.vmem [shape: bf16[2048,128], index: 1, kind: input, shape index: {}]
  %s2 = inlined_call_operand.vmem [shape: f32[1,128], index: 2, kind: input, shape index: {}]
  %s3 = inlined_call_operand.vmem [shape: f32[48,128], index: 3, kind: output, shape index: {}]
  %s4 = sld [smem:[#allocation0]]
  $region22: #{jcu_discriminator_forward.8} parent=0
    _
  %s6 = ssub.s32 1, %s4
  %s7 = scalar_select 0, %s6, %s4
  // Predicated region
  $region2: #{jcu_discriminator_forward.8} parent=0 // pred_check
    _
  $region3: #{jcu_discriminator_forward.8} parent=0 // pred_check_branch
    %9 = sbr.rel (0) target = $region5
  $region4: #{jcu_discriminator_forward.8} parent=0 // pred_region
    _
  $region5: #{jcu_discriminator_forward.8} parent=0 // pred_fallthru
    _
  // Predicated region
  $region6: #{jcu_discriminator_forward.8} parent=0 // pred_check
    _
  $region7: #{jcu_discriminator_forward.8} parent=0 // pred_check_branch
    %11 = sbr.rel (0) target = $region9
  $region8: #{jcu_discriminator_forward.8} parent=0 // pred_region
    _
  $region9: #{jcu_discriminator_forward.8} parent=0 // pred_fallthru
    _
  // Predicated region
  $region10: #{jcu_discriminator_forward.8} parent=0 // pred_check
    _
  $region11: #{jcu_discriminator_forward.8} parent=0 // pred_check_branch
    %13 = sbr.rel (0) target = $region13
  $region12: #{jcu_discriminator_forward.8} parent=0 // pred_region
    _
  $region13: #{jcu_discriminator_forward.8} parent=0 // pred_fallthru
    _
  %v15 = vld [vmem:[%s0] sm:$0xff]
  %v16 = vld [vmem:[%s0 + $0x8] sm:$0xff]
  %v17 = vld [vmem:[%s0 + $0x10] sm:$0xff]
  %v18 = vld [vmem:[%s0 + $0x18] sm:$0xff]
  %v19 = vld [vmem:[%s0 + $0x20] sm:$0xff]
  %v20 = vld [vmem:[%s0 + $0x28] sm:$0xff]
  %v21 = vld [vmem:[%s0 + $0x30] sm:$0xff]
  %v22 = vld [vmem:[%s0 + $0x38] sm:$0xff]
  %v23 = vld [vmem:[%s0 + $0x40] sm:$0xff]
  %v24 = vld [vmem:[%s0 + $0x48] sm:$0xff]
  %v25 = vld [vmem:[%s0 + $0x50] sm:$0xff]
  %v26 = vld [vmem:[%s0 + $0x58] sm:$0xff]
  %v27 = vld [vmem:[%s0 + $0x60] sm:$0xff]
  %v28 = vld [vmem:[%s0 + $0x68] sm:$0xff]
  %v29 = vld [vmem:[%s0 + $0x70] sm:$0xff]
  %v30 = vld [vmem:[%s0 + $0x78] sm:$0xff]
  %v31 = vld [vmem:[%s0 + $0x80] sm:$0xff]
  %v32 = vld [vmem:[%s0 + $0x88] sm:$0xff]
  %v33 = vld [vmem:[%s0 + $0x90] sm:$0xff]
  %v34 = vld [vmem:[%s0 + $0x98] sm:$0xff]
  %v35 = vld [vmem:[%s0 + $0xa0] sm:$0xff]
  %v36 = vld [vmem:[%s0 + $0xa8] sm:$0xff]
  %v37 = vld [vmem:[%s0 + $0xb0] sm:$0xff]
  %v38 = vld [vmem:[%s0 + $0xb8] sm:$0xff]
  %v39 = vld [vmem:[%s0 + $0xc0] sm:$0xff]
  %v40 = vld [vmem:[%s0 + $0xc8] sm:$0xff]
  %v41 = vld [vmem:[%s0 + $0xd0] sm:$0xff]
  %v42 = vld [vmem:[%s0 + $0xd8] sm:$0xff]
  %v43 = vld [vmem:[%s0 + $0xe0] sm:$0xff]
  %v44 = vld [vmem:[%s0 + $0xe8] sm:$0xff]
  %v45 = vld [vmem:[%s0 + $0xf0] sm:$0xff]
  %v46 = vld [vmem:[%s0 + $0xf8] sm:$0xff]
  %v47 = vld [vmem:[%s0 + $0x100] sm:$0xff]
  %v48 = vld [vmem:[%s0 + $0x108] sm:$0xff]
  %v49 = vld [vmem:[%s0 + $0x110] sm:$0xff]
  %v50 = vld [vmem:[%s0 + $0x118] sm:$0xff]
  %v51 = vld [vmem:[%s0 + $0x120] sm:$0xff]
  %v52 = vld [vmem:[%s0 + $0x128] sm:$0xff]
  %v53 = vld [vmem:[%s0 + $0x130] sm:$0xff]
  %v54 = vld [vmem:[%s0 + $0x138] sm:$0xff]
  %v55 = vld [vmem:[%s0 + $0x140] sm:$0xff]
  %v56 = vld [vmem:[%s0 + $0x148] sm:$0xff]
  %v57 = vld [vmem:[%s0 + $0x150] sm:$0xff]
  %v58 = vld [vmem:[%s0 + $0x158] sm:$0xff]
  %v59 = vld [vmem:[%s0 + $0x160] sm:$0xff]
  %v60 = vld [vmem:[%s0 + $0x168] sm:$0xff]
  %v61 = vld [vmem:[%s0 + $0x170] sm:$0xff]
  %v62 = vld [vmem:[%s0 + $0x178] sm:$0xff]
  %v63 = vld [vmem:[%s1] sm:$0xf]
  %v64 = vld [vmem:[%s1 + $0x4] sm:$0xf]
  %v65 = vld [vmem:[%s1 + $0x8] sm:$0xf]
  %v66 = vld [vmem:[%s1 + $0xc] sm:$0xf]
  %v67 = vld [vmem:[%s1 + $0x10] sm:$0xf]
  %v68 = vld [vmem:[%s1 + $0x14] sm:$0xf]
  %v69 = vld [vmem:[%s1 + $0x18] sm:$0xf]
  %v70 = vld [vmem:[%s1 + $0x1c] sm:$0xf]
  %v71 = vld [vmem:[%s1 + $0x20] sm:$0xf]
  %v72 = vld [vmem:[%s1 + $0x24] sm:$0xf]
  %v73 = vld [vmem:[%s1 + $0x28] sm:$0xf]
  %v74 = vld [vmem:[%s1 + $0x2c] sm:$0xf]
  %v75 = vld [vmem:[%s1 + $0x30] sm:$0xf]
  %v76 = vld [vmem:[%s1 + $0x34] sm:$0xf]
  %v77 = vld [vmem:[%s1 + $0x38] sm:$0xf]
  %v78 = vld [vmem:[%s1 + $0x3c] sm:$0xf]
  %v79 = vld [vmem:[%s1 + $0x40] sm:$0xf]
  %v80 = vld [vmem:[%s1 + $0x44] sm:$0xf]
  %v81 = vld [vmem:[%s1 + $0x48] sm:$0xf]
  %v82 = vld [vmem:[%s1 + $0x4c] sm:$0xf]
  %v83 = vld [vmem:[%s1 + $0x50] sm:$0xf]
  %v84 = vld [vmem:[%s1 + $0x54] sm:$0xf]
  %v85 = vld [vmem:[%s1 + $0x58] sm:$0xf]
  %v86 = vld [vmem:[%s1 + $0x5c] sm:$0xf]
  %v87 = vld [vmem:[%s1 + $0x60] sm:$0xf]
  %v88 = vld [vmem:[%s1 + $0x64] sm:$0xf]
  %v89 = vld [vmem:[%s1 + $0x68] sm:$0xf]
  %v90 = vld [vmem:[%s1 + $0x6c] sm:$0xf]
  %v91 = vld [vmem:[%s1 + $0x70] sm:$0xf]
  %v92 = vld [vmem:[%s1 + $0x74] sm:$0xf]
  %v93 = vld [vmem:[%s1 + $0x78] sm:$0xf]
  %v94 = vld [vmem:[%s1 + $0x7c] sm:$0xf]
  %v95 = vld [vmem:[%s1 + $0x80] sm:$0xf]
  %v96 = vld [vmem:[%s1 + $0x84] sm:$0xf]
  %v97 = vld [vmem:[%s1 + $0x88] sm:$0xf]
  %v98 = vld [vmem:[%s1 + $0x8c] sm:$0xf]
  %v99 = vld [vmem:[%s1 + $0x90] sm:$0xf]
  %v100 = vld [vmem:[%s1 + $0x94] sm:$0xf]
  %v101 = vld [vmem:[%s1 + $0x98] sm:$0xf]
  %v102 = vld [vmem:[%s1 + $0x9c] sm:$0xf]
  %v103 = vld [vmem:[%s1 + $0xa0] sm:$0xf]
  %v104 = vld [vmem:[%s1 + $0xa4] sm:$0xf]
  %v105 = vld [vmem:[%s1 + $0xa8] sm:$0xf]
  %v106 = vld [vmem:[%s1 + $0xac] sm:$0xf]
  %v107 = vld [vmem:[%s1 + $0xb0] sm:$0xf]
  %v108 = vld [vmem:[%s1 + $0xb4] sm:$0xf]
  %v109 = vld [vmem:[%s1 + $0xb8] sm:$0xf]
  %v110 = vld [vmem:[%s1 + $0xbc] sm:$0xf]
  %v111 = vld [vmem:[%s1 + $0xc0] sm:$0xf]
  %v112 = vld [vmem:[%s1 + $0xc4] sm:$0xf]
  %v113 = vld [vmem:[%s1 + $0xc8] sm:$0xf]
  %v114 = vld [vmem:[%s1 + $0xcc] sm:$0xf]
  %v115 = vld [vmem:[%s1 + $0xd0] sm:$0xf]
  %v116 = vld [vmem:[%s1 + $0xd4] sm:$0xf]
  %v117 = vld [vmem:[%s1 + $0xd8] sm:$0xf]
  %v118 = vld [vmem:[%s1 + $0xdc] sm:$0xf]
  %v119 = vld [vmem:[%s1 + $0xe0] sm:$0xf]
  %v120 = vld [vmem:[%s1 + $0xe4] sm:$0xf]
  %v121 = vld [vmem:[%s1 + $0xe8] sm:$0xf]
  %v122 = vld [vmem:[%s1 + $0xec] sm:$0xf]
  %v123 = vld [vmem:[%s1 + $0xf0] sm:$0xf]
  %v124 = vld [vmem:[%s1 + $0xf4] sm:$0xf]
  %v125 = vld [vmem:[%s1 + $0xf8] sm:$0xf]
  %v126 = vld [vmem:[%s1 + $0xfc] sm:$0xf]
  %v127 = vld [vmem:[%s1 + $0x100] sm:$0xf]
  %v128 = vld [vmem:[%s1 + $0x104] sm:$0xf]
  %v129 = vld [vmem:[%s1 + $0x108] sm:$0xf]
  %v130 = vld [vmem:[%s1 + $0x10c] sm:$0xf]
  %v131 = vld [vmem:[%s1 + $0x110] sm:$0xf]
  %v132 = vld [vmem:[%s1 + $0x114] sm:$0xf]
  %v133 = vld [vmem:[%s1 + $0x118] sm:$0xf]
  %v134 = vld [vmem:[%s1 + $0x11c] sm:$0xf]
  %v135 = vld [vmem:[%s1 + $0x120] sm:$0xf]
  %v136 = vld [vmem:[%s1 + $0x124] sm:$0xf]
  %v137 = vld [vmem:[%s1 + $0x128] sm:$0xf]
  %v138 = vld [vmem:[%s1 + $0x12c] sm:$0xf]
  %v139 = vld [vmem:[%s1 + $0x130] sm:$0xf]
  %v140 = vld [vmem:[%s1 + $0x134] sm:$0xf]
  %v141 = vld [vmem:[%s1 + $0x138] sm:$0xf]
  %v142 = vld [vmem:[%s1 + $0x13c] sm:$0xf]
  %v143 = vld [vmem:[%s1 + $0x140] sm:$0xf]
  %v144 = vld [vmem:[%s1 + $0x144] sm:$0xf]
  %v145 = vld [vmem:[%s1 + $0x148] sm:$0xf]
  %v146 = vld [vmem:[%s1 + $0x14c] sm:$0xf]
  %v147 = vld [vmem:[%s1 + $0x150] sm:$0xf]
  %v148 = vld [vmem:[%s1 + $0x154] sm:$0xf]
  %v149 = vld [vmem:[%s1 + $0x158] sm:$0xf]
  %v150 = vld [vmem:[%s1 + $0x15c] sm:$0xf]
  %v151 = vld [vmem:[%s1 + $0x160] sm:$0xf]
  %v152 = vld [vmem:[%s1 + $0x164] sm:$0xf]
  %v153 = vld [vmem:[%s1 + $0x168] sm:$0xf]
  %v154 = vld [vmem:[%s1 + $0x16c] sm:$0xf]
  %v155 = vld [vmem:[%s1 + $0x170] sm:$0xf]
  %v156 = vld [vmem:[%s1 + $0x174] sm:$0xf]
  %v157 = vld [vmem:[%s1 + $0x178] sm:$0xf]
  %v158 = vld [vmem:[%s1 + $0x17c] sm:$0xf]
  %v159 = vld [vmem:[%s1 + $0x180] sm:$0xf]
  %v160 = vld [vmem:[%s1 + $0x184] sm:$0xf]
  %v161 = vld [vmem:[%s1 + $0x188] sm:$0xf]
  %v162 = vld [vmem:[%s1 + $0x18c] sm:$0xf]
  %v163 = vld [vmem:[%s1 + $0x190] sm:$0xf]
  %v164 = vld [vmem:[%s1 + $0x194] sm:$0xf]
  %v165 = vld [vmem:[%s1 + $0x198] sm:$0xf]
  %v166 = vld [vmem:[%s1 + $0x19c] sm:$0xf]
  %v167 = vld [vmem:[%s1 + $0x1a0] sm:$0xf]
  %v168 = vld [vmem:[%s1 + $0x1a4] sm:$0xf]
  %v169 = vld [vmem:[%s1 + $0x1a8] sm:$0xf]
  %v170 = vld [vmem:[%s1 + $0x1ac] sm:$0xf]
  %v171 = vld [vmem:[%s1 + $0x1b0] sm:$0xf]
  %v172 = vld [vmem:[%s1 + $0x1b4] sm:$0xf]
  %v173 = vld [vmem:[%s1 + $0x1b8] sm:$0xf]
  %v174 = vld [vmem:[%s1 + $0x1bc] sm:$0xf]
  %v175 = vld [vmem:[%s1 + $0x1c0] sm:$0xf]
  %v176 = vld [vmem:[%s1 + $0x1c4] sm:$0xf]
  %v177 = vld [vmem:[%s1 + $0x1c8] sm:$0xf]
  %v178 = vld [vmem:[%s1 + $0x1cc] sm:$0xf]
  %v179 = vld [vmem:[%s1 + $0x1d0] sm:$0xf]
  %v180 = vld [vmem:[%s1 + $0x1d4] sm:$0xf]
  %v181 = vld [vmem:[%s1 + $0x1d8] sm:$0xf]
  %v182 = vld [vmem:[%s1 + $0x1dc] sm:$0xf]
  %v183 = vld [vmem:[%s1 + $0x1e0] sm:$0xf]
  %v184 = vld [vmem:[%s1 + $0x1e4] sm:$0xf]
  %v185 = vld [vmem:[%s1 + $0x1e8] sm:$0xf]
  %v186 = vld [vmem:[%s1 + $0x1ec] sm:$0xf]
  %v187 = vld [vmem:[%s1 + $0x1f0] sm:$0xf]
  %v188 = vld [vmem:[%s1 + $0x1f4] sm:$0xf]
  %v189 = vld [vmem:[%s1 + $0x1f8] sm:$0xf]
  %v190 = vld [vmem:[%s1 + $0x1fc] sm:$0xf]
  %v191 = vld [vmem:[%s1 + $0x200] sm:$0xf]
  %v192 = vld [vmem:[%s1 + $0x204] sm:$0xf]
  %v193 = vld [vmem:[%s1 + $0x208] sm:$0xf]
  %v194 = vld [vmem:[%s1 + $0x20c] sm:$0xf]
  %v195 = vld [vmem:[%s1 + $0x210] sm:$0xf]
  %v196 = vld [vmem:[%s1 + $0x214] sm:$0xf]
  %v197 = vld [vmem:[%s1 + $0x218] sm:$0xf]
  %v198 = vld [vmem:[%s1 + $0x21c] sm:$0xf]
  %v199 = vld [vmem:[%s1 + $0x220] sm:$0xf]
  %v200 = vld [vmem:[%s1 + $0x224] sm:$0xf]
  %v201 = vld [vmem:[%s1 + $0x228] sm:$0xf]
  %v202 = vld [vmem:[%s1 + $0x22c] sm:$0xf]
  %v203 = vld [vmem:[%s1 + $0x230] sm:$0xf]
  %v204 = vld [vmem:[%s1 + $0x234] sm:$0xf]
  %v205 = vld [vmem:[%s1 + $0x238] sm:$0xf]
  %v206 = vld [vmem:[%s1 + $0x23c] sm:$0xf]
  %v207 = vld [vmem:[%s1 + $0x240] sm:$0xf]
  %v208 = vld [vmem:[%s1 + $0x244] sm:$0xf]
  %v209 = vld [vmem:[%s1 + $0x248] sm:$0xf]
  %v210 = vld [vmem:[%s1 + $0x24c] sm:$0xf]
  %v211 = vld [vmem:[%s1 + $0x250] sm:$0xf]
  %v212 = vld [vmem:[%s1 + $0x254] sm:$0xf]
  %v213 = vld [vmem:[%s1 + $0x258] sm:$0xf]
  %v214 = vld [vmem:[%s1 + $0x25c] sm:$0xf]
  %v215 = vld [vmem:[%s1 + $0x260] sm:$0xf]
  %v216 = vld [vmem:[%s1 + $0x264] sm:$0xf]
  %v217 = vld [vmem:[%s1 + $0x268] sm:$0xf]
  %v218 = vld [vmem:[%s1 + $0x26c] sm:$0xf]
  %v219 = vld [vmem:[%s1 + $0x270] sm:$0xf]
  %v220 = vld [vmem:[%s1 + $0x274] sm:$0xf]
  %v221 = vld [vmem:[%s1 + $0x278] sm:$0xf]
  %v222 = vld [vmem:[%s1 + $0x27c] sm:$0xf]
  %v223 = vld [vmem:[%s1 + $0x280] sm:$0xf]
  %v224 = vld [vmem:[%s1 + $0x284] sm:$0xf]
  %v225 = vld [vmem:[%s1 + $0x288] sm:$0xf]
  %v226 = vld [vmem:[%s1 + $0x28c] sm:$0xf]
  %v227 = vld [vmem:[%s1 + $0x290] sm:$0xf]
  %v228 = vld [vmem:[%s1 + $0x294] sm:$0xf]
  %v229 = vld [vmem:[%s1 + $0x298] sm:$0xf]
  %v230 = vld [vmem:[%s1 + $0x29c] sm:$0xf]
  %v231 = vld [vmem:[%s1 + $0x2a0] sm:$0xf]
  %v232 = vld [vmem:[%s1 + $0x2a4] sm:$0xf]
  %v233 = vld [vmem:[%s1 + $0x2a8] sm:$0xf]
  %v234 = vld [vmem:[%s1 + $0x2ac] sm:$0xf]
  %v235 = vld [vmem:[%s1 + $0x2b0] sm:$0xf]
  %v236 = vld [vmem:[%s1 + $0x2b4] sm:$0xf]
  %v237 = vld [vmem:[%s1 + $0x2b8] sm:$0xf]
  %v238 = vld [vmem:[%s1 + $0x2bc] sm:$0xf]
  %v239 = vld [vmem:[%s1 + $0x2c0] sm:$0xf]
  %v240 = vld [vmem:[%s1 + $0x2c4] sm:$0xf]
  %v241 = vld [vmem:[%s1 + $0x2c8] sm:$0xf]
  %v242 = vld [vmem:[%s1 + $0x2cc] sm:$0xf]
  %v243 = vld [vmem:[%s1 + $0x2d0] sm:$0xf]
  %v244 = vld [vmem:[%s1 + $0x2d4] sm:$0xf]
  %v245 = vld [vmem:[%s1 + $0x2d8] sm:$0xf]
  %v246 = vld [vmem:[%s1 + $0x2dc] sm:$0xf]
  %v247 = vld [vmem:[%s1 + $0x2e0] sm:$0xf]
  %v248 = vld [vmem:[%s1 + $0x2e4] sm:$0xf]
  %v249 = vld [vmem:[%s1 + $0x2e8] sm:$0xf]
  %v250 = vld [vmem:[%s1 + $0x2ec] sm:$0xf]
  %v251 = vld [vmem:[%s1 + $0x2f0] sm:$0xf]
  %v252 = vld [vmem:[%s1 + $0x2f4] sm:$0xf]
  %v253 = vld [vmem:[%s1 + $0x2f8] sm:$0xf]
  %v254 = vld [vmem:[%s1 + $0x2fc] sm:$0xf]
  %v255 = vld [vmem:[%s1 + $0x300] sm:$0xf]
  %v256 = vld [vmem:[%s1 + $0x304] sm:$0xf]
  %v257 = vld [vmem:[%s1 + $0x308] sm:$0xf]
  %v258 = vld [vmem:[%s1 + $0x30c] sm:$0xf]
  %v259 = vld [vmem:[%s1 + $0x310] sm:$0xf]
  %v260 = vld [vmem:[%s1 + $0x314] sm:$0xf]
  %v261 = vld [vmem:[%s1 + $0x318] sm:$0xf]
  %v262 = vld [vmem:[%s1 + $0x31c] sm:$0xf]
  %v263 = vld [vmem:[%s1 + $0x320] sm:$0xf]
  %v264 = vld [vmem:[%s1 + $0x324] sm:$0xf]
  %v265 = vld [vmem:[%s1 + $0x328] sm:$0xf]
  %v266 = vld [vmem:[%s1 + $0x32c] sm:$0xf]
  %v267 = vld [vmem:[%s1 + $0x330] sm:$0xf]
  %v268 = vld [vmem:[%s1 + $0x334] sm:$0xf]
  %v269 = vld [vmem:[%s1 + $0x338] sm:$0xf]
  %v270 = vld [vmem:[%s1 + $0x33c] sm:$0xf]
  %v271 = vld [vmem:[%s1 + $0x340] sm:$0xf]
  %v272 = vld [vmem:[%s1 + $0x344] sm:$0xf]
  %v273 = vld [vmem:[%s1 + $0x348] sm:$0xf]
  %v274 = vld [vmem:[%s1 + $0x34c] sm:$0xf]
  %v275 = vld [vmem:[%s1 + $0x350] sm:$0xf]
  %v276 = vld [vmem:[%s1 + $0x354] sm:$0xf]
  %v277 = vld [vmem:[%s1 + $0x358] sm:$0xf]
  %v278 = vld [vmem:[%s1 + $0x35c] sm:$0xf]
  %v279 = vld [vmem:[%s1 + $0x360] sm:$0xf]
  %v280 = vld [vmem:[%s1 + $0x364] sm:$0xf]
  %v281 = vld [vmem:[%s1 + $0x368] sm:$0xf]
  %v282 = vld [vmem:[%s1 + $0x36c] sm:$0xf]
  %v283 = vld [vmem:[%s1 + $0x370] sm:$0xf]
  %v284 = vld [vmem:[%s1 + $0x374] sm:$0xf]
  %v285 = vld [vmem:[%s1 + $0x378] sm:$0xf]
  %v286 = vld [vmem:[%s1 + $0x37c] sm:$0xf]
  %v287 = vld [vmem:[%s1 + $0x380] sm:$0xf]
  %v288 = vld [vmem:[%s1 + $0x384] sm:$0xf]
  %v289 = vld [vmem:[%s1 + $0x388] sm:$0xf]
  %v290 = vld [vmem:[%s1 + $0x38c] sm:$0xf]
  %v291 = vld [vmem:[%s1 + $0x390] sm:$0xf]
  %v292 = vld [vmem:[%s1 + $0x394] sm:$0xf]
  %v293 = vld [vmem:[%s1 + $0x398] sm:$0xf]
  %v294 = vld [vmem:[%s1 + $0x39c] sm:$0xf]
  %v295 = vld [vmem:[%s1 + $0x3a0] sm:$0xf]
  %v296 = vld [vmem:[%s1 + $0x3a4] sm:$0xf]
  %v297 = vld [vmem:[%s1 + $0x3a8] sm:$0xf]
  %v298 = vld [vmem:[%s1 + $0x3ac] sm:$0xf]
  %v299 = vld [vmem:[%s1 + $0x3b0] sm:$0xf]
  %v300 = vld [vmem:[%s1 + $0x3b4] sm:$0xf]
  %v301 = vld [vmem:[%s1 + $0x3b8] sm:$0xf]
  %v302 = vld [vmem:[%s1 + $0x3bc] sm:$0xf]
  %v303 = vld [vmem:[%s1 + $0x3c0] sm:$0xf]
  %v304 = vld [vmem:[%s1 + $0x3c4] sm:$0xf]
  %v305 = vld [vmem:[%s1 + $0x3c8] sm:$0xf]
  %v306 = vld [vmem:[%s1 + $0x3cc] sm:$0xf]
  %v307 = vld [vmem:[%s1 + $0x3d0] sm:$0xf]
  %v308 = vld [vmem:[%s1 + $0x3d4] sm:$0xf]
  %v309 = vld [vmem:[%s1 + $0x3d8] sm:$0xf]
  %v310 = vld [vmem:[%s1 + $0x3dc] sm:$0xf]
  %v311 = vld [vmem:[%s1 + $0x3e0] sm:$0xf]
  %v312 = vld [vmem:[%s1 + $0x3e4] sm:$0xf]
  %v313 = vld [vmem:[%s1 + $0x3e8] sm:$0xf]
  %v314 = vld [vmem:[%s1 + $0x3ec] sm:$0xf]
  %v315 = vld [vmem:[%s1 + $0x3f0] sm:$0xf]
  %v316 = vld [vmem:[%s1 + $0x3f4] sm:$0xf]
  %v317 = vld [vmem:[%s1 + $0x3f8] sm:$0xf]
  %v318 = vld [vmem:[%s1 + $0x3fc] sm:$0xf]
  %v319 = vld [vmem:[%s2] sm:$0x1]
  %v321 = vlaneseq
  %v322 = vshrl.u32 %v321, 7
  %v323 = vsub.s32 0, %v322
  %v324 = vrot.slane %v319, %v323
  %v374 = vunpack.c.l.b16 %v15
  %v375 = vunpack.c.h.b16 %v15
  %v376 = vunpack.c.l.b16 %v16
  %v377 = vunpack.c.h.b16 %v16
  %v378 = vunpack.c.l.b16 %v17
  %v379 = vunpack.c.h.b16 %v17
  %v380 = vunpack.c.l.b16 %v18
  %v381 = vunpack.c.h.b16 %v18
  %v382 = vunpack.c.l.b16 %v19
  %v383 = vunpack.c.h.b16 %v19
  %v384 = vunpack.c.l.b16 %v20
  %v385 = vunpack.c.h.b16 %v20
  %v386 = vunpack.c.l.b16 %v21
  %v387 = vunpack.c.h.b16 %v21
  %v388 = vunpack.c.l.b16 %v22
  %v389 = vunpack.c.h.b16 %v22
  %v390 = vunpack.c.l.b16 %v23
  %v391 = vunpack.c.h.b16 %v23
  %v392 = vunpack.c.l.b16 %v24
  %v393 = vunpack.c.h.b16 %v24
  %v394 = vunpack.c.l.b16 %v25
  %v395 = vunpack.c.h.b16 %v25
  %v396 = vunpack.c.l.b16 %v26
  %v397 = vunpack.c.h.b16 %v26
  %v398 = vunpack.c.l.b16 %v27
  %v399 = vunpack.c.h.b16 %v27
  %v400 = vunpack.c.l.b16 %v28
  %v401 = vunpack.c.h.b16 %v28
  %v402 = vunpack.c.l.b16 %v29
  %v403 = vunpack.c.h.b16 %v29
  %v404 = vunpack.c.l.b16 %v30
  %v405 = vunpack.c.h.b16 %v30
  %v406 = vunpack.c.l.b16 %v31
  %v407 = vunpack.c.h.b16 %v31
  %v408 = vunpack.c.l.b16 %v32
  %v409 = vunpack.c.h.b16 %v32
  %v410 = vunpack.c.l.b16 %v33
  %v411 = vunpack.c.h.b16 %v33
  %v412 = vunpack.c.l.b16 %v34
  %v413 = vunpack.c.h.b16 %v34
  %v414 = vunpack.c.l.b16 %v35
  %v415 = vunpack.c.h.b16 %v35
  %v416 = vunpack.c.l.b16 %v36
  %v417 = vunpack.c.h.b16 %v36
  %v418 = vunpack.c.l.b16 %v37
  %v419 = vunpack.c.h.b16 %v37
  %v420 = vunpack.c.l.b16 %v38
  %v421 = vunpack.c.h.b16 %v38
  %v422 = vunpack.c.l.b16 %v39
  %v423 = vunpack.c.h.b16 %v39
  %v424 = vunpack.c.l.b16 %v40
  %v425 = vunpack.c.h.b16 %v40
  %v426 = vunpack.c.l.b16 %v41
  %v427 = vunpack.c.h.b16 %v41
  %v428 = vunpack.c.l.b16 %v42
  %v429 = vunpack.c.h.b16 %v42
  %v430 = vunpack.c.l.b16 %v43
  %v431 = vunpack.c.h.b16 %v43
  %v432 = vunpack.c.l.b16 %v44
  %v433 = vunpack.c.h.b16 %v44
  %v434 = vunpack.c.l.b16 %v45
  %v435 = vunpack.c.h.b16 %v45
  %v436 = vunpack.c.l.b16 %v46
  %v437 = vunpack.c.h.b16 %v46
  %v438 = vunpack.c.l.b16 %v47
  %v439 = vunpack.c.h.b16 %v47
  %v440 = vunpack.c.l.b16 %v48
  %v441 = vunpack.c.h.b16 %v48
  %v442 = vunpack.c.l.b16 %v49
  %v443 = vunpack.c.h.b16 %v49
  %v444 = vunpack.c.l.b16 %v50
  %v445 = vunpack.c.h.b16 %v50
  %v446 = vunpack.c.l.b16 %v51
  %v447 = vunpack.c.h.b16 %v51
  %v448 = vunpack.c.l.b16 %v52
  %v449 = vunpack.c.h.b16 %v52
  %v450 = vunpack.c.l.b16 %v53
  %v451 = vunpack.c.h.b16 %v53
  %v452 = vunpack.c.l.b16 %v54
  %v453 = vunpack.c.h.b16 %v54
  %v454 = vunpack.c.l.b16 %v55
  %v455 = vunpack.c.h.b16 %v55
  %v456 = vunpack.c.l.b16 %v56
  %v457 = vunpack.c.h.b16 %v56
  %v458 = vunpack.c.l.b16 %v57
  %v459 = vunpack.c.h.b16 %v57
  %v460 = vunpack.c.l.b16 %v58
  %v461 = vunpack.c.h.b16 %v58
  %v462 = vunpack.c.l.b16 %v59
  %v463 = vunpack.c.h.b16 %v59
  %v464 = vunpack.c.l.b16 %v60
  %v465 = vunpack.c.h.b16 %v60
  %v466 = vunpack.c.l.b16 %v61
  %v467 = vunpack.c.h.b16 %v61
  %v468 = vunpack.c.l.b16 %v62
  %v469 = vunpack.c.h.b16 %v62
  %v470 = vpack.c.b16 %v390, %v374
  %v471 = vpack.c.b16 %v391, %v375
  %v472 = vpack.c.b16 %v392, %v376
  %v473 = vpack.c.b16 %v393, %v377
  %v474 = vpack.c.b16 %v394, %v378
  %v475 = vpack.c.b16 %v395, %v379
  %v476 = vpack.c.b16 %v396, %v380
  %v477 = vpack.c.b16 %v397, %v381
  %v478 = vpack.c.b16 %v398, %v382
  %v479 = vpack.c.b16 %v399, %v383
  %v480 = vpack.c.b16 %v400, %v384
  %v481 = vpack.c.b16 %v401, %v385
  %v482 = vpack.c.b16 %v402, %v386
  %v483 = vpack.c.b16 %v403, %v387
  %v484 = vpack.c.b16 %v404, %v388
  %v485 = vpack.c.b16 %v405, %v389
  %v486 = vpack.c.b16 %v422, %v406
  %v487 = vpack.c.b16 %v423, %v407
  %v488 = vpack.c.b16 %v424, %v408
  %v489 = vpack.c.b16 %v425, %v409
  %v490 = vpack.c.b16 %v426, %v410
  %v491 = vpack.c.b16 %v427, %v411
  %v492 = vpack.c.b16 %v428, %v412
  %v493 = vpack.c.b16 %v429, %v413
  %v494 = vpack.c.b16 %v430, %v414
  %v495 = vpack.c.b16 %v431, %v415
  %v496 = vpack.c.b16 %v432, %v416
  %v497 = vpack.c.b16 %v433, %v417
  %v498 = vpack.c.b16 %v434, %v418
  %v499 = vpack.c.b16 %v435, %v419
  %v500 = vpack.c.b16 %v436, %v420
  %v501 = vpack.c.b16 %v437, %v421
  %v502 = vpack.c.b16 %v454, %v438
  %v503 = vpack.c.b16 %v455, %v439
  %v504 = vpack.c.b16 %v456, %v440
  %v505 = vpack.c.b16 %v457, %v441
  %v506 = vpack.c.b16 %v458, %v442
  %v507 = vpack.c.b16 %v459, %v443
  %v508 = vpack.c.b16 %v460, %v444
  %v509 = vpack.c.b16 %v461, %v445
  %v510 = vpack.c.b16 %v462, %v446
  %v511 = vpack.c.b16 %v463, %v447
  %v512 = vpack.c.b16 %v464, %v448
  %v513 = vpack.c.b16 %v465, %v449
  %v514 = vpack.c.b16 %v466, %v450
  %v515 = vpack.c.b16 %v467, %v451
  %v516 = vpack.c.b16 %v468, %v452
  %v517 = vpack.c.b16 %v469, %v453
  %v822 = vunpack.c.l.b16 %v63
  %v823 = vunpack.c.l.b16 %v64
  %v824 = vunpack.c.l.b16 %v65
  %v825 = vunpack.c.l.b16 %v66
  %v826 = vunpack.c.l.b16 %v67
  %v827 = vunpack.c.l.b16 %v68
  %v828 = vunpack.c.l.b16 %v69
  %v829 = vunpack.c.l.b16 %v70
  %v830 = vunpack.c.l.b16 %v71
  %v831 = vunpack.c.l.b16 %v72
  %v832 = vunpack.c.l.b16 %v73
  %v833 = vunpack.c.l.b16 %v74
  %v834 = vunpack.c.l.b16 %v75
  %v835 = vunpack.c.l.b16 %v76
  %v836 = vunpack.c.l.b16 %v77
  %v837 = vunpack.c.l.b16 %v78
  %v838 = vunpack.c.l.b16 %v79
  %v839 = vunpack.c.l.b16 %v80
  %v840 = vunpack.c.l.b16 %v81
  %v841 = vunpack.c.l.b16 %v82
  %v842 = vunpack.c.l.b16 %v83
  %v843 = vunpack.c.l.b16 %v84
  %v844 = vunpack.c.l.b16 %v85
  %v845 = vunpack.c.l.b16 %v86
  %v846 = vunpack.c.l.b16 %v87
  %v847 = vunpack.c.l.b16 %v88
  %v848 = vunpack.c.l.b16 %v89
  %v849 = vunpack.c.l.b16 %v90
  %v850 = vunpack.c.l.b16 %v91
  %v851 = vunpack.c.l.b16 %v92
  %v852 = vunpack.c.l.b16 %v93
  %v853 = vunpack.c.l.b16 %v94
  %v854 = vunpack.c.l.b16 %v95
  %v855 = vunpack.c.l.b16 %v96
  %v856 = vunpack.c.l.b16 %v97
  %v857 = vunpack.c.l.b16 %v98
  %v858 = vunpack.c.l.b16 %v99
  %v859 = vunpack.c.l.b16 %v100
  %v860 = vunpack.c.l.b16 %v101
  %v861 = vunpack.c.l.b16 %v102
  %v862 = vunpack.c.l.b16 %v103
  %v863 = vunpack.c.l.b16 %v104
  %v864 = vunpack.c.l.b16 %v105
  %v865 = vunpack.c.l.b16 %v106
  %v866 = vunpack.c.l.b16 %v107
  %v867 = vunpack.c.l.b16 %v108
  %v868 = vunpack.c.l.b16 %v109
  %v869 = vunpack.c.l.b16 %v110
  %v870 = vunpack.c.l.b16 %v111
  %v871 = vunpack.c.l.b16 %v112
  %v872 = vunpack.c.l.b16 %v113
  %v873 = vunpack.c.l.b16 %v114
  %v874 = vunpack.c.l.b16 %v115
  %v875 = vunpack.c.l.b16 %v116
  %v876 = vunpack.c.l.b16 %v117
  %v877 = vunpack.c.l.b16 %v118
  %v878 = vunpack.c.l.b16 %v119
  %v879 = vunpack.c.l.b16 %v120
  %v880 = vunpack.c.l.b16 %v121
  %v881 = vunpack.c.l.b16 %v122
  %v882 = vunpack.c.l.b16 %v123
  %v883 = vunpack.c.l.b16 %v124
  %v884 = vunpack.c.l.b16 %v125
  %v885 = vunpack.c.l.b16 %v126
  %v886 = vunpack.c.l.b16 %v127
  %v887 = vunpack.c.l.b16 %v128
  %v888 = vunpack.c.l.b16 %v129
  %v889 = vunpack.c.l.b16 %v130
  %v890 = vunpack.c.l.b16 %v131
  %v891 = vunpack.c.l.b16 %v132
  %v892 = vunpack.c.l.b16 %v133
  %v893 = vunpack.c.l.b16 %v134
  %v894 = vunpack.c.l.b16 %v135
  %v895 = vunpack.c.l.b16 %v136
  %v896 = vunpack.c.l.b16 %v137
  %v897 = vunpack.c.l.b16 %v138
  %v898 = vunpack.c.l.b16 %v139
  %v899 = vunpack.c.l.b16 %v140
  %v900 = vunpack.c.l.b16 %v141
  %v901 = vunpack.c.l.b16 %v142
  %v902 = vunpack.c.l.b16 %v143
  %v903 = vunpack.c.l.b16 %v144
  %v904 = vunpack.c.l.b16 %v145
  %v905 = vunpack.c.l.b16 %v146
  %v906 = vunpack.c.l.b16 %v147
  %v907 = vunpack.c.l.b16 %v148
  %v908 = vunpack.c.l.b16 %v149
  %v909 = vunpack.c.l.b16 %v150
  %v910 = vunpack.c.l.b16 %v151
  %v911 = vunpack.c.l.b16 %v152
  %v912 = vunpack.c.l.b16 %v153
  %v913 = vunpack.c.l.b16 %v154
  %v914 = vunpack.c.l.b16 %v155
  %v915 = vunpack.c.l.b16 %v156
  %v916 = vunpack.c.l.b16 %v157
  %v917 = vunpack.c.l.b16 %v158
  %v918 = vunpack.c.l.b16 %v159
  %v919 = vunpack.c.l.b16 %v160
  %v920 = vunpack.c.l.b16 %v161
  %v921 = vunpack.c.l.b16 %v162
  %v922 = vunpack.c.l.b16 %v163
  %v923 = vunpack.c.l.b16 %v164
  %v924 = vunpack.c.l.b16 %v165
  %v925 = vunpack.c.l.b16 %v166
  %v926 = vunpack.c.l.b16 %v167
  %v927 = vunpack.c.l.b16 %v168
  %v928 = vunpack.c.l.b16 %v169
  %v929 = vunpack.c.l.b16 %v170
  %v930 = vunpack.c.l.b16 %v171
  %v931 = vunpack.c.l.b16 %v172
  %v932 = vunpack.c.l.b16 %v173
  %v933 = vunpack.c.l.b16 %v174
  %v934 = vunpack.c.l.b16 %v175
  %v935 = vunpack.c.l.b16 %v176
  %v936 = vunpack.c.l.b16 %v177
  %v937 = vunpack.c.l.b16 %v178
  %v938 = vunpack.c.l.b16 %v179
  %v939 = vunpack.c.l.b16 %v180
  %v940 = vunpack.c.l.b16 %v181
  %v941 = vunpack.c.l.b16 %v182
  %v942 = vunpack.c.l.b16 %v183
  %v943 = vunpack.c.l.b16 %v184
  %v944 = vunpack.c.l.b16 %v185
  %v945 = vunpack.c.l.b16 %v186
  %v946 = vunpack.c.l.b16 %v187
  %v947 = vunpack.c.l.b16 %v188
  %v948 = vunpack.c.l.b16 %v189
  %v949 = vunpack.c.l.b16 %v190
  %v950 = vunpack.c.l.b16 %v191
  %v951 = vunpack.c.l.b16 %v192
  %v952 = vunpack.c.l.b16 %v193
  %v953 = vunpack.c.l.b16 %v194
  %v954 = vunpack.c.l.b16 %v195
  %v955 = vunpack.c.l.b16 %v196
  %v956 = vunpack.c.l.b16 %v197
  %v957 = vunpack.c.l.b16 %v198
  %v958 = vunpack.c.l.b16 %v199
  %v959 = vunpack.c.l.b16 %v200
  %v960 = vunpack.c.l.b16 %v201
  %v961 = vunpack.c.l.b16 %v202
  %v962 = vunpack.c.l.b16 %v203
  %v963 = vunpack.c.l.b16 %v204
  %v964 = vunpack.c.l.b16 %v205
  %v965 = vunpack.c.l.b16 %v206
  %v966 = vunpack.c.l.b16 %v207
  %v967 = vunpack.c.l.b16 %v208
  %v968 = vunpack.c.l.b16 %v209
  %v969 = vunpack.c.l.b16 %v210
  %v970 = vunpack.c.l.b16 %v211
  %v971 = vunpack.c.l.b16 %v212
  %v972 = vunpack.c.l.b16 %v213
  %v973 = vunpack.c.l.b16 %v214
  %v974 = vunpack.c.l.b16 %v215
  %v975 = vunpack.c.l.b16 %v216
  %v976 = vunpack.c.l.b16 %v217
  %v977 = vunpack.c.l.b16 %v218
  %v978 = vunpack.c.l.b16 %v219
  %v979 = vunpack.c.l.b16 %v220
  %v980 = vunpack.c.l.b16 %v221
  %v981 = vunpack.c.l.b16 %v222
  %v982 = vunpack.c.l.b16 %v223
  %v983 = vunpack.c.l.b16 %v224
  %v984 = vunpack.c.l.b16 %v225
  %v985 = vunpack.c.l.b16 %v226
  %v986 = vunpack.c.l.b16 %v227
  %v987 = vunpack.c.l.b16 %v228
  %v988 = vunpack.c.l.b16 %v229
  %v989 = vunpack.c.l.b16 %v230
  %v990 = vunpack.c.l.b16 %v231
  %v991 = vunpack.c.l.b16 %v232
  %v992 = vunpack.c.l.b16 %v233
  %v993 = vunpack.c.l.b16 %v234
  %v994 = vunpack.c.l.b16 %v235
  %v995 = vunpack.c.l.b16 %v236
  %v996 = vunpack.c.l.b16 %v237
  %v997 = vunpack.c.l.b16 %v238
  %v998 = vunpack.c.l.b16 %v239
  %v999 = vunpack.c.l.b16 %v240
  %v1000 = vunpack.c.l.b16 %v241
  %v1001 = vunpack.c.l.b16 %v242
  %v1002 = vunpack.c.l.b16 %v243
  %v1003 = vunpack.c.l.b16 %v244
  %v1004 = vunpack.c.l.b16 %v245
  %v1005 = vunpack.c.l.b16 %v246
  %v1006 = vunpack.c.l.b16 %v247
  %v1007 = vunpack.c.l.b16 %v248
  %v1008 = vunpack.c.l.b16 %v249
  %v1009 = vunpack.c.l.b16 %v250
  %v1010 = vunpack.c.l.b16 %v251
  %v1011 = vunpack.c.l.b16 %v252
  %v1012 = vunpack.c.l.b16 %v253
  %v1013 = vunpack.c.l.b16 %v254
  %v1014 = vunpack.c.l.b16 %v255
  %v1015 = vunpack.c.l.b16 %v256
  %v1016 = vunpack.c.l.b16 %v257
  %v1017 = vunpack.c.l.b16 %v258
  %v1018 = vunpack.c.l.b16 %v259
  %v1019 = vunpack.c.l.b16 %v260
  %v1020 = vunpack.c.l.b16 %v261
  %v1021 = vunpack.c.l.b16 %v262
  %v1022 = vunpack.c.l.b16 %v263
  %v1023 = vunpack.c.l.b16 %v264
  %v1024 = vunpack.c.l.b16 %v265
  %v1025 = vunpack.c.l.b16 %v266
  %v1026 = vunpack.c.l.b16 %v267
  %v1027 = vunpack.c.l.b16 %v268
  %v1028 = vunpack.c.l.b16 %v269
  %v1029 = vunpack.c.l.b16 %v270
  %v1030 = vunpack.c.l.b16 %v271
  %v1031 = vunpack.c.l.b16 %v272
  %v1032 = vunpack.c.l.b16 %v273
  %v1033 = vunpack.c.l.b16 %v274
  %v1034 = vunpack.c.l.b16 %v275
  %v1035 = vunpack.c.l.b16 %v276
  %v1036 = vunpack.c.l.b16 %v277
  %v1037 = vunpack.c.l.b16 %v278
  %v1038 = vunpack.c.l.b16 %v279
  %v1039 = vunpack.c.l.b16 %v280
  %v1040 = vunpack.c.l.b16 %v281
  %v1041 = vunpack.c.l.b16 %v282
  %v1042 = vunpack.c.l.b16 %v283
  %v1043 = vunpack.c.l.b16 %v284
  %v1044 = vunpack.c.l.b16 %v285
  %v1045 = vunpack.c.l.b16 %v286
  %v1046 = vunpack.c.l.b16 %v287
  %v1047 = vunpack.c.l.b16 %v288
  %v1048 = vunpack.c.l.b16 %v289
  %v1049 = vunpack.c.l.b16 %v290
  %v1050 = vunpack.c.l.b16 %v291
  %v1051 = vunpack.c.l.b16 %v292
  %v1052 = vunpack.c.l.b16 %v293
  %v1053 = vunpack.c.l.b16 %v294
  %v1054 = vunpack.c.l.b16 %v295
  %v1055 = vunpack.c.l.b16 %v296
  %v1056 = vunpack.c.l.b16 %v297
  %v1057 = vunpack.c.l.b16 %v298
  %v1058 = vunpack.c.l.b16 %v299
  %v1059 = vunpack.c.l.b16 %v300
  %v1060 = vunpack.c.l.b16 %v301
  %v1061 = vunpack.c.l.b16 %v302
  %v1062 = vunpack.c.l.b16 %v303
  %v1063 = vunpack.c.l.b16 %v304
  %v1064 = vunpack.c.l.b16 %v305
  %v1065 = vunpack.c.l.b16 %v306
  %v1066 = vunpack.c.l.b16 %v307
  %v1067 = vunpack.c.l.b16 %v308
  %v1068 = vunpack.c.l.b16 %v309
  %v1069 = vunpack.c.l.b16 %v310
  %v1070 = vunpack.c.l.b16 %v311
  %v1071 = vunpack.c.l.b16 %v312
  %v1072 = vunpack.c.l.b16 %v313
  %v1073 = vunpack.c.l.b16 %v314
  %v1074 = vunpack.c.l.b16 %v315
  %v1075 = vunpack.c.l.b16 %v316
  %v1076 = vunpack.c.l.b16 %v317
  %v1077 = vunpack.c.l.b16 %v318
  %v1078 = vpack.c.b16 %v823, %v822
  %v1079 = vpack.c.b16 %v825, %v824
  %v1080 = vpack.c.b16 %v827, %v826
  %v1081 = vpack.c.b16 %v829, %v828
  %v1082 = vpack.c.b16 %v831, %v830
  %v1083 = vpack.c.b16 %v833, %v832
  %v1084 = vpack.c.b16 %v835, %v834
  %v1085 = vpack.c.b16 %v837, %v836
  %v1086 = vpack.c.b16 %v839, %v838
  %v1087 = vpack.c.b16 %v841, %v840
  %v1088 = vpack.c.b16 %v843, %v842
  %v1089 = vpack.c.b16 %v845, %v844
  %v1090 = vpack.c.b16 %v847, %v846
  %v1091 = vpack.c.b16 %v849, %v848
  %v1092 = vpack.c.b16 %v851, %v850
  %v1093 = vpack.c.b16 %v853, %v852
  %v1094 = vpack.c.b16 %v855, %v854
  %v1095 = vpack.c.b16 %v857, %v856
  %v1096 = vpack.c.b16 %v859, %v858
  %v1097 = vpack.c.b16 %v861, %v860
  %v1098 = vpack.c.b16 %v863, %v862
  %v1099 = vpack.c.b16 %v865, %v864
  %v1100 = vpack.c.b16 %v867, %v866
  %v1101 = vpack.c.b16 %v869, %v868
  %v1102 = vpack.c.b16 %v871, %v870
  %v1103 = vpack.c.b16 %v873, %v872
  %v1104 = vpack.c.b16 %v875, %v874
  %v1105 = vpack.c.b16 %v877, %v876
  %v1106 = vpack.c.b16 %v879, %v878
  %v1107 = vpack.c.b16 %v881, %v880
  %v1108 = vpack.c.b16 %v883, %v882
  %v1109 = vpack.c.b16 %v885, %v884
  %v1110 = vpack.c.b16 %v887, %v886
  %v1111 = vpack.c.b16 %v889, %v888
  %v1112 = vpack.c.b16 %v891, %v890
  %v1113 = vpack.c.b16 %v893, %v892
  %v1114 = vpack.c.b16 %v895, %v894
  %v1115 = vpack.c.b16 %v897, %v896
  %v1116 = vpack.c.b16 %v899, %v898
  %v1117 = vpack.c.b16 %v901, %v900
  %v1118 = vpack.c.b16 %v903, %v902
  %v1119 = vpack.c.b16 %v905, %v904
  %v1120 = vpack.c.b16 %v907, %v906
  %v1121 = vpack.c.b16 %v909, %v908
  %v1122 = vpack.c.b16 %v911, %v910
  %v1123 = vpack.c.b16 %v913, %v912
  %v1124 = vpack.c.b16 %v915, %v914
  %v1125 = vpack.c.b16 %v917, %v916
  %v1126 = vpack.c.b16 %v919, %v918
  %v1127 = vpack.c.b16 %v921, %v920
  %v1128 = vpack.c.b16 %v923, %v922
  %v1129 = vpack.c.b16 %v925, %v924
  %v1130 = vpack.c.b16 %v927, %v926
  %v1131 = vpack.c.b16 %v929, %v928
  %v1132 = vpack.c.b16 %v931, %v930
  %v1133 = vpack.c.b16 %v933, %v932
  %v1134 = vpack.c.b16 %v935, %v934
  %v1135 = vpack.c.b16 %v937, %v936
  %v1136 = vpack.c.b16 %v939, %v938
  %v1137 = vpack.c.b16 %v941, %v940
  %v1138 = vpack.c.b16 %v943, %v942
  %v1139 = vpack.c.b16 %v945, %v944
  %v1140 = vpack.c.b16 %v947, %v946
  %v1141 = vpack.c.b16 %v949, %v948
  %v1142 = vpack.c.b16 %v951, %v950
  %v1143 = vpack.c.b16 %v953, %v952
  %v1144 = vpack.c.b16 %v955, %v954
  %v1145 = vpack.c.b16 %v957, %v956
  %v1146 = vpack.c.b16 %v959, %v958
  %v1147 = vpack.c.b16 %v961, %v960
  %v1148 = vpack.c.b16 %v963, %v962
  %v1149 = vpack.c.b16 %v965, %v964
  %v1150 = vpack.c.b16 %v967, %v966
  %v1151 = vpack.c.b16 %v969, %v968
  %v1152 = vpack.c.b16 %v971, %v970
  %v1153 = vpack.c.b16 %v973, %v972
  %v1154 = vpack.c.b16 %v975, %v974
  %v1155 = vpack.c.b16 %v977, %v976
  %v1156 = vpack.c.b16 %v979, %v978
  %v1157 = vpack.c.b16 %v981, %v980
  %v1158 = vpack.c.b16 %v983, %v982
  %v1159 = vpack.c.b16 %v985, %v984
  %v1160 = vpack.c.b16 %v987, %v986
  %v1161 = vpack.c.b16 %v989, %v988
  %v1162 = vpack.c.b16 %v991, %v990
  %v1163 = vpack.c.b16 %v993, %v992
  %v1164 = vpack.c.b16 %v995, %v994
  %v1165 = vpack.c.b16 %v997, %v996
  %v1166 = vpack.c.b16 %v999, %v998
  %v1167 = vpack.c.b16 %v1001, %v1000
  %v1168 = vpack.c.b16 %v1003, %v1002
  %v1169 = vpack.c.b16 %v1005, %v1004
  %v1170 = vpack.c.b16 %v1007, %v1006
  %v1171 = vpack.c.b16 %v1009, %v1008
  %v1172 = vpack.c.b16 %v1011, %v1010
  %v1173 = vpack.c.b16 %v1013, %v1012
  %v1174 = vpack.c.b16 %v1015, %v1014
  %v1175 = vpack.c.b16 %v1017, %v1016
  %v1176 = vpack.c.b16 %v1019, %v1018
  %v1177 = vpack.c.b16 %v1021, %v1020
  %v1178 = vpack.c.b16 %v1023, %v1022
  %v1179 = vpack.c.b16 %v1025, %v1024
  %v1180 = vpack.c.b16 %v1027, %v1026
  %v1181 = vpack.c.b16 %v1029, %v1028
  %v1182 = vpack.c.b16 %v1031, %v1030
  %v1183 = vpack.c.b16 %v1033, %v1032
  %v1184 = vpack.c.b16 %v1035, %v1034
  %v1185 = vpack.c.b16 %v1037, %v1036
  %v1186 = vpack.c.b16 %v1039, %v1038
  %v1187 = vpack.c.b16 %v1041, %v1040
  %v1188 = vpack.c.b16 %v1043, %v1042
  %v1189 = vpack.c.b16 %v1045, %v1044
  %v1190 = vpack.c.b16 %v1047, %v1046
  %v1191 = vpack.c.b16 %v1049, %v1048
  %v1192 = vpack.c.b16 %v1051, %v1050
  %v1193 = vpack.c.b16 %v1053, %v1052
  %v1194 = vpack.c.b16 %v1055, %v1054
  %v1195 = vpack.c.b16 %v1057, %v1056
  %v1196 = vpack.c.b16 %v1059, %v1058
  %v1197 = vpack.c.b16 %v1061, %v1060
  %v1198 = vpack.c.b16 %v1063, %v1062
  %v1199 = vpack.c.b16 %v1065, %v1064
  %v1200 = vpack.c.b16 %v1067, %v1066
  %v1201 = vpack.c.b16 %v1069, %v1068
  %v1202 = vpack.c.b16 %v1071, %v1070
  %v1203 = vpack.c.b16 %v1073, %v1072
  %v1204 = vpack.c.b16 %v1075, %v1074
  %v1205 = vpack.c.b16 %v1077, %v1076
  %1334 = vmatprep.subr.bf16.mxu0 0
  %1335 = vmatpush1.bf16.msra.mxu0 %v1085
  %1336 = vmatprep.subr.bf16.mxu0 0
  %1337 = vmatpush1.bf16.msra.mxu0 %v1084
  %1338 = vmatprep.subr.bf16.mxu0 0
  %1339 = vmatpush1.bf16.msra.mxu0 %v1083
  %1340 = vmatprep.subr.bf16.mxu0 0
  %1341 = vmatpush1.bf16.msra.mxu0 %v1082
  %1342 = vmatprep.subr.bf16.mxu0 0
  %1343 = vmatpush1.bf16.msra.mxu0 %v1081
  %1344 = vmatprep.subr.bf16.mxu0 0
  %1345 = vmatpush1.bf16.msra.mxu0 %v1080
  %1346 = vmatprep.subr.bf16.mxu0 0
  %1347 = vmatpush1.bf16.msra.mxu0 %v1079
  %1348 = vmatprep.subr.bf16.mxu0 0
  %1349 = vmatpush1.bf16.msra.mxu0 %v1078
  %1350 = vmatprep.subr.bf16.mxu0 0
  %1351 = vmatpush2.bf16.msra.mxu0 %v1093
  %1352 = vmatprep.subr.bf16.mxu0 0
  %1353 = vmatpush2.bf16.msra.mxu0 %v1092
  %1354 = vmatprep.subr.bf16.mxu0 0
  %1355 = vmatpush2.bf16.msra.mxu0 %v1091
  %1356 = vmatprep.subr.bf16.mxu0 0
  %1357 = vmatpush2.bf16.msra.mxu0 %v1090
  %1358 = vmatprep.subr.bf16.mxu0 0
  %1359 = vmatpush2.bf16.msra.mxu0 %v1089
  %1360 = vmatprep.subr.bf16.mxu0 0
  %1361 = vmatpush2.bf16.msra.mxu0 %v1088
  %1362 = vmatprep.subr.bf16.mxu0 0
  %1363 = vmatpush2.bf16.msra.mxu0 %v1087
  %1364 = vmatprep.subr.bf16.mxu0 0
  %1365 = vmatpush2.bf16.msra.mxu0 %v1086
  %1366 = vmatprep.mubr.bf16.mxu0 %v471
  %1367 = vmatmul.mubr.bf16.gmra.mxu0 %v470
  %v1368 = vpop.f32.mrf.mxu0
  %v1369 = vadd.f32 %v324, %v1368
  %v1370 = vpop.f32.mrf.mxu0
  %v1371 = vpop.f32.mrf.mxu0
  %v1372 = vadd.f32 %v324, %v1371
  %v1373 = vpop.f32.mrf.mxu0
  %1374 = vmatprep.mubr.bf16.mxu0 %v487
  %1375 = vmatmul.mubr.bf16.gmra.mxu0 %v486
  %v1376 = vpop.f32.mrf.mxu0
  %v1377 = vadd.f32 %v324, %v1376
  %v1378 = vpop.f32.mrf.mxu0
  %v1379 = vpop.f32.mrf.mxu0
  %v1380 = vadd.f32 %v324, %v1379
  %v1381 = vpop.f32.mrf.mxu0
  %1382 = vmatprep.mubr.bf16.mxu0 %v503
  %1383 = vmatmul.mubr.bf16.gmra.mxu0 %v502
  %v1384 = vpop.f32.mrf.mxu0
  %v1385 = vadd.f32 %v324, %v1384
  %v1386 = vpop.f32.mrf.mxu0
  %v1387 = vpop.f32.mrf.mxu0
  %v1388 = vadd.f32 %v324, %v1387
  %v1389 = vpop.f32.mrf.mxu0
  %1390 = vdwg.mxu0
  %1391 = vmatprep.subr.bf16.mxu0 0
  %1392 = vmatpush1.bf16.msra.mxu0 %v1101
  %1393 = vmatprep.subr.bf16.mxu0 0
  %1394 = vmatpush1.bf16.msra.mxu0 %v1100
  %1395 = vmatprep.subr.bf16.mxu0 0
  %1396 = vmatpush1.bf16.msra.mxu0 %v1099
  %1397 = vmatprep.subr.bf16.mxu0 0
  %1398 = vmatpush1.bf16.msra.mxu0 %v1098
  %1399 = vmatprep.subr.bf16.mxu0 0
  %1400 = vmatpush1.bf16.msra.mxu0 %v1097
  %1401 = vmatprep.subr.bf16.mxu0 0
  %1402 = vmatpush1.bf16.msra.mxu0 %v1096
  %1403 = vmatprep.subr.bf16.mxu0 0
  %1404 = vmatpush1.bf16.msra.mxu0 %v1095
  %1405 = vmatprep.subr.bf16.mxu0 0
  %1406 = vmatpush1.bf16.msra.mxu0 %v1094
  %1407 = vmatprep.subr.bf16.mxu0 0
  %1408 = vmatpush2.bf16.msra.mxu0 %v1109
  %1409 = vmatprep.subr.bf16.mxu0 0
  %1410 = vmatpush2.bf16.msra.mxu0 %v1108
  %1411 = vmatprep.subr.bf16.mxu0 0
  %1412 = vmatpush2.bf16.msra.mxu0 %v1107
  %1413 = vmatprep.subr.bf16.mxu0 0
  %1414 = vmatpush2.bf16.msra.mxu0 %v1106
  %1415 = vmatprep.subr.bf16.mxu0 0
  %1416 = vmatpush2.bf16.msra.mxu0 %v1105
  %1417 = vmatprep.subr.bf16.mxu0 0
  %1418 = vmatpush2.bf16.msra.mxu0 %v1104
  %1419 = vmatprep.subr.bf16.mxu0 0
  %1420 = vmatpush2.bf16.msra.mxu0 %v1103
  %1421 = vmatprep.subr.bf16.mxu0 0
  %1422 = vmatpush2.bf16.msra.mxu0 %v1102
  %1423 = vmatprep.mubr.bf16.mxu0 %v473
  %1424 = vmatmul.mubr.bf16.gmra.mxu0 %v472
  %v1425 = vpop.f32.mrf.mxu0
  %v1426 = vadd.f32 %v1369, %v1425
  %v1427 = vpop.f32.mrf.mxu0
  %v1428 = vpop.f32.mrf.mxu0
  %v1429 = vadd.f32 %v1372, %v1428
  %v1430 = vpop.f32.mrf.mxu0
  %1431 = vmatprep.mubr.bf16.mxu0 %v489
  %1432 = vmatmul.mubr.bf16.gmra.mxu0 %v488
  %v1433 = vpop.f32.mrf.mxu0
  %v1434 = vadd.f32 %v1377, %v1433
  %v1435 = vpop.f32.mrf.mxu0
  %v1436 = vpop.f32.mrf.mxu0
  %v1437 = vadd.f32 %v1380, %v1436
  %v1438 = vpop.f32.mrf.mxu0
  %1439 = vmatprep.mubr.bf16.mxu0 %v505
  %1440 = vmatmul.mubr.bf16.gmra.mxu0 %v504
  %v1441 = vpop.f32.mrf.mxu0
  %v1442 = vadd.f32 %v1385, %v1441
  %v1443 = vpop.f32.mrf.mxu0
  %v1444 = vpop.f32.mrf.mxu0
  %v1445 = vadd.f32 %v1388, %v1444
  %v1446 = vpop.f32.mrf.mxu0
  %1447 = vdwg.mxu0
  %1448 = vmatprep.subr.bf16.mxu0 0
  %1449 = vmatpush1.bf16.msra.mxu0 %v1117
  %1450 = vmatprep.subr.bf16.mxu0 0
  %1451 = vmatpush1.bf16.msra.mxu0 %v1116
  %1452 = vmatprep.subr.bf16.mxu0 0
  %1453 = vmatpush1.bf16.msra.mxu0 %v1115
  %1454 = vmatprep.subr.bf16.mxu0 0
  %1455 = vmatpush1.bf16.msra.mxu0 %v1114
  %1456 = vmatprep.subr.bf16.mxu0 0
  %1457 = vmatpush1.bf16.msra.mxu0 %v1113
  %1458 = vmatprep.subr.bf16.mxu0 0
  %1459 = vmatpush1.bf16.msra.mxu0 %v1112
  %1460 = vmatprep.subr.bf16.mxu0 0
  %1461 = vmatpush1.bf16.msra.mxu0 %v1111
  %1462 = vmatprep.subr.bf16.mxu0 0
  %1463 = vmatpush1.bf16.msra.mxu0 %v1110
  %1464 = vmatprep.subr.bf16.mxu0 0
  %1465 = vmatpush2.bf16.msra.mxu0 %v1125
  %1466 = vmatprep.subr.bf16.mxu0 0
  %1467 = vmatpush2.bf16.msra.mxu0 %v1124
  %1468 = vmatprep.subr.bf16.mxu0 0
  %1469 = vmatpush2.bf16.msra.mxu0 %v1123
  %1470 = vmatprep.subr.bf16.mxu0 0
  %1471 = vmatpush2.bf16.msra.mxu0 %v1122
  %1472 = vmatprep.subr.bf16.mxu0 0
  %1473 = vmatpush2.bf16.msra.mxu0 %v1121
  %1474 = vmatprep.subr.bf16.mxu0 0
  %1475 = vmatpush2.bf16.msra.mxu0 %v1120
  %1476 = vmatprep.subr.bf16.mxu0 0
  %1477 = vmatpush2.bf16.msra.mxu0 %v1119
  %1478 = vmatprep.subr.bf16.mxu0 0
  %1479 = vmatpush2.bf16.msra.mxu0 %v1118
  %1480 = vmatprep.mubr.bf16.mxu0 %v475
  %1481 = vmatmul.mubr.bf16.gmra.mxu0 %v474
  %v1482 = vpop.f32.mrf.mxu0
  %v1483 = vadd.f32 %v1426, %v1482
  %v1484 = vpop.f32.mrf.mxu0
  %v1485 = vpop.f32.mrf.mxu0
  %v1486 = vadd.f32 %v1429, %v1485
  %v1487 = vpop.f32.mrf.mxu0
  %1488 = vmatprep.mubr.bf16.mxu0 %v491
  %1489 = vmatmul.mubr.bf16.gmra.mxu0 %v490
  %v1490 = vpop.f32.mrf.mxu0
  %v1491 = vadd.f32 %v1434, %v1490
  %v1492 = vpop.f32.mrf.mxu0
  %v1493 = vpop.f32.mrf.mxu0
  %v1494 = vadd.f32 %v1437, %v1493
  %v1495 = vpop.f32.mrf.mxu0
  %1496 = vmatprep.mubr.bf16.mxu0 %v507
  %1497 = vmatmul.mubr.bf16.gmra.mxu0 %v506
  %v1498 = vpop.f32.mrf.mxu0
  %v1499 = vadd.f32 %v1442, %v1498
  %v1500 = vpop.f32.mrf.mxu0
  %v1501 = vpop.f32.mrf.mxu0
  %v1502 = vadd.f32 %v1445, %v1501
  %v1503 = vpop.f32.mrf.mxu0
  %1504 = vdwg.mxu0
  %1505 = vmatprep.subr.bf16.mxu0 0
  %1506 = vmatpush1.bf16.msra.mxu0 %v1133
  %1507 = vmatprep.subr.bf16.mxu0 0
  %1508 = vmatpush1.bf16.msra.mxu0 %v1132
  %1509 = vmatprep.subr.bf16.mxu0 0
  %1510 = vmatpush1.bf16.msra.mxu0 %v1131
  %1511 = vmatprep.subr.bf16.mxu0 0
  %1512 = vmatpush1.bf16.msra.mxu0 %v1130
  %1513 = vmatprep.subr.bf16.mxu0 0
  %1514 = vmatpush1.bf16.msra.mxu0 %v1129
  %1515 = vmatprep.subr.bf16.mxu0 0
  %1516 = vmatpush1.bf16.msra.mxu0 %v1128
  %1517 = vmatprep.subr.bf16.mxu0 0
  %1518 = vmatpush1.bf16.msra.mxu0 %v1127
  %1519 = vmatprep.subr.bf16.mxu0 0
  %1520 = vmatpush1.bf16.msra.mxu0 %v1126
  %1521 = vmatprep.subr.bf16.mxu0 0
  %1522 = vmatpush2.bf16.msra.mxu0 %v1141
  %1523 = vmatprep.subr.bf16.mxu0 0
  %1524 = vmatpush2.bf16.msra.mxu0 %v1140
  %1525 = vmatprep.subr.bf16.mxu0 0
  %1526 = vmatpush2.bf16.msra.mxu0 %v1139
  %1527 = vmatprep.subr.bf16.mxu0 0
  %1528 = vmatpush2.bf16.msra.mxu0 %v1138
  %1529 = vmatprep.subr.bf16.mxu0 0
  %1530 = vmatpush2.bf16.msra.mxu0 %v1137
  %1531 = vmatprep.subr.bf16.mxu0 0
  %1532 = vmatpush2.bf16.msra.mxu0 %v1136
  %1533 = vmatprep.subr.bf16.mxu0 0
  %1534 = vmatpush2.bf16.msra.mxu0 %v1135
  %1535 = vmatprep.subr.bf16.mxu0 0
  %1536 = vmatpush2.bf16.msra.mxu0 %v1134
  %1537 = vmatprep.mubr.bf16.mxu0 %v477
  %1538 = vmatmul.mubr.bf16.gmra.mxu0 %v476
  %v1539 = vpop.f32.mrf.mxu0
  %v1540 = vadd.f32 %v1483, %v1539
  %v1541 = vpop.f32.mrf.mxu0
  %v1542 = vpop.f32.mrf.mxu0
  %v1543 = vadd.f32 %v1486, %v1542
  %v1544 = vpop.f32.mrf.mxu0
  %1545 = vmatprep.mubr.bf16.mxu0 %v493
  %1546 = vmatmul.mubr.bf16.gmra.mxu0 %v492
  %v1547 = vpop.f32.mrf.mxu0
  %v1548 = vadd.f32 %v1491, %v1547
  %v1549 = vpop.f32.mrf.mxu0
  %v1550 = vpop.f32.mrf.mxu0
  %v1551 = vadd.f32 %v1494, %v1550
  %v1552 = vpop.f32.mrf.mxu0
  %1553 = vmatprep.mubr.bf16.mxu0 %v509
  %1554 = vmatmul.mubr.bf16.gmra.mxu0 %v508
  %v1555 = vpop.f32.mrf.mxu0
  %v1556 = vadd.f32 %v1499, %v1555
  %v1557 = vpop.f32.mrf.mxu0
  %v1558 = vpop.f32.mrf.mxu0
  %v1559 = vadd.f32 %v1502, %v1558
  %v1560 = vpop.f32.mrf.mxu0
  %1561 = vdwg.mxu0
  %1562 = vmatprep.subr.bf16.mxu0 0
  %1563 = vmatpush1.bf16.msra.mxu0 %v1149
  %1564 = vmatprep.subr.bf16.mxu0 0
  %1565 = vmatpush1.bf16.msra.mxu0 %v1148
  %1566 = vmatprep.subr.bf16.mxu0 0
  %1567 = vmatpush1.bf16.msra.mxu0 %v1147
  %1568 = vmatprep.subr.bf16.mxu0 0
  %1569 = vmatpush1.bf16.msra.mxu0 %v1146
  %1570 = vmatprep.subr.bf16.mxu0 0
  %1571 = vmatpush1.bf16.msra.mxu0 %v1145
  %1572 = vmatprep.subr.bf16.mxu0 0
  %1573 = vmatpush1.bf16.msra.mxu0 %v1144
  %1574 = vmatprep.subr.bf16.mxu0 0
  %1575 = vmatpush1.bf16.msra.mxu0 %v1143
  %1576 = vmatprep.subr.bf16.mxu0 0
  %1577 = vmatpush1.bf16.msra.mxu0 %v1142
  %1578 = vmatprep.subr.bf16.mxu0 0
  %1579 = vmatpush2.bf16.msra.mxu0 %v1157
  %1580 = vmatprep.subr.bf16.mxu0 0
  %1581 = vmatpush2.bf16.msra.mxu0 %v1156
  %1582 = vmatprep.subr.bf16.mxu0 0
  %1583 = vmatpush2.bf16.msra.mxu0 %v1155
  %1584 = vmatprep.subr.bf16.mxu0 0
  %1585 = vmatpush2.bf16.msra.mxu0 %v1154
  %1586 = vmatprep.subr.bf16.mxu0 0
  %1587 = vmatpush2.bf16.msra.mxu0 %v1153
  %1588 = vmatprep.subr.bf16.mxu0 0
  %1589 = vmatpush2.bf16.msra.mxu0 %v1152
  %1590 = vmatprep.subr.bf16.mxu0 0
  %1591 = vmatpush2.bf16.msra.mxu0 %v1151
  %1592 = vmatprep.subr.bf16.mxu0 0
  %1593 = vmatpush2.bf16.msra.mxu0 %v1150
  %1594 = vmatprep.mubr.bf16.mxu0 %v479
  %1595 = vmatmul.mubr.bf16.gmra.mxu0 %v478
  %v1596 = vpop.f32.mrf.mxu0
  %v1597 = vadd.f32 %v1540, %v1596
  %v1598 = vpop.f32.mrf.mxu0
  %v1599 = vpop.f32.mrf.mxu0
  %v1600 = vadd.f32 %v1543, %v1599
  %v1601 = vpop.f32.mrf.mxu0
  %1602 = vmatprep.mubr.bf16.mxu0 %v495
  %1603 = vmatmul.mubr.bf16.gmra.mxu0 %v494
  %v1604 = vpop.f32.mrf.mxu0
  %v1605 = vadd.f32 %v1548, %v1604
  %v1606 = vpop.f32.mrf.mxu0
  %v1607 = vpop.f32.mrf.mxu0
  %v1608 = vadd.f32 %v1551, %v1607
  %v1609 = vpop.f32.mrf.mxu0
  %1610 = vmatprep.mubr.bf16.mxu0 %v511
  %1611 = vmatmul.mubr.bf16.gmra.mxu0 %v510
  %v1612 = vpop.f32.mrf.mxu0
  %v1613 = vadd.f32 %v1556, %v1612
  %v1614 = vpop.f32.mrf.mxu0
  %v1615 = vpop.f32.mrf.mxu0
  %v1616 = vadd.f32 %v1559, %v1615
  %v1617 = vpop.f32.mrf.mxu0
  %1618 = vdwg.mxu0
  %1619 = vmatprep.subr.bf16.mxu0 0
  %1620 = vmatpush1.bf16.msra.mxu0 %v1165
  %1621 = vmatprep.subr.bf16.mxu0 0
  %1622 = vmatpush1.bf16.msra.mxu0 %v1164
  %1623 = vmatprep.subr.bf16.mxu0 0
  %1624 = vmatpush1.bf16.msra.mxu0 %v1163
  %1625 = vmatprep.subr.bf16.mxu0 0
  %1626 = vmatpush1.bf16.msra.mxu0 %v1162
  %1627 = vmatprep.subr.bf16.mxu0 0
  %1628 = vmatpush1.bf16.msra.mxu0 %v1161
  %1629 = vmatprep.subr.bf16.mxu0 0
  %1630 = vmatpush1.bf16.msra.mxu0 %v1160
  %1631 = vmatprep.subr.bf16.mxu0 0
  %1632 = vmatpush1.bf16.msra.mxu0 %v1159
  %1633 = vmatprep.subr.bf16.mxu0 0
  %1634 = vmatpush1.bf16.msra.mxu0 %v1158
  %1635 = vmatprep.subr.bf16.mxu0 0
  %1636 = vmatpush2.bf16.msra.mxu0 %v1173
  %1637 = vmatprep.subr.bf16.mxu0 0
  %1638 = vmatpush2.bf16.msra.mxu0 %v1172
  %1639 = vmatprep.subr.bf16.mxu0 0
  %1640 = vmatpush2.bf16.msra.mxu0 %v1171
  %1641 = vmatprep.subr.bf16.mxu0 0
  %1642 = vmatpush2.bf16.msra.mxu0 %v1170
  %1643 = vmatprep.subr.bf16.mxu0 0
  %1644 = vmatpush2.bf16.msra.mxu0 %v1169
  %1645 = vmatprep.subr.bf16.mxu0 0
  %1646 = vmatpush2.bf16.msra.mxu0 %v1168
  %1647 = vmatprep.subr.bf16.mxu0 0
  %1648 = vmatpush2.bf16.msra.mxu0 %v1167
  %1649 = vmatprep.subr.bf16.mxu0 0
  %1650 = vmatpush2.bf16.msra.mxu0 %v1166
  %1651 = vmatprep.mubr.bf16.mxu0 %v481
  %1652 = vmatmul.mubr.bf16.gmra.mxu0 %v480
  %v1653 = vpop.f32.mrf.mxu0
  %v1654 = vadd.f32 %v1597, %v1653
  %v1655 = vpop.f32.mrf.mxu0
  %v1656 = vpop.f32.mrf.mxu0
  %v1657 = vadd.f32 %v1600, %v1656
  %v1658 = vpop.f32.mrf.mxu0
  %1659 = vmatprep.mubr.bf16.mxu0 %v497
  %1660 = vmatmul.mubr.bf16.gmra.mxu0 %v496
  %v1661 = vpop.f32.mrf.mxu0
  %v1662 = vadd.f32 %v1605, %v1661
  %v1663 = vpop.f32.mrf.mxu0
  %v1664 = vpop.f32.mrf.mxu0
  %v1665 = vadd.f32 %v1608, %v1664
  %v1666 = vpop.f32.mrf.mxu0
  %1667 = vmatprep.mubr.bf16.mxu0 %v513
  %1668 = vmatmul.mubr.bf16.gmra.mxu0 %v512
  %v1669 = vpop.f32.mrf.mxu0
  %v1670 = vadd.f32 %v1613, %v1669
  %v1671 = vpop.f32.mrf.mxu0
  %v1672 = vpop.f32.mrf.mxu0
  %v1673 = vadd.f32 %v1616, %v1672
  %v1674 = vpop.f32.mrf.mxu0
  %1675 = vdwg.mxu0
  %1676 = vmatprep.subr.bf16.mxu0 0
  %1677 = vmatpush1.bf16.msra.mxu0 %v1181
  %1678 = vmatprep.subr.bf16.mxu0 0
  %1679 = vmatpush1.bf16.msra.mxu0 %v1180
  %1680 = vmatprep.subr.bf16.mxu0 0
  %1681 = vmatpush1.bf16.msra.mxu0 %v1179
  %1682 = vmatprep.subr.bf16.mxu0 0
  %1683 = vmatpush1.bf16.msra.mxu0 %v1178
  %1684 = vmatprep.subr.bf16.mxu0 0
  %1685 = vmatpush1.bf16.msra.mxu0 %v1177
  %1686 = vmatprep.subr.bf16.mxu0 0
  %1687 = vmatpush1.bf16.msra.mxu0 %v1176
  %1688 = vmatprep.subr.bf16.mxu0 0
  %1689 = vmatpush1.bf16.msra.mxu0 %v1175
  %1690 = vmatprep.subr.bf16.mxu0 0
  %1691 = vmatpush1.bf16.msra.mxu0 %v1174
  %1692 = vmatprep.subr.bf16.mxu0 0
  %1693 = vmatpush2.bf16.msra.mxu0 %v1189
  %1694 = vmatprep.subr.bf16.mxu0 0
  %1695 = vmatpush2.bf16.msra.mxu0 %v1188
  %1696 = vmatprep.subr.bf16.mxu0 0
  %1697 = vmatpush2.bf16.msra.mxu0 %v1187
  %1698 = vmatprep.subr.bf16.mxu0 0
  %1699 = vmatpush2.bf16.msra.mxu0 %v1186
  %1700 = vmatprep.subr.bf16.mxu0 0
  %1701 = vmatpush2.bf16.msra.mxu0 %v1185
  %1702 = vmatprep.subr.bf16.mxu0 0
  %1703 = vmatpush2.bf16.msra.mxu0 %v1184
  %1704 = vmatprep.subr.bf16.mxu0 0
  %1705 = vmatpush2.bf16.msra.mxu0 %v1183
  %1706 = vmatprep.subr.bf16.mxu0 0
  %1707 = vmatpush2.bf16.msra.mxu0 %v1182
  %1708 = vmatprep.mubr.bf16.mxu0 %v483
  %1709 = vmatmul.mubr.bf16.gmra.mxu0 %v482
  %v1710 = vpop.f32.mrf.mxu0
  %v1711 = vadd.f32 %v1654, %v1710
  %v1712 = vpop.f32.mrf.mxu0
  %v1713 = vpop.f32.mrf.mxu0
  %v1714 = vadd.f32 %v1657, %v1713
  %v1715 = vpop.f32.mrf.mxu0
  %1716 = vmatprep.mubr.bf16.mxu0 %v499
  %1717 = vmatmul.mubr.bf16.gmra.mxu0 %v498
  %v1718 = vpop.f32.mrf.mxu0
  %v1719 = vadd.f32 %v1662, %v1718
  %v1720 = vpop.f32.mrf.mxu0
  %v1721 = vpop.f32.mrf.mxu0
  %v1722 = vadd.f32 %v1665, %v1721
  %v1723 = vpop.f32.mrf.mxu0
  %1724 = vmatprep.mubr.bf16.mxu0 %v515
  %1725 = vmatmul.mubr.bf16.gmra.mxu0 %v514
  %v1726 = vpop.f32.mrf.mxu0
  %v1727 = vadd.f32 %v1670, %v1726
  %v1728 = vpop.f32.mrf.mxu0
  %v1729 = vpop.f32.mrf.mxu0
  %v1730 = vadd.f32 %v1673, %v1729
  %v1731 = vpop.f32.mrf.mxu0
  %1732 = vdwg.mxu0
  %1733 = vmatprep.subr.bf16.mxu0 0
  %1734 = vmatpush1.bf16.msra.mxu0 %v1197
  %1735 = vmatprep.subr.bf16.mxu0 0
  %1736 = vmatpush1.bf16.msra.mxu0 %v1196
  %1737 = vmatprep.subr.bf16.mxu0 0
  %1738 = vmatpush1.bf16.msra.mxu0 %v1195
  %1739 = vmatprep.subr.bf16.mxu0 0
  %1740 = vmatpush1.bf16.msra.mxu0 %v1194
  %1741 = vmatprep.subr.bf16.mxu0 0
  %1742 = vmatpush1.bf16.msra.mxu0 %v1193
  %1743 = vmatprep.subr.bf16.mxu0 0
  %1744 = vmatpush1.bf16.msra.mxu0 %v1192
  %1745 = vmatprep.subr.bf16.mxu0 0
  %1746 = vmatpush1.bf16.msra.mxu0 %v1191
  %1747 = vmatprep.subr.bf16.mxu0 0
  %1748 = vmatpush1.bf16.msra.mxu0 %v1190
  %1749 = vmatprep.subr.bf16.mxu0 0
  %1750 = vmatpush2.bf16.msra.mxu0 %v1205
  %1751 = vmatprep.subr.bf16.mxu0 0
  %1752 = vmatpush2.bf16.msra.mxu0 %v1204
  %1753 = vmatprep.subr.bf16.mxu0 0
  %1754 = vmatpush2.bf16.msra.mxu0 %v1203
  %1755 = vmatprep.subr.bf16.mxu0 0
  %1756 = vmatpush2.bf16.msra.mxu0 %v1202
  %1757 = vmatprep.subr.bf16.mxu0 0
  %1758 = vmatpush2.bf16.msra.mxu0 %v1201
  %1759 = vmatprep.subr.bf16.mxu0 0
  %1760 = vmatpush2.bf16.msra.mxu0 %v1200
  %1761 = vmatprep.subr.bf16.mxu0 0
  %1762 = vmatpush2.bf16.msra.mxu0 %v1199
  %1763 = vmatprep.subr.bf16.mxu0 0
  %1764 = vmatpush2.bf16.msra.mxu0 %v1198
  %1765 = vmatprep.mubr.bf16.mxu0 %v485
  %1766 = vmatmul.mubr.bf16.gmra.mxu0 %v484
  %v1767 = vpop.f32.mrf.mxu0
  %v1768 = vadd.f32 %v1711, %v1767
  %v1769 = vpop.f32.mrf.mxu0
  %v1770 = vpop.f32.mrf.mxu0
  %v1771 = vadd.f32 %v1714, %v1770
  %v1772 = vpop.f32.mrf.mxu0
  %1773 = vmatprep.mubr.bf16.mxu0 %v501
  %1774 = vmatmul.mubr.bf16.gmra.mxu0 %v500
  %v1775 = vpop.f32.mrf.mxu0
  %v1776 = vadd.f32 %v1719, %v1775
  %v1777 = vpop.f32.mrf.mxu0
  %v1778 = vpop.f32.mrf.mxu0
  %v1779 = vadd.f32 %v1722, %v1778
  %v1780 = vpop.f32.mrf.mxu0
  %1781 = vmatprep.mubr.bf16.mxu0 %v517
  %1782 = vmatmul.mubr.bf16.gmra.mxu0 %v516
  %v1783 = vpop.f32.mrf.mxu0
  %v1784 = vadd.f32 %v1727, %v1783
  %v1785 = vpop.f32.mrf.mxu0
  %v1786 = vpop.f32.mrf.mxu0
  %v1787 = vadd.f32 %v1730, %v1786
  %v1788 = vpop.f32.mrf.mxu0
  %1789 = vdwg.mxu0
  %vm1790 = vcmp.ge.f32.partialorder %v1768, 0.0
  %vm1791 = vcmp.ge.f32.partialorder %v1771, 0.0
  %vm1792 = vcmp.ge.f32.partialorder %v1776, 0.0
  %vm1793 = vcmp.ge.f32.partialorder %v1779, 0.0
  %vm1794 = vcmp.ge.f32.partialorder %v1784, 0.0
  %vm1795 = vcmp.ge.f32.partialorder %v1787, 0.0
  %v1796 = vmul.f32 %v1768, 0.2
  %v1797 = vmul.f32 %v1771, 0.2
  %v1798 = vmul.f32 %v1776, 0.2
  %v1799 = vmul.f32 %v1779, 0.2
  %v1800 = vmul.f32 %v1784, 0.2
  %v1801 = vmul.f32 %v1787, 0.2
  %v1802 = vsel %vm1790, %v1768, %v1796
  %v1803 = vsel %vm1791, %v1771, %v1797
  %v1804 = vsel %vm1792, %v1776, %v1798
  %v1805 = vsel %vm1793, %v1779, %v1799
  %v1806 = vsel %vm1794, %v1784, %v1800
  %v1807 = vsel %vm1795, %v1787, %v1801
  %1808 = vst [vmem:[%s3] sm:$0xff] %v1802
  %1809 = vst [vmem:[%s3 + $0x8] sm:$0xff] %v1803
  %1810 = vst [vmem:[%s3 + $0x10] sm:$0xff] %v1804
  %1811 = vst [vmem:[%s3 + $0x18] sm:$0xff] %v1805
  %1812 = vst [vmem:[%s3 + $0x20] sm:$0xff] %v1806
  %1813 = vst [vmem:[%s3 + $0x28] sm:$0xff] %v1807
  // Predicated region
  $region14: #{jcu_discriminator_forward.8} parent=0 // pred_check
    _
  $region15: #{jcu_discriminator_forward.8} parent=0 // pred_check_branch
    %1815 = sbr.rel (0) target = $region17
  $region16: #{jcu_discriminator_forward.8} parent=0 // pred_region
    _
  $region17: #{jcu_discriminator_forward.8} parent=0 // pred_fallthru
    _
  // Predicated region
  $region18: #{jcu_discriminator_forward.8} parent=0 // pred_check
    _
  $region19: #{jcu_discriminator_forward.8} parent=0 // pred_check_branch
    %1817 = sbr.rel (0) target = $region21
  $region20: #{jcu_discriminator_forward.8} parent=0 // pred_region
    _
  $region21: #{jcu_discriminator_forward.8} parent=0 // pred_fallthru
    _

// kernel: jcu_discriminator_forward.9
$region0: #{jcu_discriminator_forward.9}
  #allocation0 [shape = 'u32[]', space=smem, size = 0x4, offset = 0x4, fixed_abs, tag = 'smem constant byte address 0x4 - core index']
  #allocation1 [shape = 'u32[144,128]{1,0:T(1,128)}', space=vmem, size = 0x12000, scoped, tag = 'internal scratch']
  %s0 = inlined_call_operand.vmem [shape: bf16[16,1920], index: 0, kind: input, shape index: {}]
  %s1 = inlined_call_operand.vmem [shape: bf16[1920,512], index: 1, kind: input, shape index: {}]
  %s2 = inlined_call_operand.vmem [shape: f32[1,512], index: 2, kind: input, shape index: {}]
  %s3 = inlined_call_operand.vmem [shape: f32[16,512], index: 3, kind: output, shape index: {}]
  %s4 = sld [smem:[#allocation0]]
  $region22: #{jcu_discriminator_forward.9} parent=0
    _
  %s6 = ssub.s32 1, %s4
  %s7 = scalar_select 0, %s6, %s4
  // Predicated region
  $region2: #{jcu_discriminator_forward.9} parent=0 // pred_check
    _
  $region3: #{jcu_discriminator_forward.9} parent=0 // pred_check_branch
    %9 = sbr.rel (0) target = $region5
  $region4: #{jcu_discriminator_forward.9} parent=0 // pred_region
    _
  $region5: #{jcu_discriminator_forward.9} parent=0 // pred_fallthru
    _
  // Predicated region
  $region6: #{jcu_discriminator_forward.9} parent=0 // pred_check
    _
  $region7: #{jcu_discriminator_forward.9} parent=0 // pred_check_branch
    %11 = sbr.rel (0) target = $region9
  $region8: #{jcu_discriminator_forward.9} parent=0 // pred_region
    _
  $region9: #{jcu_discriminator_forward.9} parent=0 // pred_fallthru
    _
  // Predicated region
  $region10: #{jcu_discriminator_forward.9} parent=0 // pred_check
    _
  $region11: #{jcu_discriminator_forward.9} parent=0 // pred_check_branch
    %13 = sbr.rel (0) target = $region13
  $region12: #{jcu_discriminator_forward.9} parent=0 // pred_region
    _
  $region13: #{jcu_discriminator_forward.9} parent=0 // pred_fallthru
    _
  %v15 = vld [vmem:[%s0] sm:$0xff]
  %v16 = vld [vmem:[%s0 + $0x8] sm:$0xff]
  %v17 = vld [vmem:[%s0 + $0x10] sm:$0xff]
  %v18 = vld [vmem:[%s0 + $0x18] sm:$0xff]
  %v19 = vld [vmem:[%s0 + $0x20] sm:$0xff]
  %v20 = vld [vmem:[%s0 + $0x28] sm:$0xff]
  %v21 = vld [vmem:[%s0 + $0x30] sm:$0xff]
  %v22 = vld [vmem:[%s0 + $0x38] sm:$0xf]
  %v23 = vld [vmem:[%s0 + $0x3c] sm:$0xff]
  %v24 = vld [vmem:[%s0 + $0x44] sm:$0xff]
  %v25 = vld [vmem:[%s0 + $0x4c] sm:$0xff]
  %v26 = vld [vmem:[%s0 + $0x54] sm:$0xff]
  %v27 = vld [vmem:[%s0 + $0x5c] sm:$0xff]
  %v28 = vld [vmem:[%s0 + $0x64] sm:$0xff]
  %v29 = vld [vmem:[%s0 + $0x6c] sm:$0xff]
  %v30 = vld [vmem:[%s0 + $0x74] sm:$0xf]
  %v31 = vld [vmem:[%s1] sm:$0xff]
  %v32 = vld [vmem:[%s1 + $0x8] sm:$0xff]
  %v33 = vld [vmem:[%s1 + $0x10] sm:$0xff]
  %v34 = vld [vmem:[%s1 + $0x18] sm:$0xff]
  %v35 = vld [vmem:[%s1 + $0x20] sm:$0xff]
  %v36 = vld [vmem:[%s1 + $0x28] sm:$0xff]
  %v37 = vld [vmem:[%s1 + $0x30] sm:$0xff]
  %v38 = vld [vmem:[%s1 + $0x38] sm:$0xff]
  %v39 = vld [vmem:[%s1 + $0x40] sm:$0xff]
  %v40 = vld [vmem:[%s1 + $0x48] sm:$0xff]
  %v41 = vld [vmem:[%s1 + $0x50] sm:$0xff]
  %v42 = vld [vmem:[%s1 + $0x58] sm:$0xff]
  %v43 = vld [vmem:[%s1 + $0x60] sm:$0xff]
  %v44 = vld [vmem:[%s1 + $0x68] sm:$0xff]
  %v45 = vld [vmem:[%s1 + $0x70] sm:$0xff]
  %v46 = vld [vmem:[%s1 + $0x78] sm:$0xff]
  %v47 = vld [vmem:[%s1 + $0x80] sm:$0xff]
  %v48 = vld [vmem:[%s1 + $0x88] sm:$0xff]
  %v49 = vld [vmem:[%s1 + $0x90] sm:$0xff]
  %v50 = vld [vmem:[%s1 + $0x98] sm:$0xff]
  %v51 = vld [vmem:[%s1 + $0xa0] sm:$0xff]
  %v52 = vld [vmem:[%s1 + $0xa8] sm:$0xff]
  %v53 = vld [vmem:[%s1 + $0xb0] sm:$0xff]
  %v54 = vld [vmem:[%s1 + $0xb8] sm:$0xff]
  %v55 = vld [vmem:[%s1 + $0xc0] sm:$0xff]
  %v56 = vld [vmem:[%s1 + $0xc8] sm:$0xff]
  %v57 = vld [vmem:[%s1 + $0xd0] sm:$0xff]
  %v58 = vld [vmem:[%s1 + $0xd8] sm:$0xff]
  %v59 = vld [vmem:[%s1 + $0xe0] sm:$0xff]
  %v60 = vld [vmem:[%s1 + $0xe8] sm:$0xff]
  %v61 = vld [vmem:[%s1 + $0xf0] sm:$0xff]
  %v62 = vld [vmem:[%s1 + $0xf8] sm:$0xff]
  %v63 = vld [vmem:[%s1 + $0x100] sm:$0xff]
  %v64 = vld [vmem:[%s1 + $0x108] sm:$0xff]
  %v65 = vld [vmem:[%s1 + $0x110] sm:$0xff]
  %v66 = vld [vmem:[%s1 + $0x118] sm:$0xff]
  %v67 = vld [vmem:[%s1 + $0x120] sm:$0xff]
  %v68 = vld [vmem:[%s1 + $0x128] sm:$0xff]
  %v69 = vld [vmem:[%s1 + $0x130] sm:$0xff]
  %v70 = vld [vmem:[%s1 + $0x138] sm:$0xff]
  %v71 = vld [vmem:[%s1 + $0x140] sm:$0xff]
  %v72 = vld [vmem:[%s1 + $0x148] sm:$0xff]
  %v73 = vld [vmem:[%s1 + $0x150] sm:$0xff]
  %v74 = vld [vmem:[%s1 + $0x158] sm:$0xff]
  %v75 = vld [vmem:[%s1 + $0x160] sm:$0xff]
  %v76 = vld [vmem:[%s1 + $0x168] sm:$0xff]
  %v77 = vld [vmem:[%s1 + $0x170] sm:$0xff]
  %v78 = vld [vmem:[%s1 + $0x178] sm:$0xff]
  %v79 = vld [vmem:[%s1 + $0x180] sm:$0xff]
  %v80 = vld [vmem:[%s1 + $0x188] sm:$0xff]
  %v81 = vld [vmem:[%s1 + $0x190] sm:$0xff]
  %v82 = vld [vmem:[%s1 + $0x198] sm:$0xff]
  %v83 = vld [vmem:[%s1 + $0x1a0] sm:$0xff]
  %v84 = vld [vmem:[%s1 + $0x1a8] sm:$0xff]
  %v85 = vld [vmem:[%s1 + $0x1b0] sm:$0xff]
  %v86 = vld [vmem:[%s1 + $0x1b8] sm:$0xff]
  %v87 = vld [vmem:[%s1 + $0x1c0] sm:$0xff]
  %v88 = vld [vmem:[%s1 + $0x1c8] sm:$0xff]
  %v89 = vld [vmem:[%s1 + $0x1d0] sm:$0xff]
  %v90 = vld [vmem:[%s1 + $0x1d8] sm:$0xff]
  %v91 = vld [vmem:[%s1 + $0x1e0] sm:$0xff]
  %v92 = vld [vmem:[%s1 + $0x1e8] sm:$0xff]
  %v93 = vld [vmem:[%s1 + $0x1f0] sm:$0xff]
  %v94 = vld [vmem:[%s1 + $0x1f8] sm:$0xff]
  %v95 = vld [vmem:[%s1 + $0x200] sm:$0xff]
  %v96 = vld [vmem:[%s1 + $0x208] sm:$0xff]
  %v97 = vld [vmem:[%s1 + $0x210] sm:$0xff]
  %v98 = vld [vmem:[%s1 + $0x218] sm:$0xff]
  %v99 = vld [vmem:[%s1 + $0x220] sm:$0xff]
  %v100 = vld [vmem:[%s1 + $0x228] sm:$0xff]
  %v101 = vld [vmem:[%s1 + $0x230] sm:$0xff]
  %v102 = vld [vmem:[%s1 + $0x238] sm:$0xff]
  %v103 = vld [vmem:[%s1 + $0x240] sm:$0xff]
  %v104 = vld [vmem:[%s1 + $0x248] sm:$0xff]
  %v105 = vld [vmem:[%s1 + $0x250] sm:$0xff]
  %v106 = vld [vmem:[%s1 + $0x258] sm:$0xff]
  %v107 = vld [vmem:[%s1 + $0x260] sm:$0xff]
  %v108 = vld [vmem:[%s1 + $0x268] sm:$0xff]
  %v109 = vld [vmem:[%s1 + $0x270] sm:$0xff]
  %v110 = vld [vmem:[%s1 + $0x278] sm:$0xff]
  %v111 = vld [vmem:[%s1 + $0x280] sm:$0xff]
  %v112 = vld [vmem:[%s1 + $0x288] sm:$0xff]
  %v113 = vld [vmem:[%s1 + $0x290] sm:$0xff]
  %v114 = vld [vmem:[%s1 + $0x298] sm:$0xff]
  %v115 = vld [vmem:[%s1 + $0x2a0] sm:$0xff]
  %v116 = vld [vmem:[%s1 + $0x2a8] sm:$0xff]
  %v117 = vld [vmem:[%s1 + $0x2b0] sm:$0xff]
  %v118 = vld [vmem:[%s1 + $0x2b8] sm:$0xff]
  %v119 = vld [vmem:[%s1 + $0x2c0] sm:$0xff]
  %v120 = vld [vmem:[%s1 + $0x2c8] sm:$0xff]
  %v121 = vld [vmem:[%s1 + $0x2d0] sm:$0xff]
  %v122 = vld [vmem:[%s1 + $0x2d8] sm:$0xff]
  %v123 = vld [vmem:[%s1 + $0x2e0] sm:$0xff]
  %v124 = vld [vmem:[%s1 + $0x2e8] sm:$0xff]
  %v125 = vld [vmem:[%s1 + $0x2f0] sm:$0xff]
  %v126 = vld [vmem:[%s1 + $0x2f8] sm:$0xff]
  %v127 = vld [vmem:[%s1 + $0x300] sm:$0xff]
  %v128 = vld [vmem:[%s1 + $0x308] sm:$0xff]
  %v129 = vld [vmem:[%s1 + $0x310] sm:$0xff]
  %v130 = vld [vmem:[%s1 + $0x318] sm:$0xff]
  %v131 = vld [vmem:[%s1 + $0x320] sm:$0xff]
  %v132 = vld [vmem:[%s1 + $0x328] sm:$0xff]
  %v133 = vld [vmem:[%s1 + $0x330] sm:$0xff]
  %v134 = vld [vmem:[%s1 + $0x338] sm:$0xff]
  %v135 = vld [vmem:[%s1 + $0x340] sm:$0xff]
  %v136 = vld [vmem:[%s1 + $0x348] sm:$0xff]
  %v137 = vld [vmem:[%s1 + $0x350] sm:$0xff]
  %v138 = vld [vmem:[%s1 + $0x358] sm:$0xff]
  %v139 = vld [vmem:[%s1 + $0x360] sm:$0xff]
  %v140 = vld [vmem:[%s1 + $0x368] sm:$0xff]
  %v141 = vld [vmem:[%s1 + $0x370] sm:$0xff]
  %v142 = vld [vmem:[%s1 + $0x378] sm:$0xff]
  %v143 = vld [vmem:[%s1 + $0x380] sm:$0xff]
  %v144 = vld [vmem:[%s1 + $0x388] sm:$0xff]
  %v145 = vld [vmem:[%s1 + $0x390] sm:$0xff]
  %v146 = vld [vmem:[%s1 + $0x398] sm:$0xff]
  %v147 = vld [vmem:[%s1 + $0x3a0] sm:$0xff]
  %v148 = vld [vmem:[%s1 + $0x3a8] sm:$0xff]
  %v149 = vld [vmem:[%s1 + $0x3b0] sm:$0xff]
  %v150 = vld [vmem:[%s1 + $0x3b8] sm:$0xff]
  %v151 = vld [vmem:[%s1 + $0x3c0] sm:$0xff]
  %v152 = vld [vmem:[%s1 + $0x3c8] sm:$0xff]
  %v153 = vld [vmem:[%s1 + $0x3d0] sm:$0xff]
  %v154 = vld [vmem:[%s1 + $0x3d8] sm:$0xff]
  %v155 = vld [vmem:[%s1 + $0x3e0] sm:$0xff]
  %v156 = vld [vmem:[%s1 + $0x3e8] sm:$0xff]
  %v157 = vld [vmem:[%s1 + $0x3f0] sm:$0xff]
  %v158 = vld [vmem:[%s1 + $0x3f8] sm:$0xff]
  %v159 = vld [vmem:[%s1 + $0x400] sm:$0xff]
  %v160 = vld [vmem:[%s1 + $0x408] sm:$0xff]
  %v161 = vld [vmem:[%s1 + $0x410] sm:$0xff]
  %v162 = vld [vmem:[%s1 + $0x418] sm:$0xff]
  %v163 = vld [vmem:[%s1 + $0x420] sm:$0xff]
  %v164 = vld [vmem:[%s1 + $0x428] sm:$0xff]
  %v165 = vld [vmem:[%s1 + $0x430] sm:$0xff]
  %v166 = vld [vmem:[%s1 + $0x438] sm:$0xff]
  %v167 = vld [vmem:[%s1 + $0x440] sm:$0xff]
  %v168 = vld [vmem:[%s1 + $0x448] sm:$0xff]
  %v169 = vld [vmem:[%s1 + $0x450] sm:$0xff]
  %v170 = vld [vmem:[%s1 + $0x458] sm:$0xff]
  %v171 = vld [vmem:[%s1 + $0x460] sm:$0xff]
  %v172 = vld [vmem:[%s1 + $0x468] sm:$0xff]
  %v173 = vld [vmem:[%s1 + $0x470] sm:$0xff]
  %v174 = vld [vmem:[%s1 + $0x478] sm:$0xff]
  %v175 = vld [vmem:[%s1 + $0x480] sm:$0xff]
  %v176 = vld [vmem:[%s1 + $0x488] sm:$0xff]
  %v177 = vld [vmem:[%s1 + $0x490] sm:$0xff]
  %v178 = vld [vmem:[%s1 + $0x498] sm:$0xff]
  %v179 = vld [vmem:[%s1 + $0x4a0] sm:$0xff]
  %v180 = vld [vmem:[%s1 + $0x4a8] sm:$0xff]
  %v181 = vld [vmem:[%s1 + $0x4b0] sm:$0xff]
  %v182 = vld [vmem:[%s1 + $0x4b8] sm:$0xff]
  %v183 = vld [vmem:[%s1 + $0x4c0] sm:$0xff]
  %v184 = vld [vmem:[%s1 + $0x4c8] sm:$0xff]
  %v185 = vld [vmem:[%s1 + $0x4d0] sm:$0xff]
  %v186 = vld [vmem:[%s1 + $0x4d8] sm:$0xff]
  %v187 = vld [vmem:[%s1 + $0x4e0] sm:$0xff]
  %v188 = vld [vmem:[%s1 + $0x4e8] sm:$0xff]
  %v189 = vld [vmem:[%s1 + $0x4f0] sm:$0xff]
  %v190 = vld [vmem:[%s1 + $0x4f8] sm:$0xff]
  %v191 = vld [vmem:[%s1 + $0x500] sm:$0xff]
  %v192 = vld [vmem:[%s1 + $0x508] sm:$0xff]
  %v193 = vld [vmem:[%s1 + $0x510] sm:$0xff]
  %v194 = vld [vmem:[%s1 + $0x518] sm:$0xff]
  %v195 = vld [vmem:[%s1 + $0x520] sm:$0xff]
  %v196 = vld [vmem:[%s1 + $0x528] sm:$0xff]
  %v197 = vld [vmem:[%s1 + $0x530] sm:$0xff]
  %v198 = vld [vmem:[%s1 + $0x538] sm:$0xff]
  %v199 = vld [vmem:[%s1 + $0x540] sm:$0xff]
  %v200 = vld [vmem:[%s1 + $0x548] sm:$0xff]
  %v201 = vld [vmem:[%s1 + $0x550] sm:$0xff]
  %v202 = vld [vmem:[%s1 + $0x558] sm:$0xff]
  %v203 = vld [vmem:[%s1 + $0x560] sm:$0xff]
  %v204 = vld [vmem:[%s1 + $0x568] sm:$0xff]
  %v205 = vld [vmem:[%s1 + $0x570] sm:$0xff]
  %v206 = vld [vmem:[%s1 + $0x578] sm:$0xff]
  %v207 = vld [vmem:[%s1 + $0x580] sm:$0xff]
  %v208 = vld [vmem:[%s1 + $0x588] sm:$0xff]
  %v209 = vld [vmem:[%s1 + $0x590] sm:$0xff]
  %v210 = vld [vmem:[%s1 + $0x598] sm:$0xff]
  %v211 = vld [vmem:[%s1 + $0x5a0] sm:$0xff]
  %v212 = vld [vmem:[%s1 + $0x5a8] sm:$0xff]
  %v213 = vld [vmem:[%s1 + $0x5b0] sm:$0xff]
  %v214 = vld [vmem:[%s1 + $0x5b8] sm:$0xff]
  %v215 = vld [vmem:[%s1 + $0x5c0] sm:$0xff]
  %v216 = vld [vmem:[%s1 + $0x5c8] sm:$0xff]
  %v217 = vld [vmem:[%s1 + $0x5d0] sm:$0xff]
  %v218 = vld [vmem:[%s1 + $0x5d8] sm:$0xff]
  %v219 = vld [vmem:[%s1 + $0x5e0] sm:$0xff]
  %v220 = vld [vmem:[%s1 + $0x5e8] sm:$0xff]
  %v221 = vld [vmem:[%s1 + $0x5f0] sm:$0xff]
  %v222 = vld [vmem:[%s1 + $0x5f8] sm:$0xff]
  %v223 = vld [vmem:[%s1 + $0x600] sm:$0xff]
  %v224 = vld [vmem:[%s1 + $0x608] sm:$0xff]
  %v225 = vld [vmem:[%s1 + $0x610] sm:$0xff]
  %v226 = vld [vmem:[%s1 + $0x618] sm:$0xff]
  %v227 = vld [vmem:[%s1 + $0x620] sm:$0xff]
  %v228 = vld [vmem:[%s1 + $0x628] sm:$0xff]
  %v229 = vld [vmem:[%s1 + $0x630] sm:$0xff]
  %v230 = vld [vmem:[%s1 + $0x638] sm:$0xff]
  %v231 = vld [vmem:[%s1 + $0x640] sm:$0xff]
  %v232 = vld [vmem:[%s1 + $0x648] sm:$0xff]
  %v233 = vld [vmem:[%s1 + $0x650] sm:$0xff]
  %v234 = vld [vmem:[%s1 + $0x658] sm:$0xff]
  %v235 = vld [vmem:[%s1 + $0x660] sm:$0xff]
  %v236 = vld [vmem:[%s1 + $0x668] sm:$0xff]
  %v237 = vld [vmem:[%s1 + $0x670] sm:$0xff]
  %v238 = vld [vmem:[%s1 + $0x678] sm:$0xff]
  %v239 = vld [vmem:[%s1 + $0x680] sm:$0xff]
  %v240 = vld [vmem:[%s1 + $0x688] sm:$0xff]
  %v241 = vld [vmem:[%s1 + $0x690] sm:$0xff]
  %v242 = vld [vmem:[%s1 + $0x698] sm:$0xff]
  %v243 = vld [vmem:[%s1 + $0x6a0] sm:$0xff]
  %v244 = vld [vmem:[%s1 + $0x6a8] sm:$0xff]
  %v245 = vld [vmem:[%s1 + $0x6b0] sm:$0xff]
  %v246 = vld [vmem:[%s1 + $0x6b8] sm:$0xff]
  %v247 = vld [vmem:[%s1 + $0x6c0] sm:$0xff]
  %v248 = vld [vmem:[%s1 + $0x6c8] sm:$0xff]
  %v249 = vld [vmem:[%s1 + $0x6d0] sm:$0xff]
  %v250 = vld [vmem:[%s1 + $0x6d8] sm:$0xff]
  %v251 = vld [vmem:[%s1 + $0x6e0] sm:$0xff]
  %v252 = vld [vmem:[%s1 + $0x6e8] sm:$0xff]
  %v253 = vld [vmem:[%s1 + $0x6f0] sm:$0xff]
  %v254 = vld [vmem:[%s1 + $0x6f8] sm:$0xff]
  %v255 = vld [vmem:[%s1 + $0x700] sm:$0xff]
  %v256 = vld [vmem:[%s1 + $0x708] sm:$0xff]
  %v257 = vld [vmem:[%s1 + $0x710] sm:$0xff]
  %v258 = vld [vmem:[%s1 + $0x718] sm:$0xff]
  %v259 = vld [vmem:[%s1 + $0x720] sm:$0xff]
  %v260 = vld [vmem:[%s1 + $0x728] sm:$0xff]
  %v261 = vld [vmem:[%s1 + $0x730] sm:$0xff]
  %v262 = vld [vmem:[%s1 + $0x738] sm:$0xff]
  %v263 = vld [vmem:[%s1 + $0x740] sm:$0xff]
  %v264 = vld [vmem:[%s1 + $0x748] sm:$0xff]
  %v265 = vld [vmem:[%s1 + $0x750] sm:$0xff]
  %v266 = vld [vmem:[%s1 + $0x758] sm:$0xff]
  %v267 = vld [vmem:[%s1 + $0x760] sm:$0xff]
  %v268 = vld [vmem:[%s1 + $0x768] sm:$0xff]
  %v269 = vld [vmem:[%s1 + $0x770] sm:$0xff]
  %v270 = vld [vmem:[%s1 + $0x778] sm:$0xff]
  %v271 = vld [vmem:[%s1 + $0x780] sm:$0xff]
  %v272 = vld [vmem:[%s1 + $0x788] sm:$0xff]
  %v273 = vld [vmem:[%s1 + $0x790] sm:$0xff]
  %v274 = vld [vmem:[%s1 + $0x798] sm:$0xff]
  %v275 = vld [vmem:[%s1 + $0x7a0] sm:$0xff]
  %v276 = vld [vmem:[%s1 + $0x7a8] sm:$0xff]
  %v277 = vld [vmem:[%s1 + $0x7b0] sm:$0xff]
  %v278 = vld [vmem:[%s1 + $0x7b8] sm:$0xff]
  %v279 = vld [vmem:[%s1 + $0x7c0] sm:$0xff]
  %v280 = vld [vmem:[%s1 + $0x7c8] sm:$0xff]
  %v281 = vld [vmem:[%s1 + $0x7d0] sm:$0xff]
  %v282 = vld [vmem:[%s1 + $0x7d8] sm:$0xff]
  %v283 = vld [vmem:[%s1 + $0x7e0] sm:$0xff]
  %v284 = vld [vmem:[%s1 + $0x7e8] sm:$0xff]
  %v285 = vld [vmem:[%s1 + $0x7f0] sm:$0xff]
  %v286 = vld [vmem:[%s1 + $0x7f8] sm:$0xff]
  %v287 = vld [vmem:[%s1 + $0x800] sm:$0xff]
  %v288 = vld [vmem:[%s1 + $0x808] sm:$0xff]
  %v289 = vld [vmem:[%s1 + $0x810] sm:$0xff]
  %v290 = vld [vmem:[%s1 + $0x818] sm:$0xff]
  %v291 = vld [vmem:[%s1 + $0x820] sm:$0xff]
  %v292 = vld [vmem:[%s1 + $0x828] sm:$0xff]
  %v293 = vld [vmem:[%s1 + $0x830] sm:$0xff]
  %v294 = vld [vmem:[%s1 + $0x838] sm:$0xff]
  %v295 = vld [vmem:[%s1 + $0x840] sm:$0xff]
  %v296 = vld [vmem:[%s1 + $0x848] sm:$0xff]
  %v297 = vld [vmem:[%s1 + $0x850] sm:$0xff]
  %v298 = vld [vmem:[%s1 + $0x858] sm:$0xff]
  %v299 = vld [vmem:[%s1 + $0x860] sm:$0xff]
  %v300 = vld [vmem:[%s1 + $0x868] sm:$0xff]
  %v301 = vld [vmem:[%s1 + $0x870] sm:$0xff]
  %v302 = vld [vmem:[%s1 + $0x878] sm:$0xff]
  %v303 = vld [vmem:[%s1 + $0x880] sm:$0xff]
  %v304 = vld [vmem:[%s1 + $0x888] sm:$0xff]
  %v305 = vld [vmem:[%s1 + $0x890] sm:$0xff]
  %v306 = vld [vmem:[%s1 + $0x898] sm:$0xff]
  %v307 = vld [vmem:[%s1 + $0x8a0] sm:$0xff]
  %v308 = vld [vmem:[%s1 + $0x8a8] sm:$0xff]
  %v309 = vld [vmem:[%s1 + $0x8b0] sm:$0xff]
  %v310 = vld [vmem:[%s1 + $0x8b8] sm:$0xff]
  %v311 = vld [vmem:[%s1 + $0x8c0] sm:$0xff]
  %v312 = vld [vmem:[%s1 + $0x8c8] sm:$0xff]
  %v313 = vld [vmem:[%s1 + $0x8d0] sm:$0xff]
  %v314 = vld [vmem:[%s1 + $0x8d8] sm:$0xff]
  %v315 = vld [vmem:[%s1 + $0x8e0] sm:$0xff]
  %v316 = vld [vmem:[%s1 + $0x8e8] sm:$0xff]
  %v317 = vld [vmem:[%s1 + $0x8f0] sm:$0xff]
  %v318 = vld [vmem:[%s1 + $0x8f8] sm:$0xff]
  %v319 = vld [vmem:[%s1 + $0x900] sm:$0xff]
  %v320 = vld [vmem:[%s1 + $0x908] sm:$0xff]
  %v321 = vld [vmem:[%s1 + $0x910] sm:$0xff]
  %v322 = vld [vmem:[%s1 + $0x918] sm:$0xff]
  %v323 = vld [vmem:[%s1 + $0x920] sm:$0xff]
  %v324 = vld [vmem:[%s1 + $0x928] sm:$0xff]
  %v325 = vld [vmem:[%s1 + $0x930] sm:$0xff]
  %v326 = vld [vmem:[%s1 + $0x938] sm:$0xff]
  %v327 = vld [vmem:[%s1 + $0x940] sm:$0xff]
  %v328 = vld [vmem:[%s1 + $0x948] sm:$0xff]
  %v329 = vld [vmem:[%s1 + $0x950] sm:$0xff]
  %v330 = vld [vmem:[%s1 + $0x958] sm:$0xff]
  %v331 = vld [vmem:[%s1 + $0x960] sm:$0xff]
  %v332 = vld [vmem:[%s1 + $0x968] sm:$0xff]
  %v333 = vld [vmem:[%s1 + $0x970] sm:$0xff]
  %v334 = vld [vmem:[%s1 + $0x978] sm:$0xff]
  %v335 = vld [vmem:[%s1 + $0x980] sm:$0xff]
  %v336 = vld [vmem:[%s1 + $0x988] sm:$0xff]
  %v337 = vld [vmem:[%s1 + $0x990] sm:$0xff]
  %v338 = vld [vmem:[%s1 + $0x998] sm:$0xff]
  %v339 = vld [vmem:[%s1 + $0x9a0] sm:$0xff]
  %v340 = vld [vmem:[%s1 + $0x9a8] sm:$0xff]
  %v341 = vld [vmem:[%s1 + $0x9b0] sm:$0xff]
  %v342 = vld [vmem:[%s1 + $0x9b8] sm:$0xff]
  %v343 = vld [vmem:[%s1 + $0x9c0] sm:$0xff]
  %v344 = vld [vmem:[%s1 + $0x9c8] sm:$0xff]
  %v345 = vld [vmem:[%s1 + $0x9d0] sm:$0xff]
  %v346 = vld [vmem:[%s1 + $0x9d8] sm:$0xff]
  %v347 = vld [vmem:[%s1 + $0x9e0] sm:$0xff]
  %v348 = vld [vmem:[%s1 + $0x9e8] sm:$0xff]
  %v349 = vld [vmem:[%s1 + $0x9f0] sm:$0xff]
  %v350 = vld [vmem:[%s1 + $0x9f8] sm:$0xff]
  %v351 = vld [vmem:[%s1 + $0xa00] sm:$0xff]
  %v352 = vld [vmem:[%s1 + $0xa08] sm:$0xff]
  %v353 = vld [vmem:[%s1 + $0xa10] sm:$0xff]
  %v354 = vld [vmem:[%s1 + $0xa18] sm:$0xff]
  %v355 = vld [vmem:[%s1 + $0xa20] sm:$0xff]
  %v356 = vld [vmem:[%s1 + $0xa28] sm:$0xff]
  %v357 = vld [vmem:[%s1 + $0xa30] sm:$0xff]
  %v358 = vld [vmem:[%s1 + $0xa38] sm:$0xff]
  %v359 = vld [vmem:[%s1 + $0xa40] sm:$0xff]
  %v360 = vld [vmem:[%s1 + $0xa48] sm:$0xff]
  %v361 = vld [vmem:[%s1 + $0xa50] sm:$0xff]
  %v362 = vld [vmem:[%s1 + $0xa58] sm:$0xff]
  %v363 = vld [vmem:[%s1 + $0xa60] sm:$0xff]
  %v364 = vld [vmem:[%s1 + $0xa68] sm:$0xff]
  %v365 = vld [vmem:[%s1 + $0xa70] sm:$0xff]
  %v366 = vld [vmem:[%s1 + $0xa78] sm:$0xff]
  %v367 = vld [vmem:[%s1 + $0xa80] sm:$0xff]
  %v368 = vld [vmem:[%s1 + $0xa88] sm:$0xff]
  %v369 = vld [vmem:[%s1 + $0xa90] sm:$0xff]
  %v370 = vld [vmem:[%s1 + $0xa98] sm:$0xff]
  %v371 = vld [vmem:[%s1 + $0xaa0] sm:$0xff]
  %v372 = vld [vmem:[%s1 + $0xaa8] sm:$0xff]
  %v373 = vld [vmem:[%s1 + $0xab0] sm:$0xff]
  %v374 = vld [vmem:[%s1 + $0xab8] sm:$0xff]
  %v375 = vld [vmem:[%s1 + $0xac0] sm:$0xff]
  %v376 = vld [vmem:[%s1 + $0xac8] sm:$0xff]
  %v377 = vld [vmem:[%s1 + $0xad0] sm:$0xff]
  %v378 = vld [vmem:[%s1 + $0xad8] sm:$0xff]
  %v379 = vld [vmem:[%s1 + $0xae0] sm:$0xff]
  %v380 = vld [vmem:[%s1 + $0xae8] sm:$0xff]
  %v381 = vld [vmem:[%s1 + $0xaf0] sm:$0xff]
  %v382 = vld [vmem:[%s1 + $0xaf8] sm:$0xff]
  %v383 = vld [vmem:[%s1 + $0xb00] sm:$0xff]
  %v384 = vld [vmem:[%s1 + $0xb08] sm:$0xff]
  %v385 = vld [vmem:[%s1 + $0xb10] sm:$0xff]
  %v386 = vld [vmem:[%s1 + $0xb18] sm:$0xff]
  %v387 = vld [vmem:[%s1 + $0xb20] sm:$0xff]
  %v388 = vld [vmem:[%s1 + $0xb28] sm:$0xff]
  %v389 = vld [vmem:[%s1 + $0xb30] sm:$0xff]
  %v390 = vld [vmem:[%s1 + $0xb38] sm:$0xff]
  %v391 = vld [vmem:[%s1 + $0xb40] sm:$0xff]
  %v392 = vld [vmem:[%s1 + $0xb48] sm:$0xff]
  %v393 = vld [vmem:[%s1 + $0xb50] sm:$0xff]
  %v394 = vld [vmem:[%s1 + $0xb58] sm:$0xff]
  %v395 = vld [vmem:[%s1 + $0xb60] sm:$0xff]
  %v396 = vld [vmem:[%s1 + $0xb68] sm:$0xff]
  %v397 = vld [vmem:[%s1 + $0xb70] sm:$0xff]
  %v398 = vld [vmem:[%s1 + $0xb78] sm:$0xff]
  %v399 = vld [vmem:[%s1 + $0xb80] sm:$0xff]
  %v400 = vld [vmem:[%s1 + $0xb88] sm:$0xff]
  %v401 = vld [vmem:[%s1 + $0xb90] sm:$0xff]
  %v402 = vld [vmem:[%s1 + $0xb98] sm:$0xff]
  %v403 = vld [vmem:[%s1 + $0xba0] sm:$0xff]
  %v404 = vld [vmem:[%s1 + $0xba8] sm:$0xff]
  %v405 = vld [vmem:[%s1 + $0xbb0] sm:$0xff]
  %v406 = vld [vmem:[%s1 + $0xbb8] sm:$0xff]
  %v407 = vld [vmem:[%s1 + $0xbc0] sm:$0xff]
  %v408 = vld [vmem:[%s1 + $0xbc8] sm:$0xff]
  %v409 = vld [vmem:[%s1 + $0xbd0] sm:$0xff]
  %v410 = vld [vmem:[%s1 + $0xbd8] sm:$0xff]
  %v411 = vld [vmem:[%s1 + $0xbe0] sm:$0xff]
  %v412 = vld [vmem:[%s1 + $0xbe8] sm:$0xff]
  %v413 = vld [vmem:[%s1 + $0xbf0] sm:$0xff]
  %v414 = vld [vmem:[%s1 + $0xbf8] sm:$0xff]
  %v415 = vld [vmem:[%s1 + $0xc00] sm:$0xff]
  %v416 = vld [vmem:[%s1 + $0xc08] sm:$0xff]
  %v417 = vld [vmem:[%s1 + $0xc10] sm:$0xff]
  %v418 = vld [vmem:[%s1 + $0xc18] sm:$0xff]
  %v419 = vld [vmem:[%s1 + $0xc20] sm:$0xff]
  %v420 = vld [vmem:[%s1 + $0xc28] sm:$0xff]
  %v421 = vld [vmem:[%s1 + $0xc30] sm:$0xff]
  %v422 = vld [vmem:[%s1 + $0xc38] sm:$0xff]
  %v423 = vld [vmem:[%s1 + $0xc40] sm:$0xff]
  %v424 = vld [vmem:[%s1 + $0xc48] sm:$0xff]
  %v425 = vld [vmem:[%s1 + $0xc50] sm:$0xff]
  %v426 = vld [vmem:[%s1 + $0xc58] sm:$0xff]
  %v427 = vld [vmem:[%s1 + $0xc60] sm:$0xff]
  %v428 = vld [vmem:[%s1 + $0xc68] sm:$0xff]
  %v429 = vld [vmem:[%s1 + $0xc70] sm:$0xff]
  %v430 = vld [vmem:[%s1 + $0xc78] sm:$0xff]
  %v431 = vld [vmem:[%s1 + $0xc80] sm:$0xff]
  %v432 = vld [vmem:[%s1 + $0xc88] sm:$0xff]
  %v433 = vld [vmem:[%s1 + $0xc90] sm:$0xff]
  %v434 = vld [vmem:[%s1 + $0xc98] sm:$0xff]
  %v435 = vld [vmem:[%s1 + $0xca0] sm:$0xff]
  %v436 = vld [vmem:[%s1 + $0xca8] sm:$0xff]
  %v437 = vld [vmem:[%s1 + $0xcb0] sm:$0xff]
  %v438 = vld [vmem:[%s1 + $0xcb8] sm:$0xff]
  %v439 = vld [vmem:[%s1 + $0xcc0] sm:$0xff]
  %v440 = vld [vmem:[%s1 + $0xcc8] sm:$0xff]
  %v441 = vld [vmem:[%s1 + $0xcd0] sm:$0xff]
  %v442 = vld [vmem:[%s1 + $0xcd8] sm:$0xff]
  %v443 = vld [vmem:[%s1 + $0xce0] sm:$0xff]
  %v444 = vld [vmem:[%s1 + $0xce8] sm:$0xff]
  %v445 = vld [vmem:[%s1 + $0xcf0] sm:$0xff]
  %v446 = vld [vmem:[%s1 + $0xcf8] sm:$0xff]
  %v447 = vld [vmem:[%s1 + $0xd00] sm:$0xff]
  %v448 = vld [vmem:[%s1 + $0xd08] sm:$0xff]
  %v449 = vld [vmem:[%s1 + $0xd10] sm:$0xff]
  %v450 = vld [vmem:[%s1 + $0xd18] sm:$0xff]
  %v451 = vld [vmem:[%s1 + $0xd20] sm:$0xff]
  %v452 = vld [vmem:[%s1 + $0xd28] sm:$0xff]
  %v453 = vld [vmem:[%s1 + $0xd30] sm:$0xff]
  %v454 = vld [vmem:[%s1 + $0xd38] sm:$0xff]
  %v455 = vld [vmem:[%s1 + $0xd40] sm:$0xff]
  %v456 = vld [vmem:[%s1 + $0xd48] sm:$0xff]
  %v457 = vld [vmem:[%s1 + $0xd50] sm:$0xff]
  %v458 = vld [vmem:[%s1 + $0xd58] sm:$0xff]
  %v459 = vld [vmem:[%s1 + $0xd60] sm:$0xff]
  %v460 = vld [vmem:[%s1 + $0xd68] sm:$0xff]
  %v461 = vld [vmem:[%s1 + $0xd70] sm:$0xff]
  %v462 = vld [vmem:[%s1 + $0xd78] sm:$0xff]
  %v463 = vld [vmem:[%s1 + $0xd80] sm:$0xff]
  %v464 = vld [vmem:[%s1 + $0xd88] sm:$0xff]
  %v465 = vld [vmem:[%s1 + $0xd90] sm:$0xff]
  %v466 = vld [vmem:[%s1 + $0xd98] sm:$0xff]
  %v467 = vld [vmem:[%s1 + $0xda0] sm:$0xff]
  %v468 = vld [vmem:[%s1 + $0xda8] sm:$0xff]
  %v469 = vld [vmem:[%s1 + $0xdb0] sm:$0xff]
  %v470 = vld [vmem:[%s1 + $0xdb8] sm:$0xff]
  %v471 = vld [vmem:[%s1 + $0xdc0] sm:$0xff]
  %v472 = vld [vmem:[%s1 + $0xdc8] sm:$0xff]
  %v473 = vld [vmem:[%s1 + $0xdd0] sm:$0xff]
  %v474 = vld [vmem:[%s1 + $0xdd8] sm:$0xff]
  %v475 = vld [vmem:[%s1 + $0xde0] sm:$0xff]
  %v476 = vld [vmem:[%s1 + $0xde8] sm:$0xff]
  %v477 = vld [vmem:[%s1 + $0xdf0] sm:$0xff]
  %v478 = vld [vmem:[%s1 + $0xdf8] sm:$0xff]
  %v479 = vld [vmem:[%s1 + $0xe00] sm:$0xff]
  %v480 = vld [vmem:[%s1 + $0xe08] sm:$0xff]
  %v481 = vld [vmem:[%s1 + $0xe10] sm:$0xff]
  %v482 = vld [vmem:[%s1 + $0xe18] sm:$0xff]
  %v483 = vld [vmem:[%s1 + $0xe20] sm:$0xff]
  %v484 = vld [vmem:[%s1 + $0xe28] sm:$0xff]
  %v485 = vld [vmem:[%s1 + $0xe30] sm:$0xff]
  %v486 = vld [vmem:[%s1 + $0xe38] sm:$0xff]
  %v487 = vld [vmem:[%s1 + $0xe40] sm:$0xff]
  %v488 = vld [vmem:[%s1 + $0xe48] sm:$0xff]
  %v489 = vld [vmem:[%s1 + $0xe50] sm:$0xff]
  %v490 = vld [vmem:[%s1 + $0xe58] sm:$0xff]
  %v491 = vld [vmem:[%s1 + $0xe60] sm:$0xff]
  %v492 = vld [vmem:[%s1 + $0xe68] sm:$0xff]
  %v493 = vld [vmem:[%s1 + $0xe70] sm:$0xff]
  %v494 = vld [vmem:[%s1 + $0xe78] sm:$0xff]
  %v495 = vld [vmem:[%s1 + $0xe80] sm:$0xff]
  %v496 = vld [vmem:[%s1 + $0xe88] sm:$0xff]
  %v497 = vld [vmem:[%s1 + $0xe90] sm:$0xff]
  %v498 = vld [vmem:[%s1 + $0xe98] sm:$0xff]
  %v499 = vld [vmem:[%s1 + $0xea0] sm:$0xff]
  %v500 = vld [vmem:[%s1 + $0xea8] sm:$0xff]
  %v501 = vld [vmem:[%s1 + $0xeb0] sm:$0xff]
  %v502 = vld [vmem:[%s1 + $0xeb8] sm:$0xff]
  %v503 = vld [vmem:[%s1 + $0xec0] sm:$0xff]
  %v504 = vld [vmem:[%s1 + $0xec8] sm:$0xff]
  %v505 = vld [vmem:[%s1 + $0xed0] sm:$0xff]
  %v506 = vld [vmem:[%s1 + $0xed8] sm:$0xff]
  %v507 = vld [vmem:[%s1 + $0xee0] sm:$0xff]
  %v508 = vld [vmem:[%s1 + $0xee8] sm:$0xff]
  %v509 = vld [vmem:[%s1 + $0xef0] sm:$0xff]
  %v510 = vld [vmem:[%s1 + $0xef8] sm:$0xff]
  %v511 = vld [vmem:[%s2] sm:$0xf]
  %v513 = vlaneseq
  %v514 = vshrl.u32 %v513, 7
  %v515 = vsub.s32 0, %v514
  %v516 = vrot.slane %v511, %v515
  %v517 = vlaneseq
  %v518 = vshrl.u32 %v517, 7
  %v519 = vsub.s32 1, %v518
  %v520 = vrot.slane %v511, %v519
  %v521 = vlaneseq
  %v522 = vshrl.u32 %v521, 7
  %v523 = vsub.s32 2, %v522
  %v524 = vrot.slane %v511, %v523
  %v525 = vlaneseq
  %v526 = vshrl.u32 %v525, 7
  %v527 = vsub.s32 3, %v526
  %v528 = vrot.slane %v511, %v527
  %v549 = vunpack.c.l.b16 %v15
  %v550 = vunpack.c.h.b16 %v15
  %v551 = vunpack.c.l.b16 %v16
  %v552 = vunpack.c.h.b16 %v16
  %v553 = vunpack.c.l.b16 %v17
  %v554 = vunpack.c.h.b16 %v17
  %v555 = vunpack.c.l.b16 %v18
  %v556 = vunpack.c.h.b16 %v18
  %v557 = vunpack.c.l.b16 %v19
  %v558 = vunpack.c.h.b16 %v19
  %v559 = vunpack.c.l.b16 %v20
  %v560 = vunpack.c.h.b16 %v20
  %v561 = vunpack.c.l.b16 %v21
  %v562 = vunpack.c.h.b16 %v21
  %v563 = vunpack.c.l.b16 %v22
  %v564 = vunpack.c.l.b16 %v23
  %v565 = vunpack.c.h.b16 %v23
  %v566 = vunpack.c.l.b16 %v24
  %v567 = vunpack.c.h.b16 %v24
  %v568 = vunpack.c.l.b16 %v25
  %v569 = vunpack.c.h.b16 %v25
  %v570 = vunpack.c.l.b16 %v26
  %v571 = vunpack.c.h.b16 %v26
  %v572 = vunpack.c.l.b16 %v27
  %v573 = vunpack.c.h.b16 %v27
  %v574 = vunpack.c.l.b16 %v28
  %v575 = vunpack.c.h.b16 %v28
  %v576 = vunpack.c.l.b16 %v29
  %v577 = vunpack.c.h.b16 %v29
  %v578 = vunpack.c.l.b16 %v30
  %v579 = vpack.c.b16 %v564, %v549
  %v580 = vpack.c.b16 %v565, %v550
  %v581 = vpack.c.b16 %v566, %v551
  %v582 = vpack.c.b16 %v567, %v552
  %v583 = vpack.c.b16 %v568, %v553
  %v584 = vpack.c.b16 %v569, %v554
  %v585 = vpack.c.b16 %v570, %v555
  %v586 = vpack.c.b16 %v571, %v556
  %v587 = vpack.c.b16 %v572, %v557
  %v588 = vpack.c.b16 %v573, %v558
  %v589 = vpack.c.b16 %v574, %v559
  %v590 = vpack.c.b16 %v575, %v560
  %v591 = vpack.c.b16 %v576, %v561
  %v592 = vpack.c.b16 %v577, %v562
  %v593 = vpack.c.b16 %v578, %v563
  %v1089 = vunpack.c.l.b16 %v31
  %v1090 = vunpack.c.h.b16 %v31
  %v1091 = vunpack.c.l.b16 %v32
  %v1092 = vunpack.c.h.b16 %v32
  %v1093 = vunpack.c.l.b16 %v33
  %v1094 = vunpack.c.h.b16 %v33
  %v1095 = vunpack.c.l.b16 %v34
  %v1096 = vunpack.c.h.b16 %v34
  %v1097 = vunpack.c.l.b16 %v35
  %v1098 = vunpack.c.h.b16 %v35
  %v1099 = vunpack.c.l.b16 %v36
  %v1100 = vunpack.c.h.b16 %v36
  %v1101 = vunpack.c.l.b16 %v37
  %v1102 = vunpack.c.h.b16 %v37
  %v1103 = vunpack.c.l.b16 %v38
  %v1104 = vunpack.c.h.b16 %v38
  %v1105 = vunpack.c.l.b16 %v39
  %v1106 = vunpack.c.h.b16 %v39
  %v1107 = vunpack.c.l.b16 %v40
  %v1108 = vunpack.c.h.b16 %v40
  %v1109 = vunpack.c.l.b16 %v41
  %v1110 = vunpack.c.h.b16 %v41
  %v1111 = vunpack.c.l.b16 %v42
  %v1112 = vunpack.c.h.b16 %v42
  %v1113 = vunpack.c.l.b16 %v43
  %v1114 = vunpack.c.h.b16 %v43
  %v1115 = vunpack.c.l.b16 %v44
  %v1116 = vunpack.c.h.b16 %v44
  %v1117 = vunpack.c.l.b16 %v45
  %v1118 = vunpack.c.h.b16 %v45
  %v1119 = vunpack.c.l.b16 %v46
  %v1120 = vunpack.c.h.b16 %v46
  %v1121 = vunpack.c.l.b16 %v47
  %v1122 = vunpack.c.h.b16 %v47
  %v1123 = vunpack.c.l.b16 %v48
  %v1124 = vunpack.c.h.b16 %v48
  %v1125 = vunpack.c.l.b16 %v49
  %v1126 = vunpack.c.h.b16 %v49
  %v1127 = vunpack.c.l.b16 %v50
  %v1128 = vunpack.c.h.b16 %v50
  %v1129 = vunpack.c.l.b16 %v51
  %v1130 = vunpack.c.h.b16 %v51
  %v1131 = vunpack.c.l.b16 %v52
  %v1132 = vunpack.c.h.b16 %v52
  %v1133 = vunpack.c.l.b16 %v53
  %v1134 = vunpack.c.h.b16 %v53
  %v1135 = vunpack.c.l.b16 %v54
  %v1136 = vunpack.c.h.b16 %v54
  %v1137 = vunpack.c.l.b16 %v55
  %v1138 = vunpack.c.h.b16 %v55
  %v1139 = vunpack.c.l.b16 %v56
  %v1140 = vunpack.c.h.b16 %v56
  %v1141 = vunpack.c.l.b16 %v57
  %v1142 = vunpack.c.h.b16 %v57
  %v1143 = vunpack.c.l.b16 %v58
  %v1144 = vunpack.c.h.b16 %v58
  %v1145 = vunpack.c.l.b16 %v59
  %v1146 = vunpack.c.h.b16 %v59
  %v1147 = vunpack.c.l.b16 %v60
  %v1148 = vunpack.c.h.b16 %v60
  %v1149 = vunpack.c.l.b16 %v61
  %v1150 = vunpack.c.h.b16 %v61
  %v1151 = vunpack.c.l.b16 %v62
  %v1152 = vunpack.c.h.b16 %v62
  %v1153 = vunpack.c.l.b16 %v63
  %v1154 = vunpack.c.h.b16 %v63
  %v1155 = vunpack.c.l.b16 %v64
  %v1156 = vunpack.c.h.b16 %v64
  %v1157 = vunpack.c.l.b16 %v65
  %v1158 = vunpack.c.h.b16 %v65
  %v1159 = vunpack.c.l.b16 %v66
  %v1160 = vunpack.c.h.b16 %v66
  %v1161 = vunpack.c.l.b16 %v67
  %v1162 = vunpack.c.h.b16 %v67
  %v1163 = vunpack.c.l.b16 %v68
  %v1164 = vunpack.c.h.b16 %v68
  %v1165 = vunpack.c.l.b16 %v69
  %v1166 = vunpack.c.h.b16 %v69
  %v1167 = vunpack.c.l.b16 %v70
  %v1168 = vunpack.c.h.b16 %v70
  %v1169 = vunpack.c.l.b16 %v71
  %v1170 = vunpack.c.h.b16 %v71
  %v1171 = vunpack.c.l.b16 %v72
  %v1172 = vunpack.c.h.b16 %v72
  %v1173 = vunpack.c.l.b16 %v73
  %v1174 = vunpack.c.h.b16 %v73
  %v1175 = vunpack.c.l.b16 %v74
  %v1176 = vunpack.c.h.b16 %v74
  %v1177 = vunpack.c.l.b16 %v75
  %v1178 = vunpack.c.h.b16 %v75
  %v1179 = vunpack.c.l.b16 %v76
  %v1180 = vunpack.c.h.b16 %v76
  %v1181 = vunpack.c.l.b16 %v77
  %v1182 = vunpack.c.h.b16 %v77
  %v1183 = vunpack.c.l.b16 %v78
  %v1184 = vunpack.c.h.b16 %v78
  %v1185 = vunpack.c.l.b16 %v79
  %v1186 = vunpack.c.h.b16 %v79
  %v1187 = vunpack.c.l.b16 %v80
  %v1188 = vunpack.c.h.b16 %v80
  %v1189 = vunpack.c.l.b16 %v81
  %v1190 = vunpack.c.h.b16 %v81
  %v1191 = vunpack.c.l.b16 %v82
  %v1192 = vunpack.c.h.b16 %v82
  %v1193 = vunpack.c.l.b16 %v83
  %v1194 = vunpack.c.h.b16 %v83
  %v1195 = vunpack.c.l.b16 %v84
  %v1196 = vunpack.c.h.b16 %v84
  %v1197 = vunpack.c.l.b16 %v85
  %v1198 = vunpack.c.h.b16 %v85
  %v1199 = vunpack.c.l.b16 %v86
  %v1200 = vunpack.c.h.b16 %v86
  %v1201 = vunpack.c.l.b16 %v87
  %v1202 = vunpack.c.h.b16 %v87
  %v1203 = vunpack.c.l.b16 %v88
  %v1204 = vunpack.c.h.b16 %v88
  %v1205 = vunpack.c.l.b16 %v89
  %v1206 = vunpack.c.h.b16 %v89
  %v1207 = vunpack.c.l.b16 %v90
  %v1208 = vunpack.c.h.b16 %v90
  %v1209 = vunpack.c.l.b16 %v91
  %v1210 = vunpack.c.h.b16 %v91
  %v1211 = vunpack.c.l.b16 %v92
  %v1212 = vunpack.c.h.b16 %v92
  %v1213 = vunpack.c.l.b16 %v93
  %v1214 = vunpack.c.h.b16 %v93
  %v1215 = vunpack.c.l.b16 %v94
  %v1216 = vunpack.c.h.b16 %v94
  %v1217 = vunpack.c.l.b16 %v95
  %v1218 = vunpack.c.h.b16 %v95
  %v1219 = vunpack.c.l.b16 %v96
  %v1220 = vunpack.c.h.b16 %v96
  %v1221 = vunpack.c.l.b16 %v97
  %v1222 = vunpack.c.h.b16 %v97
  %v1223 = vunpack.c.l.b16 %v98
  %v1224 = vunpack.c.h.b16 %v98
  %v1225 = vunpack.c.l.b16 %v99
  %v1226 = vunpack.c.h.b16 %v99
  %v1227 = vunpack.c.l.b16 %v100
  %v1228 = vunpack.c.h.b16 %v100
  %v1229 = vunpack.c.l.b16 %v101
  %v1230 = vunpack.c.h.b16 %v101
  %v1231 = vunpack.c.l.b16 %v102
  %v1232 = vunpack.c.h.b16 %v102
  %v1233 = vunpack.c.l.b16 %v103
  %v1234 = vunpack.c.h.b16 %v103
  %v1235 = vunpack.c.l.b16 %v104
  %v1236 = vunpack.c.h.b16 %v104
  %v1237 = vunpack.c.l.b16 %v105
  %v1238 = vunpack.c.h.b16 %v105
  %v1239 = vunpack.c.l.b16 %v106
  %v1240 = vunpack.c.h.b16 %v106
  %v1241 = vunpack.c.l.b16 %v107
  %v1242 = vunpack.c.h.b16 %v107
  %v1243 = vunpack.c.l.b16 %v108
  %v1244 = vunpack.c.h.b16 %v108
  %v1245 = vunpack.c.l.b16 %v109
  %v1246 = vunpack.c.h.b16 %v109
  %v1247 = vunpack.c.l.b16 %v110
  %v1248 = vunpack.c.h.b16 %v110
  %v1249 = vunpack.c.l.b16 %v111
  %v1250 = vunpack.c.h.b16 %v111
  %v1251 = vunpack.c.l.b16 %v112
  %v1252 = vunpack.c.h.b16 %v112
  %v1253 = vunpack.c.l.b16 %v113
  %v1254 = vunpack.c.h.b16 %v113
  %v1255 = vunpack.c.l.b16 %v114
  %v1256 = vunpack.c.h.b16 %v114
  %v1257 = vunpack.c.l.b16 %v115
  %v1258 = vunpack.c.h.b16 %v115
  %v1259 = vunpack.c.l.b16 %v116
  %v1260 = vunpack.c.h.b16 %v116
  %v1261 = vunpack.c.l.b16 %v117
  %v1262 = vunpack.c.h.b16 %v117
  %v1263 = vunpack.c.l.b16 %v118
  %v1264 = vunpack.c.h.b16 %v118
  %v1265 = vunpack.c.l.b16 %v119
  %v1266 = vunpack.c.h.b16 %v119
  %v1267 = vunpack.c.l.b16 %v120
  %v1268 = vunpack.c.h.b16 %v120
  %v1269 = vunpack.c.l.b16 %v121
  %v1270 = vunpack.c.h.b16 %v121
  %v1271 = vunpack.c.l.b16 %v122
  %v1272 = vunpack.c.h.b16 %v122
  %v1273 = vunpack.c.l.b16 %v123
  %v1274 = vunpack.c.h.b16 %v123
  %v1275 = vunpack.c.l.b16 %v124
  %v1276 = vunpack.c.h.b16 %v124
  %v1277 = vunpack.c.l.b16 %v125
  %v1278 = vunpack.c.h.b16 %v125
  %v1279 = vunpack.c.l.b16 %v126
  %v1280 = vunpack.c.h.b16 %v126
  %v1281 = vunpack.c.l.b16 %v127
  %v1282 = vunpack.c.h.b16 %v127
  %v1283 = vunpack.c.l.b16 %v128
  %v1284 = vunpack.c.h.b16 %v128
  %v1285 = vunpack.c.l.b16 %v129
  %v1286 = vunpack.c.h.b16 %v129
  %v1287 = vunpack.c.l.b16 %v130
  %v1288 = vunpack.c.h.b16 %v130
  %v1289 = vunpack.c.l.b16 %v131
  %v1290 = vunpack.c.h.b16 %v131
  %v1291 = vunpack.c.l.b16 %v132
  %v1292 = vunpack.c.h.b16 %v132
  %v1293 = vunpack.c.l.b16 %v133
  %v1294 = vunpack.c.h.b16 %v133
  %v1295 = vunpack.c.l.b16 %v134
  %v1296 = vunpack.c.h.b16 %v134
  %v1297 = vunpack.c.l.b16 %v135
  %v1298 = vunpack.c.h.b16 %v135
  %v1299 = vunpack.c.l.b16 %v136
  %v1300 = vunpack.c.h.b16 %v136
  %v1301 = vunpack.c.l.b16 %v137
  %v1302 = vunpack.c.h.b16 %v137
  %v1303 = vunpack.c.l.b16 %v138
  %v1304 = vunpack.c.h.b16 %v138
  %v1305 = vunpack.c.l.b16 %v139
  %v1306 = vunpack.c.h.b16 %v139
  %v1307 = vunpack.c.l.b16 %v140
  %v1308 = vunpack.c.h.b16 %v140
  %v1309 = vunpack.c.l.b16 %v141
  %v1310 = vunpack.c.h.b16 %v141
  %v1311 = vunpack.c.l.b16 %v142
  %v1312 = vunpack.c.h.b16 %v142
  %v1313 = vunpack.c.l.b16 %v143
  %v1314 = vunpack.c.h.b16 %v143
  %v1315 = vunpack.c.l.b16 %v144
  %v1316 = vunpack.c.h.b16 %v144
  %v1317 = vunpack.c.l.b16 %v145
  %v1318 = vunpack.c.h.b16 %v145
  %v1319 = vunpack.c.l.b16 %v146
  %v1320 = vunpack.c.h.b16 %v146
  %v1321 = vunpack.c.l.b16 %v147
  %v1322 = vunpack.c.h.b16 %v147
  %v1323 = vunpack.c.l.b16 %v148
  %v1324 = vunpack.c.h.b16 %v148
  %v1325 = vunpack.c.l.b16 %v149
  %v1326 = vunpack.c.h.b16 %v149
  %v1327 = vunpack.c.l.b16 %v150
  %v1328 = vunpack.c.h.b16 %v150
  %v1329 = vunpack.c.l.b16 %v151
  %v1330 = vunpack.c.h.b16 %v151
  %v1331 = vunpack.c.l.b16 %v152
  %v1332 = vunpack.c.h.b16 %v152
  %v1333 = vunpack.c.l.b16 %v153
  %v1334 = vunpack.c.h.b16 %v153
  %v1335 = vunpack.c.l.b16 %v154
  %v1336 = vunpack.c.h.b16 %v154
  %v1337 = vunpack.c.l.b16 %v155
  %v1338 = vunpack.c.h.b16 %v155
  %v1339 = vunpack.c.l.b16 %v156
  %v1340 = vunpack.c.h.b16 %v156
  %v1341 = vunpack.c.l.b16 %v157
  %v1342 = vunpack.c.h.b16 %v157
  %v1343 = vunpack.c.l.b16 %v158
  %v1344 = vunpack.c.h.b16 %v158
  %v1345 = vunpack.c.l.b16 %v159
  %v1346 = vunpack.c.h.b16 %v159
  %v1347 = vunpack.c.l.b16 %v160
  %v1348 = vunpack.c.h.b16 %v160
  %v1349 = vunpack.c.l.b16 %v161
  %v1350 = vunpack.c.h.b16 %v161
  %v1351 = vunpack.c.l.b16 %v162
  %v1352 = vunpack.c.h.b16 %v162
  %v1353 = vunpack.c.l.b16 %v163
  %v1354 = vunpack.c.h.b16 %v163
  %v1355 = vunpack.c.l.b16 %v164
  %v1356 = vunpack.c.h.b16 %v164
  %v1357 = vunpack.c.l.b16 %v165
  %v1358 = vunpack.c.h.b16 %v165
  %v1359 = vunpack.c.l.b16 %v166
  %v1360 = vunpack.c.h.b16 %v166
  %v1361 = vunpack.c.l.b16 %v167
  %v1362 = vunpack.c.h.b16 %v167
  %v1363 = vunpack.c.l.b16 %v168
  %v1364 = vunpack.c.h.b16 %v168
  %v1365 = vunpack.c.l.b16 %v169
  %v1366 = vunpack.c.h.b16 %v169
  %v1367 = vunpack.c.l.b16 %v170
  %v1368 = vunpack.c.h.b16 %v170
  %v1369 = vunpack.c.l.b16 %v171
  %v1370 = vunpack.c.h.b16 %v171
  %v1371 = vunpack.c.l.b16 %v172
  %v1372 = vunpack.c.h.b16 %v172
  %v1373 = vunpack.c.l.b16 %v173
  %v1374 = vunpack.c.h.b16 %v173
  %v1375 = vunpack.c.l.b16 %v174
  %v1376 = vunpack.c.h.b16 %v174
  %v1377 = vunpack.c.l.b16 %v175
  %v1378 = vunpack.c.h.b16 %v175
  %v1379 = vunpack.c.l.b16 %v176
  %v1380 = vunpack.c.h.b16 %v176
  %v1381 = vunpack.c.l.b16 %v177
  %v1382 = vunpack.c.h.b16 %v177
  %v1383 = vunpack.c.l.b16 %v178
  %v1384 = vunpack.c.h.b16 %v178
  %v1385 = vunpack.c.l.b16 %v179
  %v1386 = vunpack.c.h.b16 %v179
  %v1387 = vunpack.c.l.b16 %v180
  %v1388 = vunpack.c.h.b16 %v180
  %v1389 = vunpack.c.l.b16 %v181
  %v1390 = vunpack.c.h.b16 %v181
  %v1391 = vunpack.c.l.b16 %v182
  %v1392 = vunpack.c.h.b16 %v182
  %v1393 = vunpack.c.l.b16 %v183
  %v1394 = vunpack.c.h.b16 %v183
  %v1395 = vunpack.c.l.b16 %v184
  %v1396 = vunpack.c.h.b16 %v184
  %v1397 = vunpack.c.l.b16 %v185
  %v1398 = vunpack.c.h.b16 %v185
  %v1399 = vunpack.c.l.b16 %v186
  %v1400 = vunpack.c.h.b16 %v186
  %v1401 = vunpack.c.l.b16 %v187
  %v1402 = vunpack.c.h.b16 %v187
  %v1403 = vunpack.c.l.b16 %v188
  %v1404 = vunpack.c.h.b16 %v188
  %v1405 = vunpack.c.l.b16 %v189
  %v1406 = vunpack.c.h.b16 %v189
  %v1407 = vunpack.c.l.b16 %v190
  %v1408 = vunpack.c.h.b16 %v190
  %v1409 = vunpack.c.l.b16 %v191
  %v1410 = vunpack.c.h.b16 %v191
  %v1411 = vunpack.c.l.b16 %v192
  %v1412 = vunpack.c.h.b16 %v192
  %v1413 = vunpack.c.l.b16 %v193
  %v1414 = vunpack.c.h.b16 %v193
  %v1415 = vunpack.c.l.b16 %v194
  %v1416 = vunpack.c.h.b16 %v194
  %v1417 = vunpack.c.l.b16 %v195
  %v1418 = vunpack.c.h.b16 %v195
  %v1419 = vunpack.c.l.b16 %v196
  %v1420 = vunpack.c.h.b16 %v196
  %v1421 = vunpack.c.l.b16 %v197
  %v1422 = vunpack.c.h.b16 %v197
  %v1423 = vunpack.c.l.b16 %v198
  %v1424 = vunpack.c.h.b16 %v198
  %v1425 = vunpack.c.l.b16 %v199
  %v1426 = vunpack.c.h.b16 %v199
  %v1427 = vunpack.c.l.b16 %v200
  %v1428 = vunpack.c.h.b16 %v200
  %v1429 = vunpack.c.l.b16 %v201
  %v1430 = vunpack.c.h.b16 %v201
  %v1431 = vunpack.c.l.b16 %v202
  %v1432 = vunpack.c.h.b16 %v202
  %v1433 = vunpack.c.l.b16 %v203
  %v1434 = vunpack.c.h.b16 %v203
  %v1435 = vunpack.c.l.b16 %v204
  %v1436 = vunpack.c.h.b16 %v204
  %v1437 = vunpack.c.l.b16 %v205
  %v1438 = vunpack.c.h.b16 %v205
  %v1439 = vunpack.c.l.b16 %v206
  %v1440 = vunpack.c.h.b16 %v206
  %v1441 = vunpack.c.l.b16 %v207
  %v1442 = vunpack.c.h.b16 %v207
  %v1443 = vunpack.c.l.b16 %v208
  %v1444 = vunpack.c.h.b16 %v208
  %v1445 = vunpack.c.l.b16 %v209
  %v1446 = vunpack.c.h.b16 %v209
  %v1447 = vunpack.c.l.b16 %v210
  %v1448 = vunpack.c.h.b16 %v210
  %v1449 = vunpack.c.l.b16 %v211
  %v1450 = vunpack.c.h.b16 %v211
  %v1451 = vunpack.c.l.b16 %v212
  %v1452 = vunpack.c.h.b16 %v212
  %v1453 = vunpack.c.l.b16 %v213
  %v1454 = vunpack.c.h.b16 %v213
  %v1455 = vunpack.c.l.b16 %v214
  %v1456 = vunpack.c.h.b16 %v214
  %v1457 = vunpack.c.l.b16 %v215
  %v1458 = vunpack.c.h.b16 %v215
  %v1459 = vunpack.c.l.b16 %v216
  %v1460 = vunpack.c.h.b16 %v216
  %v1461 = vunpack.c.l.b16 %v217
  %v1462 = vunpack.c.h.b16 %v217
  %v1463 = vunpack.c.l.b16 %v218
  %v1464 = vunpack.c.h.b16 %v218
  %v1465 = vunpack.c.l.b16 %v219
  %v1466 = vunpack.c.h.b16 %v219
  %v1467 = vunpack.c.l.b16 %v220
  %v1468 = vunpack.c.h.b16 %v220
  %v1469 = vunpack.c.l.b16 %v221
  %v1470 = vunpack.c.h.b16 %v221
  %v1471 = vunpack.c.l.b16 %v222
  %v1472 = vunpack.c.h.b16 %v222
  %v1473 = vunpack.c.l.b16 %v223
  %v1474 = vunpack.c.h.b16 %v223
  %v1475 = vunpack.c.l.b16 %v224
  %v1476 = vunpack.c.h.b16 %v224
  %v1477 = vunpack.c.l.b16 %v225
  %v1478 = vunpack.c.h.b16 %v225
  %v1479 = vunpack.c.l.b16 %v226
  %v1480 = vunpack.c.h.b16 %v226
  %v1481 = vunpack.c.l.b16 %v227
  %v1482 = vunpack.c.h.b16 %v227
  %v1483 = vunpack.c.l.b16 %v228
  %v1484 = vunpack.c.h.b16 %v228
  %v1485 = vunpack.c.l.b16 %v229
  %v1486 = vunpack.c.h.b16 %v229
  %v1487 = vunpack.c.l.b16 %v230
  %v1488 = vunpack.c.h.b16 %v230
  %v1489 = vunpack.c.l.b16 %v231
  %v1490 = vunpack.c.h.b16 %v231
  %v1491 = vunpack.c.l.b16 %v232
  %v1492 = vunpack.c.h.b16 %v232
  %v1493 = vunpack.c.l.b16 %v233
  %v1494 = vunpack.c.h.b16 %v233
  %v1495 = vunpack.c.l.b16 %v234
  %v1496 = vunpack.c.h.b16 %v234
  %v1497 = vunpack.c.l.b16 %v235
  %v1498 = vunpack.c.h.b16 %v235
  %v1499 = vunpack.c.l.b16 %v236
  %v1500 = vunpack.c.h.b16 %v236
  %v1501 = vunpack.c.l.b16 %v237
  %v1502 = vunpack.c.h.b16 %v237
  %v1503 = vunpack.c.l.b16 %v238
  %v1504 = vunpack.c.h.b16 %v238
  %v1505 = vunpack.c.l.b16 %v239
  %v1506 = vunpack.c.h.b16 %v239
  %v1507 = vunpack.c.l.b16 %v240
  %v1508 = vunpack.c.h.b16 %v240
  %v1509 = vunpack.c.l.b16 %v241
  %v1510 = vunpack.c.h.b16 %v241
  %v1511 = vunpack.c.l.b16 %v242
  %v1512 = vunpack.c.h.b16 %v242
  %v1513 = vunpack.c.l.b16 %v243
  %v1514 = vunpack.c.h.b16 %v243
  %v1515 = vunpack.c.l.b16 %v244
  %v1516 = vunpack.c.h.b16 %v244
  %v1517 = vunpack.c.l.b16 %v245
  %v1518 = vunpack.c.h.b16 %v245
  %v1519 = vunpack.c.l.b16 %v246
  %v1520 = vunpack.c.h.b16 %v246
  %v1521 = vunpack.c.l.b16 %v247
  %v1522 = vunpack.c.h.b16 %v247
  %v1523 = vunpack.c.l.b16 %v248
  %v1524 = vunpack.c.h.b16 %v248
  %v1525 = vunpack.c.l.b16 %v249
  %v1526 = vunpack.c.h.b16 %v249
  %v1527 = vunpack.c.l.b16 %v250
  %v1528 = vunpack.c.h.b16 %v250
  %v1529 = vunpack.c.l.b16 %v251
  %v1530 = vunpack.c.h.b16 %v251
  %v1531 = vunpack.c.l.b16 %v252
  %v1532 = vunpack.c.h.b16 %v252
  %v1533 = vunpack.c.l.b16 %v253
  %v1534 = vunpack.c.h.b16 %v253
  %v1535 = vunpack.c.l.b16 %v254
  %v1536 = vunpack.c.h.b16 %v254
  %v1537 = vunpack.c.l.b16 %v255
  %v1538 = vunpack.c.h.b16 %v255
  %v1539 = vunpack.c.l.b16 %v256
  %v1540 = vunpack.c.h.b16 %v256
  %v1541 = vunpack.c.l.b16 %v257
  %v1542 = vunpack.c.h.b16 %v257
  %v1543 = vunpack.c.l.b16 %v258
  %v1544 = vunpack.c.h.b16 %v258
  %v1545 = vunpack.c.l.b16 %v259
  %v1546 = vunpack.c.h.b16 %v259
  %v1547 = vunpack.c.l.b16 %v260
  %v1548 = vunpack.c.h.b16 %v260
  %v1549 = vunpack.c.l.b16 %v261
  %v1550 = vunpack.c.h.b16 %v261
  %v1551 = vunpack.c.l.b16 %v262
  %v1552 = vunpack.c.h.b16 %v262
  %v1553 = vunpack.c.l.b16 %v263
  %v1554 = vunpack.c.h.b16 %v263
  %v1555 = vunpack.c.l.b16 %v264
  %v1556 = vunpack.c.h.b16 %v264
  %v1557 = vunpack.c.l.b16 %v265
  %v1558 = vunpack.c.h.b16 %v265
  %v1559 = vunpack.c.l.b16 %v266
  %v1560 = vunpack.c.h.b16 %v266
  %v1561 = vunpack.c.l.b16 %v267
  %v1562 = vunpack.c.h.b16 %v267
  %v1563 = vunpack.c.l.b16 %v268
  %v1564 = vunpack.c.h.b16 %v268
  %v1565 = vunpack.c.l.b16 %v269
  %v1566 = vunpack.c.h.b16 %v269
  %v1567 = vunpack.c.l.b16 %v270
  %v1568 = vunpack.c.h.b16 %v270
  %v1569 = vunpack.c.l.b16 %v271
  %v1570 = vunpack.c.h.b16 %v271
  %v1571 = vunpack.c.l.b16 %v272
  %v1572 = vunpack.c.h.b16 %v272
  %v1573 = vunpack.c.l.b16 %v273
  %v1574 = vunpack.c.h.b16 %v273
  %v1575 = vunpack.c.l.b16 %v274
  %v1576 = vunpack.c.h.b16 %v274
  %v1577 = vunpack.c.l.b16 %v275
  %v1578 = vunpack.c.h.b16 %v275
  %v1579 = vunpack.c.l.b16 %v276
  %v1580 = vunpack.c.h.b16 %v276
  %v1581 = vunpack.c.l.b16 %v277
  %v1582 = vunpack.c.h.b16 %v277
  %v1583 = vunpack.c.l.b16 %v278
  %v1584 = vunpack.c.h.b16 %v278
  %v1585 = vunpack.c.l.b16 %v279
  %v1586 = vunpack.c.h.b16 %v279
  %v1587 = vunpack.c.l.b16 %v280
  %v1588 = vunpack.c.h.b16 %v280
  %v1589 = vunpack.c.l.b16 %v281
  %v1590 = vunpack.c.h.b16 %v281
  %v1591 = vunpack.c.l.b16 %v282
  %v1592 = vunpack.c.h.b16 %v282
  %v1593 = vunpack.c.l.b16 %v283
  %v1594 = vunpack.c.h.b16 %v283
  %v1595 = vunpack.c.l.b16 %v284
  %v1596 = vunpack.c.h.b16 %v284
  %v1597 = vunpack.c.l.b16 %v285
  %v1598 = vunpack.c.h.b16 %v285
  %v1599 = vunpack.c.l.b16 %v286
  %v1600 = vunpack.c.h.b16 %v286
  %v1601 = vunpack.c.l.b16 %v287
  %v1602 = vunpack.c.h.b16 %v287
  %v1603 = vunpack.c.l.b16 %v288
  %v1604 = vunpack.c.h.b16 %v288
  %v1605 = vunpack.c.l.b16 %v289
  %v1606 = vunpack.c.h.b16 %v289
  %v1607 = vunpack.c.l.b16 %v290
  %v1608 = vunpack.c.h.b16 %v290
  %v1609 = vunpack.c.l.b16 %v291
  %v1610 = vunpack.c.h.b16 %v291
  %v1611 = vunpack.c.l.b16 %v292
  %v1612 = vunpack.c.h.b16 %v292
  %v1613 = vunpack.c.l.b16 %v293
  %v1614 = vunpack.c.h.b16 %v293
  %v1615 = vunpack.c.l.b16 %v294
  %v1616 = vunpack.c.h.b16 %v294
  %v1617 = vunpack.c.l.b16 %v295
  %v1618 = vunpack.c.h.b16 %v295
  %v1619 = vunpack.c.l.b16 %v296
  %v1620 = vunpack.c.h.b16 %v296
  %v1621 = vunpack.c.l.b16 %v297
  %v1622 = vunpack.c.h.b16 %v297
  %v1623 = vunpack.c.l.b16 %v298
  %v1624 = vunpack.c.h.b16 %v298
  %v1625 = vunpack.c.l.b16 %v299
  %v1626 = vunpack.c.h.b16 %v299
  %v1627 = vunpack.c.l.b16 %v300
  %v1628 = vunpack.c.h.b16 %v300
  %v1629 = vunpack.c.l.b16 %v301
  %v1630 = vunpack.c.h.b16 %v301
  %v1631 = vunpack.c.l.b16 %v302
  %v1632 = vunpack.c.h.b16 %v302
  %v1633 = vunpack.c.l.b16 %v303
  %v1634 = vunpack.c.h.b16 %v303
  %v1635 = vunpack.c.l.b16 %v304
  %v1636 = vunpack.c.h.b16 %v304
  %v1637 = vunpack.c.l.b16 %v305
  %v1638 = vunpack.c.h.b16 %v305
  %v1639 = vunpack.c.l.b16 %v306
  %v1640 = vunpack.c.h.b16 %v306
  %v1641 = vunpack.c.l.b16 %v307
  %v1642 = vunpack.c.h.b16 %v307
  %v1643 = vunpack.c.l.b16 %v308
  %v1644 = vunpack.c.h.b16 %v308
  %v1645 = vunpack.c.l.b16 %v309
  %v1646 = vunpack.c.h.b16 %v309
  %v1647 = vunpack.c.l.b16 %v310
  %v1648 = vunpack.c.h.b16 %v310
  %v1649 = vunpack.c.l.b16 %v311
  %v1650 = vunpack.c.h.b16 %v311
  %v1651 = vunpack.c.l.b16 %v312
  %v1652 = vunpack.c.h.b16 %v312
  %v1653 = vunpack.c.l.b16 %v313
  %v1654 = vunpack.c.h.b16 %v313
  %v1655 = vunpack.c.l.b16 %v314
  %v1656 = vunpack.c.h.b16 %v314
  %v1657 = vunpack.c.l.b16 %v315
  %v1658 = vunpack.c.h.b16 %v315
  %v1659 = vunpack.c.l.b16 %v316
  %v1660 = vunpack.c.h.b16 %v316
  %v1661 = vunpack.c.l.b16 %v317
  %v1662 = vunpack.c.h.b16 %v317
  %v1663 = vunpack.c.l.b16 %v318
  %v1664 = vunpack.c.h.b16 %v318
  %v1665 = vunpack.c.l.b16 %v319
  %v1666 = vunpack.c.h.b16 %v319
  %v1667 = vunpack.c.l.b16 %v320
  %v1668 = vunpack.c.h.b16 %v320
  %v1669 = vunpack.c.l.b16 %v321
  %v1670 = vunpack.c.h.b16 %v321
  %v1671 = vunpack.c.l.b16 %v322
  %v1672 = vunpack.c.h.b16 %v322
  %v1673 = vunpack.c.l.b16 %v323
  %v1674 = vunpack.c.h.b16 %v323
  %v1675 = vunpack.c.l.b16 %v324
  %v1676 = vunpack.c.h.b16 %v324
  %v1677 = vunpack.c.l.b16 %v325
  %v1678 = vunpack.c.h.b16 %v325
  %v1679 = vunpack.c.l.b16 %v326
  %v1680 = vunpack.c.h.b16 %v326
  %v1681 = vunpack.c.l.b16 %v327
  %v1682 = vunpack.c.h.b16 %v327
  %v1683 = vunpack.c.l.b16 %v328
  %v1684 = vunpack.c.h.b16 %v328
  %v1685 = vunpack.c.l.b16 %v329
  %v1686 = vunpack.c.h.b16 %v329
  %v1687 = vunpack.c.l.b16 %v330
  %v1688 = vunpack.c.h.b16 %v330
  %v1689 = vunpack.c.l.b16 %v331
  %v1690 = vunpack.c.h.b16 %v331
  %v1691 = vunpack.c.l.b16 %v332
  %v1692 = vunpack.c.h.b16 %v332
  %v1693 = vunpack.c.l.b16 %v333
  %v1694 = vunpack.c.h.b16 %v333
  %v1695 = vunpack.c.l.b16 %v334
  %v1696 = vunpack.c.h.b16 %v334
  %v1697 = vunpack.c.l.b16 %v335
  %v1698 = vunpack.c.h.b16 %v335
  %v1699 = vunpack.c.l.b16 %v336
  %v1700 = vunpack.c.h.b16 %v336
  %v1701 = vunpack.c.l.b16 %v337
  %v1702 = vunpack.c.h.b16 %v337
  %v1703 = vunpack.c.l.b16 %v338
  %v1704 = vunpack.c.h.b16 %v338
  %v1705 = vunpack.c.l.b16 %v339
  %v1706 = vunpack.c.h.b16 %v339
  %v1707 = vunpack.c.l.b16 %v340
  %v1708 = vunpack.c.h.b16 %v340
  %v1709 = vunpack.c.l.b16 %v341
  %v1710 = vunpack.c.h.b16 %v341
  %v1711 = vunpack.c.l.b16 %v342
  %v1712 = vunpack.c.h.b16 %v342
  %v1713 = vunpack.c.l.b16 %v343
  %v1714 = vunpack.c.h.b16 %v343
  %v1715 = vunpack.c.l.b16 %v344
  %v1716 = vunpack.c.h.b16 %v344
  %v1717 = vunpack.c.l.b16 %v345
  %v1718 = vunpack.c.h.b16 %v345
  %v1719 = vunpack.c.l.b16 %v346
  %v1720 = vunpack.c.h.b16 %v346
  %v1721 = vunpack.c.l.b16 %v347
  %v1722 = vunpack.c.h.b16 %v347
  %v1723 = vunpack.c.l.b16 %v348
  %v1724 = vunpack.c.h.b16 %v348
  %v1725 = vunpack.c.l.b16 %v349
  %v1726 = vunpack.c.h.b16 %v349
  %v1727 = vunpack.c.l.b16 %v350
  %v1728 = vunpack.c.h.b16 %v350
  %v1729 = vunpack.c.l.b16 %v351
  %v1730 = vunpack.c.h.b16 %v351
  %v1731 = vunpack.c.l.b16 %v352
  %v1732 = vunpack.c.h.b16 %v352
  %v1733 = vunpack.c.l.b16 %v353
  %v1734 = vunpack.c.h.b16 %v353
  %v1735 = vunpack.c.l.b16 %v354
  %v1736 = vunpack.c.h.b16 %v354
  %v1737 = vunpack.c.l.b16 %v355
  %v1738 = vunpack.c.h.b16 %v355
  %v1739 = vunpack.c.l.b16 %v356
  %v1740 = vunpack.c.h.b16 %v356
  %v1741 = vunpack.c.l.b16 %v357
  %v1742 = vunpack.c.h.b16 %v357
  %v1743 = vunpack.c.l.b16 %v358
  %v1744 = vunpack.c.h.b16 %v358
  %v1745 = vunpack.c.l.b16 %v359
  %v1746 = vunpack.c.h.b16 %v359
  %v1747 = vunpack.c.l.b16 %v360
  %v1748 = vunpack.c.h.b16 %v360
  %v1749 = vunpack.c.l.b16 %v361
  %v1750 = vunpack.c.h.b16 %v361
  %v1751 = vunpack.c.l.b16 %v362
  %v1752 = vunpack.c.h.b16 %v362
  %v1753 = vunpack.c.l.b16 %v363
  %v1754 = vunpack.c.h.b16 %v363
  %v1755 = vunpack.c.l.b16 %v364
  %v1756 = vunpack.c.h.b16 %v364
  %v1757 = vunpack.c.l.b16 %v365
  %v1758 = vunpack.c.h.b16 %v365
  %v1759 = vunpack.c.l.b16 %v366
  %v1760 = vunpack.c.h.b16 %v366
  %v1761 = vunpack.c.l.b16 %v367
  %v1762 = vunpack.c.h.b16 %v367
  %v1763 = vunpack.c.l.b16 %v368
  %v1764 = vunpack.c.h.b16 %v368
  %v1765 = vunpack.c.l.b16 %v369
  %v1766 = vunpack.c.h.b16 %v369
  %v1767 = vunpack.c.l.b16 %v370
  %v1768 = vunpack.c.h.b16 %v370
  %v1769 = vunpack.c.l.b16 %v371
  %v1770 = vunpack.c.h.b16 %v371
  %v1771 = vunpack.c.l.b16 %v372
  %v1772 = vunpack.c.h.b16 %v372
  %v1773 = vunpack.c.l.b16 %v373
  %v1774 = vunpack.c.h.b16 %v373
  %v1775 = vunpack.c.l.b16 %v374
  %v1776 = vunpack.c.h.b16 %v374
  %v1777 = vunpack.c.l.b16 %v375
  %v1778 = vunpack.c.h.b16 %v375
  %v1779 = vunpack.c.l.b16 %v376
  %v1780 = vunpack.c.h.b16 %v376
  %v1781 = vunpack.c.l.b16 %v377
  %v1782 = vunpack.c.h.b16 %v377
  %v1783 = vunpack.c.l.b16 %v378
  %v1784 = vunpack.c.h.b16 %v378
  %v1785 = vunpack.c.l.b16 %v379
  %v1786 = vunpack.c.h.b16 %v379
  %v1787 = vunpack.c.l.b16 %v380
  %v1788 = vunpack.c.h.b16 %v380
  %v1789 = vunpack.c.l.b16 %v381
  %v1790 = vunpack.c.h.b16 %v381
  %v1791 = vunpack.c.l.b16 %v382
  %v1792 = vunpack.c.h.b16 %v382
  %v1793 = vunpack.c.l.b16 %v383
  %v1794 = vunpack.c.h.b16 %v383
  %v1795 = vunpack.c.l.b16 %v384
  %v1796 = vunpack.c.h.b16 %v384
  %v1797 = vunpack.c.l.b16 %v385
  %v1798 = vunpack.c.h.b16 %v385
  %v1799 = vunpack.c.l.b16 %v386
  %v1800 = vunpack.c.h.b16 %v386
  %v1801 = vunpack.c.l.b16 %v387
  %v1802 = vunpack.c.h.b16 %v387
  %v1803 = vunpack.c.l.b16 %v388
  %v1804 = vunpack.c.h.b16 %v388
  %v1805 = vunpack.c.l.b16 %v389
  %v1806 = vunpack.c.h.b16 %v389
  %v1807 = vunpack.c.l.b16 %v390
  %v1808 = vunpack.c.h.b16 %v390
  %v1809 = vunpack.c.l.b16 %v391
  %v1810 = vunpack.c.h.b16 %v391
  %v1811 = vunpack.c.l.b16 %v392
  %v1812 = vunpack.c.h.b16 %v392
  %v1813 = vunpack.c.l.b16 %v393
  %v1814 = vunpack.c.h.b16 %v393
  %v1815 = vunpack.c.l.b16 %v394
  %v1816 = vunpack.c.h.b16 %v394
  %v1817 = vunpack.c.l.b16 %v395
  %v1818 = vunpack.c.h.b16 %v395
  %v1819 = vunpack.c.l.b16 %v396
  %v1820 = vunpack.c.h.b16 %v396
  %v1821 = vunpack.c.l.b16 %v397
  %v1822 = vunpack.c.h.b16 %v397
  %v1823 = vunpack.c.l.b16 %v398
  %v1824 = vunpack.c.h.b16 %v398
  %v1825 = vunpack.c.l.b16 %v399
  %v1826 = vunpack.c.h.b16 %v399
  %v1827 = vunpack.c.l.b16 %v400
  %v1828 = vunpack.c.h.b16 %v400
  %v1829 = vunpack.c.l.b16 %v401
  %v1830 = vunpack.c.h.b16 %v401
  %v1831 = vunpack.c.l.b16 %v402
  %v1832 = vunpack.c.h.b16 %v402
  %v1833 = vunpack.c.l.b16 %v403
  %v1834 = vunpack.c.h.b16 %v403
  %v1835 = vunpack.c.l.b16 %v404
  %v1836 = vunpack.c.h.b16 %v404
  %v1837 = vunpack.c.l.b16 %v405
  %v1838 = vunpack.c.h.b16 %v405
  %v1839 = vunpack.c.l.b16 %v406
  %v1840 = vunpack.c.h.b16 %v406
  %v1841 = vunpack.c.l.b16 %v407
  %v1842 = vunpack.c.h.b16 %v407
  %v1843 = vunpack.c.l.b16 %v408
  %v1844 = vunpack.c.h.b16 %v408
  %v1845 = vunpack.c.l.b16 %v409
  %v1846 = vunpack.c.h.b16 %v409
  %v1847 = vunpack.c.l.b16 %v410
  %v1848 = vunpack.c.h.b16 %v410
  %v1849 = vunpack.c.l.b16 %v411
  %v1850 = vunpack.c.h.b16 %v411
  %v1851 = vunpack.c.l.b16 %v412
  %v1852 = vunpack.c.h.b16 %v412
  %v1853 = vunpack.c.l.b16 %v413
  %v1854 = vunpack.c.h.b16 %v413
  %v1855 = vunpack.c.l.b16 %v414
  %v1856 = vunpack.c.h.b16 %v414
  %v1857 = vunpack.c.l.b16 %v415
  %v1858 = vunpack.c.h.b16 %v415
  %v1859 = vunpack.c.l.b16 %v416
  %v1860 = vunpack.c.h.b16 %v416
  %v1861 = vunpack.c.l.b16 %v417
  %v1862 = vunpack.c.h.b16 %v417
  %v1863 = vunpack.c.l.b16 %v418
  %v1864 = vunpack.c.h.b16 %v418
  %v1865 = vunpack.c.l.b16 %v419
  %v1866 = vunpack.c.h.b16 %v419
  %v1867 = vunpack.c.l.b16 %v420
  %v1868 = vunpack.c.h.b16 %v420
  %v1869 = vunpack.c.l.b16 %v421
  %v1870 = vunpack.c.h.b16 %v421
  %v1871 = vunpack.c.l.b16 %v422
  %v1872 = vunpack.c.h.b16 %v422
  %v1873 = vunpack.c.l.b16 %v423
  %v1874 = vunpack.c.h.b16 %v423
  %v1875 = vunpack.c.l.b16 %v424
  %v1876 = vunpack.c.h.b16 %v424
  %v1877 = vunpack.c.l.b16 %v425
  %v1878 = vunpack.c.h.b16 %v425
  %v1879 = vunpack.c.l.b16 %v426
  %v1880 = vunpack.c.h.b16 %v426
  %v1881 = vunpack.c.l.b16 %v427
  %v1882 = vunpack.c.h.b16 %v427
  %v1883 = vunpack.c.l.b16 %v428
  %v1884 = vunpack.c.h.b16 %v428
  %v1885 = vunpack.c.l.b16 %v429
  %v1886 = vunpack.c.h.b16 %v429
  %v1887 = vunpack.c.l.b16 %v430
  %v1888 = vunpack.c.h.b16 %v430
  %v1889 = vunpack.c.l.b16 %v431
  %v1890 = vunpack.c.h.b16 %v431
  %v1891 = vunpack.c.l.b16 %v432
  %v1892 = vunpack.c.h.b16 %v432
  %v1893 = vunpack.c.l.b16 %v433
  %v1894 = vunpack.c.h.b16 %v433
  %v1895 = vunpack.c.l.b16 %v434
  %v1896 = vunpack.c.h.b16 %v434
  %v1897 = vunpack.c.l.b16 %v435
  %v1898 = vunpack.c.h.b16 %v435
  %v1899 = vunpack.c.l.b16 %v436
  %v1900 = vunpack.c.h.b16 %v436
  %v1901 = vunpack.c.l.b16 %v437
  %v1902 = vunpack.c.h.b16 %v437
  %v1903 = vunpack.c.l.b16 %v438
  %v1904 = vunpack.c.h.b16 %v438
  %v1905 = vunpack.c.l.b16 %v439
  %v1906 = vunpack.c.h.b16 %v439
  %v1907 = vunpack.c.l.b16 %v440
  %v1908 = vunpack.c.h.b16 %v440
  %v1909 = vunpack.c.l.b16 %v441
  %v1910 = vunpack.c.h.b16 %v441
  %v1911 = vunpack.c.l.b16 %v442
  %v1912 = vunpack.c.h.b16 %v442
  %v1913 = vunpack.c.l.b16 %v443
  %v1914 = vunpack.c.h.b16 %v443
  %v1915 = vunpack.c.l.b16 %v444
  %v1916 = vunpack.c.h.b16 %v444
  %v1917 = vunpack.c.l.b16 %v445
  %v1918 = vunpack.c.h.b16 %v445
  %v1919 = vunpack.c.l.b16 %v446
  %v1920 = vunpack.c.h.b16 %v446
  %v1921 = vunpack.c.l.b16 %v447
  %v1922 = vunpack.c.h.b16 %v447
  %v1923 = vunpack.c.l.b16 %v448
  %v1924 = vunpack.c.h.b16 %v448
  %v1925 = vunpack.c.l.b16 %v449
  %v1926 = vunpack.c.h.b16 %v449
  %v1927 = vunpack.c.l.b16 %v450
  %v1928 = vunpack.c.h.b16 %v450
  %v1929 = vunpack.c.l.b16 %v451
  %v1930 = vunpack.c.h.b16 %v451
  %v1931 = vunpack.c.l.b16 %v452
  %v1932 = vunpack.c.h.b16 %v452
  %v1933 = vunpack.c.l.b16 %v453
  %v1934 = vunpack.c.h.b16 %v453
  %v1935 = vunpack.c.l.b16 %v454
  %v1936 = vunpack.c.h.b16 %v454
  %v1937 = vunpack.c.l.b16 %v455
  %v1938 = vunpack.c.h.b16 %v455
  %v1939 = vunpack.c.l.b16 %v456
  %v1940 = vunpack.c.h.b16 %v456
  %v1941 = vunpack.c.l.b16 %v457
  %v1942 = vunpack.c.h.b16 %v457
  %v1943 = vunpack.c.l.b16 %v458
  %v1944 = vunpack.c.h.b16 %v458
  %v1945 = vunpack.c.l.b16 %v459
  %v1946 = vunpack.c.h.b16 %v459
  %v1947 = vunpack.c.l.b16 %v460
  %v1948 = vunpack.c.h.b16 %v460
  %v1949 = vunpack.c.l.b16 %v461
  %v1950 = vunpack.c.h.b16 %v461
  %v1951 = vunpack.c.l.b16 %v462
  %v1952 = vunpack.c.h.b16 %v462
  %v1953 = vunpack.c.l.b16 %v463
  %v1954 = vunpack.c.h.b16 %v463
  %v1955 = vunpack.c.l.b16 %v464
  %v1956 = vunpack.c.h.b16 %v464
  %v1957 = vunpack.c.l.b16 %v465
  %v1958 = vunpack.c.h.b16 %v465
  %v1959 = vunpack.c.l.b16 %v466
  %v1960 = vunpack.c.h.b16 %v466
  %v1961 = vunpack.c.l.b16 %v467
  %v1962 = vunpack.c.h.b16 %v467
  %v1963 = vunpack.c.l.b16 %v468
  %v1964 = vunpack.c.h.b16 %v468
  %v1965 = vunpack.c.l.b16 %v469
  %v1966 = vunpack.c.h.b16 %v469
  %v1967 = vunpack.c.l.b16 %v470
  %v1968 = vunpack.c.h.b16 %v470
  %v1969 = vunpack.c.l.b16 %v471
  %v1970 = vunpack.c.h.b16 %v471
  %v1971 = vunpack.c.l.b16 %v472
  %v1972 = vunpack.c.h.b16 %v472
  %v1973 = vunpack.c.l.b16 %v473
  %v1974 = vunpack.c.h.b16 %v473
  %v1975 = vunpack.c.l.b16 %v474
  %v1976 = vunpack.c.h.b16 %v474
  %v1977 = vunpack.c.l.b16 %v475
  %v1978 = vunpack.c.h.b16 %v475
  %v1979 = vunpack.c.l.b16 %v476
  %v1980 = vunpack.c.h.b16 %v476
  %v1981 = vunpack.c.l.b16 %v477
  %v1982 = vunpack.c.h.b16 %v477
  %v1983 = vunpack.c.l.b16 %v478
  %v1984 = vunpack.c.h.b16 %v478
  %v1985 = vunpack.c.l.b16 %v479
  %v1986 = vunpack.c.h.b16 %v479
  %v1987 = vunpack.c.l.b16 %v480
  %v1988 = vunpack.c.h.b16 %v480
  %v1989 = vunpack.c.l.b16 %v481
  %v1990 = vunpack.c.h.b16 %v481
  %v1991 = vunpack.c.l.b16 %v482
  %v1992 = vunpack.c.h.b16 %v482
  %v1993 = vunpack.c.l.b16 %v483
  %v1994 = vunpack.c.h.b16 %v483
  %v1995 = vunpack.c.l.b16 %v484
  %v1996 = vunpack.c.h.b16 %v484
  %v1997 = vunpack.c.l.b16 %v485
  %v1998 = vunpack.c.h.b16 %v485
  %v1999 = vunpack.c.l.b16 %v486
  %v2000 = vunpack.c.h.b16 %v486
  %v2001 = vunpack.c.l.b16 %v487
  %v2002 = vunpack.c.h.b16 %v487
  %v2003 = vunpack.c.l.b16 %v488
  %v2004 = vunpack.c.h.b16 %v488
  %v2005 = vunpack.c.l.b16 %v489
  %v2006 = vunpack.c.h.b16 %v489
  %v2007 = vunpack.c.l.b16 %v490
  %v2008 = vunpack.c.h.b16 %v490
  %v2009 = vunpack.c.l.b16 %v491
  %v2010 = vunpack.c.h.b16 %v491
  %v2011 = vunpack.c.l.b16 %v492
  %v2012 = vunpack.c.h.b16 %v492
  %v2013 = vunpack.c.l.b16 %v493
  %v2014 = vunpack.c.h.b16 %v493
  %v2015 = vunpack.c.l.b16 %v494
  %v2016 = vunpack.c.h.b16 %v494
  %v2017 = vunpack.c.l.b16 %v495
  %v2018 = vunpack.c.h.b16 %v495
  %v2019 = vunpack.c.l.b16 %v496
  %v2020 = vunpack.c.h.b16 %v496
  %v2021 = vunpack.c.l.b16 %v497
  %v2022 = vunpack.c.h.b16 %v497
  %v2023 = vunpack.c.l.b16 %v498
  %v2024 = vunpack.c.h.b16 %v498
  %v2025 = vunpack.c.l.b16 %v499
  %v2026 = vunpack.c.h.b16 %v499
  %v2027 = vunpack.c.l.b16 %v500
  %v2028 = vunpack.c.h.b16 %v500
  %v2029 = vunpack.c.l.b16 %v501
  %v2030 = vunpack.c.h.b16 %v501
  %v2031 = vunpack.c.l.b16 %v502
  %v2032 = vunpack.c.h.b16 %v502
  %v2033 = vunpack.c.l.b16 %v503
  %v2034 = vunpack.c.h.b16 %v503
  %v2035 = vunpack.c.l.b16 %v504
  %v2036 = vunpack.c.h.b16 %v504
  %v2037 = vunpack.c.l.b16 %v505
  %v2038 = vunpack.c.h.b16 %v505
  %v2039 = vunpack.c.l.b16 %v506
  %v2040 = vunpack.c.h.b16 %v506
  %v2041 = vunpack.c.l.b16 %v507
  %v2042 = vunpack.c.h.b16 %v507
  %v2043 = vunpack.c.l.b16 %v508
  %v2044 = vunpack.c.h.b16 %v508
  %v2045 = vunpack.c.l.b16 %v509
  %v2046 = vunpack.c.h.b16 %v509
  %v2047 = vunpack.c.l.b16 %v510
  %v2048 = vunpack.c.h.b16 %v510
  %v2049 = vpack.c.b16 %v1093, %v1089
  %v2050 = vpack.c.b16 %v1094, %v1090
  %v2051 = vpack.c.b16 %v1095, %v1091
  %v2052 = vpack.c.b16 %v1096, %v1092
  %v2053 = vpack.c.b16 %v1101, %v1097
  %v2054 = vpack.c.b16 %v1102, %v1098
  %v2055 = vpack.c.b16 %v1103, %v1099
  %v2056 = vpack.c.b16 %v1104, %v1100
  %v2057 = vpack.c.b16 %v1109, %v1105
  %v2058 = vpack.c.b16 %v1110, %v1106
  %v2059 = vpack.c.b16 %v1111, %v1107
  %v2060 = vpack.c.b16 %v1112, %v1108
  %v2061 = vpack.c.b16 %v1117, %v1113
  %v2062 = vpack.c.b16 %v1118, %v1114
  %v2063 = vpack.c.b16 %v1119, %v1115
  %v2064 = vpack.c.b16 %v1120, %v1116
  %v2065 = vpack.c.b16 %v1125, %v1121
  %v2066 = vpack.c.b16 %v1126, %v1122
  %v2067 = vpack.c.b16 %v1127, %v1123
  %v2068 = vpack.c.b16 %v1128, %v1124
  %v2069 = vpack.c.b16 %v1133, %v1129
  %v2070 = vpack.c.b16 %v1134, %v1130
  %v2071 = vpack.c.b16 %v1135, %v1131
  %v2072 = vpack.c.b16 %v1136, %v1132
  %v2073 = vpack.c.b16 %v1141, %v1137
  %v2074 = vpack.c.b16 %v1142, %v1138
  %v2075 = vpack.c.b16 %v1143, %v1139
  %v2076 = vpack.c.b16 %v1144, %v1140
  %v2077 = vpack.c.b16 %v1149, %v1145
  %v2078 = vpack.c.b16 %v1150, %v1146
  %v2079 = vpack.c.b16 %v1151, %v1147
  %v2080 = vpack.c.b16 %v1152, %v1148
  %v2081 = vpack.c.b16 %v1157, %v1153
  %v2082 = vpack.c.b16 %v1158, %v1154
  %v2083 = vpack.c.b16 %v1159, %v1155
  %v2084 = vpack.c.b16 %v1160, %v1156
  %v2085 = vpack.c.b16 %v1165, %v1161
  %v2086 = vpack.c.b16 %v1166, %v1162
  %v2087 = vpack.c.b16 %v1167, %v1163
  %v2088 = vpack.c.b16 %v1168, %v1164
  %v2089 = vpack.c.b16 %v1173, %v1169
  %v2090 = vpack.c.b16 %v1174, %v1170
  %v2091 = vpack.c.b16 %v1175, %v1171
  %v2092 = vpack.c.b16 %v1176, %v1172
  %v2093 = vpack.c.b16 %v1181, %v1177
  %v2094 = vpack.c.b16 %v1182, %v1178
  %v2095 = vpack.c.b16 %v1183, %v1179
  %v2096 = vpack.c.b16 %v1184, %v1180
  %v2097 = vpack.c.b16 %v1189, %v1185
  %v2098 = vpack.c.b16 %v1190, %v1186
  %v2099 = vpack.c.b16 %v1191, %v1187
  %v2100 = vpack.c.b16 %v1192, %v1188
  %v2101 = vpack.c.b16 %v1197, %v1193
  %v2102 = vpack.c.b16 %v1198, %v1194
  %v2103 = vpack.c.b16 %v1199, %v1195
  %v2104 = vpack.c.b16 %v1200, %v1196
  %v2105 = vpack.c.b16 %v1205, %v1201
  %v2106 = vpack.c.b16 %v1206, %v1202
  %v2107 = vpack.c.b16 %v1207, %v1203
  %v2108 = vpack.c.b16 %v1208, %v1204
  %v2109 = vpack.c.b16 %v1213, %v1209
  %v2110 = vpack.c.b16 %v1214, %v1210
  %v2111 = vpack.c.b16 %v1215, %v1211
  %v2112 = vpack.c.b16 %v1216, %v1212
  %v2113 = vpack.c.b16 %v1221, %v1217
  %v2114 = vpack.c.b16 %v1222, %v1218
  %v2115 = vpack.c.b16 %v1223, %v1219
  %v2116 = vpack.c.b16 %v1224, %v1220
  %v2117 = vpack.c.b16 %v1229, %v1225
  %v2118 = vpack.c.b16 %v1230, %v1226
  %v2119 = vpack.c.b16 %v1231, %v1227
  %v2120 = vpack.c.b16 %v1232, %v1228
  %v2121 = vpack.c.b16 %v1237, %v1233
  %v2122 = vpack.c.b16 %v1238, %v1234
  %v2123 = vpack.c.b16 %v1239, %v1235
  %v2124 = vpack.c.b16 %v1240, %v1236
  %v2125 = vpack.c.b16 %v1245, %v1241
  %v2126 = vpack.c.b16 %v1246, %v1242
  %v2127 = vpack.c.b16 %v1247, %v1243
  %v2128 = vpack.c.b16 %v1248, %v1244
  %v2129 = vpack.c.b16 %v1253, %v1249
  %v2130 = vpack.c.b16 %v1254, %v1250
  %v2131 = vpack.c.b16 %v1255, %v1251
  %v2132 = vpack.c.b16 %v1256, %v1252
  %v2133 = vpack.c.b16 %v1261, %v1257
  %v2134 = vpack.c.b16 %v1262, %v1258
  %v2135 = vpack.c.b16 %v1263, %v1259
  %v2136 = vpack.c.b16 %v1264, %v1260
  %v2137 = vpack.c.b16 %v1269, %v1265
  %v2138 = vpack.c.b16 %v1270, %v1266
  %v2139 = vpack.c.b16 %v1271, %v1267
  %v2140 = vpack.c.b16 %v1272, %v1268
  %v2141 = vpack.c.b16 %v1277, %v1273
  %v2142 = vpack.c.b16 %v1278, %v1274
  %v2143 = vpack.c.b16 %v1279, %v1275
  %v2144 = vpack.c.b16 %v1280, %v1276
  %v2145 = vpack.c.b16 %v1285, %v1281
  %v2146 = vpack.c.b16 %v1286, %v1282
  %v2147 = vpack.c.b16 %v1287, %v1283
  %v2148 = vpack.c.b16 %v1288, %v1284
  %v2149 = vpack.c.b16 %v1293, %v1289
  %v2150 = vpack.c.b16 %v1294, %v1290
  %v2151 = vpack.c.b16 %v1295, %v1291
  %v2152 = vpack.c.b16 %v1296, %v1292
  %v2153 = vpack.c.b16 %v1301, %v1297
  %v2154 = vpack.c.b16 %v1302, %v1298
  %v2155 = vpack.c.b16 %v1303, %v1299
  %v2156 = vpack.c.b16 %v1304, %v1300
  %v2157 = vpack.c.b16 %v1309, %v1305
  %v2158 = vpack.c.b16 %v1310, %v1306
  %v2159 = vpack.c.b16 %v1311, %v1307
  %v2160 = vpack.c.b16 %v1312, %v1308
  %v2161 = vpack.c.b16 %v1317, %v1313
  %v2162 = vpack.c.b16 %v1318, %v1314
  %v2163 = vpack.c.b16 %v1319, %v1315
  %v2164 = vpack.c.b16 %v1320, %v1316
  %v2165 = vpack.c.b16 %v1325, %v1321
  %v2166 = vpack.c.b16 %v1326, %v1322
  %v2167 = vpack.c.b16 %v1327, %v1323
  %v2168 = vpack.c.b16 %v1328, %v1324
  %v2169 = vpack.c.b16 %v1333, %v1329
  %v2170 = vpack.c.b16 %v1334, %v1330
  %v2171 = vpack.c.b16 %v1335, %v1331
  %v2172 = vpack.c.b16 %v1336, %v1332
  %v2173 = vpack.c.b16 %v1341, %v1337
  %v2174 = vpack.c.b16 %v1342, %v1338
  %v2175 = vpack.c.b16 %v1343, %v1339
  %v2176 = vpack.c.b16 %v1344, %v1340
  %v2177 = vpack.c.b16 %v1349, %v1345
  %v2178 = vpack.c.b16 %v1350, %v1346
  %v2179 = vpack.c.b16 %v1351, %v1347
  %v2180 = vpack.c.b16 %v1352, %v1348
  %v2181 = vpack.c.b16 %v1357, %v1353
  %v2182 = vpack.c.b16 %v1358, %v1354
  %v2183 = vpack.c.b16 %v1359, %v1355
  %v2184 = vpack.c.b16 %v1360, %v1356
  %v2185 = vpack.c.b16 %v1365, %v1361
  %v2186 = vpack.c.b16 %v1366, %v1362
  %v2187 = vpack.c.b16 %v1367, %v1363
  %v2188 = vpack.c.b16 %v1368, %v1364
  %v2189 = vpack.c.b16 %v1373, %v1369
  %v2190 = vpack.c.b16 %v1374, %v1370
  %v2191 = vpack.c.b16 %v1375, %v1371
  %v2192 = vpack.c.b16 %v1376, %v1372
  %v2193 = vpack.c.b16 %v1381, %v1377
  %v2194 = vpack.c.b16 %v1382, %v1378
  %v2195 = vpack.c.b16 %v1383, %v1379
  %v2196 = vpack.c.b16 %v1384, %v1380
  %v2197 = vpack.c.b16 %v1389, %v1385
  %v2198 = vpack.c.b16 %v1390, %v1386
  %v2199 = vpack.c.b16 %v1391, %v1387
  %v2200 = vpack.c.b16 %v1392, %v1388
  %v2201 = vpack.c.b16 %v1397, %v1393
  %v2202 = vpack.c.b16 %v1398, %v1394
  %v2203 = vpack.c.b16 %v1399, %v1395
  %v2204 = vpack.c.b16 %v1400, %v1396
  %v2205 = vpack.c.b16 %v1405, %v1401
  %v2206 = vpack.c.b16 %v1406, %v1402
  %v2207 = vpack.c.b16 %v1407, %v1403
  %v2208 = vpack.c.b16 %v1408, %v1404
  %v2209 = vpack.c.b16 %v1413, %v1409
  %v2210 = vpack.c.b16 %v1414, %v1410
  %v2211 = vpack.c.b16 %v1415, %v1411
  %v2212 = vpack.c.b16 %v1416, %v1412
  %v2213 = vpack.c.b16 %v1421, %v1417
  %v2214 = vpack.c.b16 %v1422, %v1418
  %v2215 = vpack.c.b16 %v1423, %v1419
  %v2216 = vpack.c.b16 %v1424, %v1420
  %v2217 = vpack.c.b16 %v1429, %v1425
  %v2218 = vpack.c.b16 %v1430, %v1426
  %v2219 = vpack.c.b16 %v1431, %v1427
  %v2220 = vpack.c.b16 %v1432, %v1428
  %v2221 = vpack.c.b16 %v1437, %v1433
  %v2222 = vpack.c.b16 %v1438, %v1434
  %v2223 = vpack.c.b16 %v1439, %v1435
  %v2224 = vpack.c.b16 %v1440, %v1436
  %v2225 = vpack.c.b16 %v1445, %v1441
  %v2226 = vpack.c.b16 %v1446, %v1442
  %v2227 = vpack.c.b16 %v1447, %v1443
  %v2228 = vpack.c.b16 %v1448, %v1444
  %v2229 = vpack.c.b16 %v1453, %v1449
  %v2230 = vpack.c.b16 %v1454, %v1450
  %v2231 = vpack.c.b16 %v1455, %v1451
  %v2232 = vpack.c.b16 %v1456, %v1452
  %v2233 = vpack.c.b16 %v1461, %v1457
  %v2234 = vpack.c.b16 %v1462, %v1458
  %v2235 = vpack.c.b16 %v1463, %v1459
  %v2236 = vpack.c.b16 %v1464, %v1460
  %v2237 = vpack.c.b16 %v1469, %v1465
  %v2238 = vpack.c.b16 %v1470, %v1466
  %v2239 = vpack.c.b16 %v1471, %v1467
  %v2240 = vpack.c.b16 %v1472, %v1468
  %v2241 = vpack.c.b16 %v1477, %v1473
  %v2242 = vpack.c.b16 %v1478, %v1474
  %v2243 = vpack.c.b16 %v1479, %v1475
  %v2244 = vpack.c.b16 %v1480, %v1476
  %v2245 = vpack.c.b16 %v1485, %v1481
  %v2246 = vpack.c.b16 %v1486, %v1482
  %v2247 = vpack.c.b16 %v1487, %v1483
  %v2248 = vpack.c.b16 %v1488, %v1484
  %v2249 = vpack.c.b16 %v1493, %v1489
  %v2250 = vpack.c.b16 %v1494, %v1490
  %v2251 = vpack.c.b16 %v1495, %v1491
  %v2252 = vpack.c.b16 %v1496, %v1492
  %v2253 = vpack.c.b16 %v1501, %v1497
  %v2254 = vpack.c.b16 %v1502, %v1498
  %v2255 = vpack.c.b16 %v1503, %v1499
  %v2256 = vpack.c.b16 %v1504, %v1500
  %v2257 = vpack.c.b16 %v1509, %v1505
  %v2258 = vpack.c.b16 %v1510, %v1506
  %v2259 = vpack.c.b16 %v1511, %v1507
  %v2260 = vpack.c.b16 %v1512, %v1508
  %v2261 = vpack.c.b16 %v1517, %v1513
  %v2262 = vpack.c.b16 %v1518, %v1514
  %v2263 = vpack.c.b16 %v1519, %v1515
  %v2264 = vpack.c.b16 %v1520, %v1516
  %v2265 = vpack.c.b16 %v1525, %v1521
  %v2266 = vpack.c.b16 %v1526, %v1522
  %v2267 = vpack.c.b16 %v1527, %v1523
  %v2268 = vpack.c.b16 %v1528, %v1524
  %v2269 = vpack.c.b16 %v1533, %v1529
  %v2270 = vpack.c.b16 %v1534, %v1530
  %v2271 = vpack.c.b16 %v1535, %v1531
  %v2272 = vpack.c.b16 %v1536, %v1532
  %v2273 = vpack.c.b16 %v1541, %v1537
  %v2274 = vpack.c.b16 %v1542, %v1538
  %v2275 = vpack.c.b16 %v1543, %v1539
  %v2276 = vpack.c.b16 %v1544, %v1540
  %v2277 = vpack.c.b16 %v1549, %v1545
  %v2278 = vpack.c.b16 %v1550, %v1546
  %v2279 = vpack.c.b16 %v1551, %v1547
  %v2280 = vpack.c.b16 %v1552, %v1548
  %v2281 = vpack.c.b16 %v1557, %v1553
  %v2282 = vpack.c.b16 %v1558, %v1554
  %v2283 = vpack.c.b16 %v1559, %v1555
  %v2284 = vpack.c.b16 %v1560, %v1556
  %v2285 = vpack.c.b16 %v1565, %v1561
  %v2286 = vpack.c.b16 %v1566, %v1562
  %v2287 = vpack.c.b16 %v1567, %v1563
  %v2288 = vpack.c.b16 %v1568, %v1564
  %v2289 = vpack.c.b16 %v1573, %v1569
  %v2290 = vpack.c.b16 %v1574, %v1570
  %v2291 = vpack.c.b16 %v1575, %v1571
  %v2292 = vpack.c.b16 %v1576, %v1572
  %v2293 = vpack.c.b16 %v1581, %v1577
  %v2294 = vpack.c.b16 %v1582, %v1578
  %v2295 = vpack.c.b16 %v1583, %v1579
  %v2296 = vpack.c.b16 %v1584, %v1580
  %v2297 = vpack.c.b16 %v1589, %v1585
  %v2298 = vpack.c.b16 %v1590, %v1586
  %v2299 = vpack.c.b16 %v1591, %v1587
  %v2300 = vpack.c.b16 %v1592, %v1588
  %v2301 = vpack.c.b16 %v1597, %v1593
  %v2302 = vpack.c.b16 %v1598, %v1594
  %v2303 = vpack.c.b16 %v1599, %v1595
  %v2304 = vpack.c.b16 %v1600, %v1596
  %v2305 = vpack.c.b16 %v1605, %v1601
  %v2306 = vpack.c.b16 %v1606, %v1602
  %v2307 = vpack.c.b16 %v1607, %v1603
  %v2308 = vpack.c.b16 %v1608, %v1604
  %v2309 = vpack.c.b16 %v1613, %v1609
  %v2310 = vpack.c.b16 %v1614, %v1610
  %v2311 = vpack.c.b16 %v1615, %v1611
  %v2312 = vpack.c.b16 %v1616, %v1612
  %v2313 = vpack.c.b16 %v1621, %v1617
  %v2314 = vpack.c.b16 %v1622, %v1618
  %v2315 = vpack.c.b16 %v1623, %v1619
  %v2316 = vpack.c.b16 %v1624, %v1620
  %v2317 = vpack.c.b16 %v1629, %v1625
  %v2318 = vpack.c.b16 %v1630, %v1626
  %v2319 = vpack.c.b16 %v1631, %v1627
  %v2320 = vpack.c.b16 %v1632, %v1628
  %v2321 = vpack.c.b16 %v1637, %v1633
  %v2322 = vpack.c.b16 %v1638, %v1634
  %v2323 = vpack.c.b16 %v1639, %v1635
  %v2324 = vpack.c.b16 %v1640, %v1636
  %v2325 = vpack.c.b16 %v1645, %v1641
  %v2326 = vpack.c.b16 %v1646, %v1642
  %v2327 = vpack.c.b16 %v1647, %v1643
  %v2328 = vpack.c.b16 %v1648, %v1644
  %v2329 = vpack.c.b16 %v1653, %v1649
  %v2330 = vpack.c.b16 %v1654, %v1650
  %v2331 = vpack.c.b16 %v1655, %v1651
  %v2332 = vpack.c.b16 %v1656, %v1652
  %v2333 = vpack.c.b16 %v1661, %v1657
  %v2334 = vpack.c.b16 %v1662, %v1658
  %v2335 = vpack.c.b16 %v1663, %v1659
  %v2336 = vpack.c.b16 %v1664, %v1660
  %v2337 = vpack.c.b16 %v1669, %v1665
  %v2338 = vpack.c.b16 %v1670, %v1666
  %v2339 = vpack.c.b16 %v1671, %v1667
  %v2340 = vpack.c.b16 %v1672, %v1668
  %v2341 = vpack.c.b16 %v1677, %v1673
  %v2342 = vpack.c.b16 %v1678, %v1674
  %v2343 = vpack.c.b16 %v1679, %v1675
  %v2344 = vpack.c.b16 %v1680, %v1676
  %v2345 = vpack.c.b16 %v1685, %v1681
  %v2346 = vpack.c.b16 %v1686, %v1682
  %v2347 = vpack.c.b16 %v1687, %v1683
  %v2348 = vpack.c.b16 %v1688, %v1684
  %v2349 = vpack.c.b16 %v1693, %v1689
  %v2350 = vpack.c.b16 %v1694, %v1690
  %v2351 = vpack.c.b16 %v1695, %v1691
  %v2352 = vpack.c.b16 %v1696, %v1692
  %v2353 = vpack.c.b16 %v1701, %v1697
  %v2354 = vpack.c.b16 %v1702, %v1698
  %v2355 = vpack.c.b16 %v1703, %v1699
  %v2356 = vpack.c.b16 %v1704, %v1700
  %v2357 = vpack.c.b16 %v1709, %v1705
  %v2358 = vpack.c.b16 %v1710, %v1706
  %v2359 = vpack.c.b16 %v1711, %v1707
  %v2360 = vpack.c.b16 %v1712, %v1708
  %v2361 = vpack.c.b16 %v1717, %v1713
  %v2362 = vpack.c.b16 %v1718, %v1714
  %v2363 = vpack.c.b16 %v1719, %v1715
  %v2364 = vpack.c.b16 %v1720, %v1716
  %v2365 = vpack.c.b16 %v1725, %v1721
  %v2366 = vpack.c.b16 %v1726, %v1722
  %v2367 = vpack.c.b16 %v1727, %v1723
  %v2368 = vpack.c.b16 %v1728, %v1724
  %v2369 = vpack.c.b16 %v1733, %v1729
  %v2370 = vpack.c.b16 %v1734, %v1730
  %v2371 = vpack.c.b16 %v1735, %v1731
  %v2372 = vpack.c.b16 %v1736, %v1732
  %v2373 = vpack.c.b16 %v1741, %v1737
  %v2374 = vpack.c.b16 %v1742, %v1738
  %v2375 = vpack.c.b16 %v1743, %v1739
  %v2376 = vpack.c.b16 %v1744, %v1740
  %v2377 = vpack.c.b16 %v1749, %v1745
  %v2378 = vpack.c.b16 %v1750, %v1746
  %v2379 = vpack.c.b16 %v1751, %v1747
  %v2380 = vpack.c.b16 %v1752, %v1748
  %v2381 = vpack.c.b16 %v1757, %v1753
  %v2382 = vpack.c.b16 %v1758, %v1754
  %v2383 = vpack.c.b16 %v1759, %v1755
  %v2384 = vpack.c.b16 %v1760, %v1756
  %v2385 = vpack.c.b16 %v1765, %v1761
  %v2386 = vpack.c.b16 %v1766, %v1762
  %v2387 = vpack.c.b16 %v1767, %v1763
  %v2388 = vpack.c.b16 %v1768, %v1764
  %v2389 = vpack.c.b16 %v1773, %v1769
  %v2390 = vpack.c.b16 %v1774, %v1770
  %v2391 = vpack.c.b16 %v1775, %v1771
  %v2392 = vpack.c.b16 %v1776, %v1772
  %v2393 = vpack.c.b16 %v1781, %v1777
  %v2394 = vpack.c.b16 %v1782, %v1778
  %v2395 = vpack.c.b16 %v1783, %v1779
  %v2396 = vpack.c.b16 %v1784, %v1780
  %v2397 = vpack.c.b16 %v1789, %v1785
  %v2398 = vpack.c.b16 %v1790, %v1786
  %v2399 = vpack.c.b16 %v1791, %v1787
  %v2400 = vpack.c.b16 %v1792, %v1788
  %v2401 = vpack.c.b16 %v1797, %v1793
  %v2402 = vpack.c.b16 %v1798, %v1794
  %v2403 = vpack.c.b16 %v1799, %v1795
  %v2404 = vpack.c.b16 %v1800, %v1796
  %v2405 = vpack.c.b16 %v1805, %v1801
  %v2406 = vpack.c.b16 %v1806, %v1802
  %v2407 = vpack.c.b16 %v1807, %v1803
  %v2408 = vpack.c.b16 %v1808, %v1804
  %v2409 = vpack.c.b16 %v1813, %v1809
  %v2410 = vpack.c.b16 %v1814, %v1810
  %v2411 = vpack.c.b16 %v1815, %v1811
  %v2412 = vpack.c.b16 %v1816, %v1812
  %v2413 = vpack.c.b16 %v1821, %v1817
  %v2414 = vpack.c.b16 %v1822, %v1818
  %v2415 = vpack.c.b16 %v1823, %v1819
  %v2416 = vpack.c.b16 %v1824, %v1820
  %v2417 = vpack.c.b16 %v1829, %v1825
  %v2418 = vpack.c.b16 %v1830, %v1826
  %v2419 = vpack.c.b16 %v1831, %v1827
  %v2420 = vpack.c.b16 %v1832, %v1828
  %v2421 = vpack.c.b16 %v1837, %v1833
  %v2422 = vpack.c.b16 %v1838, %v1834
  %v2423 = vpack.c.b16 %v1839, %v1835
  %v2424 = vpack.c.b16 %v1840, %v1836
  %v2425 = vpack.c.b16 %v1845, %v1841
  %v2426 = vpack.c.b16 %v1846, %v1842
  %v2427 = vpack.c.b16 %v1847, %v1843
  %v2428 = vpack.c.b16 %v1848, %v1844
  %v2429 = vpack.c.b16 %v1853, %v1849
  %v2430 = vpack.c.b16 %v1854, %v1850
  %v2431 = vpack.c.b16 %v1855, %v1851
  %v2432 = vpack.c.b16 %v1856, %v1852
  %v2433 = vpack.c.b16 %v1861, %v1857
  %v2434 = vpack.c.b16 %v1862, %v1858
  %v2435 = vpack.c.b16 %v1863, %v1859
  %v2436 = vpack.c.b16 %v1864, %v1860
  %v2437 = vpack.c.b16 %v1869, %v1865
  %v2438 = vpack.c.b16 %v1870, %v1866
  %v2439 = vpack.c.b16 %v1871, %v1867
  %v2440 = vpack.c.b16 %v1872, %v1868
  %v2441 = vpack.c.b16 %v1877, %v1873
  %v2442 = vpack.c.b16 %v1878, %v1874
  %v2443 = vpack.c.b16 %v1879, %v1875
  %v2444 = vpack.c.b16 %v1880, %v1876
  %v2445 = vpack.c.b16 %v1885, %v1881
  %v2446 = vpack.c.b16 %v1886, %v1882
  %v2447 = vpack.c.b16 %v1887, %v1883
  %v2448 = vpack.c.b16 %v1888, %v1884
  %v2449 = vpack.c.b16 %v1893, %v1889
  %v2450 = vpack.c.b16 %v1894, %v1890
  %v2451 = vpack.c.b16 %v1895, %v1891
  %v2452 = vpack.c.b16 %v1896, %v1892
  %v2453 = vpack.c.b16 %v1901, %v1897
  %v2454 = vpack.c.b16 %v1902, %v1898
  %v2455 = vpack.c.b16 %v1903, %v1899
  %v2456 = vpack.c.b16 %v1904, %v1900
  %v2457 = vpack.c.b16 %v1909, %v1905
  %v2458 = vpack.c.b16 %v1910, %v1906
  %v2459 = vpack.c.b16 %v1911, %v1907
  %v2460 = vpack.c.b16 %v1912, %v1908
  %v2461 = vpack.c.b16 %v1917, %v1913
  %v2462 = vpack.c.b16 %v1918, %v1914
  %v2463 = vpack.c.b16 %v1919, %v1915
  %v2464 = vpack.c.b16 %v1920, %v1916
  %v2465 = vpack.c.b16 %v1925, %v1921
  %v2466 = vpack.c.b16 %v1926, %v1922
  %v2467 = vpack.c.b16 %v1927, %v1923
  %v2468 = vpack.c.b16 %v1928, %v1924
  %v2469 = vpack.c.b16 %v1933, %v1929
  %v2470 = vpack.c.b16 %v1934, %v1930
  %v2471 = vpack.c.b16 %v1935, %v1931
  %v2472 = vpack.c.b16 %v1936, %v1932
  %v2473 = vpack.c.b16 %v1941, %v1937
  %v2474 = vpack.c.b16 %v1942, %v1938
  %v2475 = vpack.c.b16 %v1943, %v1939
  %v2476 = vpack.c.b16 %v1944, %v1940
  %v2477 = vpack.c.b16 %v1949, %v1945
  %v2478 = vpack.c.b16 %v1950, %v1946
  %v2479 = vpack.c.b16 %v1951, %v1947
  %v2480 = vpack.c.b16 %v1952, %v1948
  %v2481 = vpack.c.b16 %v1957, %v1953
  %v2482 = vpack.c.b16 %v1958, %v1954
  %v2483 = vpack.c.b16 %v1959, %v1955
  %v2484 = vpack.c.b16 %v1960, %v1956
  %v2485 = vpack.c.b16 %v1965, %v1961
  %v2486 = vpack.c.b16 %v1966, %v1962
  %v2487 = vpack.c.b16 %v1967, %v1963
  %v2488 = vpack.c.b16 %v1968, %v1964
  %v2489 = vpack.c.b16 %v1973, %v1969
  %v2490 = vpack.c.b16 %v1974, %v1970
  %v2491 = vpack.c.b16 %v1975, %v1971
  %v2492 = vpack.c.b16 %v1976, %v1972
  %v2493 = vpack.c.b16 %v1981, %v1977
  %v2494 = vpack.c.b16 %v1982, %v1978
  %v2495 = vpack.c.b16 %v1983, %v1979
  %v2496 = vpack.c.b16 %v1984, %v1980
  %v2497 = vpack.c.b16 %v1989, %v1985
  %v2498 = vpack.c.b16 %v1990, %v1986
  %v2499 = vpack.c.b16 %v1991, %v1987
  %v2500 = vpack.c.b16 %v1992, %v1988
  %v2501 = vpack.c.b16 %v1997, %v1993
  %v2502 = vpack.c.b16 %v1998, %v1994
  %v2503 = vpack.c.b16 %v1999, %v1995
  %v2504 = vpack.c.b16 %v2000, %v1996
  %v2505 = vpack.c.b16 %v2005, %v2001
  %v2506 = vpack.c.b16 %v2006, %v2002
  %v2507 = vpack.c.b16 %v2007, %v2003
  %v2508 = vpack.c.b16 %v2008, %v2004
  %v2509 = vpack.c.b16 %v2013, %v2009
  %v2510 = vpack.c.b16 %v2014, %v2010
  %v2511 = vpack.c.b16 %v2015, %v2011
  %v2512 = vpack.c.b16 %v2016, %v2012
  %v2513 = vpack.c.b16 %v2021, %v2017
  %v2514 = vpack.c.b16 %v2022, %v2018
  %v2515 = vpack.c.b16 %v2023, %v2019
  %v2516 = vpack.c.b16 %v2024, %v2020
  %v2517 = vpack.c.b16 %v2029, %v2025
  %v2518 = vpack.c.b16 %v2030, %v2026
  %v2519 = vpack.c.b16 %v2031, %v2027
  %v2520 = vpack.c.b16 %v2032, %v2028
  %v2521 = vpack.c.b16 %v2037, %v2033
  %v2522 = vpack.c.b16 %v2038, %v2034
  %v2523 = vpack.c.b16 %v2039, %v2035
  %v2524 = vpack.c.b16 %v2040, %v2036
  %v2525 = vpack.c.b16 %v2045, %v2041
  %v2526 = vpack.c.b16 %v2046, %v2042
  %v2527 = vpack.c.b16 %v2047, %v2043
  %v2528 = vpack.c.b16 %v2048, %v2044
  %3009 = vmatprep.subr.bf16.mxu0 %v2078
  %3010 = vmatpush1.bf16.msra.mxu0 %v2077
  %3011 = vmatprep.subr.bf16.mxu0 %v2074
  %3012 = vmatpush1.bf16.msra.mxu0 %v2073
  %3013 = vmatprep.subr.bf16.mxu0 %v2070
  %3014 = vmatpush1.bf16.msra.mxu0 %v2069
  %3015 = vmatprep.subr.bf16.mxu0 %v2066
  %3016 = vmatpush1.bf16.msra.mxu0 %v2065
  %3017 = vmatprep.subr.bf16.mxu0 %v2062
  %3018 = vmatpush1.bf16.msra.mxu0 %v2061
  %3019 = vmatprep.subr.bf16.mxu0 %v2058
  %3020 = vmatpush1.bf16.msra.mxu0 %v2057
  %3021 = vmatprep.subr.bf16.mxu0 %v2054
  %3022 = vmatpush1.bf16.msra.mxu0 %v2053
  %3023 = vmatprep.subr.bf16.mxu0 %v2050
  %3024 = vmatpush1.bf16.msra.mxu0 %v2049
  %3025 = vmatprep.subr.bf16.mxu0 %v2110
  %3026 = vmatpush2.bf16.msra.mxu0 %v2109
  %3027 = vmatprep.subr.bf16.mxu0 %v2106
  %3028 = vmatpush2.bf16.msra.mxu0 %v2105
  %3029 = vmatprep.subr.bf16.mxu0 %v2102
  %3030 = vmatpush2.bf16.msra.mxu0 %v2101
  %3031 = vmatprep.subr.bf16.mxu0 %v2098
  %3032 = vmatpush2.bf16.msra.mxu0 %v2097
  %3033 = vmatprep.subr.bf16.mxu0 %v2094
  %3034 = vmatpush2.bf16.msra.mxu0 %v2093
  %3035 = vmatprep.subr.bf16.mxu0 %v2090
  %3036 = vmatpush2.bf16.msra.mxu0 %v2089
  %3037 = vmatprep.subr.bf16.mxu0 %v2086
  %3038 = vmatpush2.bf16.msra.mxu0 %v2085
  %3039 = vmatprep.subr.bf16.mxu0 %v2082
  %3040 = vmatpush2.bf16.msra.mxu0 %v2081
  %3041 = vmatprep.mubr.bf16.mxu0 %v580
  %3042 = vmatmul.mubr.bf16.gmra.mxu0 %v579
  %v3043 = vpop.f32.mrf.mxu0
  %v3044 = vadd.f32 %v516, %v3043
  %v3045 = vpop.f32.mrf.mxu0
  %v3046 = vadd.f32 %v520, %v3045
  %v3047 = vpop.f32.mrf.mxu0
  %v3048 = vadd.f32 %v516, %v3047
  %v3049 = vpop.f32.mrf.mxu0
  %v3050 = vadd.f32 %v520, %v3049
  %3051 = vdwg.mxu0
  %3052 = vmatprep.subr.bf16.mxu0 %v2142
  %3053 = vmatpush1.bf16.msra.mxu0 %v2141
  %3054 = vmatprep.subr.bf16.mxu0 %v2138
  %3055 = vmatpush1.bf16.msra.mxu0 %v2137
  %3056 = vmatprep.subr.bf16.mxu0 %v2134
  %3057 = vmatpush1.bf16.msra.mxu0 %v2133
  %3058 = vmatprep.subr.bf16.mxu0 %v2130
  %3059 = vmatpush1.bf16.msra.mxu0 %v2129
  %3060 = vmatprep.subr.bf16.mxu0 %v2126
  %3061 = vmatpush1.bf16.msra.mxu0 %v2125
  %3062 = vmatprep.subr.bf16.mxu0 %v2122
  %3063 = vmatpush1.bf16.msra.mxu0 %v2121
  %3064 = vmatprep.subr.bf16.mxu0 %v2118
  %3065 = vmatpush1.bf16.msra.mxu0 %v2117
  %3066 = vmatprep.subr.bf16.mxu0 %v2114
  %3067 = vmatpush1.bf16.msra.mxu0 %v2113
  %3068 = vmatprep.subr.bf16.mxu0 %v2174
  %3069 = vmatpush2.bf16.msra.mxu0 %v2173
  %3070 = vmatprep.subr.bf16.mxu0 %v2170
  %3071 = vmatpush2.bf16.msra.mxu0 %v2169
  %3072 = vmatprep.subr.bf16.mxu0 %v2166
  %3073 = vmatpush2.bf16.msra.mxu0 %v2165
  %3074 = vmatprep.subr.bf16.mxu0 %v2162
  %3075 = vmatpush2.bf16.msra.mxu0 %v2161
  %3076 = vmatprep.subr.bf16.mxu0 %v2158
  %3077 = vmatpush2.bf16.msra.mxu0 %v2157
  %3078 = vmatprep.subr.bf16.mxu0 %v2154
  %3079 = vmatpush2.bf16.msra.mxu0 %v2153
  %3080 = vmatprep.subr.bf16.mxu0 %v2150
  %3081 = vmatpush2.bf16.msra.mxu0 %v2149
  %3082 = vmatprep.subr.bf16.mxu0 %v2146
  %3083 = vmatpush2.bf16.msra.mxu0 %v2145
  %3084 = vmatprep.mubr.bf16.mxu0 %v582
  %3085 = vmatmul.mubr.bf16.gmra.mxu0 %v581
  %v3086 = vpop.f32.mrf.mxu0
  %v3087 = vadd.f32 %v3044, %v3086
  %v3088 = vpop.f32.mrf.mxu0
  %v3089 = vadd.f32 %v3046, %v3088
  %v3090 = vpop.f32.mrf.mxu0
  %v3091 = vadd.f32 %v3048, %v3090
  %v3092 = vpop.f32.mrf.mxu0
  %v3093 = vadd.f32 %v3050, %v3092
  %3094 = vdwg.mxu0
  %3095 = vmatprep.subr.bf16.mxu0 %v2206
  %3096 = vmatpush1.bf16.msra.mxu0 %v2205
  %3097 = vmatprep.subr.bf16.mxu0 %v2202
  %3098 = vmatpush1.bf16.msra.mxu0 %v2201
  %3099 = vmatprep.subr.bf16.mxu0 %v2198
  %3100 = vmatpush1.bf16.msra.mxu0 %v2197
  %3101 = vmatprep.subr.bf16.mxu0 %v2194
  %3102 = vmatpush1.bf16.msra.mxu0 %v2193
  %3103 = vmatprep.subr.bf16.mxu0 %v2190
  %3104 = vmatpush1.bf16.msra.mxu0 %v2189
  %3105 = vmatprep.subr.bf16.mxu0 %v2186
  %3106 = vmatpush1.bf16.msra.mxu0 %v2185
  %3107 = vmatprep.subr.bf16.mxu0 %v2182
  %3108 = vmatpush1.bf16.msra.mxu0 %v2181
  %3109 = vmatprep.subr.bf16.mxu0 %v2178
  %3110 = vmatpush1.bf16.msra.mxu0 %v2177
  %3111 = vmatprep.subr.bf16.mxu0 %v2238
  %3112 = vmatpush2.bf16.msra.mxu0 %v2237
  %3113 = vmatprep.subr.bf16.mxu0 %v2234
  %3114 = vmatpush2.bf16.msra.mxu0 %v2233
  %3115 = vmatprep.subr.bf16.mxu0 %v2230
  %3116 = vmatpush2.bf16.msra.mxu0 %v2229
  %3117 = vmatprep.subr.bf16.mxu0 %v2226
  %3118 = vmatpush2.bf16.msra.mxu0 %v2225
  %3119 = vmatprep.subr.bf16.mxu0 %v2222
  %3120 = vmatpush2.bf16.msra.mxu0 %v2221
  %3121 = vmatprep.subr.bf16.mxu0 %v2218
  %3122 = vmatpush2.bf16.msra.mxu0 %v2217
  %3123 = vmatprep.subr.bf16.mxu0 %v2214
  %3124 = vmatpush2.bf16.msra.mxu0 %v2213
  %3125 = vmatprep.subr.bf16.mxu0 %v2210
  %3126 = vmatpush2.bf16.msra.mxu0 %v2209
  %3127 = vmatprep.mubr.bf16.mxu0 %v584
  %3128 = vmatmul.mubr.bf16.gmra.mxu0 %v583
  %v3129 = vpop.f32.mrf.mxu0
  %v3130 = vadd.f32 %v3087, %v3129
  %v3131 = vpop.f32.mrf.mxu0
  %v3132 = vadd.f32 %v3089, %v3131
  %v3133 = vpop.f32.mrf.mxu0
  %v3134 = vadd.f32 %v3091, %v3133
  %v3135 = vpop.f32.mrf.mxu0
  %v3136 = vadd.f32 %v3093, %v3135
  %3137 = vdwg.mxu0
  %3138 = vmatprep.subr.bf16.mxu0 %v2270
  %3139 = vmatpush1.bf16.msra.mxu0 %v2269
  %3140 = vmatprep.subr.bf16.mxu0 %v2266
  %3141 = vmatpush1.bf16.msra.mxu0 %v2265
  %3142 = vmatprep.subr.bf16.mxu0 %v2262
  %3143 = vmatpush1.bf16.msra.mxu0 %v2261
  %3144 = vmatprep.subr.bf16.mxu0 %v2258
  %3145 = vmatpush1.bf16.msra.mxu0 %v2257
  %3146 = vmatprep.subr.bf16.mxu0 %v2254
  %3147 = vmatpush1.bf16.msra.mxu0 %v2253
  %3148 = vmatprep.subr.bf16.mxu0 %v2250
  %3149 = vmatpush1.bf16.msra.mxu0 %v2249
  %3150 = vmatprep.subr.bf16.mxu0 %v2246
  %3151 = vmatpush1.bf16.msra.mxu0 %v2245
  %3152 = vmatprep.subr.bf16.mxu0 %v2242
  %3153 = vmatpush1.bf16.msra.mxu0 %v2241
  %3154 = vmatprep.subr.bf16.mxu0 %v2302
  %3155 = vmatpush2.bf16.msra.mxu0 %v2301
  %3156 = vmatprep.subr.bf16.mxu0 %v2298
  %3157 = vmatpush2.bf16.msra.mxu0 %v2297
  %3158 = vmatprep.subr.bf16.mxu0 %v2294
  %3159 = vmatpush2.bf16.msra.mxu0 %v2293
  %3160 = vmatprep.subr.bf16.mxu0 %v2290
  %3161 = vmatpush2.bf16.msra.mxu0 %v2289
  %3162 = vmatprep.subr.bf16.mxu0 %v2286
  %3163 = vmatpush2.bf16.msra.mxu0 %v2285
  %3164 = vmatprep.subr.bf16.mxu0 %v2282
  %3165 = vmatpush2.bf16.msra.mxu0 %v2281
  %3166 = vmatprep.subr.bf16.mxu0 %v2278
  %3167 = vmatpush2.bf16.msra.mxu0 %v2277
  %3168 = vmatprep.subr.bf16.mxu0 %v2274
  %3169 = vmatpush2.bf16.msra.mxu0 %v2273
  %3170 = vmatprep.mubr.bf16.mxu0 %v586
  %3171 = vmatmul.mubr.bf16.gmra.mxu0 %v585
  %v3172 = vpop.f32.mrf.mxu0
  %v3173 = vadd.f32 %v3130, %v3172
  %v3174 = vpop.f32.mrf.mxu0
  %v3175 = vadd.f32 %v3132, %v3174
  %v3176 = vpop.f32.mrf.mxu0
  %v3177 = vadd.f32 %v3134, %v3176
  %v3178 = vpop.f32.mrf.mxu0
  %v3179 = vadd.f32 %v3136, %v3178
  %3180 = vdwg.mxu0
  %3181 = vmatprep.subr.bf16.mxu0 %v2334
  %3182 = vmatpush1.bf16.msra.mxu0 %v2333
  %3183 = vmatprep.subr.bf16.mxu0 %v2330
  %3184 = vmatpush1.bf16.msra.mxu0 %v2329
  %3185 = vmatprep.subr.bf16.mxu0 %v2326
  %3186 = vmatpush1.bf16.msra.mxu0 %v2325
  %3187 = vmatprep.subr.bf16.mxu0 %v2322
  %3188 = vmatpush1.bf16.msra.mxu0 %v2321
  %3189 = vmatprep.subr.bf16.mxu0 %v2318
  %3190 = vmatpush1.bf16.msra.mxu0 %v2317
  %3191 = vmatprep.subr.bf16.mxu0 %v2314
  %3192 = vmatpush1.bf16.msra.mxu0 %v2313
  %3193 = vmatprep.subr.bf16.mxu0 %v2310
  %3194 = vmatpush1.bf16.msra.mxu0 %v2309
  %3195 = vmatprep.subr.bf16.mxu0 %v2306
  %3196 = vmatpush1.bf16.msra.mxu0 %v2305
  %3197 = vmatprep.subr.bf16.mxu0 %v2366
  %3198 = vmatpush2.bf16.msra.mxu0 %v2365
  %3199 = vmatprep.subr.bf16.mxu0 %v2362
  %3200 = vmatpush2.bf16.msra.mxu0 %v2361
  %3201 = vmatprep.subr.bf16.mxu0 %v2358
  %3202 = vmatpush2.bf16.msra.mxu0 %v2357
  %3203 = vmatprep.subr.bf16.mxu0 %v2354
  %3204 = vmatpush2.bf16.msra.mxu0 %v2353
  %3205 = vmatprep.subr.bf16.mxu0 %v2350
  %3206 = vmatpush2.bf16.msra.mxu0 %v2349
  %3207 = vmatprep.subr.bf16.mxu0 %v2346
  %3208 = vmatpush2.bf16.msra.mxu0 %v2345
  %3209 = vmatprep.subr.bf16.mxu0 %v2342
  %3210 = vmatpush2.bf16.msra.mxu0 %v2341
  %3211 = vmatprep.subr.bf16.mxu0 %v2338
  %3212 = vmatpush2.bf16.msra.mxu0 %v2337
  %3213 = vmatprep.mubr.bf16.mxu0 %v588
  %3214 = vmatmul.mubr.bf16.gmra.mxu0 %v587
  %v3215 = vpop.f32.mrf.mxu0
  %v3216 = vadd.f32 %v3173, %v3215
  %v3217 = vpop.f32.mrf.mxu0
  %v3218 = vadd.f32 %v3175, %v3217
  %v3219 = vpop.f32.mrf.mxu0
  %v3220 = vadd.f32 %v3177, %v3219
  %v3221 = vpop.f32.mrf.mxu0
  %v3222 = vadd.f32 %v3179, %v3221
  %3223 = vdwg.mxu0
  %3224 = vmatprep.subr.bf16.mxu0 %v2398
  %3225 = vmatpush1.bf16.msra.mxu0 %v2397
  %3226 = vmatprep.subr.bf16.mxu0 %v2394
  %3227 = vmatpush1.bf16.msra.mxu0 %v2393
  %3228 = vmatprep.subr.bf16.mxu0 %v2390
  %3229 = vmatpush1.bf16.msra.mxu0 %v2389
  %3230 = vmatprep.subr.bf16.mxu0 %v2386
  %3231 = vmatpush1.bf16.msra.mxu0 %v2385
  %3232 = vmatprep.subr.bf16.mxu0 %v2382
  %3233 = vmatpush1.bf16.msra.mxu0 %v2381
  %3234 = vmatprep.subr.bf16.mxu0 %v2378
  %3235 = vmatpush1.bf16.msra.mxu0 %v2377
  %3236 = vmatprep.subr.bf16.mxu0 %v2374
  %3237 = vmatpush1.bf16.msra.mxu0 %v2373
  %3238 = vmatprep.subr.bf16.mxu0 %v2370
  %3239 = vmatpush1.bf16.msra.mxu0 %v2369
  %3240 = vmatprep.subr.bf16.mxu0 %v2430
  %3241 = vmatpush2.bf16.msra.mxu0 %v2429
  %3242 = vmatprep.subr.bf16.mxu0 %v2426
  %3243 = vmatpush2.bf16.msra.mxu0 %v2425
  %3244 = vmatprep.subr.bf16.mxu0 %v2422
  %3245 = vmatpush2.bf16.msra.mxu0 %v2421
  %3246 = vmatprep.subr.bf16.mxu0 %v2418
  %3247 = vmatpush2.bf16.msra.mxu0 %v2417
  %3248 = vmatprep.subr.bf16.mxu0 %v2414
  %3249 = vmatpush2.bf16.msra.mxu0 %v2413
  %3250 = vmatprep.subr.bf16.mxu0 %v2410
  %3251 = vmatpush2.bf16.msra.mxu0 %v2409
  %3252 = vmatprep.subr.bf16.mxu0 %v2406
  %3253 = vmatpush2.bf16.msra.mxu0 %v2405
  %3254 = vmatprep.subr.bf16.mxu0 %v2402
  %3255 = vmatpush2.bf16.msra.mxu0 %v2401
  %3256 = vmatprep.mubr.bf16.mxu0 %v590
  %3257 = vmatmul.mubr.bf16.gmra.mxu0 %v589
  %v3258 = vpop.f32.mrf.mxu0
  %v3259 = vadd.f32 %v3216, %v3258
  %v3260 = vpop.f32.mrf.mxu0
  %v3261 = vadd.f32 %v3218, %v3260
  %v3262 = vpop.f32.mrf.mxu0
  %v3263 = vadd.f32 %v3220, %v3262
  %v3264 = vpop.f32.mrf.mxu0
  %v3265 = vadd.f32 %v3222, %v3264
  %3266 = vdwg.mxu0
  %3267 = vmatprep.subr.bf16.mxu0 %v2462
  %3268 = vmatpush1.bf16.msra.mxu0 %v2461
  %3269 = vmatprep.subr.bf16.mxu0 %v2458
  %3270 = vmatpush1.bf16.msra.mxu0 %v2457
  %3271 = vmatprep.subr.bf16.mxu0 %v2454
  %3272 = vmatpush1.bf16.msra.mxu0 %v2453
  %3273 = vmatprep.subr.bf16.mxu0 %v2450
  %3274 = vmatpush1.bf16.msra.mxu0 %v2449
  %3275 = vmatprep.subr.bf16.mxu0 %v2446
  %3276 = vmatpush1.bf16.msra.mxu0 %v2445
  %3277 = vmatprep.subr.bf16.mxu0 %v2442
  %3278 = vmatpush1.bf16.msra.mxu0 %v2441
  %3279 = vmatprep.subr.bf16.mxu0 %v2438
  %3280 = vmatpush1.bf16.msra.mxu0 %v2437
  %3281 = vmatprep.subr.bf16.mxu0 %v2434
  %3282 = vmatpush1.bf16.msra.mxu0 %v2433
  %3283 = vmatprep.subr.bf16.mxu0 %v2494
  %3284 = vmatpush2.bf16.msra.mxu0 %v2493
  %3285 = vmatprep.subr.bf16.mxu0 %v2490
  %3286 = vmatpush2.bf16.msra.mxu0 %v2489
  %3287 = vmatprep.subr.bf16.mxu0 %v2486
  %3288 = vmatpush2.bf16.msra.mxu0 %v2485
  %3289 = vmatprep.subr.bf16.mxu0 %v2482
  %3290 = vmatpush2.bf16.msra.mxu0 %v2481
  %3291 = vmatprep.subr.bf16.mxu0 %v2478
  %3292 = vmatpush2.bf16.msra.mxu0 %v2477
  %3293 = vmatprep.subr.bf16.mxu0 %v2474
  %3294 = vmatpush2.bf16.msra.mxu0 %v2473
  %3295 = vmatprep.subr.bf16.mxu0 %v2470
  %3296 = vmatpush2.bf16.msra.mxu0 %v2469
  %3297 = vmatprep.subr.bf16.mxu0 %v2466
  %3298 = vmatpush2.bf16.msra.mxu0 %v2465
  %3299 = vmatprep.mubr.bf16.mxu0 %v592
  %3300 = vmatmul.mubr.bf16.gmra.mxu0 %v591
  %v3301 = vpop.f32.mrf.mxu0
  %v3302 = vadd.f32 %v3259, %v3301
  %v3303 = vpop.f32.mrf.mxu0
  %v3304 = vadd.f32 %v3261, %v3303
  %v3305 = vpop.f32.mrf.mxu0
  %v3306 = vadd.f32 %v3263, %v3305
  %v3307 = vpop.f32.mrf.mxu0
  %v3308 = vadd.f32 %v3265, %v3307
  %3309 = vdwg.mxu0
  %3310 = vmatprep.subr.bf16.mxu0 %v2526
  %3311 = vmatpush1.bf16.msra.mxu0 %v2525
  %3312 = vmatprep.subr.bf16.mxu0 %v2522
  %3313 = vmatpush1.bf16.msra.mxu0 %v2521
  %3314 = vmatprep.subr.bf16.mxu0 %v2518
  %3315 = vmatpush1.bf16.msra.mxu0 %v2517
  %3316 = vmatprep.subr.bf16.mxu0 %v2514
  %3317 = vmatpush1.bf16.msra.mxu0 %v2513
  %3318 = vmatprep.subr.bf16.mxu0 %v2510
  %3319 = vmatpush1.bf16.msra.mxu0 %v2509
  %3320 = vmatprep.subr.bf16.mxu0 %v2506
  %3321 = vmatpush1.bf16.msra.mxu0 %v2505
  %3322 = vmatprep.subr.bf16.mxu0 %v2502
  %3323 = vmatpush1.bf16.msra.mxu0 %v2501
  %3324 = vmatprep.subr.bf16.mxu0 %v2498
  %3325 = vmatpush1.bf16.msra.mxu0 %v2497
  %3326 = vmatprep.subr.bf16.mxu0 0
  %3327 = vmatpush2.bf16.msra.mxu0 0
  %3328 = vmatprep.subr.bf16.mxu0 0
  %3329 = vmatpush2.bf16.msra.mxu0 0
  %3330 = vmatprep.subr.bf16.mxu0 0
  %3331 = vmatpush2.bf16.msra.mxu0 0
  %3332 = vmatprep.subr.bf16.mxu0 0
  %3333 = vmatpush2.bf16.msra.mxu0 0
  %3334 = vmatprep.subr.bf16.mxu0 0
  %3335 = vmatpush2.bf16.msra.mxu0 0
  %3336 = vmatprep.subr.bf16.mxu0 0
  %3337 = vmatpush2.bf16.msra.mxu0 0
  %3338 = vmatprep.subr.bf16.mxu0 0
  %3339 = vmatpush2.bf16.msra.mxu0 0
  %3340 = vmatprep.subr.bf16.mxu0 0
  %3341 = vmatpush2.bf16.msra.mxu0 0
  %3342 = vmatprep.mubr.bf16.mxu0 0
  %3343 = vmatmul.mubr.bf16.gmra.mxu0 %v593
  %v3344 = vpop.f32.mrf.mxu0
  %v3345 = vadd.f32 %v3302, %v3344
  %v3346 = vpop.f32.mrf.mxu0
  %v3347 = vadd.f32 %v3304, %v3346
  %v3348 = vpop.f32.mrf.mxu0
  %v3349 = vadd.f32 %v3306, %v3348
  %v3350 = vpop.f32.mrf.mxu0
  %v3351 = vadd.f32 %v3308, %v3350
  %3352 = vdwg.mxu0
  %3353 = vmatprep.subr.bf16.mxu0 %v2080
  %3354 = vmatpush1.bf16.msra.mxu0 %v2079
  %3355 = vmatprep.subr.bf16.mxu0 %v2076
  %3356 = vmatpush1.bf16.msra.mxu0 %v2075
  %3357 = vmatprep.subr.bf16.mxu0 %v2072
  %3358 = vmatpush1.bf16.msra.mxu0 %v2071
  %3359 = vmatprep.subr.bf16.mxu0 %v2068
  %3360 = vmatpush1.bf16.msra.mxu0 %v2067
  %3361 = vmatprep.subr.bf16.mxu0 %v2064
  %3362 = vmatpush1.bf16.msra.mxu0 %v2063
  %3363 = vmatprep.subr.bf16.mxu0 %v2060
  %3364 = vmatpush1.bf16.msra.mxu0 %v2059
  %3365 = vmatprep.subr.bf16.mxu0 %v2056
  %3366 = vmatpush1.bf16.msra.mxu0 %v2055
  %3367 = vmatprep.subr.bf16.mxu0 %v2052
  %3368 = vmatpush1.bf16.msra.mxu0 %v2051
  %3369 = vmatprep.subr.bf16.mxu0 %v2112
  %3370 = vmatpush2.bf16.msra.mxu0 %v2111
  %3371 = vmatprep.subr.bf16.mxu0 %v2108
  %3372 = vmatpush2.bf16.msra.mxu0 %v2107
  %3373 = vmatprep.subr.bf16.mxu0 %v2104
  %3374 = vmatpush2.bf16.msra.mxu0 %v2103
  %3375 = vmatprep.subr.bf16.mxu0 %v2100
  %3376 = vmatpush2.bf16.msra.mxu0 %v2099
  %3377 = vmatprep.subr.bf16.mxu0 %v2096
  %3378 = vmatpush2.bf16.msra.mxu0 %v2095
  %3379 = vmatprep.subr.bf16.mxu0 %v2092
  %3380 = vmatpush2.bf16.msra.mxu0 %v2091
  %3381 = vmatprep.subr.bf16.mxu0 %v2088
  %3382 = vmatpush2.bf16.msra.mxu0 %v2087
  %3383 = vmatprep.subr.bf16.mxu0 %v2084
  %3384 = vmatpush2.bf16.msra.mxu0 %v2083
  %3385 = vmatprep.mubr.bf16.mxu0 %v580
  %3386 = vmatmul.mubr.bf16.gmra.mxu0 %v579
  %v3387 = vpop.f32.mrf.mxu0
  %v3388 = vadd.f32 %v524, %v3387
  %v3389 = vpop.f32.mrf.mxu0
  %v3390 = vadd.f32 %v528, %v3389
  %v3391 = vpop.f32.mrf.mxu0
  %v3392 = vadd.f32 %v524, %v3391
  %v3393 = vpop.f32.mrf.mxu0
  %v3394 = vadd.f32 %v528, %v3393
  %3395 = vdwg.mxu0
  %3396 = vmatprep.subr.bf16.mxu0 %v2144
  %3397 = vmatpush1.bf16.msra.mxu0 %v2143
  %3398 = vmatprep.subr.bf16.mxu0 %v2140
  %3399 = vmatpush1.bf16.msra.mxu0 %v2139
  %3400 = vmatprep.subr.bf16.mxu0 %v2136
  %3401 = vmatpush1.bf16.msra.mxu0 %v2135
  %3402 = vmatprep.subr.bf16.mxu0 %v2132
  %3403 = vmatpush1.bf16.msra.mxu0 %v2131
  %3404 = vmatprep.subr.bf16.mxu0 %v2128
  %3405 = vmatpush1.bf16.msra.mxu0 %v2127
  %3406 = vmatprep.subr.bf16.mxu0 %v2124
  %3407 = vmatpush1.bf16.msra.mxu0 %v2123
  %3408 = vmatprep.subr.bf16.mxu0 %v2120
  %3409 = vmatpush1.bf16.msra.mxu0 %v2119
  %3410 = vmatprep.subr.bf16.mxu0 %v2116
  %3411 = vmatpush1.bf16.msra.mxu0 %v2115
  %3412 = vmatprep.subr.bf16.mxu0 %v2176
  %3413 = vmatpush2.bf16.msra.mxu0 %v2175
  %3414 = vmatprep.subr.bf16.mxu0 %v2172
  %3415 = vmatpush2.bf16.msra.mxu0 %v2171
  %3416 = vmatprep.subr.bf16.mxu0 %v2168
  %3417 = vmatpush2.bf16.msra.mxu0 %v2167
  %3418 = vmatprep.subr.bf16.mxu0 %v2164
  %3419 = vmatpush2.bf16.msra.mxu0 %v2163
  %3420 = vmatprep.subr.bf16.mxu0 %v2160
  %3421 = vmatpush2.bf16.msra.mxu0 %v2159
  %3422 = vmatprep.subr.bf16.mxu0 %v2156
  %3423 = vmatpush2.bf16.msra.mxu0 %v2155
  %3424 = vmatprep.subr.bf16.mxu0 %v2152
  %3425 = vmatpush2.bf16.msra.mxu0 %v2151
  %3426 = vmatprep.subr.bf16.mxu0 %v2148
  %3427 = vmatpush2.bf16.msra.mxu0 %v2147
  %3428 = vmatprep.mubr.bf16.mxu0 %v582
  %3429 = vmatmul.mubr.bf16.gmra.mxu0 %v581
  %v3430 = vpop.f32.mrf.mxu0
  %v3431 = vadd.f32 %v3388, %v3430
  %v3432 = vpop.f32.mrf.mxu0
  %v3433 = vadd.f32 %v3390, %v3432
  %v3434 = vpop.f32.mrf.mxu0
  %v3435 = vadd.f32 %v3392, %v3434
  %v3436 = vpop.f32.mrf.mxu0
  %v3437 = vadd.f32 %v3394, %v3436
  %3438 = vdwg.mxu0
  %3439 = vmatprep.subr.bf16.mxu0 %v2208
  %3440 = vmatpush1.bf16.msra.mxu0 %v2207
  %3441 = vmatprep.subr.bf16.mxu0 %v2204
  %3442 = vmatpush1.bf16.msra.mxu0 %v2203
  %3443 = vmatprep.subr.bf16.mxu0 %v2200
  %3444 = vmatpush1.bf16.msra.mxu0 %v2199
  %3445 = vmatprep.subr.bf16.mxu0 %v2196
  %3446 = vmatpush1.bf16.msra.mxu0 %v2195
  %3447 = vmatprep.subr.bf16.mxu0 %v2192
  %3448 = vmatpush1.bf16.msra.mxu0 %v2191
  %3449 = vmatprep.subr.bf16.mxu0 %v2188
  %3450 = vmatpush1.bf16.msra.mxu0 %v2187
  %3451 = vmatprep.subr.bf16.mxu0 %v2184
  %3452 = vmatpush1.bf16.msra.mxu0 %v2183
  %3453 = vmatprep.subr.bf16.mxu0 %v2180
  %3454 = vmatpush1.bf16.msra.mxu0 %v2179
  %3455 = vmatprep.subr.bf16.mxu0 %v2240
  %3456 = vmatpush2.bf16.msra.mxu0 %v2239
  %3457 = vmatprep.subr.bf16.mxu0 %v2236
  %3458 = vmatpush2.bf16.msra.mxu0 %v2235
  %3459 = vmatprep.subr.bf16.mxu0 %v2232
  %3460 = vmatpush2.bf16.msra.mxu0 %v2231
  %3461 = vmatprep.subr.bf16.mxu0 %v2228
  %3462 = vmatpush2.bf16.msra.mxu0 %v2227
  %3463 = vmatprep.subr.bf16.mxu0 %v2224
  %3464 = vmatpush2.bf16.msra.mxu0 %v2223
  %3465 = vmatprep.subr.bf16.mxu0 %v2220
  %3466 = vmatpush2.bf16.msra.mxu0 %v2219
  %3467 = vmatprep.subr.bf16.mxu0 %v2216
  %3468 = vmatpush2.bf16.msra.mxu0 %v2215
  %3469 = vmatprep.subr.bf16.mxu0 %v2212
  %3470 = vmatpush2.bf16.msra.mxu0 %v2211
  %3471 = vmatprep.mubr.bf16.mxu0 %v584
  %3472 = vmatmul.mubr.bf16.gmra.mxu0 %v583
  %v3473 = vpop.f32.mrf.mxu0
  %v3474 = vadd.f32 %v3431, %v3473
  %v3475 = vpop.f32.mrf.mxu0
  %v3476 = vadd.f32 %v3433, %v3475
  %v3477 = vpop.f32.mrf.mxu0
  %v3478 = vadd.f32 %v3435, %v3477
  %v3479 = vpop.f32.mrf.mxu0
  %v3480 = vadd.f32 %v3437, %v3479
  %3481 = vdwg.mxu0
  %3482 = vmatprep.subr.bf16.mxu0 %v2272
  %3483 = vmatpush1.bf16.msra.mxu0 %v2271
  %3484 = vmatprep.subr.bf16.mxu0 %v2268
  %3485 = vmatpush1.bf16.msra.mxu0 %v2267
  %3486 = vmatprep.subr.bf16.mxu0 %v2264
  %3487 = vmatpush1.bf16.msra.mxu0 %v2263
  %3488 = vmatprep.subr.bf16.mxu0 %v2260
  %3489 = vmatpush1.bf16.msra.mxu0 %v2259
  %3490 = vmatprep.subr.bf16.mxu0 %v2256
  %3491 = vmatpush1.bf16.msra.mxu0 %v2255
  %3492 = vmatprep.subr.bf16.mxu0 %v2252
  %3493 = vmatpush1.bf16.msra.mxu0 %v2251
  %3494 = vmatprep.subr.bf16.mxu0 %v2248
  %3495 = vmatpush1.bf16.msra.mxu0 %v2247
  %3496 = vmatprep.subr.bf16.mxu0 %v2244
  %3497 = vmatpush1.bf16.msra.mxu0 %v2243
  %3498 = vmatprep.subr.bf16.mxu0 %v2304
  %3499 = vmatpush2.bf16.msra.mxu0 %v2303
  %3500 = vmatprep.subr.bf16.mxu0 %v2300
  %3501 = vmatpush2.bf16.msra.mxu0 %v2299
  %3502 = vmatprep.subr.bf16.mxu0 %v2296
  %3503 = vmatpush2.bf16.msra.mxu0 %v2295
  %3504 = vmatprep.subr.bf16.mxu0 %v2292
  %3505 = vmatpush2.bf16.msra.mxu0 %v2291
  %3506 = vmatprep.subr.bf16.mxu0 %v2288
  %3507 = vmatpush2.bf16.msra.mxu0 %v2287
  %3508 = vmatprep.subr.bf16.mxu0 %v2284
  %3509 = vmatpush2.bf16.msra.mxu0 %v2283
  %3510 = vmatprep.subr.bf16.mxu0 %v2280
  %3511 = vmatpush2.bf16.msra.mxu0 %v2279
  %3512 = vmatprep.subr.bf16.mxu0 %v2276
  %3513 = vmatpush2.bf16.msra.mxu0 %v2275
  %3514 = vmatprep.mubr.bf16.mxu0 %v586
  %3515 = vmatmul.mubr.bf16.gmra.mxu0 %v585
  %v3516 = vpop.f32.mrf.mxu0
  %v3517 = vadd.f32 %v3474, %v3516
  %v3518 = vpop.f32.mrf.mxu0
  %v3519 = vadd.f32 %v3476, %v3518
  %v3520 = vpop.f32.mrf.mxu0
  %v3521 = vadd.f32 %v3478, %v3520
  %v3522 = vpop.f32.mrf.mxu0
  %v3523 = vadd.f32 %v3480, %v3522
  %3524 = vdwg.mxu0
  %3525 = vmatprep.subr.bf16.mxu0 %v2336
  %3526 = vmatpush1.bf16.msra.mxu0 %v2335
  %3527 = vmatprep.subr.bf16.mxu0 %v2332
  %3528 = vmatpush1.bf16.msra.mxu0 %v2331
  %3529 = vmatprep.subr.bf16.mxu0 %v2328
  %3530 = vmatpush1.bf16.msra.mxu0 %v2327
  %3531 = vmatprep.subr.bf16.mxu0 %v2324
  %3532 = vmatpush1.bf16.msra.mxu0 %v2323
  %3533 = vmatprep.subr.bf16.mxu0 %v2320
  %3534 = vmatpush1.bf16.msra.mxu0 %v2319
  %3535 = vmatprep.subr.bf16.mxu0 %v2316
  %3536 = vmatpush1.bf16.msra.mxu0 %v2315
  %3537 = vmatprep.subr.bf16.mxu0 %v2312
  %3538 = vmatpush1.bf16.msra.mxu0 %v2311
  %3539 = vmatprep.subr.bf16.mxu0 %v2308
  %3540 = vmatpush1.bf16.msra.mxu0 %v2307
  %3541 = vmatprep.subr.bf16.mxu0 %v2368
  %3542 = vmatpush2.bf16.msra.mxu0 %v2367
  %3543 = vmatprep.subr.bf16.mxu0 %v2364
  %3544 = vmatpush2.bf16.msra.mxu0 %v2363
  %3545 = vmatprep.subr.bf16.mxu0 %v2360
  %3546 = vmatpush2.bf16.msra.mxu0 %v2359
  %3547 = vmatprep.subr.bf16.mxu0 %v2356
  %3548 = vmatpush2.bf16.msra.mxu0 %v2355
  %3549 = vmatprep.subr.bf16.mxu0 %v2352
  %3550 = vmatpush2.bf16.msra.mxu0 %v2351
  %3551 = vmatprep.subr.bf16.mxu0 %v2348
  %3552 = vmatpush2.bf16.msra.mxu0 %v2347
  %3553 = vmatprep.subr.bf16.mxu0 %v2344
  %3554 = vmatpush2.bf16.msra.mxu0 %v2343
  %3555 = vmatprep.subr.bf16.mxu0 %v2340
  %3556 = vmatpush2.bf16.msra.mxu0 %v2339
  %3557 = vmatprep.mubr.bf16.mxu0 %v588
  %3558 = vmatmul.mubr.bf16.gmra.mxu0 %v587
  %v3559 = vpop.f32.mrf.mxu0
  %v3560 = vadd.f32 %v3517, %v3559
  %v3561 = vpop.f32.mrf.mxu0
  %v3562 = vadd.f32 %v3519, %v3561
  %v3563 = vpop.f32.mrf.mxu0
  %v3564 = vadd.f32 %v3521, %v3563
  %v3565 = vpop.f32.mrf.mxu0
  %v3566 = vadd.f32 %v3523, %v3565
  %3567 = vdwg.mxu0
  %3568 = vmatprep.subr.bf16.mxu0 %v2400
  %3569 = vmatpush1.bf16.msra.mxu0 %v2399
  %3570 = vmatprep.subr.bf16.mxu0 %v2396
  %3571 = vmatpush1.bf16.msra.mxu0 %v2395
  %3572 = vmatprep.subr.bf16.mxu0 %v2392
  %3573 = vmatpush1.bf16.msra.mxu0 %v2391
  %3574 = vmatprep.subr.bf16.mxu0 %v2388
  %3575 = vmatpush1.bf16.msra.mxu0 %v2387
  %3576 = vmatprep.subr.bf16.mxu0 %v2384
  %3577 = vmatpush1.bf16.msra.mxu0 %v2383
  %3578 = vmatprep.subr.bf16.mxu0 %v2380
  %3579 = vmatpush1.bf16.msra.mxu0 %v2379
  %3580 = vmatprep.subr.bf16.mxu0 %v2376
  %3581 = vmatpush1.bf16.msra.mxu0 %v2375
  %3582 = vmatprep.subr.bf16.mxu0 %v2372
  %3583 = vmatpush1.bf16.msra.mxu0 %v2371
  %3584 = vmatprep.subr.bf16.mxu0 %v2432
  %3585 = vmatpush2.bf16.msra.mxu0 %v2431
  %3586 = vmatprep.subr.bf16.mxu0 %v2428
  %3587 = vmatpush2.bf16.msra.mxu0 %v2427
  %3588 = vmatprep.subr.bf16.mxu0 %v2424
  %3589 = vmatpush2.bf16.msra.mxu0 %v2423
  %3590 = vmatprep.subr.bf16.mxu0 %v2420
  %3591 = vmatpush2.bf16.msra.mxu0 %v2419
  %3592 = vmatprep.subr.bf16.mxu0 %v2416
  %3593 = vmatpush2.bf16.msra.mxu0 %v2415
  %3594 = vmatprep.subr.bf16.mxu0 %v2412
  %3595 = vmatpush2.bf16.msra.mxu0 %v2411
  %3596 = vmatprep.subr.bf16.mxu0 %v2408
  %3597 = vmatpush2.bf16.msra.mxu0 %v2407
  %3598 = vmatprep.subr.bf16.mxu0 %v2404
  %3599 = vmatpush2.bf16.msra.mxu0 %v2403
  %3600 = vmatprep.mubr.bf16.mxu0 %v590
  %3601 = vmatmul.mubr.bf16.gmra.mxu0 %v589
  %v3602 = vpop.f32.mrf.mxu0
  %v3603 = vadd.f32 %v3560, %v3602
  %v3604 = vpop.f32.mrf.mxu0
  %v3605 = vadd.f32 %v3562, %v3604
  %v3606 = vpop.f32.mrf.mxu0
  %v3607 = vadd.f32 %v3564, %v3606
  %v3608 = vpop.f32.mrf.mxu0
  %v3609 = vadd.f32 %v3566, %v3608
  %3610 = vdwg.mxu0
  %3611 = vmatprep.subr.bf16.mxu0 %v2464
  %3612 = vmatpush1.bf16.msra.mxu0 %v2463
  %3613 = vmatprep.subr.bf16.mxu0 %v2460
  %3614 = vmatpush1.bf16.msra.mxu0 %v2459
  %3615 = vmatprep.subr.bf16.mxu0 %v2456
  %3616 = vmatpush1.bf16.msra.mxu0 %v2455
  %3617 = vmatprep.subr.bf16.mxu0 %v2452
  %3618 = vmatpush1.bf16.msra.mxu0 %v2451
  %3619 = vmatprep.subr.bf16.mxu0 %v2448
  %3620 = vmatpush1.bf16.msra.mxu0 %v2447
  %3621 = vmatprep.subr.bf16.mxu0 %v2444
  %3622 = vmatpush1.bf16.msra.mxu0 %v2443
  %3623 = vmatprep.subr.bf16.mxu0 %v2440
  %3624 = vmatpush1.bf16.msra.mxu0 %v2439
  %3625 = vmatprep.subr.bf16.mxu0 %v2436
  %3626 = vmatpush1.bf16.msra.mxu0 %v2435
  %3627 = vmatprep.subr.bf16.mxu0 %v2496
  %3628 = vmatpush2.bf16.msra.mxu0 %v2495
  %3629 = vmatprep.subr.bf16.mxu0 %v2492
  %3630 = vmatpush2.bf16.msra.mxu0 %v2491
  %3631 = vmatprep.subr.bf16.mxu0 %v2488
  %3632 = vmatpush2.bf16.msra.mxu0 %v2487
  %3633 = vmatprep.subr.bf16.mxu0 %v2484
  %3634 = vmatpush2.bf16.msra.mxu0 %v2483
  %3635 = vmatprep.subr.bf16.mxu0 %v2480
  %3636 = vmatpush2.bf16.msra.mxu0 %v2479
  %3637 = vmatprep.subr.bf16.mxu0 %v2476
  %3638 = vmatpush2.bf16.msra.mxu0 %v2475
  %3639 = vmatprep.subr.bf16.mxu0 %v2472
  %3640 = vmatpush2.bf16.msra.mxu0 %v2471
  %3641 = vmatprep.subr.bf16.mxu0 %v2468
  %3642 = vmatpush2.bf16.msra.mxu0 %v2467
  %3643 = vmatprep.mubr.bf16.mxu0 %v592
  %3644 = vmatmul.mubr.bf16.gmra.mxu0 %v591
  %v3645 = vpop.f32.mrf.mxu0
  %v3646 = vadd.f32 %v3603, %v3645
  %v3647 = vpop.f32.mrf.mxu0
  %v3648 = vadd.f32 %v3605, %v3647
  %v3649 = vpop.f32.mrf.mxu0
  %v3650 = vadd.f32 %v3607, %v3649
  %v3651 = vpop.f32.mrf.mxu0
  %v3652 = vadd.f32 %v3609, %v3651
  %3653 = vdwg.mxu0
  %3654 = vmatprep.subr.bf16.mxu0 %v2528
  %3655 = vmatpush1.bf16.msra.mxu0 %v2527
  %3656 = vmatprep.subr.bf16.mxu0 %v2524
  %3657 = vmatpush1.bf16.msra.mxu0 %v2523
  %3658 = vmatprep.subr.bf16.mxu0 %v2520
  %3659 = vmatpush1.bf16.msra.mxu0 %v2519
  %3660 = vmatprep.subr.bf16.mxu0 %v2516
  %3661 = vmatpush1.bf16.msra.mxu0 %v2515
  %3662 = vmatprep.subr.bf16.mxu0 %v2512
  %3663 = vmatpush1.bf16.msra.mxu0 %v2511
  %3664 = vmatprep.subr.bf16.mxu0 %v2508
  %3665 = vmatpush1.bf16.msra.mxu0 %v2507
  %3666 = vmatprep.subr.bf16.mxu0 %v2504
  %3667 = vmatpush1.bf16.msra.mxu0 %v2503
  %3668 = vmatprep.subr.bf16.mxu0 %v2500
  %3669 = vmatpush1.bf16.msra.mxu0 %v2499
  %3670 = vmatprep.subr.bf16.mxu0 0
  %3671 = vmatpush2.bf16.msra.mxu0 0
  %3672 = vmatprep.subr.bf16.mxu0 0
  %3673 = vmatpush2.bf16.msra.mxu0 0
  %3674 = vmatprep.subr.bf16.mxu0 0
  %3675 = vmatpush2.bf16.msra.mxu0 0
  %3676 = vmatprep.subr.bf16.mxu0 0
  %3677 = vmatpush2.bf16.msra.mxu0 0
  %3678 = vmatprep.subr.bf16.mxu0 0
  %3679 = vmatpush2.bf16.msra.mxu0 0
  %3680 = vmatprep.subr.bf16.mxu0 0
  %3681 = vmatpush2.bf16.msra.mxu0 0
  %3682 = vmatprep.subr.bf16.mxu0 0
  %3683 = vmatpush2.bf16.msra.mxu0 0
  %3684 = vmatprep.subr.bf16.mxu0 0
  %3685 = vmatpush2.bf16.msra.mxu0 0
  %3686 = vmatprep.mubr.bf16.mxu0 0
  %3687 = vmatmul.mubr.bf16.gmra.mxu0 %v593
  %v3688 = vpop.f32.mrf.mxu0
  %v3689 = vadd.f32 %v3646, %v3688
  %v3690 = vpop.f32.mrf.mxu0
  %v3691 = vadd.f32 %v3648, %v3690
  %v3692 = vpop.f32.mrf.mxu0
  %v3693 = vadd.f32 %v3650, %v3692
  %v3694 = vpop.f32.mrf.mxu0
  %v3695 = vadd.f32 %v3652, %v3694
  %3696 = vdwg.mxu0
  %vm3697 = vcmp.ge.f32.partialorder %v3345, 0.0
  %vm3698 = vcmp.ge.f32.partialorder %v3347, 0.0
  %vm3699 = vcmp.ge.f32.partialorder %v3689, 0.0
  %vm3700 = vcmp.ge.f32.partialorder %v3691, 0.0
  %vm3701 = vcmp.ge.f32.partialorder %v3349, 0.0
  %vm3702 = vcmp.ge.f32.partialorder %v3351, 0.0
  %vm3703 = vcmp.ge.f32.partialorder %v3693, 0.0
  %vm3704 = vcmp.ge.f32.partialorder %v3695, 0.0
  %v3705 = vmul.f32 %v3345, 0.2
  %v3706 = vmul.f32 %v3347, 0.2
  %v3707 = vmul.f32 %v3689, 0.2
  %v3708 = vmul.f32 %v3691, 0.2
  %v3709 = vmul.f32 %v3349, 0.2
  %v3710 = vmul.f32 %v3351, 0.2
  %v3711 = vmul.f32 %v3693, 0.2
  %v3712 = vmul.f32 %v3695, 0.2
  %v3713 = vsel %vm3697, %v3345, %v3705
  %v3714 = vsel %vm3698, %v3347, %v3706
  %v3715 = vsel %vm3699, %v3689, %v3707
  %v3716 = vsel %vm3700, %v3691, %v3708
  %v3717 = vsel %vm3701, %v3349, %v3709
  %v3718 = vsel %vm3702, %v3351, %v3710
  %v3719 = vsel %vm3703, %v3693, %v3711
  %v3720 = vsel %vm3704, %v3695, %v3712
  %3721 = vst [vmem:[%s3] sm:$0xff] %v3713
  %3722 = vst [vmem:[%s3 + $0x8] sm:$0xff] %v3714
  %3723 = vst [vmem:[%s3 + $0x10] sm:$0xff] %v3715
  %3724 = vst [vmem:[%s3 + $0x18] sm:$0xff] %v3716
  %3725 = vst [vmem:[%s3 + $0x20] sm:$0xff] %v3717
  %3726 = vst [vmem:[%s3 + $0x28] sm:$0xff] %v3718
  %3727 = vst [vmem:[%s3 + $0x30] sm:$0xff] %v3719
  %3728 = vst [vmem:[%s3 + $0x38] sm:$0xff] %v3720
  // Predicated region
  $region14: #{jcu_discriminator_forward.9} parent=0 // pred_check
    _
  $region15: #{jcu_discriminator_forward.9} parent=0 // pred_check_branch
    %3730 = sbr.rel (0) target = $region17
  $region16: #{jcu_discriminator_forward.9} parent=0 // pred_region
    _
  $region17: #{jcu_discriminator_forward.9} parent=0 // pred_fallthru
    _
  // Predicated region
  $region18: #{jcu_discriminator_forward.9} parent=0 // pred_check
    _
  $region19: #{jcu_discriminator_forward.9} parent=0 // pred_check_branch
    %3732 = sbr.rel (0) target = $region21
  $region20: #{jcu_discriminator_forward.9} parent=0 // pred_region
    _
  $region21: #{jcu_discriminator_forward.9} parent=0 // pred_fallthru
    _

// kernel: jcu_discriminator_forward.6
$region0: #{jcu_discriminator_forward.6}
  #allocation0 [shape = 'u32[]', space=smem, size = 0x4, offset = 0x4, fixed_abs, tag = 'smem constant byte address 0x4 - core index']
  #allocation1 [shape = 'u32[144,128]{1,0:T(1,128)}', space=vmem, size = 0x12000, scoped, tag = 'internal scratch']
  %s0 = inlined_call_operand.vmem [shape: bf16[8,128], index: 0, kind: input, shape index: {}]
  %s1 = inlined_call_operand.vmem [shape: bf16[128,512], index: 1, kind: input, shape index: {}]
  %s2 = inlined_call_operand.vmem [shape: f32[1,512], index: 2, kind: input, shape index: {}]
  %s3 = inlined_call_operand.vmem [shape: bf16[512,512], index: 3, kind: input, shape index: {}]
  %s4 = inlined_call_operand.vmem [shape: f32[1,512], index: 4, kind: input, shape index: {}]
  %s5 = inlined_call_operand.vmem [shape: bf16[512,128], index: 5, kind: input, shape index: {}]
  %s6 = inlined_call_operand.vmem [shape: f32[8,128], index: 6, kind: output, shape index: {}]
  %s7 = sld [smem:[#allocation0]]
  $region34: #{jcu_discriminator_forward.6} parent=0
    _
  %s9 = ssub.s32 1, %s7
  %s10 = scalar_select 0, %s9, %s7
  // Predicated region
  $region2: #{jcu_discriminator_forward.6} parent=0 // pred_check
    _
  $region3: #{jcu_discriminator_forward.6} parent=0 // pred_check_branch
    %12 = sbr.rel (0) target = $region5
  $region4: #{jcu_discriminator_forward.6} parent=0 // pred_region
    _
  $region5: #{jcu_discriminator_forward.6} parent=0 // pred_fallthru
    _
  // Predicated region
  $region6: #{jcu_discriminator_forward.6} parent=0 // pred_check
    _
  $region7: #{jcu_discriminator_forward.6} parent=0 // pred_check_branch
    %14 = sbr.rel (0) target = $region9
  $region8: #{jcu_discriminator_forward.6} parent=0 // pred_region
    _
  $region9: #{jcu_discriminator_forward.6} parent=0 // pred_fallthru
    _
  // Predicated region
  $region10: #{jcu_discriminator_forward.6} parent=0 // pred_check
    _
  $region11: #{jcu_discriminator_forward.6} parent=0 // pred_check_branch
    %16 = sbr.rel (0) target = $region13
  $region12: #{jcu_discriminator_forward.6} parent=0 // pred_region
    _
  $region13: #{jcu_discriminator_forward.6} parent=0 // pred_fallthru
    _
  // Predicated region
  $region14: #{jcu_discriminator_forward.6} parent=0 // pred_check
    _
  $region15: #{jcu_discriminator_forward.6} parent=0 // pred_check_branch
    %18 = sbr.rel (0) target = $region17
  $region16: #{jcu_discriminator_forward.6} parent=0 // pred_region
    _
  $region17: #{jcu_discriminator_forward.6} parent=0 // pred_fallthru
    _
  // Predicated region
  $region18: #{jcu_discriminator_forward.6} parent=0 // pred_check
    _
  $region19: #{jcu_discriminator_forward.6} parent=0 // pred_check_branch
    %20 = sbr.rel (0) target = $region21
  $region20: #{jcu_discriminator_forward.6} parent=0 // pred_region
    _
  $region21: #{jcu_discriminator_forward.6} parent=0 // pred_fallthru
    _
  // Predicated region
  $region22: #{jcu_discriminator_forward.6} parent=0 // pred_check
    _
  $region23: #{jcu_discriminator_forward.6} parent=0 // pred_check_branch
    %22 = sbr.rel (0) target = $region25
  $region24: #{jcu_discriminator_forward.6} parent=0 // pred_region
    _
  $region25: #{jcu_discriminator_forward.6} parent=0 // pred_fallthru
    _
  %v24 = vld [vmem:[%s0] sm:$0xf]
  %v25 = vld [vmem:[%s1] sm:$0xff]
  %v26 = vld [vmem:[%s1 + $0x8] sm:$0xff]
  %v27 = vld [vmem:[%s1 + $0x10] sm:$0xff]
  %v28 = vld [vmem:[%s1 + $0x18] sm:$0xff]
  %v29 = vld [vmem:[%s1 + $0x20] sm:$0xff]
  %v30 = vld [vmem:[%s1 + $0x28] sm:$0xff]
  %v31 = vld [vmem:[%s1 + $0x30] sm:$0xff]
  %v32 = vld [vmem:[%s1 + $0x38] sm:$0xff]
  %v33 = vld [vmem:[%s1 + $0x40] sm:$0xff]
  %v34 = vld [vmem:[%s1 + $0x48] sm:$0xff]
  %v35 = vld [vmem:[%s1 + $0x50] sm:$0xff]
  %v36 = vld [vmem:[%s1 + $0x58] sm:$0xff]
  %v37 = vld [vmem:[%s1 + $0x60] sm:$0xff]
  %v38 = vld [vmem:[%s1 + $0x68] sm:$0xff]
  %v39 = vld [vmem:[%s1 + $0x70] sm:$0xff]
  %v40 = vld [vmem:[%s1 + $0x78] sm:$0xff]
  %v41 = vld [vmem:[%s1 + $0x80] sm:$0xff]
  %v42 = vld [vmem:[%s1 + $0x88] sm:$0xff]
  %v43 = vld [vmem:[%s1 + $0x90] sm:$0xff]
  %v44 = vld [vmem:[%s1 + $0x98] sm:$0xff]
  %v45 = vld [vmem:[%s1 + $0xa0] sm:$0xff]
  %v46 = vld [vmem:[%s1 + $0xa8] sm:$0xff]
  %v47 = vld [vmem:[%s1 + $0xb0] sm:$0xff]
  %v48 = vld [vmem:[%s1 + $0xb8] sm:$0xff]
  %v49 = vld [vmem:[%s1 + $0xc0] sm:$0xff]
  %v50 = vld [vmem:[%s1 + $0xc8] sm:$0xff]
  %v51 = vld [vmem:[%s1 + $0xd0] sm:$0xff]
  %v52 = vld [vmem:[%s1 + $0xd8] sm:$0xff]
  %v53 = vld [vmem:[%s1 + $0xe0] sm:$0xff]
  %v54 = vld [vmem:[%s1 + $0xe8] sm:$0xff]
  %v55 = vld [vmem:[%s1 + $0xf0] sm:$0xff]
  %v56 = vld [vmem:[%s1 + $0xf8] sm:$0xff]
  %v57 = vld [vmem:[%s2] sm:$0xf]
  %v59 = vlaneseq
  %v60 = vshrl.u32 %v59, 7
  %v61 = vsub.s32 0, %v60
  %v62 = vrot.slane %v57, %v61
  %v63 = vlaneseq
  %v64 = vshrl.u32 %v63, 7
  %v65 = vsub.s32 1, %v64
  %v66 = vrot.slane %v57, %v65
  %v67 = vlaneseq
  %v68 = vshrl.u32 %v67, 7
  %v69 = vsub.s32 2, %v68
  %v70 = vrot.slane %v57, %v69
  %v71 = vlaneseq
  %v72 = vshrl.u32 %v71, 7
  %v73 = vsub.s32 3, %v72
  %v74 = vrot.slane %v57, %v73
  %v111 = vunpack.c.l.b16 %v25
  %v112 = vunpack.c.h.b16 %v25
  %v113 = vunpack.c.l.b16 %v26
  %v114 = vunpack.c.h.b16 %v26
  %v115 = vunpack.c.l.b16 %v27
  %v116 = vunpack.c.h.b16 %v27
  %v117 = vunpack.c.l.b16 %v28
  %v118 = vunpack.c.h.b16 %v28
  %v119 = vunpack.c.l.b16 %v29
  %v120 = vunpack.c.h.b16 %v29
  %v121 = vunpack.c.l.b16 %v30
  %v122 = vunpack.c.h.b16 %v30
  %v123 = vunpack.c.l.b16 %v31
  %v124 = vunpack.c.h.b16 %v31
  %v125 = vunpack.c.l.b16 %v32
  %v126 = vunpack.c.h.b16 %v32
  %v127 = vunpack.c.l.b16 %v33
  %v128 = vunpack.c.h.b16 %v33
  %v129 = vunpack.c.l.b16 %v34
  %v130 = vunpack.c.h.b16 %v34
  %v131 = vunpack.c.l.b16 %v35
  %v132 = vunpack.c.h.b16 %v35
  %v133 = vunpack.c.l.b16 %v36
  %v134 = vunpack.c.h.b16 %v36
  %v135 = vunpack.c.l.b16 %v37
  %v136 = vunpack.c.h.b16 %v37
  %v137 = vunpack.c.l.b16 %v38
  %v138 = vunpack.c.h.b16 %v38
  %v139 = vunpack.c.l.b16 %v39
  %v140 = vunpack.c.h.b16 %v39
  %v141 = vunpack.c.l.b16 %v40
  %v142 = vunpack.c.h.b16 %v40
  %v143 = vunpack.c.l.b16 %v41
  %v144 = vunpack.c.h.b16 %v41
  %v145 = vunpack.c.l.b16 %v42
  %v146 = vunpack.c.h.b16 %v42
  %v147 = vunpack.c.l.b16 %v43
  %v148 = vunpack.c.h.b16 %v43
  %v149 = vunpack.c.l.b16 %v44
  %v150 = vunpack.c.h.b16 %v44
  %v151 = vunpack.c.l.b16 %v45
  %v152 = vunpack.c.h.b16 %v45
  %v153 = vunpack.c.l.b16 %v46
  %v154 = vunpack.c.h.b16 %v46
  %v155 = vunpack.c.l.b16 %v47
  %v156 = vunpack.c.h.b16 %v47
  %v157 = vunpack.c.l.b16 %v48
  %v158 = vunpack.c.h.b16 %v48
  %v159 = vunpack.c.l.b16 %v49
  %v160 = vunpack.c.h.b16 %v49
  %v161 = vunpack.c.l.b16 %v50
  %v162 = vunpack.c.h.b16 %v50
  %v163 = vunpack.c.l.b16 %v51
  %v164 = vunpack.c.h.b16 %v51
  %v165 = vunpack.c.l.b16 %v52
  %v166 = vunpack.c.h.b16 %v52
  %v167 = vunpack.c.l.b16 %v53
  %v168 = vunpack.c.h.b16 %v53
  %v169 = vunpack.c.l.b16 %v54
  %v170 = vunpack.c.h.b16 %v54
  %v171 = vunpack.c.l.b16 %v55
  %v172 = vunpack.c.h.b16 %v55
  %v173 = vunpack.c.l.b16 %v56
  %v174 = vunpack.c.h.b16 %v56
  %v175 = vpack.c.b16 %v115, %v111
  %v176 = vpack.c.b16 %v116, %v112
  %v177 = vpack.c.b16 %v117, %v113
  %v178 = vpack.c.b16 %v118, %v114
  %v179 = vpack.c.b16 %v123, %v119
  %v180 = vpack.c.b16 %v124, %v120
  %v181 = vpack.c.b16 %v125, %v121
  %v182 = vpack.c.b16 %v126, %v122
  %v183 = vpack.c.b16 %v131, %v127
  %v184 = vpack.c.b16 %v132, %v128
  %v185 = vpack.c.b16 %v133, %v129
  %v186 = vpack.c.b16 %v134, %v130
  %v187 = vpack.c.b16 %v139, %v135
  %v188 = vpack.c.b16 %v140, %v136
  %v189 = vpack.c.b16 %v141, %v137
  %v190 = vpack.c.b16 %v142, %v138
  %v191 = vpack.c.b16 %v147, %v143
  %v192 = vpack.c.b16 %v148, %v144
  %v193 = vpack.c.b16 %v149, %v145
  %v194 = vpack.c.b16 %v150, %v146
  %v195 = vpack.c.b16 %v155, %v151
  %v196 = vpack.c.b16 %v156, %v152
  %v197 = vpack.c.b16 %v157, %v153
  %v198 = vpack.c.b16 %v158, %v154
  %v199 = vpack.c.b16 %v163, %v159
  %v200 = vpack.c.b16 %v164, %v160
  %v201 = vpack.c.b16 %v165, %v161
  %v202 = vpack.c.b16 %v166, %v162
  %v203 = vpack.c.b16 %v171, %v167
  %v204 = vpack.c.b16 %v172, %v168
  %v205 = vpack.c.b16 %v173, %v169
  %v206 = vpack.c.b16 %v174, %v170
  %239 = vmatprep.subr.bf16.mxu0 %v204
  %240 = vmatpush1.bf16.msra.mxu0 %v203
  %241 = vmatprep.subr.bf16.mxu0 %v200
  %242 = vmatpush1.bf16.msra.mxu0 %v199
  %243 = vmatprep.subr.bf16.mxu0 %v196
  %244 = vmatpush1.bf16.msra.mxu0 %v195
  %245 = vmatprep.subr.bf16.mxu0 %v192
  %246 = vmatpush1.bf16.msra.mxu0 %v191
  %247 = vmatprep.subr.bf16.mxu0 %v188
  %248 = vmatpush1.bf16.msra.mxu0 %v187
  %249 = vmatprep.subr.bf16.mxu0 %v184
  %250 = vmatpush1.bf16.msra.mxu0 %v183
  %251 = vmatprep.subr.bf16.mxu0 %v180
  %252 = vmatpush1.bf16.msra.mxu0 %v179
  %253 = vmatprep.subr.bf16.mxu0 %v176
  %254 = vmatpush1.bf16.msra.mxu0 %v175
  %255 = vmatprep.subr.bf16.mxu0 0
  %256 = vmatpush2.bf16.msra.mxu0 0
  %257 = vmatprep.subr.bf16.mxu0 0
  %258 = vmatpush2.bf16.msra.mxu0 0
  %259 = vmatprep.subr.bf16.mxu0 0
  %260 = vmatpush2.bf16.msra.mxu0 0
  %261 = vmatprep.subr.bf16.mxu0 0
  %262 = vmatpush2.bf16.msra.mxu0 0
  %263 = vmatprep.subr.bf16.mxu0 0
  %264 = vmatpush2.bf16.msra.mxu0 0
  %265 = vmatprep.subr.bf16.mxu0 0
  %266 = vmatpush2.bf16.msra.mxu0 0
  %267 = vmatprep.subr.bf16.mxu0 0
  %268 = vmatpush2.bf16.msra.mxu0 0
  %269 = vmatprep.subr.bf16.mxu0 0
  %270 = vmatpush2.bf16.msra.mxu0 0
  %271 = vmatprep.mubr.bf16.mxu0 0
  %272 = vmatmul.mubr.bf16.gmra.mxu0 %v24
  %v273 = vpop.f32.mrf.mxu0
  %v274 = vadd.f32 %v62, %v273
  %v275 = vpop.f32.mrf.mxu0
  %v276 = vadd.f32 %v66, %v275
  %v277 = vpop.f32.mrf.mxu0
  %v278 = vpop.f32.mrf.mxu0
  %279 = vdwg.mxu0
  %280 = vmatprep.subr.bf16.mxu0 %v206
  %281 = vmatpush1.bf16.msra.mxu0 %v205
  %282 = vmatprep.subr.bf16.mxu0 %v202
  %283 = vmatpush1.bf16.msra.mxu0 %v201
  %284 = vmatprep.subr.bf16.mxu0 %v198
  %285 = vmatpush1.bf16.msra.mxu0 %v197
  %286 = vmatprep.subr.bf16.mxu0 %v194
  %287 = vmatpush1.bf16.msra.mxu0 %v193
  %288 = vmatprep.subr.bf16.mxu0 %v190
  %289 = vmatpush1.bf16.msra.mxu0 %v189
  %290 = vmatprep.subr.bf16.mxu0 %v186
  %291 = vmatpush1.bf16.msra.mxu0 %v185
  %292 = vmatprep.subr.bf16.mxu0 %v182
  %293 = vmatpush1.bf16.msra.mxu0 %v181
  %294 = vmatprep.subr.bf16.mxu0 %v178
  %295 = vmatpush1.bf16.msra.mxu0 %v177
  %296 = vmatprep.subr.bf16.mxu0 0
  %297 = vmatpush2.bf16.msra.mxu0 0
  %298 = vmatprep.subr.bf16.mxu0 0
  %299 = vmatpush2.bf16.msra.mxu0 0
  %300 = vmatprep.subr.bf16.mxu0 0
  %301 = vmatpush2.bf16.msra.mxu0 0
  %302 = vmatprep.subr.bf16.mxu0 0
  %303 = vmatpush2.bf16.msra.mxu0 0
  %304 = vmatprep.subr.bf16.mxu0 0
  %305 = vmatpush2.bf16.msra.mxu0 0
  %306 = vmatprep.subr.bf16.mxu0 0
  %307 = vmatpush2.bf16.msra.mxu0 0
  %308 = vmatprep.subr.bf16.mxu0 0
  %309 = vmatpush2.bf16.msra.mxu0 0
  %310 = vmatprep.subr.bf16.mxu0 0
  %311 = vmatpush2.bf16.msra.mxu0 0
  %312 = vmatprep.mubr.bf16.mxu0 0
  %313 = vmatmul.mubr.bf16.gmra.mxu0 %v24
  %v314 = vpop.f32.mrf.mxu0
  %v315 = vadd.f32 %v70, %v314
  %v316 = vpop.f32.mrf.mxu0
  %v317 = vadd.f32 %v74, %v316
  %v318 = vpop.f32.mrf.mxu0
  %v319 = vpop.f32.mrf.mxu0
  %320 = vdwg.mxu0
  %v321 = vmul.f32 %v274, 0.5
  %v322 = vmul.f32 %v276, 0.5
  %v323 = vmul.f32 %v315, 0.5
  %v324 = vmul.f32 %v317, 0.5
  %v325 = vtanh.pop %v321
  %v326 = vtanh.pop %v322
  %v327 = vtanh.pop %v323
  %v328 = vtanh.pop %v324
  %v329 = vadd.f32 %v325, 1.0
  %v330 = vadd.f32 %v326, 1.0
  %v331 = vadd.f32 %v327, 1.0
  %v332 = vadd.f32 %v328, 1.0
  %v333 = vmul.f32 %v329, 0.5
  %v334 = vmul.f32 %v330, 0.5
  %v335 = vmul.f32 %v331, 0.5
  %v336 = vmul.f32 %v332, 0.5
  %v337 = vmul.f32 %v274, %v333
  %v338 = vmul.f32 %v276, %v334
  %v339 = vmul.f32 %v315, %v335
  %v340 = vmul.f32 %v317, %v336
  %v341 = vpack.c.bf16 %v337, %v337
  %v342 = vpack.c.bf16 %v338, %v338
  %v343 = vpack.c.bf16 %v339, %v339
  %v344 = vpack.c.bf16 %v340, %v340
  %v345 = vld [vmem:[%s3] sm:$0xff]
  %v346 = vld [vmem:[%s3 + $0x8] sm:$0xff]
  %v347 = vld [vmem:[%s3 + $0x10] sm:$0xff]
  %v348 = vld [vmem:[%s3 + $0x18] sm:$0xff]
  %v349 = vld [vmem:[%s3 + $0x20] sm:$0xff]
  %v350 = vld [vmem:[%s3 + $0x28] sm:$0xff]
  %v351 = vld [vmem:[%s3 + $0x30] sm:$0xff]
  %v352 = vld [vmem:[%s3 + $0x38] sm:$0xff]
  %v353 = vld [vmem:[%s3 + $0x40] sm:$0xff]
  %v354 = vld [vmem:[%s3 + $0x48] sm:$0xff]
  %v355 = vld [vmem:[%s3 + $0x50] sm:$0xff]
  %v356 = vld [vmem:[%s3 + $0x58] sm:$0xff]
  %v357 = vld [vmem:[%s3 + $0x60] sm:$0xff]
  %v358 = vld [vmem:[%s3 + $0x68] sm:$0xff]
  %v359 = vld [vmem:[%s3 + $0x70] sm:$0xff]
  %v360 = vld [vmem:[%s3 + $0x78] sm:$0xff]
  %v361 = vld [vmem:[%s3 + $0x80] sm:$0xff]
  %v362 = vld [vmem:[%s3 + $0x88] sm:$0xff]
  %v363 = vld [vmem:[%s3 + $0x90] sm:$0xff]
  %v364 = vld [vmem:[%s3 + $0x98] sm:$0xff]
  %v365 = vld [vmem:[%s3 + $0xa0] sm:$0xff]
  %v366 = vld [vmem:[%s3 + $0xa8] sm:$0xff]
  %v367 = vld [vmem:[%s3 + $0xb0] sm:$0xff]
  %v368 = vld [vmem:[%s3 + $0xb8] sm:$0xff]
  %v369 = vld [vmem:[%s3 + $0xc0] sm:$0xff]
  %v370 = vld [vmem:[%s3 + $0xc8] sm:$0xff]
  %v371 = vld [vmem:[%s3 + $0xd0] sm:$0xff]
  %v372 = vld [vmem:[%s3 + $0xd8] sm:$0xff]
  %v373 = vld [vmem:[%s3 + $0xe0] sm:$0xff]
  %v374 = vld [vmem:[%s3 + $0xe8] sm:$0xff]
  %v375 = vld [vmem:[%s3 + $0xf0] sm:$0xff]
  %v376 = vld [vmem:[%s3 + $0xf8] sm:$0xff]
  %v377 = vld [vmem:[%s3 + $0x100] sm:$0xff]
  %v378 = vld [vmem:[%s3 + $0x108] sm:$0xff]
  %v379 = vld [vmem:[%s3 + $0x110] sm:$0xff]
  %v380 = vld [vmem:[%s3 + $0x118] sm:$0xff]
  %v381 = vld [vmem:[%s3 + $0x120] sm:$0xff]
  %v382 = vld [vmem:[%s3 + $0x128] sm:$0xff]
  %v383 = vld [vmem:[%s3 + $0x130] sm:$0xff]
  %v384 = vld [vmem:[%s3 + $0x138] sm:$0xff]
  %v385 = vld [vmem:[%s3 + $0x140] sm:$0xff]
  %v386 = vld [vmem:[%s3 + $0x148] sm:$0xff]
  %v387 = vld [vmem:[%s3 + $0x150] sm:$0xff]
  %v388 = vld [vmem:[%s3 + $0x158] sm:$0xff]
  %v389 = vld [vmem:[%s3 + $0x160] sm:$0xff]
  %v390 = vld [vmem:[%s3 + $0x168] sm:$0xff]
  %v391 = vld [vmem:[%s3 + $0x170] sm:$0xff]
  %v392 = vld [vmem:[%s3 + $0x178] sm:$0xff]
  %v393 = vld [vmem:[%s3 + $0x180] sm:$0xff]
  %v394 = vld [vmem:[%s3 + $0x188] sm:$0xff]
  %v395 = vld [vmem:[%s3 + $0x190] sm:$0xff]
  %v396 = vld [vmem:[%s3 + $0x198] sm:$0xff]
  %v397 = vld [vmem:[%s3 + $0x1a0] sm:$0xff]
  %v398 = vld [vmem:[%s3 + $0x1a8] sm:$0xff]
  %v399 = vld [vmem:[%s3 + $0x1b0] sm:$0xff]
  %v400 = vld [vmem:[%s3 + $0x1b8] sm:$0xff]
  %v401 = vld [vmem:[%s3 + $0x1c0] sm:$0xff]
  %v402 = vld [vmem:[%s3 + $0x1c8] sm:$0xff]
  %v403 = vld [vmem:[%s3 + $0x1d0] sm:$0xff]
  %v404 = vld [vmem:[%s3 + $0x1d8] sm:$0xff]
  %v405 = vld [vmem:[%s3 + $0x1e0] sm:$0xff]
  %v406 = vld [vmem:[%s3 + $0x1e8] sm:$0xff]
  %v407 = vld [vmem:[%s3 + $0x1f0] sm:$0xff]
  %v408 = vld [vmem:[%s3 + $0x1f8] sm:$0xff]
  %v409 = vld [vmem:[%s3 + $0x200] sm:$0xff]
  %v410 = vld [vmem:[%s3 + $0x208] sm:$0xff]
  %v411 = vld [vmem:[%s3 + $0x210] sm:$0xff]
  %v412 = vld [vmem:[%s3 + $0x218] sm:$0xff]
  %v413 = vld [vmem:[%s3 + $0x220] sm:$0xff]
  %v414 = vld [vmem:[%s3 + $0x228] sm:$0xff]
  %v415 = vld [vmem:[%s3 + $0x230] sm:$0xff]
  %v416 = vld [vmem:[%s3 + $0x238] sm:$0xff]
  %v417 = vld [vmem:[%s3 + $0x240] sm:$0xff]
  %v418 = vld [vmem:[%s3 + $0x248] sm:$0xff]
  %v419 = vld [vmem:[%s3 + $0x250] sm:$0xff]
  %v420 = vld [vmem:[%s3 + $0x258] sm:$0xff]
  %v421 = vld [vmem:[%s3 + $0x260] sm:$0xff]
  %v422 = vld [vmem:[%s3 + $0x268] sm:$0xff]
  %v423 = vld [vmem:[%s3 + $0x270] sm:$0xff]
  %v424 = vld [vmem:[%s3 + $0x278] sm:$0xff]
  %v425 = vld [vmem:[%s3 + $0x280] sm:$0xff]
  %v426 = vld [vmem:[%s3 + $0x288] sm:$0xff]
  %v427 = vld [vmem:[%s3 + $0x290] sm:$0xff]
  %v428 = vld [vmem:[%s3 + $0x298] sm:$0xff]
  %v429 = vld [vmem:[%s3 + $0x2a0] sm:$0xff]
  %v430 = vld [vmem:[%s3 + $0x2a8] sm:$0xff]
  %v431 = vld [vmem:[%s3 + $0x2b0] sm:$0xff]
  %v432 = vld [vmem:[%s3 + $0x2b8] sm:$0xff]
  %v433 = vld [vmem:[%s3 + $0x2c0] sm:$0xff]
  %v434 = vld [vmem:[%s3 + $0x2c8] sm:$0xff]
  %v435 = vld [vmem:[%s3 + $0x2d0] sm:$0xff]
  %v436 = vld [vmem:[%s3 + $0x2d8] sm:$0xff]
  %v437 = vld [vmem:[%s3 + $0x2e0] sm:$0xff]
  %v438 = vld [vmem:[%s3 + $0x2e8] sm:$0xff]
  %v439 = vld [vmem:[%s3 + $0x2f0] sm:$0xff]
  %v440 = vld [vmem:[%s3 + $0x2f8] sm:$0xff]
  %v441 = vld [vmem:[%s3 + $0x300] sm:$0xff]
  %v442 = vld [vmem:[%s3 + $0x308] sm:$0xff]
  %v443 = vld [vmem:[%s3 + $0x310] sm:$0xff]
  %v444 = vld [vmem:[%s3 + $0x318] sm:$0xff]
  %v445 = vld [vmem:[%s3 + $0x320] sm:$0xff]
  %v446 = vld [vmem:[%s3 + $0x328] sm:$0xff]
  %v447 = vld [vmem:[%s3 + $0x330] sm:$0xff]
  %v448 = vld [vmem:[%s3 + $0x338] sm:$0xff]
  %v449 = vld [vmem:[%s3 + $0x340] sm:$0xff]
  %v450 = vld [vmem:[%s3 + $0x348] sm:$0xff]
  %v451 = vld [vmem:[%s3 + $0x350] sm:$0xff]
  %v452 = vld [vmem:[%s3 + $0x358] sm:$0xff]
  %v453 = vld [vmem:[%s3 + $0x360] sm:$0xff]
  %v454 = vld [vmem:[%s3 + $0x368] sm:$0xff]
  %v455 = vld [vmem:[%s3 + $0x370] sm:$0xff]
  %v456 = vld [vmem:[%s3 + $0x378] sm:$0xff]
  %v457 = vld [vmem:[%s3 + $0x380] sm:$0xff]
  %v458 = vld [vmem:[%s3 + $0x388] sm:$0xff]
  %v459 = vld [vmem:[%s3 + $0x390] sm:$0xff]
  %v460 = vld [vmem:[%s3 + $0x398] sm:$0xff]
  %v461 = vld [vmem:[%s3 + $0x3a0] sm:$0xff]
  %v462 = vld [vmem:[%s3 + $0x3a8] sm:$0xff]
  %v463 = vld [vmem:[%s3 + $0x3b0] sm:$0xff]
  %v464 = vld [vmem:[%s3 + $0x3b8] sm:$0xff]
  %v465 = vld [vmem:[%s3 + $0x3c0] sm:$0xff]
  %v466 = vld [vmem:[%s3 + $0x3c8] sm:$0xff]
  %v467 = vld [vmem:[%s3 + $0x3d0] sm:$0xff]
  %v468 = vld [vmem:[%s3 + $0x3d8] sm:$0xff]
  %v469 = vld [vmem:[%s3 + $0x3e0] sm:$0xff]
  %v470 = vld [vmem:[%s3 + $0x3e8] sm:$0xff]
  %v471 = vld [vmem:[%s3 + $0x3f0] sm:$0xff]
  %v472 = vld [vmem:[%s3 + $0x3f8] sm:$0xff]
  %v473 = vld [vmem:[%s4] sm:$0xf]
  %v475 = vlaneseq
  %v476 = vshrl.u32 %v475, 7
  %v477 = vsub.s32 0, %v476
  %v478 = vrot.slane %v473, %v477
  %v479 = vlaneseq
  %v480 = vshrl.u32 %v479, 7
  %v481 = vsub.s32 1, %v480
  %v482 = vrot.slane %v473, %v481
  %v483 = vlaneseq
  %v484 = vshrl.u32 %v483, 7
  %v485 = vsub.s32 2, %v484
  %v486 = vrot.slane %v473, %v485
  %v487 = vlaneseq
  %v488 = vshrl.u32 %v487, 7
  %v489 = vsub.s32 3, %v488
  %v490 = vrot.slane %v473, %v489
  %v623 = vunpack.c.l.b16 %v345
  %v624 = vunpack.c.h.b16 %v345
  %v625 = vunpack.c.l.b16 %v346
  %v626 = vunpack.c.h.b16 %v346
  %v627 = vunpack.c.l.b16 %v347
  %v628 = vunpack.c.h.b16 %v347
  %v629 = vunpack.c.l.b16 %v348
  %v630 = vunpack.c.h.b16 %v348
  %v631 = vunpack.c.l.b16 %v349
  %v632 = vunpack.c.h.b16 %v349
  %v633 = vunpack.c.l.b16 %v350
  %v634 = vunpack.c.h.b16 %v350
  %v635 = vunpack.c.l.b16 %v351
  %v636 = vunpack.c.h.b16 %v351
  %v637 = vunpack.c.l.b16 %v352
  %v638 = vunpack.c.h.b16 %v352
  %v639 = vunpack.c.l.b16 %v353
  %v640 = vunpack.c.h.b16 %v353
  %v641 = vunpack.c.l.b16 %v354
  %v642 = vunpack.c.h.b16 %v354
  %v643 = vunpack.c.l.b16 %v355
  %v644 = vunpack.c.h.b16 %v355
  %v645 = vunpack.c.l.b16 %v356
  %v646 = vunpack.c.h.b16 %v356
  %v647 = vunpack.c.l.b16 %v357
  %v648 = vunpack.c.h.b16 %v357
  %v649 = vunpack.c.l.b16 %v358
  %v650 = vunpack.c.h.b16 %v358
  %v651 = vunpack.c.l.b16 %v359
  %v652 = vunpack.c.h.b16 %v359
  %v653 = vunpack.c.l.b16 %v360
  %v654 = vunpack.c.h.b16 %v360
  %v655 = vunpack.c.l.b16 %v361
  %v656 = vunpack.c.h.b16 %v361
  %v657 = vunpack.c.l.b16 %v362
  %v658 = vunpack.c.h.b16 %v362
  %v659 = vunpack.c.l.b16 %v363
  %v660 = vunpack.c.h.b16 %v363
  %v661 = vunpack.c.l.b16 %v364
  %v662 = vunpack.c.h.b16 %v364
  %v663 = vunpack.c.l.b16 %v365
  %v664 = vunpack.c.h.b16 %v365
  %v665 = vunpack.c.l.b16 %v366
  %v666 = vunpack.c.h.b16 %v366
  %v667 = vunpack.c.l.b16 %v367
  %v668 = vunpack.c.h.b16 %v367
  %v669 = vunpack.c.l.b16 %v368
  %v670 = vunpack.c.h.b16 %v368
  %v671 = vunpack.c.l.b16 %v369
  %v672 = vunpack.c.h.b16 %v369
  %v673 = vunpack.c.l.b16 %v370
  %v674 = vunpack.c.h.b16 %v370
  %v675 = vunpack.c.l.b16 %v371
  %v676 = vunpack.c.h.b16 %v371
  %v677 = vunpack.c.l.b16 %v372
  %v678 = vunpack.c.h.b16 %v372
  %v679 = vunpack.c.l.b16 %v373
  %v680 = vunpack.c.h.b16 %v373
  %v681 = vunpack.c.l.b16 %v374
  %v682 = vunpack.c.h.b16 %v374
  %v683 = vunpack.c.l.b16 %v375
  %v684 = vunpack.c.h.b16 %v375
  %v685 = vunpack.c.l.b16 %v376
  %v686 = vunpack.c.h.b16 %v376
  %v687 = vunpack.c.l.b16 %v377
  %v688 = vunpack.c.h.b16 %v377
  %v689 = vunpack.c.l.b16 %v378
  %v690 = vunpack.c.h.b16 %v378
  %v691 = vunpack.c.l.b16 %v379
  %v692 = vunpack.c.h.b16 %v379
  %v693 = vunpack.c.l.b16 %v380
  %v694 = vunpack.c.h.b16 %v380
  %v695 = vunpack.c.l.b16 %v381
  %v696 = vunpack.c.h.b16 %v381
  %v697 = vunpack.c.l.b16 %v382
  %v698 = vunpack.c.h.b16 %v382
  %v699 = vunpack.c.l.b16 %v383
  %v700 = vunpack.c.h.b16 %v383
  %v701 = vunpack.c.l.b16 %v384
  %v702 = vunpack.c.h.b16 %v384
  %v703 = vunpack.c.l.b16 %v385
  %v704 = vunpack.c.h.b16 %v385
  %v705 = vunpack.c.l.b16 %v386
  %v706 = vunpack.c.h.b16 %v386
  %v707 = vunpack.c.l.b16 %v387
  %v708 = vunpack.c.h.b16 %v387
  %v709 = vunpack.c.l.b16 %v388
  %v710 = vunpack.c.h.b16 %v388
  %v711 = vunpack.c.l.b16 %v389
  %v712 = vunpack.c.h.b16 %v389
  %v713 = vunpack.c.l.b16 %v390
  %v714 = vunpack.c.h.b16 %v390
  %v715 = vunpack.c.l.b16 %v391
  %v716 = vunpack.c.h.b16 %v391
  %v717 = vunpack.c.l.b16 %v392
  %v718 = vunpack.c.h.b16 %v392
  %v719 = vunpack.c.l.b16 %v393
  %v720 = vunpack.c.h.b16 %v393
  %v721 = vunpack.c.l.b16 %v394
  %v722 = vunpack.c.h.b16 %v394
  %v723 = vunpack.c.l.b16 %v395
  %v724 = vunpack.c.h.b16 %v395
  %v725 = vunpack.c.l.b16 %v396
  %v726 = vunpack.c.h.b16 %v396
  %v727 = vunpack.c.l.b16 %v397
  %v728 = vunpack.c.h.b16 %v397
  %v729 = vunpack.c.l.b16 %v398
  %v730 = vunpack.c.h.b16 %v398
  %v731 = vunpack.c.l.b16 %v399
  %v732 = vunpack.c.h.b16 %v399
  %v733 = vunpack.c.l.b16 %v400
  %v734 = vunpack.c.h.b16 %v400
  %v735 = vunpack.c.l.b16 %v401
  %v736 = vunpack.c.h.b16 %v401
  %v737 = vunpack.c.l.b16 %v402
  %v738 = vunpack.c.h.b16 %v402
  %v739 = vunpack.c.l.b16 %v403
  %v740 = vunpack.c.h.b16 %v403
  %v741 = vunpack.c.l.b16 %v404
  %v742 = vunpack.c.h.b16 %v404
  %v743 = vunpack.c.l.b16 %v405
  %v744 = vunpack.c.h.b16 %v405
  %v745 = vunpack.c.l.b16 %v406
  %v746 = vunpack.c.h.b16 %v406
  %v747 = vunpack.c.l.b16 %v407
  %v748 = vunpack.c.h.b16 %v407
  %v749 = vunpack.c.l.b16 %v408
  %v750 = vunpack.c.h.b16 %v408
  %v751 = vunpack.c.l.b16 %v409
  %v752 = vunpack.c.h.b16 %v409
  %v753 = vunpack.c.l.b16 %v410
  %v754 = vunpack.c.h.b16 %v410
  %v755 = vunpack.c.l.b16 %v411
  %v756 = vunpack.c.h.b16 %v411
  %v757 = vunpack.c.l.b16 %v412
  %v758 = vunpack.c.h.b16 %v412
  %v759 = vunpack.c.l.b16 %v413
  %v760 = vunpack.c.h.b16 %v413
  %v761 = vunpack.c.l.b16 %v414
  %v762 = vunpack.c.h.b16 %v414
  %v763 = vunpack.c.l.b16 %v415
  %v764 = vunpack.c.h.b16 %v415
  %v765 = vunpack.c.l.b16 %v416
  %v766 = vunpack.c.h.b16 %v416
  %v767 = vunpack.c.l.b16 %v417
  %v768 = vunpack.c.h.b16 %v417
  %v769 = vunpack.c.l.b16 %v418
  %v770 = vunpack.c.h.b16 %v418
  %v771 = vunpack.c.l.b16 %v419
  %v772 = vunpack.c.h.b16 %v419
  %v773 = vunpack.c.l.b16 %v420
  %v774 = vunpack.c.h.b16 %v420
  %v775 = vunpack.c.l.b16 %v421
  %v776 = vunpack.c.h.b16 %v421
  %v777 = vunpack.c.l.b16 %v422
  %v778 = vunpack.c.h.b16 %v422
  %v779 = vunpack.c.l.b16 %v423
  %v780 = vunpack.c.h.b16 %v423
  %v781 = vunpack.c.l.b16 %v424
  %v782 = vunpack.c.h.b16 %v424
  %v783 = vunpack.c.l.b16 %v425
  %v784 = vunpack.c.h.b16 %v425
  %v785 = vunpack.c.l.b16 %v426
  %v786 = vunpack.c.h.b16 %v426
  %v787 = vunpack.c.l.b16 %v427
  %v788 = vunpack.c.h.b16 %v427
  %v789 = vunpack.c.l.b16 %v428
  %v790 = vunpack.c.h.b16 %v428
  %v791 = vunpack.c.l.b16 %v429
  %v792 = vunpack.c.h.b16 %v429
  %v793 = vunpack.c.l.b16 %v430
  %v794 = vunpack.c.h.b16 %v430
  %v795 = vunpack.c.l.b16 %v431
  %v796 = vunpack.c.h.b16 %v431
  %v797 = vunpack.c.l.b16 %v432
  %v798 = vunpack.c.h.b16 %v432
  %v799 = vunpack.c.l.b16 %v433
  %v800 = vunpack.c.h.b16 %v433
  %v801 = vunpack.c.l.b16 %v434
  %v802 = vunpack.c.h.b16 %v434
  %v803 = vunpack.c.l.b16 %v435
  %v804 = vunpack.c.h.b16 %v435
  %v805 = vunpack.c.l.b16 %v436
  %v806 = vunpack.c.h.b16 %v436
  %v807 = vunpack.c.l.b16 %v437
  %v808 = vunpack.c.h.b16 %v437
  %v809 = vunpack.c.l.b16 %v438
  %v810 = vunpack.c.h.b16 %v438
  %v811 = vunpack.c.l.b16 %v439
  %v812 = vunpack.c.h.b16 %v439
  %v813 = vunpack.c.l.b16 %v440
  %v814 = vunpack.c.h.b16 %v440
  %v815 = vunpack.c.l.b16 %v441
  %v816 = vunpack.c.h.b16 %v441
  %v817 = vunpack.c.l.b16 %v442
  %v818 = vunpack.c.h.b16 %v442
  %v819 = vunpack.c.l.b16 %v443
  %v820 = vunpack.c.h.b16 %v443
  %v821 = vunpack.c.l.b16 %v444
  %v822 = vunpack.c.h.b16 %v444
  %v823 = vunpack.c.l.b16 %v445
  %v824 = vunpack.c.h.b16 %v445
  %v825 = vunpack.c.l.b16 %v446
  %v826 = vunpack.c.h.b16 %v446
  %v827 = vunpack.c.l.b16 %v447
  %v828 = vunpack.c.h.b16 %v447
  %v829 = vunpack.c.l.b16 %v448
  %v830 = vunpack.c.h.b16 %v448
  %v831 = vunpack.c.l.b16 %v449
  %v832 = vunpack.c.h.b16 %v449
  %v833 = vunpack.c.l.b16 %v450
  %v834 = vunpack.c.h.b16 %v450
  %v835 = vunpack.c.l.b16 %v451
  %v836 = vunpack.c.h.b16 %v451
  %v837 = vunpack.c.l.b16 %v452
  %v838 = vunpack.c.h.b16 %v452
  %v839 = vunpack.c.l.b16 %v453
  %v840 = vunpack.c.h.b16 %v453
  %v841 = vunpack.c.l.b16 %v454
  %v842 = vunpack.c.h.b16 %v454
  %v843 = vunpack.c.l.b16 %v455
  %v844 = vunpack.c.h.b16 %v455
  %v845 = vunpack.c.l.b16 %v456
  %v846 = vunpack.c.h.b16 %v456
  %v847 = vunpack.c.l.b16 %v457
  %v848 = vunpack.c.h.b16 %v457
  %v849 = vunpack.c.l.b16 %v458
  %v850 = vunpack.c.h.b16 %v458
  %v851 = vunpack.c.l.b16 %v459
  %v852 = vunpack.c.h.b16 %v459
  %v853 = vunpack.c.l.b16 %v460
  %v854 = vunpack.c.h.b16 %v460
  %v855 = vunpack.c.l.b16 %v461
  %v856 = vunpack.c.h.b16 %v461
  %v857 = vunpack.c.l.b16 %v462
  %v858 = vunpack.c.h.b16 %v462
  %v859 = vunpack.c.l.b16 %v463
  %v860 = vunpack.c.h.b16 %v463
  %v861 = vunpack.c.l.b16 %v464
  %v862 = vunpack.c.h.b16 %v464
  %v863 = vunpack.c.l.b16 %v465
  %v864 = vunpack.c.h.b16 %v465
  %v865 = vunpack.c.l.b16 %v466
  %v866 = vunpack.c.h.b16 %v466
  %v867 = vunpack.c.l.b16 %v467
  %v868 = vunpack.c.h.b16 %v467
  %v869 = vunpack.c.l.b16 %v468
  %v870 = vunpack.c.h.b16 %v468
  %v871 = vunpack.c.l.b16 %v469
  %v872 = vunpack.c.h.b16 %v469
  %v873 = vunpack.c.l.b16 %v470
  %v874 = vunpack.c.h.b16 %v470
  %v875 = vunpack.c.l.b16 %v471
  %v876 = vunpack.c.h.b16 %v471
  %v877 = vunpack.c.l.b16 %v472
  %v878 = vunpack.c.h.b16 %v472
  %v879 = vpack.c.b16 %v627, %v623
  %v880 = vpack.c.b16 %v628, %v624
  %v881 = vpack.c.b16 %v629, %v625
  %v882 = vpack.c.b16 %v630, %v626
  %v883 = vpack.c.b16 %v635, %v631
  %v884 = vpack.c.b16 %v636, %v632
  %v885 = vpack.c.b16 %v637, %v633
  %v886 = vpack.c.b16 %v638, %v634
  %v887 = vpack.c.b16 %v643, %v639
  %v888 = vpack.c.b16 %v644, %v640
  %v889 = vpack.c.b16 %v645, %v641
  %v890 = vpack.c.b16 %v646, %v642
  %v891 = vpack.c.b16 %v651, %v647
  %v892 = vpack.c.b16 %v652, %v648
  %v893 = vpack.c.b16 %v653, %v649
  %v894 = vpack.c.b16 %v654, %v650
  %v895 = vpack.c.b16 %v659, %v655
  %v896 = vpack.c.b16 %v660, %v656
  %v897 = vpack.c.b16 %v661, %v657
  %v898 = vpack.c.b16 %v662, %v658
  %v899 = vpack.c.b16 %v667, %v663
  %v900 = vpack.c.b16 %v668, %v664
  %v901 = vpack.c.b16 %v669, %v665
  %v902 = vpack.c.b16 %v670, %v666
  %v903 = vpack.c.b16 %v675, %v671
  %v904 = vpack.c.b16 %v676, %v672
  %v905 = vpack.c.b16 %v677, %v673
  %v906 = vpack.c.b16 %v678, %v674
  %v907 = vpack.c.b16 %v683, %v679
  %v908 = vpack.c.b16 %v684, %v680
  %v909 = vpack.c.b16 %v685, %v681
  %v910 = vpack.c.b16 %v686, %v682
  %v911 = vpack.c.b16 %v691, %v687
  %v912 = vpack.c.b16 %v692, %v688
  %v913 = vpack.c.b16 %v693, %v689
  %v914 = vpack.c.b16 %v694, %v690
  %v915 = vpack.c.b16 %v699, %v695
  %v916 = vpack.c.b16 %v700, %v696
  %v917 = vpack.c.b16 %v701, %v697
  %v918 = vpack.c.b16 %v702, %v698
  %v919 = vpack.c.b16 %v707, %v703
  %v920 = vpack.c.b16 %v708, %v704
  %v921 = vpack.c.b16 %v709, %v705
  %v922 = vpack.c.b16 %v710, %v706
  %v923 = vpack.c.b16 %v715, %v711
  %v924 = vpack.c.b16 %v716, %v712
  %v925 = vpack.c.b16 %v717, %v713
  %v926 = vpack.c.b16 %v718, %v714
  %v927 = vpack.c.b16 %v723, %v719
  %v928 = vpack.c.b16 %v724, %v720
  %v929 = vpack.c.b16 %v725, %v721
  %v930 = vpack.c.b16 %v726, %v722
  %v931 = vpack.c.b16 %v731, %v727
  %v932 = vpack.c.b16 %v732, %v728
  %v933 = vpack.c.b16 %v733, %v729
  %v934 = vpack.c.b16 %v734, %v730
  %v935 = vpack.c.b16 %v739, %v735
  %v936 = vpack.c.b16 %v740, %v736
  %v937 = vpack.c.b16 %v741, %v737
  %v938 = vpack.c.b16 %v742, %v738
  %v939 = vpack.c.b16 %v747, %v743
  %v940 = vpack.c.b16 %v748, %v744
  %v941 = vpack.c.b16 %v749, %v745
  %v942 = vpack.c.b16 %v750, %v746
  %v943 = vpack.c.b16 %v755, %v751
  %v944 = vpack.c.b16 %v756, %v752
  %v945 = vpack.c.b16 %v757, %v753
  %v946 = vpack.c.b16 %v758, %v754
  %v947 = vpack.c.b16 %v763, %v759
  %v948 = vpack.c.b16 %v764, %v760
  %v949 = vpack.c.b16 %v765, %v761
  %v950 = vpack.c.b16 %v766, %v762
  %v951 = vpack.c.b16 %v771, %v767
  %v952 = vpack.c.b16 %v772, %v768
  %v953 = vpack.c.b16 %v773, %v769
  %v954 = vpack.c.b16 %v774, %v770
  %v955 = vpack.c.b16 %v779, %v775
  %v956 = vpack.c.b16 %v780, %v776
  %v957 = vpack.c.b16 %v781, %v777
  %v958 = vpack.c.b16 %v782, %v778
  %v959 = vpack.c.b16 %v787, %v783
  %v960 = vpack.c.b16 %v788, %v784
  %v961 = vpack.c.b16 %v789, %v785
  %v962 = vpack.c.b16 %v790, %v786
  %v963 = vpack.c.b16 %v795, %v791
  %v964 = vpack.c.b16 %v796, %v792
  %v965 = vpack.c.b16 %v797, %v793
  %v966 = vpack.c.b16 %v798, %v794
  %v967 = vpack.c.b16 %v803, %v799
  %v968 = vpack.c.b16 %v804, %v800
  %v969 = vpack.c.b16 %v805, %v801
  %v970 = vpack.c.b16 %v806, %v802
  %v971 = vpack.c.b16 %v811, %v807
  %v972 = vpack.c.b16 %v812, %v808
  %v973 = vpack.c.b16 %v813, %v809
  %v974 = vpack.c.b16 %v814, %v810
  %v975 = vpack.c.b16 %v819, %v815
  %v976 = vpack.c.b16 %v820, %v816
  %v977 = vpack.c.b16 %v821, %v817
  %v978 = vpack.c.b16 %v822, %v818
  %v979 = vpack.c.b16 %v827, %v823
  %v980 = vpack.c.b16 %v828, %v824
  %v981 = vpack.c.b16 %v829, %v825
  %v982 = vpack.c.b16 %v830, %v826
  %v983 = vpack.c.b16 %v835, %v831
  %v984 = vpack.c.b16 %v836, %v832
  %v985 = vpack.c.b16 %v837, %v833
  %v986 = vpack.c.b16 %v838, %v834
  %v987 = vpack.c.b16 %v843, %v839
  %v988 = vpack.c.b16 %v844, %v840
  %v989 = vpack.c.b16 %v845, %v841
  %v990 = vpack.c.b16 %v846, %v842
  %v991 = vpack.c.b16 %v851, %v847
  %v992 = vpack.c.b16 %v852, %v848
  %v993 = vpack.c.b16 %v853, %v849
  %v994 = vpack.c.b16 %v854, %v850
  %v995 = vpack.c.b16 %v859, %v855
  %v996 = vpack.c.b16 %v860, %v856
  %v997 = vpack.c.b16 %v861, %v857
  %v998 = vpack.c.b16 %v862, %v858
  %v999 = vpack.c.b16 %v867, %v863
  %v1000 = vpack.c.b16 %v868, %v864
  %v1001 = vpack.c.b16 %v869, %v865
  %v1002 = vpack.c.b16 %v870, %v866
  %v1003 = vpack.c.b16 %v875, %v871
  %v1004 = vpack.c.b16 %v876, %v872
  %v1005 = vpack.c.b16 %v877, %v873
  %v1006 = vpack.c.b16 %v878, %v874
  %1135 = vmatprep.subr.bf16.mxu0 %v908
  %1136 = vmatpush1.bf16.msra.mxu0 %v907
  %1137 = vmatprep.subr.bf16.mxu0 %v904
  %1138 = vmatpush1.bf16.msra.mxu0 %v903
  %1139 = vmatprep.subr.bf16.mxu0 %v900
  %1140 = vmatpush1.bf16.msra.mxu0 %v899
  %1141 = vmatprep.subr.bf16.mxu0 %v896
  %1142 = vmatpush1.bf16.msra.mxu0 %v895
  %1143 = vmatprep.subr.bf16.mxu0 %v892
  %1144 = vmatpush1.bf16.msra.mxu0 %v891
  %1145 = vmatprep.subr.bf16.mxu0 %v888
  %1146 = vmatpush1.bf16.msra.mxu0 %v887
  %1147 = vmatprep.subr.bf16.mxu0 %v884
  %1148 = vmatpush1.bf16.msra.mxu0 %v883
  %1149 = vmatprep.subr.bf16.mxu0 %v880
  %1150 = vmatpush1.bf16.msra.mxu0 %v879
  %1151 = vmatprep.subr.bf16.mxu0 %v940
  %1152 = vmatpush2.bf16.msra.mxu0 %v939
  %1153 = vmatprep.subr.bf16.mxu0 %v936
  %1154 = vmatpush2.bf16.msra.mxu0 %v935
  %1155 = vmatprep.subr.bf16.mxu0 %v932
  %1156 = vmatpush2.bf16.msra.mxu0 %v931
  %1157 = vmatprep.subr.bf16.mxu0 %v928
  %1158 = vmatpush2.bf16.msra.mxu0 %v927
  %1159 = vmatprep.subr.bf16.mxu0 %v924
  %1160 = vmatpush2.bf16.msra.mxu0 %v923
  %1161 = vmatprep.subr.bf16.mxu0 %v920
  %1162 = vmatpush2.bf16.msra.mxu0 %v919
  %1163 = vmatprep.subr.bf16.mxu0 %v916
  %1164 = vmatpush2.bf16.msra.mxu0 %v915
  %1165 = vmatprep.subr.bf16.mxu0 %v912
  %1166 = vmatpush2.bf16.msra.mxu0 %v911
  %1167 = vmatprep.mubr.bf16.mxu0 %v342
  %1168 = vmatmul.mubr.bf16.gmra.mxu0 %v341
  %v1169 = vpop.f32.mrf.mxu0
  %v1170 = vadd.f32 %v478, %v1169
  %v1171 = vpop.f32.mrf.mxu0
  %v1172 = vadd.f32 %v482, %v1171
  %v1173 = vpop.f32.mrf.mxu0
  %v1174 = vpop.f32.mrf.mxu0
  %1175 = vdwg.mxu0
  %1176 = vmatprep.subr.bf16.mxu0 %v972
  %1177 = vmatpush1.bf16.msra.mxu0 %v971
  %1178 = vmatprep.subr.bf16.mxu0 %v968
  %1179 = vmatpush1.bf16.msra.mxu0 %v967
  %1180 = vmatprep.subr.bf16.mxu0 %v964
  %1181 = vmatpush1.bf16.msra.mxu0 %v963
  %1182 = vmatprep.subr.bf16.mxu0 %v960
  %1183 = vmatpush1.bf16.msra.mxu0 %v959
  %1184 = vmatprep.subr.bf16.mxu0 %v956
  %1185 = vmatpush1.bf16.msra.mxu0 %v955
  %1186 = vmatprep.subr.bf16.mxu0 %v952
  %1187 = vmatpush1.bf16.msra.mxu0 %v951
  %1188 = vmatprep.subr.bf16.mxu0 %v948
  %1189 = vmatpush1.bf16.msra.mxu0 %v947
  %1190 = vmatprep.subr.bf16.mxu0 %v944
  %1191 = vmatpush1.bf16.msra.mxu0 %v943
  %1192 = vmatprep.subr.bf16.mxu0 %v1004
  %1193 = vmatpush2.bf16.msra.mxu0 %v1003
  %1194 = vmatprep.subr.bf16.mxu0 %v1000
  %1195 = vmatpush2.bf16.msra.mxu0 %v999
  %1196 = vmatprep.subr.bf16.mxu0 %v996
  %1197 = vmatpush2.bf16.msra.mxu0 %v995
  %1198 = vmatprep.subr.bf16.mxu0 %v992
  %1199 = vmatpush2.bf16.msra.mxu0 %v991
  %1200 = vmatprep.subr.bf16.mxu0 %v988
  %1201 = vmatpush2.bf16.msra.mxu0 %v987
  %1202 = vmatprep.subr.bf16.mxu0 %v984
  %1203 = vmatpush2.bf16.msra.mxu0 %v983
  %1204 = vmatprep.subr.bf16.mxu0 %v980
  %1205 = vmatpush2.bf16.msra.mxu0 %v979
  %1206 = vmatprep.subr.bf16.mxu0 %v976
  %1207 = vmatpush2.bf16.msra.mxu0 %v975
  %1208 = vmatprep.mubr.bf16.mxu0 %v344
  %1209 = vmatmul.mubr.bf16.gmra.mxu0 %v343
  %v1210 = vpop.f32.mrf.mxu0
  %v1211 = vadd.f32 %v1170, %v1210
  %v1212 = vpop.f32.mrf.mxu0
  %v1213 = vadd.f32 %v1172, %v1212
  %v1214 = vpop.f32.mrf.mxu0
  %v1215 = vpop.f32.mrf.mxu0
  %1216 = vdwg.mxu0
  %1217 = vmatprep.subr.bf16.mxu0 %v910
  %1218 = vmatpush1.bf16.msra.mxu0 %v909
  %1219 = vmatprep.subr.bf16.mxu0 %v906
  %1220 = vmatpush1.bf16.msra.mxu0 %v905
  %1221 = vmatprep.subr.bf16.mxu0 %v902
  %1222 = vmatpush1.bf16.msra.mxu0 %v901
  %1223 = vmatprep.subr.bf16.mxu0 %v898
  %1224 = vmatpush1.bf16.msra.mxu0 %v897
  %1225 = vmatprep.subr.bf16.mxu0 %v894
  %1226 = vmatpush1.bf16.msra.mxu0 %v893
  %1227 = vmatprep.subr.bf16.mxu0 %v890
  %1228 = vmatpush1.bf16.msra.mxu0 %v889
  %1229 = vmatprep.subr.bf16.mxu0 %v886
  %1230 = vmatpush1.bf16.msra.mxu0 %v885
  %1231 = vmatprep.subr.bf16.mxu0 %v882
  %1232 = vmatpush1.bf16.msra.mxu0 %v881
  %1233 = vmatprep.subr.bf16.mxu0 %v942
  %1234 = vmatpush2.bf16.msra.mxu0 %v941
  %1235 = vmatprep.subr.bf16.mxu0 %v938
  %1236 = vmatpush2.bf16.msra.mxu0 %v937
  %1237 = vmatprep.subr.bf16.mxu0 %v934
  %1238 = vmatpush2.bf16.msra.mxu0 %v933
  %1239 = vmatprep.subr.bf16.mxu0 %v930
  %1240 = vmatpush2.bf16.msra.mxu0 %v929
  %1241 = vmatprep.subr.bf16.mxu0 %v926
  %1242 = vmatpush2.bf16.msra.mxu0 %v925
  %1243 = vmatprep.subr.bf16.mxu0 %v922
  %1244 = vmatpush2.bf16.msra.mxu0 %v921
  %1245 = vmatprep.subr.bf16.mxu0 %v918
  %1246 = vmatpush2.bf16.msra.mxu0 %v917
  %1247 = vmatprep.subr.bf16.mxu0 %v914
  %1248 = vmatpush2.bf16.msra.mxu0 %v913
  %1249 = vmatprep.mubr.bf16.mxu0 %v342
  %1250 = vmatmul.mubr.bf16.gmra.mxu0 %v341
  %v1251 = vpop.f32.mrf.mxu0
  %v1252 = vadd.f32 %v486, %v1251
  %v1253 = vpop.f32.mrf.mxu0
  %v1254 = vadd.f32 %v490, %v1253
  %v1255 = vpop.f32.mrf.mxu0
  %v1256 = vpop.f32.mrf.mxu0
  %1257 = vdwg.mxu0
  %1258 = vmatprep.subr.bf16.mxu0 %v974
  %1259 = vmatpush1.bf16.msra.mxu0 %v973
  %1260 = vmatprep.subr.bf16.mxu0 %v970
  %1261 = vmatpush1.bf16.msra.mxu0 %v969
  %1262 = vmatprep.subr.bf16.mxu0 %v966
  %1263 = vmatpush1.bf16.msra.mxu0 %v965
  %1264 = vmatprep.subr.bf16.mxu0 %v962
  %1265 = vmatpush1.bf16.msra.mxu0 %v961
  %1266 = vmatprep.subr.bf16.mxu0 %v958
  %1267 = vmatpush1.bf16.msra.mxu0 %v957
  %1268 = vmatprep.subr.bf16.mxu0 %v954
  %1269 = vmatpush1.bf16.msra.mxu0 %v953
  %1270 = vmatprep.subr.bf16.mxu0 %v950
  %1271 = vmatpush1.bf16.msra.mxu0 %v949
  %1272 = vmatprep.subr.bf16.mxu0 %v946
  %1273 = vmatpush1.bf16.msra.mxu0 %v945
  %1274 = vmatprep.subr.bf16.mxu0 %v1006
  %1275 = vmatpush2.bf16.msra.mxu0 %v1005
  %1276 = vmatprep.subr.bf16.mxu0 %v1002
  %1277 = vmatpush2.bf16.msra.mxu0 %v1001
  %1278 = vmatprep.subr.bf16.mxu0 %v998
  %1279 = vmatpush2.bf16.msra.mxu0 %v997
  %1280 = vmatprep.subr.bf16.mxu0 %v994
  %1281 = vmatpush2.bf16.msra.mxu0 %v993
  %1282 = vmatprep.subr.bf16.mxu0 %v990
  %1283 = vmatpush2.bf16.msra.mxu0 %v989
  %1284 = vmatprep.subr.bf16.mxu0 %v986
  %1285 = vmatpush2.bf16.msra.mxu0 %v985
  %1286 = vmatprep.subr.bf16.mxu0 %v982
  %1287 = vmatpush2.bf16.msra.mxu0 %v981
  %1288 = vmatprep.subr.bf16.mxu0 %v978
  %1289 = vmatpush2.bf16.msra.mxu0 %v977
  %1290 = vmatprep.mubr.bf16.mxu0 %v344
  %1291 = vmatmul.mubr.bf16.gmra.mxu0 %v343
  %v1292 = vpop.f32.mrf.mxu0
  %v1293 = vadd.f32 %v1252, %v1292
  %v1294 = vpop.f32.mrf.mxu0
  %v1295 = vadd.f32 %v1254, %v1294
  %v1296 = vpop.f32.mrf.mxu0
  %v1297 = vpop.f32.mrf.mxu0
  %1298 = vdwg.mxu0
  %v1299 = vmul.f32 %v1211, 0.5
  %v1300 = vmul.f32 %v1213, 0.5
  %v1301 = vmul.f32 %v1293, 0.5
  %v1302 = vmul.f32 %v1295, 0.5
  %v1303 = vtanh.pop %v1299
  %v1304 = vtanh.pop %v1300
  %v1305 = vtanh.pop %v1301
  %v1306 = vtanh.pop %v1302
  %v1307 = vadd.f32 %v1303, 1.0
  %v1308 = vadd.f32 %v1304, 1.0
  %v1309 = vadd.f32 %v1305, 1.0
  %v1310 = vadd.f32 %v1306, 1.0
  %v1311 = vmul.f32 %v1307, 0.5
  %v1312 = vmul.f32 %v1308, 0.5
  %v1313 = vmul.f32 %v1309, 0.5
  %v1314 = vmul.f32 %v1310, 0.5
  %v1315 = vmul.f32 %v1211, %v1311
  %v1316 = vmul.f32 %v1213, %v1312
  %v1317 = vmul.f32 %v1293, %v1313
  %v1318 = vmul.f32 %v1295, %v1314
  %v1319 = vpack.c.bf16 %v1315, %v1315
  %v1320 = vpack.c.bf16 %v1316, %v1316
  %v1321 = vpack.c.bf16 %v1317, %v1317
  %v1322 = vpack.c.bf16 %v1318, %v1318
  %v1323 = vld [vmem:[%s5] sm:$0xf]
  %v1324 = vld [vmem:[%s5 + $0x4] sm:$0xf]
  %v1325 = vld [vmem:[%s5 + $0x8] sm:$0xf]
  %v1326 = vld [vmem:[%s5 + $0xc] sm:$0xf]
  %v1327 = vld [vmem:[%s5 + $0x10] sm:$0xf]
  %v1328 = vld [vmem:[%s5 + $0x14] sm:$0xf]
  %v1329 = vld [vmem:[%s5 + $0x18] sm:$0xf]
  %v1330 = vld [vmem:[%s5 + $0x1c] sm:$0xf]
  %v1331 = vld [vmem:[%s5 + $0x20] sm:$0xf]
  %v1332 = vld [vmem:[%s5 + $0x24] sm:$0xf]
  %v1333 = vld [vmem:[%s5 + $0x28] sm:$0xf]
  %v1334 = vld [vmem:[%s5 + $0x2c] sm:$0xf]
  %v1335 = vld [vmem:[%s5 + $0x30] sm:$0xf]
  %v1336 = vld [vmem:[%s5 + $0x34] sm:$0xf]
  %v1337 = vld [vmem:[%s5 + $0x38] sm:$0xf]
  %v1338 = vld [vmem:[%s5 + $0x3c] sm:$0xf]
  %v1339 = vld [vmem:[%s5 + $0x40] sm:$0xf]
  %v1340 = vld [vmem:[%s5 + $0x44] sm:$0xf]
  %v1341 = vld [vmem:[%s5 + $0x48] sm:$0xf]
  %v1342 = vld [vmem:[%s5 + $0x4c] sm:$0xf]
  %v1343 = vld [vmem:[%s5 + $0x50] sm:$0xf]
  %v1344 = vld [vmem:[%s5 + $0x54] sm:$0xf]
  %v1345 = vld [vmem:[%s5 + $0x58] sm:$0xf]
  %v1346 = vld [vmem:[%s5 + $0x5c] sm:$0xf]
  %v1347 = vld [vmem:[%s5 + $0x60] sm:$0xf]
  %v1348 = vld [vmem:[%s5 + $0x64] sm:$0xf]
  %v1349 = vld [vmem:[%s5 + $0x68] sm:$0xf]
  %v1350 = vld [vmem:[%s5 + $0x6c] sm:$0xf]
  %v1351 = vld [vmem:[%s5 + $0x70] sm:$0xf]
  %v1352 = vld [vmem:[%s5 + $0x74] sm:$0xf]
  %v1353 = vld [vmem:[%s5 + $0x78] sm:$0xf]
  %v1354 = vld [vmem:[%s5 + $0x7c] sm:$0xf]
  %v1355 = vld [vmem:[%s5 + $0x80] sm:$0xf]
  %v1356 = vld [vmem:[%s5 + $0x84] sm:$0xf]
  %v1357 = vld [vmem:[%s5 + $0x88] sm:$0xf]
  %v1358 = vld [vmem:[%s5 + $0x8c] sm:$0xf]
  %v1359 = vld [vmem:[%s5 + $0x90] sm:$0xf]
  %v1360 = vld [vmem:[%s5 + $0x94] sm:$0xf]
  %v1361 = vld [vmem:[%s5 + $0x98] sm:$0xf]
  %v1362 = vld [vmem:[%s5 + $0x9c] sm:$0xf]
  %v1363 = vld [vmem:[%s5 + $0xa0] sm:$0xf]
  %v1364 = vld [vmem:[%s5 + $0xa4] sm:$0xf]
  %v1365 = vld [vmem:[%s5 + $0xa8] sm:$0xf]
  %v1366 = vld [vmem:[%s5 + $0xac] sm:$0xf]
  %v1367 = vld [vmem:[%s5 + $0xb0] sm:$0xf]
  %v1368 = vld [vmem:[%s5 + $0xb4] sm:$0xf]
  %v1369 = vld [vmem:[%s5 + $0xb8] sm:$0xf]
  %v1370 = vld [vmem:[%s5 + $0xbc] sm:$0xf]
  %v1371 = vld [vmem:[%s5 + $0xc0] sm:$0xf]
  %v1372 = vld [vmem:[%s5 + $0xc4] sm:$0xf]
  %v1373 = vld [vmem:[%s5 + $0xc8] sm:$0xf]
  %v1374 = vld [vmem:[%s5 + $0xcc] sm:$0xf]
  %v1375 = vld [vmem:[%s5 + $0xd0] sm:$0xf]
  %v1376 = vld [vmem:[%s5 + $0xd4] sm:$0xf]
  %v1377 = vld [vmem:[%s5 + $0xd8] sm:$0xf]
  %v1378 = vld [vmem:[%s5 + $0xdc] sm:$0xf]
  %v1379 = vld [vmem:[%s5 + $0xe0] sm:$0xf]
  %v1380 = vld [vmem:[%s5 + $0xe4] sm:$0xf]
  %v1381 = vld [vmem:[%s5 + $0xe8] sm:$0xf]
  %v1382 = vld [vmem:[%s5 + $0xec] sm:$0xf]
  %v1383 = vld [vmem:[%s5 + $0xf0] sm:$0xf]
  %v1384 = vld [vmem:[%s5 + $0xf4] sm:$0xf]
  %v1385 = vld [vmem:[%s5 + $0xf8] sm:$0xf]
  %v1386 = vld [vmem:[%s5 + $0xfc] sm:$0xf]
  %v1451 = vunpack.c.l.b16 %v1323
  %v1452 = vunpack.c.l.b16 %v1324
  %v1453 = vunpack.c.l.b16 %v1325
  %v1454 = vunpack.c.l.b16 %v1326
  %v1455 = vunpack.c.l.b16 %v1327
  %v1456 = vunpack.c.l.b16 %v1328
  %v1457 = vunpack.c.l.b16 %v1329
  %v1458 = vunpack.c.l.b16 %v1330
  %v1459 = vunpack.c.l.b16 %v1331
  %v1460 = vunpack.c.l.b16 %v1332
  %v1461 = vunpack.c.l.b16 %v1333
  %v1462 = vunpack.c.l.b16 %v1334
  %v1463 = vunpack.c.l.b16 %v1335
  %v1464 = vunpack.c.l.b16 %v1336
  %v1465 = vunpack.c.l.b16 %v1337
  %v1466 = vunpack.c.l.b16 %v1338
  %v1467 = vunpack.c.l.b16 %v1339
  %v1468 = vunpack.c.l.b16 %v1340
  %v1469 = vunpack.c.l.b16 %v1341
  %v1470 = vunpack.c.l.b16 %v1342
  %v1471 = vunpack.c.l.b16 %v1343
  %v1472 = vunpack.c.l.b16 %v1344
  %v1473 = vunpack.c.l.b16 %v1345
  %v1474 = vunpack.c.l.b16 %v1346
  %v1475 = vunpack.c.l.b16 %v1347
  %v1476 = vunpack.c.l.b16 %v1348
  %v1477 = vunpack.c.l.b16 %v1349
  %v1478 = vunpack.c.l.b16 %v1350
  %v1479 = vunpack.c.l.b16 %v1351
  %v1480 = vunpack.c.l.b16 %v1352
  %v1481 = vunpack.c.l.b16 %v1353
  %v1482 = vunpack.c.l.b16 %v1354
  %v1483 = vunpack.c.l.b16 %v1355
  %v1484 = vunpack.c.l.b16 %v1356
  %v1485 = vunpack.c.l.b16 %v1357
  %v1486 = vunpack.c.l.b16 %v1358
  %v1487 = vunpack.c.l.b16 %v1359
  %v1488 = vunpack.c.l.b16 %v1360
  %v1489 = vunpack.c.l.b16 %v1361
  %v1490 = vunpack.c.l.b16 %v1362
  %v1491 = vunpack.c.l.b16 %v1363
  %v1492 = vunpack.c.l.b16 %v1364
  %v1493 = vunpack.c.l.b16 %v1365
  %v1494 = vunpack.c.l.b16 %v1366
  %v1495 = vunpack.c.l.b16 %v1367
  %v1496 = vunpack.c.l.b16 %v1368
  %v1497 = vunpack.c.l.b16 %v1369
  %v1498 = vunpack.c.l.b16 %v1370
  %v1499 = vunpack.c.l.b16 %v1371
  %v1500 = vunpack.c.l.b16 %v1372
  %v1501 = vunpack.c.l.b16 %v1373
  %v1502 = vunpack.c.l.b16 %v1374
  %v1503 = vunpack.c.l.b16 %v1375
  %v1504 = vunpack.c.l.b16 %v1376
  %v1505 = vunpack.c.l.b16 %v1377
  %v1506 = vunpack.c.l.b16 %v1378
  %v1507 = vunpack.c.l.b16 %v1379
  %v1508 = vunpack.c.l.b16 %v1380
  %v1509 = vunpack.c.l.b16 %v1381
  %v1510 = vunpack.c.l.b16 %v1382
  %v1511 = vunpack.c.l.b16 %v1383
  %v1512 = vunpack.c.l.b16 %v1384
  %v1513 = vunpack.c.l.b16 %v1385
  %v1514 = vunpack.c.l.b16 %v1386
  %v1515 = vpack.c.b16 %v1452, %v1451
  %v1516 = vpack.c.b16 %v1454, %v1453
  %v1517 = vpack.c.b16 %v1456, %v1455
  %v1518 = vpack.c.b16 %v1458, %v1457
  %v1519 = vpack.c.b16 %v1460, %v1459
  %v1520 = vpack.c.b16 %v1462, %v1461
  %v1521 = vpack.c.b16 %v1464, %v1463
  %v1522 = vpack.c.b16 %v1466, %v1465
  %v1523 = vpack.c.b16 %v1468, %v1467
  %v1524 = vpack.c.b16 %v1470, %v1469
  %v1525 = vpack.c.b16 %v1472, %v1471
  %v1526 = vpack.c.b16 %v1474, %v1473
  %v1527 = vpack.c.b16 %v1476, %v1475
  %v1528 = vpack.c.b16 %v1478, %v1477
  %v1529 = vpack.c.b16 %v1480, %v1479
  %v1530 = vpack.c.b16 %v1482, %v1481
  %v1531 = vpack.c.b16 %v1484, %v1483
  %v1532 = vpack.c.b16 %v1486, %v1485
  %v1533 = vpack.c.b16 %v1488, %v1487
  %v1534 = vpack.c.b16 %v1490, %v1489
  %v1535 = vpack.c.b16 %v1492, %v1491
  %v1536 = vpack.c.b16 %v1494, %v1493
  %v1537 = vpack.c.b16 %v1496, %v1495
  %v1538 = vpack.c.b16 %v1498, %v1497
  %v1539 = vpack.c.b16 %v1500, %v1499
  %v1540 = vpack.c.b16 %v1502, %v1501
  %v1541 = vpack.c.b16 %v1504, %v1503
  %v1542 = vpack.c.b16 %v1506, %v1505
  %v1543 = vpack.c.b16 %v1508, %v1507
  %v1544 = vpack.c.b16 %v1510, %v1509
  %v1545 = vpack.c.b16 %v1512, %v1511
  %v1546 = vpack.c.b16 %v1514, %v1513
  %1579 = vmatprep.subr.bf16.mxu0 0
  %1580 = vmatpush1.bf16.msra.mxu0 %v1522
  %1581 = vmatprep.subr.bf16.mxu0 0
  %1582 = vmatpush1.bf16.msra.mxu0 %v1521
  %1583 = vmatprep.subr.bf16.mxu0 0
  %1584 = vmatpush1.bf16.msra.mxu0 %v1520
  %1585 = vmatprep.subr.bf16.mxu0 0
  %1586 = vmatpush1.bf16.msra.mxu0 %v1519
  %1587 = vmatprep.subr.bf16.mxu0 0
  %1588 = vmatpush1.bf16.msra.mxu0 %v1518
  %1589 = vmatprep.subr.bf16.mxu0 0
  %1590 = vmatpush1.bf16.msra.mxu0 %v1517
  %1591 = vmatprep.subr.bf16.mxu0 0
  %1592 = vmatpush1.bf16.msra.mxu0 %v1516
  %1593 = vmatprep.subr.bf16.mxu0 0
  %1594 = vmatpush1.bf16.msra.mxu0 %v1515
  %1595 = vmatprep.subr.bf16.mxu0 0
  %1596 = vmatpush2.bf16.msra.mxu0 %v1530
  %1597 = vmatprep.subr.bf16.mxu0 0
  %1598 = vmatpush2.bf16.msra.mxu0 %v1529
  %1599 = vmatprep.subr.bf16.mxu0 0
  %1600 = vmatpush2.bf16.msra.mxu0 %v1528
  %1601 = vmatprep.subr.bf16.mxu0 0
  %1602 = vmatpush2.bf16.msra.mxu0 %v1527
  %1603 = vmatprep.subr.bf16.mxu0 0
  %1604 = vmatpush2.bf16.msra.mxu0 %v1526
  %1605 = vmatprep.subr.bf16.mxu0 0
  %1606 = vmatpush2.bf16.msra.mxu0 %v1525
  %1607 = vmatprep.subr.bf16.mxu0 0
  %1608 = vmatpush2.bf16.msra.mxu0 %v1524
  %1609 = vmatprep.subr.bf16.mxu0 0
  %1610 = vmatpush2.bf16.msra.mxu0 %v1523
  %1611 = vmatprep.mubr.bf16.mxu0 %v1320
  %1612 = vmatmul.mubr.bf16.gmra.mxu0 %v1319
  %v1613 = vpop.f32.mrf.mxu0
  %v1614 = vadd.f32 0.0, %v1613
  %v1615 = vpop.f32.mrf.mxu0
  %v1616 = vpop.f32.mrf.mxu0
  %v1617 = vpop.f32.mrf.mxu0
  %1618 = vdwg.mxu0
  %1619 = vmatprep.subr.bf16.mxu0 0
  %1620 = vmatpush1.bf16.msra.mxu0 %v1538
  %1621 = vmatprep.subr.bf16.mxu0 0
  %1622 = vmatpush1.bf16.msra.mxu0 %v1537
  %1623 = vmatprep.subr.bf16.mxu0 0
  %1624 = vmatpush1.bf16.msra.mxu0 %v1536
  %1625 = vmatprep.subr.bf16.mxu0 0
  %1626 = vmatpush1.bf16.msra.mxu0 %v1535
  %1627 = vmatprep.subr.bf16.mxu0 0
  %1628 = vmatpush1.bf16.msra.mxu0 %v1534
  %1629 = vmatprep.subr.bf16.mxu0 0
  %1630 = vmatpush1.bf16.msra.mxu0 %v1533
  %1631 = vmatprep.subr.bf16.mxu0 0
  %1632 = vmatpush1.bf16.msra.mxu0 %v1532
  %1633 = vmatprep.subr.bf16.mxu0 0
  %1634 = vmatpush1.bf16.msra.mxu0 %v1531
  %1635 = vmatprep.subr.bf16.mxu0 0
  %1636 = vmatpush2.bf16.msra.mxu0 %v1546
  %1637 = vmatprep.subr.bf16.mxu0 0
  %1638 = vmatpush2.bf16.msra.mxu0 %v1545
  %1639 = vmatprep.subr.bf16.mxu0 0
  %1640 = vmatpush2.bf16.msra.mxu0 %v1544
  %1641 = vmatprep.subr.bf16.mxu0 0
  %1642 = vmatpush2.bf16.msra.mxu0 %v1543
  %1643 = vmatprep.subr.bf16.mxu0 0
  %1644 = vmatpush2.bf16.msra.mxu0 %v1542
  %1645 = vmatprep.subr.bf16.mxu0 0
  %1646 = vmatpush2.bf16.msra.mxu0 %v1541
  %1647 = vmatprep.subr.bf16.mxu0 0
  %1648 = vmatpush2.bf16.msra.mxu0 %v1540
  %1649 = vmatprep.subr.bf16.mxu0 0
  %1650 = vmatpush2.bf16.msra.mxu0 %v1539
  %1651 = vmatprep.mubr.bf16.mxu0 %v1322
  %1652 = vmatmul.mubr.bf16.gmra.mxu0 %v1321
  %v1653 = vpop.f32.mrf.mxu0
  %v1654 = vadd.f32 %v1614, %v1653
  %v1655 = vpop.f32.mrf.mxu0
  %v1656 = vpop.f32.mrf.mxu0
  %v1657 = vpop.f32.mrf.mxu0
  %1658 = vdwg.mxu0
  %1659 = vst [vmem:[%s6] sm:$0xff] %v1654
  // Predicated region
  $region26: #{jcu_discriminator_forward.6} parent=0 // pred_check
    _
  $region27: #{jcu_discriminator_forward.6} parent=0 // pred_check_branch
    %1661 = sbr.rel (0) target = $region29
  $region28: #{jcu_discriminator_forward.6} parent=0 // pred_region
    _
  $region29: #{jcu_discriminator_forward.6} parent=0 // pred_fallthru
    _
  // Predicated region
  $region30: #{jcu_discriminator_forward.6} parent=0 // pred_check
    _
  $region31: #{jcu_discriminator_forward.6} parent=0 // pred_check_branch
    %1663 = sbr.rel (0) target = $region33
  $region32: #{jcu_discriminator_forward.6} parent=0 // pred_region
    _
  $region33: #{jcu_discriminator_forward.6} parent=0 // pred_fallthru
    _

// kernel: jcu_discriminator_forward.10
$region0: #{jcu_discriminator_forward.10}
  #allocation0 [shape = 'u32[]', space=smem, size = 0x4, offset = 0x4, fixed_abs, tag = 'smem constant byte address 0x4 - core index']
  #allocation1 [shape = 'u32[144,128]{1,0:T(1,128)}', space=vmem, size = 0x12000, scoped, tag = 'internal scratch']
  %s0 = inlined_call_operand.vmem [shape: bf16[8,2560], index: 0, kind: input, shape index: {}]
  %s1 = inlined_call_operand.vmem [shape: bf16[2560,256], index: 1, kind: input, shape index: {}]
  %s2 = inlined_call_operand.vmem [shape: f32[1,256], index: 2, kind: input, shape index: {}]
  %s3 = inlined_call_operand.vmem [shape: f32[8,256], index: 3, kind: input, shape index: {}]
  %s4 = inlined_call_operand.vmem [shape: f32[8,256], index: 4, kind: output, shape index: {}]
  %s5 = sld [smem:[#allocation0]]
  $region26: #{jcu_discriminator_forward.10} parent=0
    _
  %s7 = ssub.s32 1, %s5
  %s8 = scalar_select 0, %s7, %s5
  // Predicated region
  $region2: #{jcu_discriminator_forward.10} parent=0 // pred_check
    _
  $region3: #{jcu_discriminator_forward.10} parent=0 // pred_check_branch
    %10 = sbr.rel (0) target = $region5
  $region4: #{jcu_discriminator_forward.10} parent=0 // pred_region
    _
  $region5: #{jcu_discriminator_forward.10} parent=0 // pred_fallthru
    _
  // Predicated region
  $region6: #{jcu_discriminator_forward.10} parent=0 // pred_check
    _
  $region7: #{jcu_discriminator_forward.10} parent=0 // pred_check_branch
    %12 = sbr.rel (0) target = $region9
  $region8: #{jcu_discriminator_forward.10} parent=0 // pred_region
    _
  $region9: #{jcu_discriminator_forward.10} parent=0 // pred_fallthru
    _
  // Predicated region
  $region10: #{jcu_discriminator_forward.10} parent=0 // pred_check
    _
  $region11: #{jcu_discriminator_forward.10} parent=0 // pred_check_branch
    %14 = sbr.rel (0) target = $region13
  $region12: #{jcu_discriminator_forward.10} parent=0 // pred_region
    _
  $region13: #{jcu_discriminator_forward.10} parent=0 // pred_fallthru
    _
  // Predicated region
  $region14: #{jcu_discriminator_forward.10} parent=0 // pred_check
    _
  $region15: #{jcu_discriminator_forward.10} parent=0 // pred_check_branch
    %16 = sbr.rel (0) target = $region17
  $region16: #{jcu_discriminator_forward.10} parent=0 // pred_region
    _
  $region17: #{jcu_discriminator_forward.10} parent=0 // pred_fallthru
    _
  %v17 = vld [vmem:[%s0] sm:$0xff]
  %v18 = vld [vmem:[%s0 + $0x8] sm:$0xff]
  %v19 = vld [vmem:[%s0 + $0x10] sm:$0xff]
  %v20 = vld [vmem:[%s0 + $0x18] sm:$0xff]
  %v21 = vld [vmem:[%s0 + $0x20] sm:$0xff]
  %v22 = vld [vmem:[%s0 + $0x28] sm:$0xff]
  %v23 = vld [vmem:[%s0 + $0x30] sm:$0xff]
  %v24 = vld [vmem:[%s0 + $0x38] sm:$0xff]
  %v25 = vld [vmem:[%s0 + $0x40] sm:$0xff]
  %v26 = vld [vmem:[%s0 + $0x48] sm:$0xff]
  %v27 = vld [vmem:[%s1] sm:$0xff]
  %v28 = vld [vmem:[%s1 + $0x8] sm:$0xff]
  %v29 = vld [vmem:[%s1 + $0x10] sm:$0xff]
  %v30 = vld [vmem:[%s1 + $0x18] sm:$0xff]
  %v31 = vld [vmem:[%s1 + $0x20] sm:$0xff]
  %v32 = vld [vmem:[%s1 + $0x28] sm:$0xff]
  %v33 = vld [vmem:[%s1 + $0x30] sm:$0xff]
  %v34 = vld [vmem:[%s1 + $0x38] sm:$0xff]
  %v35 = vld [vmem:[%s1 + $0x40] sm:$0xff]
  %v36 = vld [vmem:[%s1 + $0x48] sm:$0xff]
  %v37 = vld [vmem:[%s1 + $0x50] sm:$0xff]
  %v38 = vld [vmem:[%s1 + $0x58] sm:$0xff]
  %v39 = vld [vmem:[%s1 + $0x60] sm:$0xff]
  %v40 = vld [vmem:[%s1 + $0x68] sm:$0xff]
  %v41 = vld [vmem:[%s1 + $0x70] sm:$0xff]
  %v42 = vld [vmem:[%s1 + $0x78] sm:$0xff]
  %v43 = vld [vmem:[%s1 + $0x80] sm:$0xff]
  %v44 = vld [vmem:[%s1 + $0x88] sm:$0xff]
  %v45 = vld [vmem:[%s1 + $0x90] sm:$0xff]
  %v46 = vld [vmem:[%s1 + $0x98] sm:$0xff]
  %v47 = vld [vmem:[%s1 + $0xa0] sm:$0xff]
  %v48 = vld [vmem:[%s1 + $0xa8] sm:$0xff]
  %v49 = vld [vmem:[%s1 + $0xb0] sm:$0xff]
  %v50 = vld [vmem:[%s1 + $0xb8] sm:$0xff]
  %v51 = vld [vmem:[%s1 + $0xc0] sm:$0xff]
  %v52 = vld [vmem:[%s1 + $0xc8] sm:$0xff]
  %v53 = vld [vmem:[%s1 + $0xd0] sm:$0xff]
  %v54 = vld [vmem:[%s1 + $0xd8] sm:$0xff]
  %v55 = vld [vmem:[%s1 + $0xe0] sm:$0xff]
  %v56 = vld [vmem:[%s1 + $0xe8] sm:$0xff]
  %v57 = vld [vmem:[%s1 + $0xf0] sm:$0xff]
  %v58 = vld [vmem:[%s1 + $0xf8] sm:$0xff]
  %v59 = vld [vmem:[%s1 + $0x100] sm:$0xff]
  %v60 = vld [vmem:[%s1 + $0x108] sm:$0xff]
  %v61 = vld [vmem:[%s1 + $0x110] sm:$0xff]
  %v62 = vld [vmem:[%s1 + $0x118] sm:$0xff]
  %v63 = vld [vmem:[%s1 + $0x120] sm:$0xff]
  %v64 = vld [vmem:[%s1 + $0x128] sm:$0xff]
  %v65 = vld [vmem:[%s1 + $0x130] sm:$0xff]
  %v66 = vld [vmem:[%s1 + $0x138] sm:$0xff]
  %v67 = vld [vmem:[%s1 + $0x140] sm:$0xff]
  %v68 = vld [vmem:[%s1 + $0x148] sm:$0xff]
  %v69 = vld [vmem:[%s1 + $0x150] sm:$0xff]
  %v70 = vld [vmem:[%s1 + $0x158] sm:$0xff]
  %v71 = vld [vmem:[%s1 + $0x160] sm:$0xff]
  %v72 = vld [vmem:[%s1 + $0x168] sm:$0xff]
  %v73 = vld [vmem:[%s1 + $0x170] sm:$0xff]
  %v74 = vld [vmem:[%s1 + $0x178] sm:$0xff]
  %v75 = vld [vmem:[%s1 + $0x180] sm:$0xff]
  %v76 = vld [vmem:[%s1 + $0x188] sm:$0xff]
  %v77 = vld [vmem:[%s1 + $0x190] sm:$0xff]
  %v78 = vld [vmem:[%s1 + $0x198] sm:$0xff]
  %v79 = vld [vmem:[%s1 + $0x1a0] sm:$0xff]
  %v80 = vld [vmem:[%s1 + $0x1a8] sm:$0xff]
  %v81 = vld [vmem:[%s1 + $0x1b0] sm:$0xff]
  %v82 = vld [vmem:[%s1 + $0x1b8] sm:$0xff]
  %v83 = vld [vmem:[%s1 + $0x1c0] sm:$0xff]
  %v84 = vld [vmem:[%s1 + $0x1c8] sm:$0xff]
  %v85 = vld [vmem:[%s1 + $0x1d0] sm:$0xff]
  %v86 = vld [vmem:[%s1 + $0x1d8] sm:$0xff]
  %v87 = vld [vmem:[%s1 + $0x1e0] sm:$0xff]
  %v88 = vld [vmem:[%s1 + $0x1e8] sm:$0xff]
  %v89 = vld [vmem:[%s1 + $0x1f0] sm:$0xff]
  %v90 = vld [vmem:[%s1 + $0x1f8] sm:$0xff]
  %v91 = vld [vmem:[%s1 + $0x200] sm:$0xff]
  %v92 = vld [vmem:[%s1 + $0x208] sm:$0xff]
  %v93 = vld [vmem:[%s1 + $0x210] sm:$0xff]
  %v94 = vld [vmem:[%s1 + $0x218] sm:$0xff]
  %v95 = vld [vmem:[%s1 + $0x220] sm:$0xff]
  %v96 = vld [vmem:[%s1 + $0x228] sm:$0xff]
  %v97 = vld [vmem:[%s1 + $0x230] sm:$0xff]
  %v98 = vld [vmem:[%s1 + $0x238] sm:$0xff]
  %v99 = vld [vmem:[%s1 + $0x240] sm:$0xff]
  %v100 = vld [vmem:[%s1 + $0x248] sm:$0xff]
  %v101 = vld [vmem:[%s1 + $0x250] sm:$0xff]
  %v102 = vld [vmem:[%s1 + $0x258] sm:$0xff]
  %v103 = vld [vmem:[%s1 + $0x260] sm:$0xff]
  %v104 = vld [vmem:[%s1 + $0x268] sm:$0xff]
  %v105 = vld [vmem:[%s1 + $0x270] sm:$0xff]
  %v106 = vld [vmem:[%s1 + $0x278] sm:$0xff]
  %v107 = vld [vmem:[%s1 + $0x280] sm:$0xff]
  %v108 = vld [vmem:[%s1 + $0x288] sm:$0xff]
  %v109 = vld [vmem:[%s1 + $0x290] sm:$0xff]
  %v110 = vld [vmem:[%s1 + $0x298] sm:$0xff]
  %v111 = vld [vmem:[%s1 + $0x2a0] sm:$0xff]
  %v112 = vld [vmem:[%s1 + $0x2a8] sm:$0xff]
  %v113 = vld [vmem:[%s1 + $0x2b0] sm:$0xff]
  %v114 = vld [vmem:[%s1 + $0x2b8] sm:$0xff]
  %v115 = vld [vmem:[%s1 + $0x2c0] sm:$0xff]
  %v116 = vld [vmem:[%s1 + $0x2c8] sm:$0xff]
  %v117 = vld [vmem:[%s1 + $0x2d0] sm:$0xff]
  %v118 = vld [vmem:[%s1 + $0x2d8] sm:$0xff]
  %v119 = vld [vmem:[%s1 + $0x2e0] sm:$0xff]
  %v120 = vld [vmem:[%s1 + $0x2e8] sm:$0xff]
  %v121 = vld [vmem:[%s1 + $0x2f0] sm:$0xff]
  %v122 = vld [vmem:[%s1 + $0x2f8] sm:$0xff]
  %v123 = vld [vmem:[%s1 + $0x300] sm:$0xff]
  %v124 = vld [vmem:[%s1 + $0x308] sm:$0xff]
  %v125 = vld [vmem:[%s1 + $0x310] sm:$0xff]
  %v126 = vld [vmem:[%s1 + $0x318] sm:$0xff]
  %v127 = vld [vmem:[%s1 + $0x320] sm:$0xff]
  %v128 = vld [vmem:[%s1 + $0x328] sm:$0xff]
  %v129 = vld [vmem:[%s1 + $0x330] sm:$0xff]
  %v130 = vld [vmem:[%s1 + $0x338] sm:$0xff]
  %v131 = vld [vmem:[%s1 + $0x340] sm:$0xff]
  %v132 = vld [vmem:[%s1 + $0x348] sm:$0xff]
  %v133 = vld [vmem:[%s1 + $0x350] sm:$0xff]
  %v134 = vld [vmem:[%s1 + $0x358] sm:$0xff]
  %v135 = vld [vmem:[%s1 + $0x360] sm:$0xff]
  %v136 = vld [vmem:[%s1 + $0x368] sm:$0xff]
  %v137 = vld [vmem:[%s1 + $0x370] sm:$0xff]
  %v138 = vld [vmem:[%s1 + $0x378] sm:$0xff]
  %v139 = vld [vmem:[%s1 + $0x380] sm:$0xff]
  %v140 = vld [vmem:[%s1 + $0x388] sm:$0xff]
  %v141 = vld [vmem:[%s1 + $0x390] sm:$0xff]
  %v142 = vld [vmem:[%s1 + $0x398] sm:$0xff]
  %v143 = vld [vmem:[%s1 + $0x3a0] sm:$0xff]
  %v144 = vld [vmem:[%s1 + $0x3a8] sm:$0xff]
  %v145 = vld [vmem:[%s1 + $0x3b0] sm:$0xff]
  %v146 = vld [vmem:[%s1 + $0x3b8] sm:$0xff]
  %v147 = vld [vmem:[%s1 + $0x3c0] sm:$0xff]
  %v148 = vld [vmem:[%s1 + $0x3c8] sm:$0xff]
  %v149 = vld [vmem:[%s1 + $0x3d0] sm:$0xff]
  %v150 = vld [vmem:[%s1 + $0x3d8] sm:$0xff]
  %v151 = vld [vmem:[%s1 + $0x3e0] sm:$0xff]
  %v152 = vld [vmem:[%s1 + $0x3e8] sm:$0xff]
  %v153 = vld [vmem:[%s1 + $0x3f0] sm:$0xff]
  %v154 = vld [vmem:[%s1 + $0x3f8] sm:$0xff]
  %v155 = vld [vmem:[%s1 + $0x400] sm:$0xff]
  %v156 = vld [vmem:[%s1 + $0x408] sm:$0xff]
  %v157 = vld [vmem:[%s1 + $0x410] sm:$0xff]
  %v158 = vld [vmem:[%s1 + $0x418] sm:$0xff]
  %v159 = vld [vmem:[%s1 + $0x420] sm:$0xff]
  %v160 = vld [vmem:[%s1 + $0x428] sm:$0xff]
  %v161 = vld [vmem:[%s1 + $0x430] sm:$0xff]
  %v162 = vld [vmem:[%s1 + $0x438] sm:$0xff]
  %v163 = vld [vmem:[%s1 + $0x440] sm:$0xff]
  %v164 = vld [vmem:[%s1 + $0x448] sm:$0xff]
  %v165 = vld [vmem:[%s1 + $0x450] sm:$0xff]
  %v166 = vld [vmem:[%s1 + $0x458] sm:$0xff]
  %v167 = vld [vmem:[%s1 + $0x460] sm:$0xff]
  %v168 = vld [vmem:[%s1 + $0x468] sm:$0xff]
  %v169 = vld [vmem:[%s1 + $0x470] sm:$0xff]
  %v170 = vld [vmem:[%s1 + $0x478] sm:$0xff]
  %v171 = vld [vmem:[%s1 + $0x480] sm:$0xff]
  %v172 = vld [vmem:[%s1 + $0x488] sm:$0xff]
  %v173 = vld [vmem:[%s1 + $0x490] sm:$0xff]
  %v174 = vld [vmem:[%s1 + $0x498] sm:$0xff]
  %v175 = vld [vmem:[%s1 + $0x4a0] sm:$0xff]
  %v176 = vld [vmem:[%s1 + $0x4a8] sm:$0xff]
  %v177 = vld [vmem:[%s1 + $0x4b0] sm:$0xff]
  %v178 = vld [vmem:[%s1 + $0x4b8] sm:$0xff]
  %v179 = vld [vmem:[%s1 + $0x4c0] sm:$0xff]
  %v180 = vld [vmem:[%s1 + $0x4c8] sm:$0xff]
  %v181 = vld [vmem:[%s1 + $0x4d0] sm:$0xff]
  %v182 = vld [vmem:[%s1 + $0x4d8] sm:$0xff]
  %v183 = vld [vmem:[%s1 + $0x4e0] sm:$0xff]
  %v184 = vld [vmem:[%s1 + $0x4e8] sm:$0xff]
  %v185 = vld [vmem:[%s1 + $0x4f0] sm:$0xff]
  %v186 = vld [vmem:[%s1 + $0x4f8] sm:$0xff]
  %v187 = vld [vmem:[%s1 + $0x500] sm:$0xff]
  %v188 = vld [vmem:[%s1 + $0x508] sm:$0xff]
  %v189 = vld [vmem:[%s1 + $0x510] sm:$0xff]
  %v190 = vld [vmem:[%s1 + $0x518] sm:$0xff]
  %v191 = vld [vmem:[%s1 + $0x520] sm:$0xff]
  %v192 = vld [vmem:[%s1 + $0x528] sm:$0xff]
  %v193 = vld [vmem:[%s1 + $0x530] sm:$0xff]
  %v194 = vld [vmem:[%s1 + $0x538] sm:$0xff]
  %v195 = vld [vmem:[%s1 + $0x540] sm:$0xff]
  %v196 = vld [vmem:[%s1 + $0x548] sm:$0xff]
  %v197 = vld [vmem:[%s1 + $0x550] sm:$0xff]
  %v198 = vld [vmem:[%s1 + $0x558] sm:$0xff]
  %v199 = vld [vmem:[%s1 + $0x560] sm:$0xff]
  %v200 = vld [vmem:[%s1 + $0x568] sm:$0xff]
  %v201 = vld [vmem:[%s1 + $0x570] sm:$0xff]
  %v202 = vld [vmem:[%s1 + $0x578] sm:$0xff]
  %v203 = vld [vmem:[%s1 + $0x580] sm:$0xff]
  %v204 = vld [vmem:[%s1 + $0x588] sm:$0xff]
  %v205 = vld [vmem:[%s1 + $0x590] sm:$0xff]
  %v206 = vld [vmem:[%s1 + $0x598] sm:$0xff]
  %v207 = vld [vmem:[%s1 + $0x5a0] sm:$0xff]
  %v208 = vld [vmem:[%s1 + $0x5a8] sm:$0xff]
  %v209 = vld [vmem:[%s1 + $0x5b0] sm:$0xff]
  %v210 = vld [vmem:[%s1 + $0x5b8] sm:$0xff]
  %v211 = vld [vmem:[%s1 + $0x5c0] sm:$0xff]
  %v212 = vld [vmem:[%s1 + $0x5c8] sm:$0xff]
  %v213 = vld [vmem:[%s1 + $0x5d0] sm:$0xff]
  %v214 = vld [vmem:[%s1 + $0x5d8] sm:$0xff]
  %v215 = vld [vmem:[%s1 + $0x5e0] sm:$0xff]
  %v216 = vld [vmem:[%s1 + $0x5e8] sm:$0xff]
  %v217 = vld [vmem:[%s1 + $0x5f0] sm:$0xff]
  %v218 = vld [vmem:[%s1 + $0x5f8] sm:$0xff]
  %v219 = vld [vmem:[%s1 + $0x600] sm:$0xff]
  %v220 = vld [vmem:[%s1 + $0x608] sm:$0xff]
  %v221 = vld [vmem:[%s1 + $0x610] sm:$0xff]
  %v222 = vld [vmem:[%s1 + $0x618] sm:$0xff]
  %v223 = vld [vmem:[%s1 + $0x620] sm:$0xff]
  %v224 = vld [vmem:[%s1 + $0x628] sm:$0xff]
  %v225 = vld [vmem:[%s1 + $0x630] sm:$0xff]
  %v226 = vld [vmem:[%s1 + $0x638] sm:$0xff]
  %v227 = vld [vmem:[%s1 + $0x640] sm:$0xff]
  %v228 = vld [vmem:[%s1 + $0x648] sm:$0xff]
  %v229 = vld [vmem:[%s1 + $0x650] sm:$0xff]
  %v230 = vld [vmem:[%s1 + $0x658] sm:$0xff]
  %v231 = vld [vmem:[%s1 + $0x660] sm:$0xff]
  %v232 = vld [vmem:[%s1 + $0x668] sm:$0xff]
  %v233 = vld [vmem:[%s1 + $0x670] sm:$0xff]
  %v234 = vld [vmem:[%s1 + $0x678] sm:$0xff]
  %v235 = vld [vmem:[%s1 + $0x680] sm:$0xff]
  %v236 = vld [vmem:[%s1 + $0x688] sm:$0xff]
  %v237 = vld [vmem:[%s1 + $0x690] sm:$0xff]
  %v238 = vld [vmem:[%s1 + $0x698] sm:$0xff]
  %v239 = vld [vmem:[%s1 + $0x6a0] sm:$0xff]
  %v240 = vld [vmem:[%s1 + $0x6a8] sm:$0xff]
  %v241 = vld [vmem:[%s1 + $0x6b0] sm:$0xff]
  %v242 = vld [vmem:[%s1 + $0x6b8] sm:$0xff]
  %v243 = vld [vmem:[%s1 + $0x6c0] sm:$0xff]
  %v244 = vld [vmem:[%s1 + $0x6c8] sm:$0xff]
  %v245 = vld [vmem:[%s1 + $0x6d0] sm:$0xff]
  %v246 = vld [vmem:[%s1 + $0x6d8] sm:$0xff]
  %v247 = vld [vmem:[%s1 + $0x6e0] sm:$0xff]
  %v248 = vld [vmem:[%s1 + $0x6e8] sm:$0xff]
  %v249 = vld [vmem:[%s1 + $0x6f0] sm:$0xff]
  %v250 = vld [vmem:[%s1 + $0x6f8] sm:$0xff]
  %v251 = vld [vmem:[%s1 + $0x700] sm:$0xff]
  %v252 = vld [vmem:[%s1 + $0x708] sm:$0xff]
  %v253 = vld [vmem:[%s1 + $0x710] sm:$0xff]
  %v254 = vld [vmem:[%s1 + $0x718] sm:$0xff]
  %v255 = vld [vmem:[%s1 + $0x720] sm:$0xff]
  %v256 = vld [vmem:[%s1 + $0x728] sm:$0xff]
  %v257 = vld [vmem:[%s1 + $0x730] sm:$0xff]
  %v258 = vld [vmem:[%s1 + $0x738] sm:$0xff]
  %v259 = vld [vmem:[%s1 + $0x740] sm:$0xff]
  %v260 = vld [vmem:[%s1 + $0x748] sm:$0xff]
  %v261 = vld [vmem:[%s1 + $0x750] sm:$0xff]
  %v262 = vld [vmem:[%s1 + $0x758] sm:$0xff]
  %v263 = vld [vmem:[%s1 + $0x760] sm:$0xff]
  %v264 = vld [vmem:[%s1 + $0x768] sm:$0xff]
  %v265 = vld [vmem:[%s1 + $0x770] sm:$0xff]
  %v266 = vld [vmem:[%s1 + $0x778] sm:$0xff]
  %v267 = vld [vmem:[%s1 + $0x780] sm:$0xff]
  %v268 = vld [vmem:[%s1 + $0x788] sm:$0xff]
  %v269 = vld [vmem:[%s1 + $0x790] sm:$0xff]
  %v270 = vld [vmem:[%s1 + $0x798] sm:$0xff]
  %v271 = vld [vmem:[%s1 + $0x7a0] sm:$0xff]
  %v272 = vld [vmem:[%s1 + $0x7a8] sm:$0xff]
  %v273 = vld [vmem:[%s1 + $0x7b0] sm:$0xff]
  %v274 = vld [vmem:[%s1 + $0x7b8] sm:$0xff]
  %v275 = vld [vmem:[%s1 + $0x7c0] sm:$0xff]
  %v276 = vld [vmem:[%s1 + $0x7c8] sm:$0xff]
  %v277 = vld [vmem:[%s1 + $0x7d0] sm:$0xff]
  %v278 = vld [vmem:[%s1 + $0x7d8] sm:$0xff]
  %v279 = vld [vmem:[%s1 + $0x7e0] sm:$0xff]
  %v280 = vld [vmem:[%s1 + $0x7e8] sm:$0xff]
  %v281 = vld [vmem:[%s1 + $0x7f0] sm:$0xff]
  %v282 = vld [vmem:[%s1 + $0x7f8] sm:$0xff]
  %v283 = vld [vmem:[%s1 + $0x800] sm:$0xff]
  %v284 = vld [vmem:[%s1 + $0x808] sm:$0xff]
  %v285 = vld [vmem:[%s1 + $0x810] sm:$0xff]
  %v286 = vld [vmem:[%s1 + $0x818] sm:$0xff]
  %v287 = vld [vmem:[%s1 + $0x820] sm:$0xff]
  %v288 = vld [vmem:[%s1 + $0x828] sm:$0xff]
  %v289 = vld [vmem:[%s1 + $0x830] sm:$0xff]
  %v290 = vld [vmem:[%s1 + $0x838] sm:$0xff]
  %v291 = vld [vmem:[%s1 + $0x840] sm:$0xff]
  %v292 = vld [vmem:[%s1 + $0x848] sm:$0xff]
  %v293 = vld [vmem:[%s1 + $0x850] sm:$0xff]
  %v294 = vld [vmem:[%s1 + $0x858] sm:$0xff]
  %v295 = vld [vmem:[%s1 + $0x860] sm:$0xff]
  %v296 = vld [vmem:[%s1 + $0x868] sm:$0xff]
  %v297 = vld [vmem:[%s1 + $0x870] sm:$0xff]
  %v298 = vld [vmem:[%s1 + $0x878] sm:$0xff]
  %v299 = vld [vmem:[%s1 + $0x880] sm:$0xff]
  %v300 = vld [vmem:[%s1 + $0x888] sm:$0xff]
  %v301 = vld [vmem:[%s1 + $0x890] sm:$0xff]
  %v302 = vld [vmem:[%s1 + $0x898] sm:$0xff]
  %v303 = vld [vmem:[%s1 + $0x8a0] sm:$0xff]
  %v304 = vld [vmem:[%s1 + $0x8a8] sm:$0xff]
  %v305 = vld [vmem:[%s1 + $0x8b0] sm:$0xff]
  %v306 = vld [vmem:[%s1 + $0x8b8] sm:$0xff]
  %v307 = vld [vmem:[%s1 + $0x8c0] sm:$0xff]
  %v308 = vld [vmem:[%s1 + $0x8c8] sm:$0xff]
  %v309 = vld [vmem:[%s1 + $0x8d0] sm:$0xff]
  %v310 = vld [vmem:[%s1 + $0x8d8] sm:$0xff]
  %v311 = vld [vmem:[%s1 + $0x8e0] sm:$0xff]
  %v312 = vld [vmem:[%s1 + $0x8e8] sm:$0xff]
  %v313 = vld [vmem:[%s1 + $0x8f0] sm:$0xff]
  %v314 = vld [vmem:[%s1 + $0x8f8] sm:$0xff]
  %v315 = vld [vmem:[%s1 + $0x900] sm:$0xff]
  %v316 = vld [vmem:[%s1 + $0x908] sm:$0xff]
  %v317 = vld [vmem:[%s1 + $0x910] sm:$0xff]
  %v318 = vld [vmem:[%s1 + $0x918] sm:$0xff]
  %v319 = vld [vmem:[%s1 + $0x920] sm:$0xff]
  %v320 = vld [vmem:[%s1 + $0x928] sm:$0xff]
  %v321 = vld [vmem:[%s1 + $0x930] sm:$0xff]
  %v322 = vld [vmem:[%s1 + $0x938] sm:$0xff]
  %v323 = vld [vmem:[%s1 + $0x940] sm:$0xff]
  %v324 = vld [vmem:[%s1 + $0x948] sm:$0xff]
  %v325 = vld [vmem:[%s1 + $0x950] sm:$0xff]
  %v326 = vld [vmem:[%s1 + $0x958] sm:$0xff]
  %v327 = vld [vmem:[%s1 + $0x960] sm:$0xff]
  %v328 = vld [vmem:[%s1 + $0x968] sm:$0xff]
  %v329 = vld [vmem:[%s1 + $0x970] sm:$0xff]
  %v330 = vld [vmem:[%s1 + $0x978] sm:$0xff]
  %v331 = vld [vmem:[%s1 + $0x980] sm:$0xff]
  %v332 = vld [vmem:[%s1 + $0x988] sm:$0xff]
  %v333 = vld [vmem:[%s1 + $0x990] sm:$0xff]
  %v334 = vld [vmem:[%s1 + $0x998] sm:$0xff]
  %v335 = vld [vmem:[%s1 + $0x9a0] sm:$0xff]
  %v336 = vld [vmem:[%s1 + $0x9a8] sm:$0xff]
  %v337 = vld [vmem:[%s1 + $0x9b0] sm:$0xff]
  %v338 = vld [vmem:[%s1 + $0x9b8] sm:$0xff]
  %v339 = vld [vmem:[%s1 + $0x9c0] sm:$0xff]
  %v340 = vld [vmem:[%s1 + $0x9c8] sm:$0xff]
  %v341 = vld [vmem:[%s1 + $0x9d0] sm:$0xff]
  %v342 = vld [vmem:[%s1 + $0x9d8] sm:$0xff]
  %v343 = vld [vmem:[%s1 + $0x9e0] sm:$0xff]
  %v344 = vld [vmem:[%s1 + $0x9e8] sm:$0xff]
  %v345 = vld [vmem:[%s1 + $0x9f0] sm:$0xff]
  %v346 = vld [vmem:[%s1 + $0x9f8] sm:$0xff]
  %v347 = vld [vmem:[%s2] sm:$0x3]
  %v349 = vlaneseq
  %v350 = vshrl.u32 %v349, 7
  %v351 = vsub.s32 0, %v350
  %v352 = vrot.slane %v347, %v351
  %v353 = vlaneseq
  %v354 = vshrl.u32 %v353, 7
  %v355 = vsub.s32 1, %v354
  %v356 = vrot.slane %v347, %v355
  %v369 = vunpack.c.l.b16 %v17
  %v370 = vunpack.c.h.b16 %v17
  %v371 = vunpack.c.l.b16 %v18
  %v372 = vunpack.c.h.b16 %v18
  %v373 = vunpack.c.l.b16 %v19
  %v374 = vunpack.c.h.b16 %v19
  %v375 = vunpack.c.l.b16 %v20
  %v376 = vunpack.c.h.b16 %v20
  %v377 = vunpack.c.l.b16 %v21
  %v378 = vunpack.c.h.b16 %v21
  %v379 = vunpack.c.l.b16 %v22
  %v380 = vunpack.c.h.b16 %v22
  %v381 = vunpack.c.l.b16 %v23
  %v382 = vunpack.c.h.b16 %v23
  %v383 = vunpack.c.l.b16 %v24
  %v384 = vunpack.c.h.b16 %v24
  %v385 = vunpack.c.l.b16 %v25
  %v386 = vunpack.c.h.b16 %v25
  %v387 = vunpack.c.l.b16 %v26
  %v388 = vunpack.c.h.b16 %v26
  %v389 = vpack.c.b16 %v369, %v369
  %v390 = vpack.c.b16 %v370, %v370
  %v391 = vpack.c.b16 %v371, %v371
  %v392 = vpack.c.b16 %v372, %v372
  %v393 = vpack.c.b16 %v373, %v373
  %v394 = vpack.c.b16 %v374, %v374
  %v395 = vpack.c.b16 %v375, %v375
  %v396 = vpack.c.b16 %v376, %v376
  %v397 = vpack.c.b16 %v377, %v377
  %v398 = vpack.c.b16 %v378, %v378
  %v399 = vpack.c.b16 %v379, %v379
  %v400 = vpack.c.b16 %v380, %v380
  %v401 = vpack.c.b16 %v381, %v381
  %v402 = vpack.c.b16 %v382, %v382
  %v403 = vpack.c.b16 %v383, %v383
  %v404 = vpack.c.b16 %v384, %v384
  %v405 = vpack.c.b16 %v385, %v385
  %v406 = vpack.c.b16 %v386, %v386
  %v407 = vpack.c.b16 %v387, %v387
  %v408 = vpack.c.b16 %v388, %v388
  %v749 = vunpack.c.l.b16 %v27
  %v750 = vunpack.c.h.b16 %v27
  %v751 = vunpack.c.l.b16 %v28
  %v752 = vunpack.c.h.b16 %v28
  %v753 = vunpack.c.l.b16 %v29
  %v754 = vunpack.c.h.b16 %v29
  %v755 = vunpack.c.l.b16 %v30
  %v756 = vunpack.c.h.b16 %v30
  %v757 = vunpack.c.l.b16 %v31
  %v758 = vunpack.c.h.b16 %v31
  %v759 = vunpack.c.l.b16 %v32
  %v760 = vunpack.c.h.b16 %v32
  %v761 = vunpack.c.l.b16 %v33
  %v762 = vunpack.c.h.b16 %v33
  %v763 = vunpack.c.l.b16 %v34
  %v764 = vunpack.c.h.b16 %v34
  %v765 = vunpack.c.l.b16 %v35
  %v766 = vunpack.c.h.b16 %v35
  %v767 = vunpack.c.l.b16 %v36
  %v768 = vunpack.c.h.b16 %v36
  %v769 = vunpack.c.l.b16 %v37
  %v770 = vunpack.c.h.b16 %v37
  %v771 = vunpack.c.l.b16 %v38
  %v772 = vunpack.c.h.b16 %v38
  %v773 = vunpack.c.l.b16 %v39
  %v774 = vunpack.c.h.b16 %v39
  %v775 = vunpack.c.l.b16 %v40
  %v776 = vunpack.c.h.b16 %v40
  %v777 = vunpack.c.l.b16 %v41
  %v778 = vunpack.c.h.b16 %v41
  %v779 = vunpack.c.l.b16 %v42
  %v780 = vunpack.c.h.b16 %v42
  %v781 = vunpack.c.l.b16 %v43
  %v782 = vunpack.c.h.b16 %v43
  %v783 = vunpack.c.l.b16 %v44
  %v784 = vunpack.c.h.b16 %v44
  %v785 = vunpack.c.l.b16 %v45
  %v786 = vunpack.c.h.b16 %v45
  %v787 = vunpack.c.l.b16 %v46
  %v788 = vunpack.c.h.b16 %v46
  %v789 = vunpack.c.l.b16 %v47
  %v790 = vunpack.c.h.b16 %v47
  %v791 = vunpack.c.l.b16 %v48
  %v792 = vunpack.c.h.b16 %v48
  %v793 = vunpack.c.l.b16 %v49
  %v794 = vunpack.c.h.b16 %v49
  %v795 = vunpack.c.l.b16 %v50
  %v796 = vunpack.c.h.b16 %v50
  %v797 = vunpack.c.l.b16 %v51
  %v798 = vunpack.c.h.b16 %v51
  %v799 = vunpack.c.l.b16 %v52
  %v800 = vunpack.c.h.b16 %v52
  %v801 = vunpack.c.l.b16 %v53
  %v802 = vunpack.c.h.b16 %v53
  %v803 = vunpack.c.l.b16 %v54
  %v804 = vunpack.c.h.b16 %v54
  %v805 = vunpack.c.l.b16 %v55
  %v806 = vunpack.c.h.b16 %v55
  %v807 = vunpack.c.l.b16 %v56
  %v808 = vunpack.c.h.b16 %v56
  %v809 = vunpack.c.l.b16 %v57
  %v810 = vunpack.c.h.b16 %v57
  %v811 = vunpack.c.l.b16 %v58
  %v812 = vunpack.c.h.b16 %v58
  %v813 = vunpack.c.l.b16 %v59
  %v814 = vunpack.c.h.b16 %v59
  %v815 = vunpack.c.l.b16 %v60
  %v816 = vunpack.c.h.b16 %v60
  %v817 = vunpack.c.l.b16 %v61
  %v818 = vunpack.c.h.b16 %v61
  %v819 = vunpack.c.l.b16 %v62
  %v820 = vunpack.c.h.b16 %v62
  %v821 = vunpack.c.l.b16 %v63
  %v822 = vunpack.c.h.b16 %v63
  %v823 = vunpack.c.l.b16 %v64
  %v824 = vunpack.c.h.b16 %v64
  %v825 = vunpack.c.l.b16 %v65
  %v826 = vunpack.c.h.b16 %v65
  %v827 = vunpack.c.l.b16 %v66
  %v828 = vunpack.c.h.b16 %v66
  %v829 = vunpack.c.l.b16 %v67
  %v830 = vunpack.c.h.b16 %v67
  %v831 = vunpack.c.l.b16 %v68
  %v832 = vunpack.c.h.b16 %v68
  %v833 = vunpack.c.l.b16 %v69
  %v834 = vunpack.c.h.b16 %v69
  %v835 = vunpack.c.l.b16 %v70
  %v836 = vunpack.c.h.b16 %v70
  %v837 = vunpack.c.l.b16 %v71
  %v838 = vunpack.c.h.b16 %v71
  %v839 = vunpack.c.l.b16 %v72
  %v840 = vunpack.c.h.b16 %v72
  %v841 = vunpack.c.l.b16 %v73
  %v842 = vunpack.c.h.b16 %v73
  %v843 = vunpack.c.l.b16 %v74
  %v844 = vunpack.c.h.b16 %v74
  %v845 = vunpack.c.l.b16 %v75
  %v846 = vunpack.c.h.b16 %v75
  %v847 = vunpack.c.l.b16 %v76
  %v848 = vunpack.c.h.b16 %v76
  %v849 = vunpack.c.l.b16 %v77
  %v850 = vunpack.c.h.b16 %v77
  %v851 = vunpack.c.l.b16 %v78
  %v852 = vunpack.c.h.b16 %v78
  %v853 = vunpack.c.l.b16 %v79
  %v854 = vunpack.c.h.b16 %v79
  %v855 = vunpack.c.l.b16 %v80
  %v856 = vunpack.c.h.b16 %v80
  %v857 = vunpack.c.l.b16 %v81
  %v858 = vunpack.c.h.b16 %v81
  %v859 = vunpack.c.l.b16 %v82
  %v860 = vunpack.c.h.b16 %v82
  %v861 = vunpack.c.l.b16 %v83
  %v862 = vunpack.c.h.b16 %v83
  %v863 = vunpack.c.l.b16 %v84
  %v864 = vunpack.c.h.b16 %v84
  %v865 = vunpack.c.l.b16 %v85
  %v866 = vunpack.c.h.b16 %v85
  %v867 = vunpack.c.l.b16 %v86
  %v868 = vunpack.c.h.b16 %v86
  %v869 = vunpack.c.l.b16 %v87
  %v870 = vunpack.c.h.b16 %v87
  %v871 = vunpack.c.l.b16 %v88
  %v872 = vunpack.c.h.b16 %v88
  %v873 = vunpack.c.l.b16 %v89
  %v874 = vunpack.c.h.b16 %v89
  %v875 = vunpack.c.l.b16 %v90
  %v876 = vunpack.c.h.b16 %v90
  %v877 = vunpack.c.l.b16 %v91
  %v878 = vunpack.c.h.b16 %v91
  %v879 = vunpack.c.l.b16 %v92
  %v880 = vunpack.c.h.b16 %v92
  %v881 = vunpack.c.l.b16 %v93
  %v882 = vunpack.c.h.b16 %v93
  %v883 = vunpack.c.l.b16 %v94
  %v884 = vunpack.c.h.b16 %v94
  %v885 = vunpack.c.l.b16 %v95
  %v886 = vunpack.c.h.b16 %v95
  %v887 = vunpack.c.l.b16 %v96
  %v888 = vunpack.c.h.b16 %v96
  %v889 = vunpack.c.l.b16 %v97
  %v890 = vunpack.c.h.b16 %v97
  %v891 = vunpack.c.l.b16 %v98
  %v892 = vunpack.c.h.b16 %v98
  %v893 = vunpack.c.l.b16 %v99
  %v894 = vunpack.c.h.b16 %v99
  %v895 = vunpack.c.l.b16 %v100
  %v896 = vunpack.c.h.b16 %v100
  %v897 = vunpack.c.l.b16 %v101
  %v898 = vunpack.c.h.b16 %v101
  %v899 = vunpack.c.l.b16 %v102
  %v900 = vunpack.c.h.b16 %v102
  %v901 = vunpack.c.l.b16 %v103
  %v902 = vunpack.c.h.b16 %v103
  %v903 = vunpack.c.l.b16 %v104
  %v904 = vunpack.c.h.b16 %v104
  %v905 = vunpack.c.l.b16 %v105
  %v906 = vunpack.c.h.b16 %v105
  %v907 = vunpack.c.l.b16 %v106
  %v908 = vunpack.c.h.b16 %v106
  %v909 = vunpack.c.l.b16 %v107
  %v910 = vunpack.c.h.b16 %v107
  %v911 = vunpack.c.l.b16 %v108
  %v912 = vunpack.c.h.b16 %v108
  %v913 = vunpack.c.l.b16 %v109
  %v914 = vunpack.c.h.b16 %v109
  %v915 = vunpack.c.l.b16 %v110
  %v916 = vunpack.c.h.b16 %v110
  %v917 = vunpack.c.l.b16 %v111
  %v918 = vunpack.c.h.b16 %v111
  %v919 = vunpack.c.l.b16 %v112
  %v920 = vunpack.c.h.b16 %v112
  %v921 = vunpack.c.l.b16 %v113
  %v922 = vunpack.c.h.b16 %v113
  %v923 = vunpack.c.l.b16 %v114
  %v924 = vunpack.c.h.b16 %v114
  %v925 = vunpack.c.l.b16 %v115
  %v926 = vunpack.c.h.b16 %v115
  %v927 = vunpack.c.l.b16 %v116
  %v928 = vunpack.c.h.b16 %v116
  %v929 = vunpack.c.l.b16 %v117
  %v930 = vunpack.c.h.b16 %v117
  %v931 = vunpack.c.l.b16 %v118
  %v932 = vunpack.c.h.b16 %v118
  %v933 = vunpack.c.l.b16 %v119
  %v934 = vunpack.c.h.b16 %v119
  %v935 = vunpack.c.l.b16 %v120
  %v936 = vunpack.c.h.b16 %v120
  %v937 = vunpack.c.l.b16 %v121
  %v938 = vunpack.c.h.b16 %v121
  %v939 = vunpack.c.l.b16 %v122
  %v940 = vunpack.c.h.b16 %v122
  %v941 = vunpack.c.l.b16 %v123
  %v942 = vunpack.c.h.b16 %v123
  %v943 = vunpack.c.l.b16 %v124
  %v944 = vunpack.c.h.b16 %v124
  %v945 = vunpack.c.l.b16 %v125
  %v946 = vunpack.c.h.b16 %v125
  %v947 = vunpack.c.l.b16 %v126
  %v948 = vunpack.c.h.b16 %v126
  %v949 = vunpack.c.l.b16 %v127
  %v950 = vunpack.c.h.b16 %v127
  %v951 = vunpack.c.l.b16 %v128
  %v952 = vunpack.c.h.b16 %v128
  %v953 = vunpack.c.l.b16 %v129
  %v954 = vunpack.c.h.b16 %v129
  %v955 = vunpack.c.l.b16 %v130
  %v956 = vunpack.c.h.b16 %v130
  %v957 = vunpack.c.l.b16 %v131
  %v958 = vunpack.c.h.b16 %v131
  %v959 = vunpack.c.l.b16 %v132
  %v960 = vunpack.c.h.b16 %v132
  %v961 = vunpack.c.l.b16 %v133
  %v962 = vunpack.c.h.b16 %v133
  %v963 = vunpack.c.l.b16 %v134
  %v964 = vunpack.c.h.b16 %v134
  %v965 = vunpack.c.l.b16 %v135
  %v966 = vunpack.c.h.b16 %v135
  %v967 = vunpack.c.l.b16 %v136
  %v968 = vunpack.c.h.b16 %v136
  %v969 = vunpack.c.l.b16 %v137
  %v970 = vunpack.c.h.b16 %v137
  %v971 = vunpack.c.l.b16 %v138
  %v972 = vunpack.c.h.b16 %v138
  %v973 = vunpack.c.l.b16 %v139
  %v974 = vunpack.c.h.b16 %v139
  %v975 = vunpack.c.l.b16 %v140
  %v976 = vunpack.c.h.b16 %v140
  %v977 = vunpack.c.l.b16 %v141
  %v978 = vunpack.c.h.b16 %v141
  %v979 = vunpack.c.l.b16 %v142
  %v980 = vunpack.c.h.b16 %v142
  %v981 = vunpack.c.l.b16 %v143
  %v982 = vunpack.c.h.b16 %v143
  %v983 = vunpack.c.l.b16 %v144
  %v984 = vunpack.c.h.b16 %v144
  %v985 = vunpack.c.l.b16 %v145
  %v986 = vunpack.c.h.b16 %v145
  %v987 = vunpack.c.l.b16 %v146
  %v988 = vunpack.c.h.b16 %v146
  %v989 = vunpack.c.l.b16 %v147
  %v990 = vunpack.c.h.b16 %v147
  %v991 = vunpack.c.l.b16 %v148
  %v992 = vunpack.c.h.b16 %v148
  %v993 = vunpack.c.l.b16 %v149
  %v994 = vunpack.c.h.b16 %v149
  %v995 = vunpack.c.l.b16 %v150
  %v996 = vunpack.c.h.b16 %v150
  %v997 = vunpack.c.l.b16 %v151
  %v998 = vunpack.c.h.b16 %v151
  %v999 = vunpack.c.l.b16 %v152
  %v1000 = vunpack.c.h.b16 %v152
  %v1001 = vunpack.c.l.b16 %v153
  %v1002 = vunpack.c.h.b16 %v153
  %v1003 = vunpack.c.l.b16 %v154
  %v1004 = vunpack.c.h.b16 %v154
  %v1005 = vunpack.c.l.b16 %v155
  %v1006 = vunpack.c.h.b16 %v155
  %v1007 = vunpack.c.l.b16 %v156
  %v1008 = vunpack.c.h.b16 %v156
  %v1009 = vunpack.c.l.b16 %v157
  %v1010 = vunpack.c.h.b16 %v157
  %v1011 = vunpack.c.l.b16 %v158
  %v1012 = vunpack.c.h.b16 %v158
  %v1013 = vunpack.c.l.b16 %v159
  %v1014 = vunpack.c.h.b16 %v159
  %v1015 = vunpack.c.l.b16 %v160
  %v1016 = vunpack.c.h.b16 %v160
  %v1017 = vunpack.c.l.b16 %v161
  %v1018 = vunpack.c.h.b16 %v161
  %v1019 = vunpack.c.l.b16 %v162
  %v1020 = vunpack.c.h.b16 %v162
  %v1021 = vunpack.c.l.b16 %v163
  %v1022 = vunpack.c.h.b16 %v163
  %v1023 = vunpack.c.l.b16 %v164
  %v1024 = vunpack.c.h.b16 %v164
  %v1025 = vunpack.c.l.b16 %v165
  %v1026 = vunpack.c.h.b16 %v165
  %v1027 = vunpack.c.l.b16 %v166
  %v1028 = vunpack.c.h.b16 %v166
  %v1029 = vunpack.c.l.b16 %v167
  %v1030 = vunpack.c.h.b16 %v167
  %v1031 = vunpack.c.l.b16 %v168
  %v1032 = vunpack.c.h.b16 %v168
  %v1033 = vunpack.c.l.b16 %v169
  %v1034 = vunpack.c.h.b16 %v169
  %v1035 = vunpack.c.l.b16 %v170
  %v1036 = vunpack.c.h.b16 %v170
  %v1037 = vunpack.c.l.b16 %v171
  %v1038 = vunpack.c.h.b16 %v171
  %v1039 = vunpack.c.l.b16 %v172
  %v1040 = vunpack.c.h.b16 %v172
  %v1041 = vunpack.c.l.b16 %v173
  %v1042 = vunpack.c.h.b16 %v173
  %v1043 = vunpack.c.l.b16 %v174
  %v1044 = vunpack.c.h.b16 %v174
  %v1045 = vunpack.c.l.b16 %v175
  %v1046 = vunpack.c.h.b16 %v175
  %v1047 = vunpack.c.l.b16 %v176
  %v1048 = vunpack.c.h.b16 %v176
  %v1049 = vunpack.c.l.b16 %v177
  %v1050 = vunpack.c.h.b16 %v177
  %v1051 = vunpack.c.l.b16 %v178
  %v1052 = vunpack.c.h.b16 %v178
  %v1053 = vunpack.c.l.b16 %v179
  %v1054 = vunpack.c.h.b16 %v179
  %v1055 = vunpack.c.l.b16 %v180
  %v1056 = vunpack.c.h.b16 %v180
  %v1057 = vunpack.c.l.b16 %v181
  %v1058 = vunpack.c.h.b16 %v181
  %v1059 = vunpack.c.l.b16 %v182
  %v1060 = vunpack.c.h.b16 %v182
  %v1061 = vunpack.c.l.b16 %v183
  %v1062 = vunpack.c.h.b16 %v183
  %v1063 = vunpack.c.l.b16 %v184
  %v1064 = vunpack.c.h.b16 %v184
  %v1065 = vunpack.c.l.b16 %v185
  %v1066 = vunpack.c.h.b16 %v185
  %v1067 = vunpack.c.l.b16 %v186
  %v1068 = vunpack.c.h.b16 %v186
  %v1069 = vunpack.c.l.b16 %v187
  %v1070 = vunpack.c.h.b16 %v187
  %v1071 = vunpack.c.l.b16 %v188
  %v1072 = vunpack.c.h.b16 %v188
  %v1073 = vunpack.c.l.b16 %v189
  %v1074 = vunpack.c.h.b16 %v189
  %v1075 = vunpack.c.l.b16 %v190
  %v1076 = vunpack.c.h.b16 %v190
  %v1077 = vunpack.c.l.b16 %v191
  %v1078 = vunpack.c.h.b16 %v191
  %v1079 = vunpack.c.l.b16 %v192
  %v1080 = vunpack.c.h.b16 %v192
  %v1081 = vunpack.c.l.b16 %v193
  %v1082 = vunpack.c.h.b16 %v193
  %v1083 = vunpack.c.l.b16 %v194
  %v1084 = vunpack.c.h.b16 %v194
  %v1085 = vunpack.c.l.b16 %v195
  %v1086 = vunpack.c.h.b16 %v195
  %v1087 = vunpack.c.l.b16 %v196
  %v1088 = vunpack.c.h.b16 %v196
  %v1089 = vunpack.c.l.b16 %v197
  %v1090 = vunpack.c.h.b16 %v197
  %v1091 = vunpack.c.l.b16 %v198
  %v1092 = vunpack.c.h.b16 %v198
  %v1093 = vunpack.c.l.b16 %v199
  %v1094 = vunpack.c.h.b16 %v199
  %v1095 = vunpack.c.l.b16 %v200
  %v1096 = vunpack.c.h.b16 %v200
  %v1097 = vunpack.c.l.b16 %v201
  %v1098 = vunpack.c.h.b16 %v201
  %v1099 = vunpack.c.l.b16 %v202
  %v1100 = vunpack.c.h.b16 %v202
  %v1101 = vunpack.c.l.b16 %v203
  %v1102 = vunpack.c.h.b16 %v203
  %v1103 = vunpack.c.l.b16 %v204
  %v1104 = vunpack.c.h.b16 %v204
  %v1105 = vunpack.c.l.b16 %v205
  %v1106 = vunpack.c.h.b16 %v205
  %v1107 = vunpack.c.l.b16 %v206
  %v1108 = vunpack.c.h.b16 %v206
  %v1109 = vunpack.c.l.b16 %v207
  %v1110 = vunpack.c.h.b16 %v207
  %v1111 = vunpack.c.l.b16 %v208
  %v1112 = vunpack.c.h.b16 %v208
  %v1113 = vunpack.c.l.b16 %v209
  %v1114 = vunpack.c.h.b16 %v209
  %v1115 = vunpack.c.l.b16 %v210
  %v1116 = vunpack.c.h.b16 %v210
  %v1117 = vunpack.c.l.b16 %v211
  %v1118 = vunpack.c.h.b16 %v211
  %v1119 = vunpack.c.l.b16 %v212
  %v1120 = vunpack.c.h.b16 %v212
  %v1121 = vunpack.c.l.b16 %v213
  %v1122 = vunpack.c.h.b16 %v213
  %v1123 = vunpack.c.l.b16 %v214
  %v1124 = vunpack.c.h.b16 %v214
  %v1125 = vunpack.c.l.b16 %v215
  %v1126 = vunpack.c.h.b16 %v215
  %v1127 = vunpack.c.l.b16 %v216
  %v1128 = vunpack.c.h.b16 %v216
  %v1129 = vunpack.c.l.b16 %v217
  %v1130 = vunpack.c.h.b16 %v217
  %v1131 = vunpack.c.l.b16 %v218
  %v1132 = vunpack.c.h.b16 %v218
  %v1133 = vunpack.c.l.b16 %v219
  %v1134 = vunpack.c.h.b16 %v219
  %v1135 = vunpack.c.l.b16 %v220
  %v1136 = vunpack.c.h.b16 %v220
  %v1137 = vunpack.c.l.b16 %v221
  %v1138 = vunpack.c.h.b16 %v221
  %v1139 = vunpack.c.l.b16 %v222
  %v1140 = vunpack.c.h.b16 %v222
  %v1141 = vunpack.c.l.b16 %v223
  %v1142 = vunpack.c.h.b16 %v223
  %v1143 = vunpack.c.l.b16 %v224
  %v1144 = vunpack.c.h.b16 %v224
  %v1145 = vunpack.c.l.b16 %v225
  %v1146 = vunpack.c.h.b16 %v225
  %v1147 = vunpack.c.l.b16 %v226
  %v1148 = vunpack.c.h.b16 %v226
  %v1149 = vunpack.c.l.b16 %v227
  %v1150 = vunpack.c.h.b16 %v227
  %v1151 = vunpack.c.l.b16 %v228
  %v1152 = vunpack.c.h.b16 %v228
  %v1153 = vunpack.c.l.b16 %v229
  %v1154 = vunpack.c.h.b16 %v229
  %v1155 = vunpack.c.l.b16 %v230
  %v1156 = vunpack.c.h.b16 %v230
  %v1157 = vunpack.c.l.b16 %v231
  %v1158 = vunpack.c.h.b16 %v231
  %v1159 = vunpack.c.l.b16 %v232
  %v1160 = vunpack.c.h.b16 %v232
  %v1161 = vunpack.c.l.b16 %v233
  %v1162 = vunpack.c.h.b16 %v233
  %v1163 = vunpack.c.l.b16 %v234
  %v1164 = vunpack.c.h.b16 %v234
  %v1165 = vunpack.c.l.b16 %v235
  %v1166 = vunpack.c.h.b16 %v235
  %v1167 = vunpack.c.l.b16 %v236
  %v1168 = vunpack.c.h.b16 %v236
  %v1169 = vunpack.c.l.b16 %v237
  %v1170 = vunpack.c.h.b16 %v237
  %v1171 = vunpack.c.l.b16 %v238
  %v1172 = vunpack.c.h.b16 %v238
  %v1173 = vunpack.c.l.b16 %v239
  %v1174 = vunpack.c.h.b16 %v239
  %v1175 = vunpack.c.l.b16 %v240
  %v1176 = vunpack.c.h.b16 %v240
  %v1177 = vunpack.c.l.b16 %v241
  %v1178 = vunpack.c.h.b16 %v241
  %v1179 = vunpack.c.l.b16 %v242
  %v1180 = vunpack.c.h.b16 %v242
  %v1181 = vunpack.c.l.b16 %v243
  %v1182 = vunpack.c.h.b16 %v243
  %v1183 = vunpack.c.l.b16 %v244
  %v1184 = vunpack.c.h.b16 %v244
  %v1185 = vunpack.c.l.b16 %v245
  %v1186 = vunpack.c.h.b16 %v245
  %v1187 = vunpack.c.l.b16 %v246
  %v1188 = vunpack.c.h.b16 %v246
  %v1189 = vunpack.c.l.b16 %v247
  %v1190 = vunpack.c.h.b16 %v247
  %v1191 = vunpack.c.l.b16 %v248
  %v1192 = vunpack.c.h.b16 %v248
  %v1193 = vunpack.c.l.b16 %v249
  %v1194 = vunpack.c.h.b16 %v249
  %v1195 = vunpack.c.l.b16 %v250
  %v1196 = vunpack.c.h.b16 %v250
  %v1197 = vunpack.c.l.b16 %v251
  %v1198 = vunpack.c.h.b16 %v251
  %v1199 = vunpack.c.l.b16 %v252
  %v1200 = vunpack.c.h.b16 %v252
  %v1201 = vunpack.c.l.b16 %v253
  %v1202 = vunpack.c.h.b16 %v253
  %v1203 = vunpack.c.l.b16 %v254
  %v1204 = vunpack.c.h.b16 %v254
  %v1205 = vunpack.c.l.b16 %v255
  %v1206 = vunpack.c.h.b16 %v255
  %v1207 = vunpack.c.l.b16 %v256
  %v1208 = vunpack.c.h.b16 %v256
  %v1209 = vunpack.c.l.b16 %v257
  %v1210 = vunpack.c.h.b16 %v257
  %v1211 = vunpack.c.l.b16 %v258
  %v1212 = vunpack.c.h.b16 %v258
  %v1213 = vunpack.c.l.b16 %v259
  %v1214 = vunpack.c.h.b16 %v259
  %v1215 = vunpack.c.l.b16 %v260
  %v1216 = vunpack.c.h.b16 %v260
  %v1217 = vunpack.c.l.b16 %v261
  %v1218 = vunpack.c.h.b16 %v261
  %v1219 = vunpack.c.l.b16 %v262
  %v1220 = vunpack.c.h.b16 %v262
  %v1221 = vunpack.c.l.b16 %v263
  %v1222 = vunpack.c.h.b16 %v263
  %v1223 = vunpack.c.l.b16 %v264
  %v1224 = vunpack.c.h.b16 %v264
  %v1225 = vunpack.c.l.b16 %v265
  %v1226 = vunpack.c.h.b16 %v265
  %v1227 = vunpack.c.l.b16 %v266
  %v1228 = vunpack.c.h.b16 %v266
  %v1229 = vunpack.c.l.b16 %v267
  %v1230 = vunpack.c.h.b16 %v267
  %v1231 = vunpack.c.l.b16 %v268
  %v1232 = vunpack.c.h.b16 %v268
  %v1233 = vunpack.c.l.b16 %v269
  %v1234 = vunpack.c.h.b16 %v269
  %v1235 = vunpack.c.l.b16 %v270
  %v1236 = vunpack.c.h.b16 %v270
  %v1237 = vunpack.c.l.b16 %v271
  %v1238 = vunpack.c.h.b16 %v271
  %v1239 = vunpack.c.l.b16 %v272
  %v1240 = vunpack.c.h.b16 %v272
  %v1241 = vunpack.c.l.b16 %v273
  %v1242 = vunpack.c.h.b16 %v273
  %v1243 = vunpack.c.l.b16 %v274
  %v1244 = vunpack.c.h.b16 %v274
  %v1245 = vunpack.c.l.b16 %v275
  %v1246 = vunpack.c.h.b16 %v275
  %v1247 = vunpack.c.l.b16 %v276
  %v1248 = vunpack.c.h.b16 %v276
  %v1249 = vunpack.c.l.b16 %v277
  %v1250 = vunpack.c.h.b16 %v277
  %v1251 = vunpack.c.l.b16 %v278
  %v1252 = vunpack.c.h.b16 %v278
  %v1253 = vunpack.c.l.b16 %v279
  %v1254 = vunpack.c.h.b16 %v279
  %v1255 = vunpack.c.l.b16 %v280
  %v1256 = vunpack.c.h.b16 %v280
  %v1257 = vunpack.c.l.b16 %v281
  %v1258 = vunpack.c.h.b16 %v281
  %v1259 = vunpack.c.l.b16 %v282
  %v1260 = vunpack.c.h.b16 %v282
  %v1261 = vunpack.c.l.b16 %v283
  %v1262 = vunpack.c.h.b16 %v283
  %v1263 = vunpack.c.l.b16 %v284
  %v1264 = vunpack.c.h.b16 %v284
  %v1265 = vunpack.c.l.b16 %v285
  %v1266 = vunpack.c.h.b16 %v285
  %v1267 = vunpack.c.l.b16 %v286
  %v1268 = vunpack.c.h.b16 %v286
  %v1269 = vunpack.c.l.b16 %v287
  %v1270 = vunpack.c.h.b16 %v287
  %v1271 = vunpack.c.l.b16 %v288
  %v1272 = vunpack.c.h.b16 %v288
  %v1273 = vunpack.c.l.b16 %v289
  %v1274 = vunpack.c.h.b16 %v289
  %v1275 = vunpack.c.l.b16 %v290
  %v1276 = vunpack.c.h.b16 %v290
  %v1277 = vunpack.c.l.b16 %v291
  %v1278 = vunpack.c.h.b16 %v291
  %v1279 = vunpack.c.l.b16 %v292
  %v1280 = vunpack.c.h.b16 %v292
  %v1281 = vunpack.c.l.b16 %v293
  %v1282 = vunpack.c.h.b16 %v293
  %v1283 = vunpack.c.l.b16 %v294
  %v1284 = vunpack.c.h.b16 %v294
  %v1285 = vunpack.c.l.b16 %v295
  %v1286 = vunpack.c.h.b16 %v295
  %v1287 = vunpack.c.l.b16 %v296
  %v1288 = vunpack.c.h.b16 %v296
  %v1289 = vunpack.c.l.b16 %v297
  %v1290 = vunpack.c.h.b16 %v297
  %v1291 = vunpack.c.l.b16 %v298
  %v1292 = vunpack.c.h.b16 %v298
  %v1293 = vunpack.c.l.b16 %v299
  %v1294 = vunpack.c.h.b16 %v299
  %v1295 = vunpack.c.l.b16 %v300
  %v1296 = vunpack.c.h.b16 %v300
  %v1297 = vunpack.c.l.b16 %v301
  %v1298 = vunpack.c.h.b16 %v301
  %v1299 = vunpack.c.l.b16 %v302
  %v1300 = vunpack.c.h.b16 %v302
  %v1301 = vunpack.c.l.b16 %v303
  %v1302 = vunpack.c.h.b16 %v303
  %v1303 = vunpack.c.l.b16 %v304
  %v1304 = vunpack.c.h.b16 %v304
  %v1305 = vunpack.c.l.b16 %v305
  %v1306 = vunpack.c.h.b16 %v305
  %v1307 = vunpack.c.l.b16 %v306
  %v1308 = vunpack.c.h.b16 %v306
  %v1309 = vunpack.c.l.b16 %v307
  %v1310 = vunpack.c.h.b16 %v307
  %v1311 = vunpack.c.l.b16 %v308
  %v1312 = vunpack.c.h.b16 %v308
  %v1313 = vunpack.c.l.b16 %v309
  %v1314 = vunpack.c.h.b16 %v309
  %v1315 = vunpack.c.l.b16 %v310
  %v1316 = vunpack.c.h.b16 %v310
  %v1317 = vunpack.c.l.b16 %v311
  %v1318 = vunpack.c.h.b16 %v311
  %v1319 = vunpack.c.l.b16 %v312
  %v1320 = vunpack.c.h.b16 %v312
  %v1321 = vunpack.c.l.b16 %v313
  %v1322 = vunpack.c.h.b16 %v313
  %v1323 = vunpack.c.l.b16 %v314
  %v1324 = vunpack.c.h.b16 %v314
  %v1325 = vunpack.c.l.b16 %v315
  %v1326 = vunpack.c.h.b16 %v315
  %v1327 = vunpack.c.l.b16 %v316
  %v1328 = vunpack.c.h.b16 %v316
  %v1329 = vunpack.c.l.b16 %v317
  %v1330 = vunpack.c.h.b16 %v317
  %v1331 = vunpack.c.l.b16 %v318
  %v1332 = vunpack.c.h.b16 %v318
  %v1333 = vunpack.c.l.b16 %v319
  %v1334 = vunpack.c.h.b16 %v319
  %v1335 = vunpack.c.l.b16 %v320
  %v1336 = vunpack.c.h.b16 %v320
  %v1337 = vunpack.c.l.b16 %v321
  %v1338 = vunpack.c.h.b16 %v321
  %v1339 = vunpack.c.l.b16 %v322
  %v1340 = vunpack.c.h.b16 %v322
  %v1341 = vunpack.c.l.b16 %v323
  %v1342 = vunpack.c.h.b16 %v323
  %v1343 = vunpack.c.l.b16 %v324
  %v1344 = vunpack.c.h.b16 %v324
  %v1345 = vunpack.c.l.b16 %v325
  %v1346 = vunpack.c.h.b16 %v325
  %v1347 = vunpack.c.l.b16 %v326
  %v1348 = vunpack.c.h.b16 %v326
  %v1349 = vunpack.c.l.b16 %v327
  %v1350 = vunpack.c.h.b16 %v327
  %v1351 = vunpack.c.l.b16 %v328
  %v1352 = vunpack.c.h.b16 %v328
  %v1353 = vunpack.c.l.b16 %v329
  %v1354 = vunpack.c.h.b16 %v329
  %v1355 = vunpack.c.l.b16 %v330
  %v1356 = vunpack.c.h.b16 %v330
  %v1357 = vunpack.c.l.b16 %v331
  %v1358 = vunpack.c.h.b16 %v331
  %v1359 = vunpack.c.l.b16 %v332
  %v1360 = vunpack.c.h.b16 %v332
  %v1361 = vunpack.c.l.b16 %v333
  %v1362 = vunpack.c.h.b16 %v333
  %v1363 = vunpack.c.l.b16 %v334
  %v1364 = vunpack.c.h.b16 %v334
  %v1365 = vunpack.c.l.b16 %v335
  %v1366 = vunpack.c.h.b16 %v335
  %v1367 = vunpack.c.l.b16 %v336
  %v1368 = vunpack.c.h.b16 %v336
  %v1369 = vunpack.c.l.b16 %v337
  %v1370 = vunpack.c.h.b16 %v337
  %v1371 = vunpack.c.l.b16 %v338
  %v1372 = vunpack.c.h.b16 %v338
  %v1373 = vunpack.c.l.b16 %v339
  %v1374 = vunpack.c.h.b16 %v339
  %v1375 = vunpack.c.l.b16 %v340
  %v1376 = vunpack.c.h.b16 %v340
  %v1377 = vunpack.c.l.b16 %v341
  %v1378 = vunpack.c.h.b16 %v341
  %v1379 = vunpack.c.l.b16 %v342
  %v1380 = vunpack.c.h.b16 %v342
  %v1381 = vunpack.c.l.b16 %v343
  %v1382 = vunpack.c.h.b16 %v343
  %v1383 = vunpack.c.l.b16 %v344
  %v1384 = vunpack.c.h.b16 %v344
  %v1385 = vunpack.c.l.b16 %v345
  %v1386 = vunpack.c.h.b16 %v345
  %v1387 = vunpack.c.l.b16 %v346
  %v1388 = vunpack.c.h.b16 %v346
  %v1389 = vpack.c.b16 %v751, %v749
  %v1390 = vpack.c.b16 %v752, %v750
  %v1391 = vpack.c.b16 %v755, %v753
  %v1392 = vpack.c.b16 %v756, %v754
  %v1393 = vpack.c.b16 %v759, %v757
  %v1394 = vpack.c.b16 %v760, %v758
  %v1395 = vpack.c.b16 %v763, %v761
  %v1396 = vpack.c.b16 %v764, %v762
  %v1397 = vpack.c.b16 %v767, %v765
  %v1398 = vpack.c.b16 %v768, %v766
  %v1399 = vpack.c.b16 %v771, %v769
  %v1400 = vpack.c.b16 %v772, %v770
  %v1401 = vpack.c.b16 %v775, %v773
  %v1402 = vpack.c.b16 %v776, %v774
  %v1403 = vpack.c.b16 %v779, %v777
  %v1404 = vpack.c.b16 %v780, %v778
  %v1405 = vpack.c.b16 %v783, %v781
  %v1406 = vpack.c.b16 %v784, %v782
  %v1407 = vpack.c.b16 %v787, %v785
  %v1408 = vpack.c.b16 %v788, %v786
  %v1409 = vpack.c.b16 %v791, %v789
  %v1410 = vpack.c.b16 %v792, %v790
  %v1411 = vpack.c.b16 %v795, %v793
  %v1412 = vpack.c.b16 %v796, %v794
  %v1413 = vpack.c.b16 %v799, %v797
  %v1414 = vpack.c.b16 %v800, %v798
  %v1415 = vpack.c.b16 %v803, %v801
  %v1416 = vpack.c.b16 %v804, %v802
  %v1417 = vpack.c.b16 %v807, %v805
  %v1418 = vpack.c.b16 %v808, %v806
  %v1419 = vpack.c.b16 %v811, %v809
  %v1420 = vpack.c.b16 %v812, %v810
  %v1421 = vpack.c.b16 %v815, %v813
  %v1422 = vpack.c.b16 %v816, %v814
  %v1423 = vpack.c.b16 %v819, %v817
  %v1424 = vpack.c.b16 %v820, %v818
  %v1425 = vpack.c.b16 %v823, %v821
  %v1426 = vpack.c.b16 %v824, %v822
  %v1427 = vpack.c.b16 %v827, %v825
  %v1428 = vpack.c.b16 %v828, %v826
  %v1429 = vpack.c.b16 %v831, %v829
  %v1430 = vpack.c.b16 %v832, %v830
  %v1431 = vpack.c.b16 %v835, %v833
  %v1432 = vpack.c.b16 %v836, %v834
  %v1433 = vpack.c.b16 %v839, %v837
  %v1434 = vpack.c.b16 %v840, %v838
  %v1435 = vpack.c.b16 %v843, %v841
  %v1436 = vpack.c.b16 %v844, %v842
  %v1437 = vpack.c.b16 %v847, %v845
  %v1438 = vpack.c.b16 %v848, %v846
  %v1439 = vpack.c.b16 %v851, %v849
  %v1440 = vpack.c.b16 %v852, %v850
  %v1441 = vpack.c.b16 %v855, %v853
  %v1442 = vpack.c.b16 %v856, %v854
  %v1443 = vpack.c.b16 %v859, %v857
  %v1444 = vpack.c.b16 %v860, %v858
  %v1445 = vpack.c.b16 %v863, %v861
  %v1446 = vpack.c.b16 %v864, %v862
  %v1447 = vpack.c.b16 %v867, %v865
  %v1448 = vpack.c.b16 %v868, %v866
  %v1449 = vpack.c.b16 %v871, %v869
  %v1450 = vpack.c.b16 %v872, %v870
  %v1451 = vpack.c.b16 %v875, %v873
  %v1452 = vpack.c.b16 %v876, %v874
  %v1453 = vpack.c.b16 %v879, %v877
  %v1454 = vpack.c.b16 %v880, %v878
  %v1455 = vpack.c.b16 %v883, %v881
  %v1456 = vpack.c.b16 %v884, %v882
  %v1457 = vpack.c.b16 %v887, %v885
  %v1458 = vpack.c.b16 %v888, %v886
  %v1459 = vpack.c.b16 %v891, %v889
  %v1460 = vpack.c.b16 %v892, %v890
  %v1461 = vpack.c.b16 %v895, %v893
  %v1462 = vpack.c.b16 %v896, %v894
  %v1463 = vpack.c.b16 %v899, %v897
  %v1464 = vpack.c.b16 %v900, %v898
  %v1465 = vpack.c.b16 %v903, %v901
  %v1466 = vpack.c.b16 %v904, %v902
  %v1467 = vpack.c.b16 %v907, %v905
  %v1468 = vpack.c.b16 %v908, %v906
  %v1469 = vpack.c.b16 %v911, %v909
  %v1470 = vpack.c.b16 %v912, %v910
  %v1471 = vpack.c.b16 %v915, %v913
  %v1472 = vpack.c.b16 %v916, %v914
  %v1473 = vpack.c.b16 %v919, %v917
  %v1474 = vpack.c.b16 %v920, %v918
  %v1475 = vpack.c.b16 %v923, %v921
  %v1476 = vpack.c.b16 %v924, %v922
  %v1477 = vpack.c.b16 %v927, %v925
  %v1478 = vpack.c.b16 %v928, %v926
  %v1479 = vpack.c.b16 %v931, %v929
  %v1480 = vpack.c.b16 %v932, %v930
  %v1481 = vpack.c.b16 %v935, %v933
  %v1482 = vpack.c.b16 %v936, %v934
  %v1483 = vpack.c.b16 %v939, %v937
  %v1484 = vpack.c.b16 %v940, %v938
  %v1485 = vpack.c.b16 %v943, %v941
  %v1486 = vpack.c.b16 %v944, %v942
  %v1487 = vpack.c.b16 %v947, %v945
  %v1488 = vpack.c.b16 %v948, %v946
  %v1489 = vpack.c.b16 %v951, %v949
  %v1490 = vpack.c.b16 %v952, %v950
  %v1491 = vpack.c.b16 %v955, %v953
  %v1492 = vpack.c.b16 %v956, %v954
  %v1493 = vpack.c.b16 %v959, %v957
  %v1494 = vpack.c.b16 %v960, %v958
  %v1495 = vpack.c.b16 %v963, %v961
  %v1496 = vpack.c.b16 %v964, %v962
  %v1497 = vpack.c.b16 %v967, %v965
  %v1498 = vpack.c.b16 %v968, %v966
  %v1499 = vpack.c.b16 %v971, %v969
  %v1500 = vpack.c.b16 %v972, %v970
  %v1501 = vpack.c.b16 %v975, %v973
  %v1502 = vpack.c.b16 %v976, %v974
  %v1503 = vpack.c.b16 %v979, %v977
  %v1504 = vpack.c.b16 %v980, %v978
  %v1505 = vpack.c.b16 %v983, %v981
  %v1506 = vpack.c.b16 %v984, %v982
  %v1507 = vpack.c.b16 %v987, %v985
  %v1508 = vpack.c.b16 %v988, %v986
  %v1509 = vpack.c.b16 %v991, %v989
  %v1510 = vpack.c.b16 %v992, %v990
  %v1511 = vpack.c.b16 %v995, %v993
  %v1512 = vpack.c.b16 %v996, %v994
  %v1513 = vpack.c.b16 %v999, %v997
  %v1514 = vpack.c.b16 %v1000, %v998
  %v1515 = vpack.c.b16 %v1003, %v1001
  %v1516 = vpack.c.b16 %v1004, %v1002
  %v1517 = vpack.c.b16 %v1007, %v1005
  %v1518 = vpack.c.b16 %v1008, %v1006
  %v1519 = vpack.c.b16 %v1011, %v1009
  %v1520 = vpack.c.b16 %v1012, %v1010
  %v1521 = vpack.c.b16 %v1015, %v1013
  %v1522 = vpack.c.b16 %v1016, %v1014
  %v1523 = vpack.c.b16 %v1019, %v1017
  %v1524 = vpack.c.b16 %v1020, %v1018
  %v1525 = vpack.c.b16 %v1023, %v1021
  %v1526 = vpack.c.b16 %v1024, %v1022
  %v1527 = vpack.c.b16 %v1027, %v1025
  %v1528 = vpack.c.b16 %v1028, %v1026
  %v1529 = vpack.c.b16 %v1031, %v1029
  %v1530 = vpack.c.b16 %v1032, %v1030
  %v1531 = vpack.c.b16 %v1035, %v1033
  %v1532 = vpack.c.b16 %v1036, %v1034
  %v1533 = vpack.c.b16 %v1039, %v1037
  %v1534 = vpack.c.b16 %v1040, %v1038
  %v1535 = vpack.c.b16 %v1043, %v1041
  %v1536 = vpack.c.b16 %v1044, %v1042
  %v1537 = vpack.c.b16 %v1047, %v1045
  %v1538 = vpack.c.b16 %v1048, %v1046
  %v1539 = vpack.c.b16 %v1051, %v1049
  %v1540 = vpack.c.b16 %v1052, %v1050
  %v1541 = vpack.c.b16 %v1055, %v1053
  %v1542 = vpack.c.b16 %v1056, %v1054
  %v1543 = vpack.c.b16 %v1059, %v1057
  %v1544 = vpack.c.b16 %v1060, %v1058
  %v1545 = vpack.c.b16 %v1063, %v1061
  %v1546 = vpack.c.b16 %v1064, %v1062
  %v1547 = vpack.c.b16 %v1067, %v1065
  %v1548 = vpack.c.b16 %v1068, %v1066
  %v1549 = vpack.c.b16 %v1071, %v1069
  %v1550 = vpack.c.b16 %v1072, %v1070
  %v1551 = vpack.c.b16 %v1075, %v1073
  %v1552 = vpack.c.b16 %v1076, %v1074
  %v1553 = vpack.c.b16 %v1079, %v1077
  %v1554 = vpack.c.b16 %v1080, %v1078
  %v1555 = vpack.c.b16 %v1083, %v1081
  %v1556 = vpack.c.b16 %v1084, %v1082
  %v1557 = vpack.c.b16 %v1087, %v1085
  %v1558 = vpack.c.b16 %v1088, %v1086
  %v1559 = vpack.c.b16 %v1091, %v1089
  %v1560 = vpack.c.b16 %v1092, %v1090
  %v1561 = vpack.c.b16 %v1095, %v1093
  %v1562 = vpack.c.b16 %v1096, %v1094
  %v1563 = vpack.c.b16 %v1099, %v1097
  %v1564 = vpack.c.b16 %v1100, %v1098
  %v1565 = vpack.c.b16 %v1103, %v1101
  %v1566 = vpack.c.b16 %v1104, %v1102
  %v1567 = vpack.c.b16 %v1107, %v1105
  %v1568 = vpack.c.b16 %v1108, %v1106
  %v1569 = vpack.c.b16 %v1111, %v1109
  %v1570 = vpack.c.b16 %v1112, %v1110
  %v1571 = vpack.c.b16 %v1115, %v1113
  %v1572 = vpack.c.b16 %v1116, %v1114
  %v1573 = vpack.c.b16 %v1119, %v1117
  %v1574 = vpack.c.b16 %v1120, %v1118
  %v1575 = vpack.c.b16 %v1123, %v1121
  %v1576 = vpack.c.b16 %v1124, %v1122
  %v1577 = vpack.c.b16 %v1127, %v1125
  %v1578 = vpack.c.b16 %v1128, %v1126
  %v1579 = vpack.c.b16 %v1131, %v1129
  %v1580 = vpack.c.b16 %v1132, %v1130
  %v1581 = vpack.c.b16 %v1135, %v1133
  %v1582 = vpack.c.b16 %v1136, %v1134
  %v1583 = vpack.c.b16 %v1139, %v1137
  %v1584 = vpack.c.b16 %v1140, %v1138
  %v1585 = vpack.c.b16 %v1143, %v1141
  %v1586 = vpack.c.b16 %v1144, %v1142
  %v1587 = vpack.c.b16 %v1147, %v1145
  %v1588 = vpack.c.b16 %v1148, %v1146
  %v1589 = vpack.c.b16 %v1151, %v1149
  %v1590 = vpack.c.b16 %v1152, %v1150
  %v1591 = vpack.c.b16 %v1155, %v1153
  %v1592 = vpack.c.b16 %v1156, %v1154
  %v1593 = vpack.c.b16 %v1159, %v1157
  %v1594 = vpack.c.b16 %v1160, %v1158
  %v1595 = vpack.c.b16 %v1163, %v1161
  %v1596 = vpack.c.b16 %v1164, %v1162
  %v1597 = vpack.c.b16 %v1167, %v1165
  %v1598 = vpack.c.b16 %v1168, %v1166
  %v1599 = vpack.c.b16 %v1171, %v1169
  %v1600 = vpack.c.b16 %v1172, %v1170
  %v1601 = vpack.c.b16 %v1175, %v1173
  %v1602 = vpack.c.b16 %v1176, %v1174
  %v1603 = vpack.c.b16 %v1179, %v1177
  %v1604 = vpack.c.b16 %v1180, %v1178
  %v1605 = vpack.c.b16 %v1183, %v1181
  %v1606 = vpack.c.b16 %v1184, %v1182
  %v1607 = vpack.c.b16 %v1187, %v1185
  %v1608 = vpack.c.b16 %v1188, %v1186
  %v1609 = vpack.c.b16 %v1191, %v1189
  %v1610 = vpack.c.b16 %v1192, %v1190
  %v1611 = vpack.c.b16 %v1195, %v1193
  %v1612 = vpack.c.b16 %v1196, %v1194
  %v1613 = vpack.c.b16 %v1199, %v1197
  %v1614 = vpack.c.b16 %v1200, %v1198
  %v1615 = vpack.c.b16 %v1203, %v1201
  %v1616 = vpack.c.b16 %v1204, %v1202
  %v1617 = vpack.c.b16 %v1207, %v1205
  %v1618 = vpack.c.b16 %v1208, %v1206
  %v1619 = vpack.c.b16 %v1211, %v1209
  %v1620 = vpack.c.b16 %v1212, %v1210
  %v1621 = vpack.c.b16 %v1215, %v1213
  %v1622 = vpack.c.b16 %v1216, %v1214
  %v1623 = vpack.c.b16 %v1219, %v1217
  %v1624 = vpack.c.b16 %v1220, %v1218
  %v1625 = vpack.c.b16 %v1223, %v1221
  %v1626 = vpack.c.b16 %v1224, %v1222
  %v1627 = vpack.c.b16 %v1227, %v1225
  %v1628 = vpack.c.b16 %v1228, %v1226
  %v1629 = vpack.c.b16 %v1231, %v1229
  %v1630 = vpack.c.b16 %v1232, %v1230
  %v1631 = vpack.c.b16 %v1235, %v1233
  %v1632 = vpack.c.b16 %v1236, %v1234
  %v1633 = vpack.c.b16 %v1239, %v1237
  %v1634 = vpack.c.b16 %v1240, %v1238
  %v1635 = vpack.c.b16 %v1243, %v1241
  %v1636 = vpack.c.b16 %v1244, %v1242
  %v1637 = vpack.c.b16 %v1247, %v1245
  %v1638 = vpack.c.b16 %v1248, %v1246
  %v1639 = vpack.c.b16 %v1251, %v1249
  %v1640 = vpack.c.b16 %v1252, %v1250
  %v1641 = vpack.c.b16 %v1255, %v1253
  %v1642 = vpack.c.b16 %v1256, %v1254
  %v1643 = vpack.c.b16 %v1259, %v1257
  %v1644 = vpack.c.b16 %v1260, %v1258
  %v1645 = vpack.c.b16 %v1263, %v1261
  %v1646 = vpack.c.b16 %v1264, %v1262
  %v1647 = vpack.c.b16 %v1267, %v1265
  %v1648 = vpack.c.b16 %v1268, %v1266
  %v1649 = vpack.c.b16 %v1271, %v1269
  %v1650 = vpack.c.b16 %v1272, %v1270
  %v1651 = vpack.c.b16 %v1275, %v1273
  %v1652 = vpack.c.b16 %v1276, %v1274
  %v1653 = vpack.c.b16 %v1279, %v1277
  %v1654 = vpack.c.b16 %v1280, %v1278
  %v1655 = vpack.c.b16 %v1283, %v1281
  %v1656 = vpack.c.b16 %v1284, %v1282
  %v1657 = vpack.c.b16 %v1287, %v1285
  %v1658 = vpack.c.b16 %v1288, %v1286
  %v1659 = vpack.c.b16 %v1291, %v1289
  %v1660 = vpack.c.b16 %v1292, %v1290
  %v1661 = vpack.c.b16 %v1295, %v1293
  %v1662 = vpack.c.b16 %v1296, %v1294
  %v1663 = vpack.c.b16 %v1299, %v1297
  %v1664 = vpack.c.b16 %v1300, %v1298
  %v1665 = vpack.c.b16 %v1303, %v1301
  %v1666 = vpack.c.b16 %v1304, %v1302
  %v1667 = vpack.c.b16 %v1307, %v1305
  %v1668 = vpack.c.b16 %v1308, %v1306
  %v1669 = vpack.c.b16 %v1311, %v1309
  %v1670 = vpack.c.b16 %v1312, %v1310
  %v1671 = vpack.c.b16 %v1315, %v1313
  %v1672 = vpack.c.b16 %v1316, %v1314
  %v1673 = vpack.c.b16 %v1319, %v1317
  %v1674 = vpack.c.b16 %v1320, %v1318
  %v1675 = vpack.c.b16 %v1323, %v1321
  %v1676 = vpack.c.b16 %v1324, %v1322
  %v1677 = vpack.c.b16 %v1327, %v1325
  %v1678 = vpack.c.b16 %v1328, %v1326
  %v1679 = vpack.c.b16 %v1331, %v1329
  %v1680 = vpack.c.b16 %v1332, %v1330
  %v1681 = vpack.c.b16 %v1335, %v1333
  %v1682 = vpack.c.b16 %v1336, %v1334
  %v1683 = vpack.c.b16 %v1339, %v1337
  %v1684 = vpack.c.b16 %v1340, %v1338
  %v1685 = vpack.c.b16 %v1343, %v1341
  %v1686 = vpack.c.b16 %v1344, %v1342
  %v1687 = vpack.c.b16 %v1347, %v1345
  %v1688 = vpack.c.b16 %v1348, %v1346
  %v1689 = vpack.c.b16 %v1351, %v1349
  %v1690 = vpack.c.b16 %v1352, %v1350
  %v1691 = vpack.c.b16 %v1355, %v1353
  %v1692 = vpack.c.b16 %v1356, %v1354
  %v1693 = vpack.c.b16 %v1359, %v1357
  %v1694 = vpack.c.b16 %v1360, %v1358
  %v1695 = vpack.c.b16 %v1363, %v1361
  %v1696 = vpack.c.b16 %v1364, %v1362
  %v1697 = vpack.c.b16 %v1367, %v1365
  %v1698 = vpack.c.b16 %v1368, %v1366
  %v1699 = vpack.c.b16 %v1371, %v1369
  %v1700 = vpack.c.b16 %v1372, %v1370
  %v1701 = vpack.c.b16 %v1375, %v1373
  %v1702 = vpack.c.b16 %v1376, %v1374
  %v1703 = vpack.c.b16 %v1379, %v1377
  %v1704 = vpack.c.b16 %v1380, %v1378
  %v1705 = vpack.c.b16 %v1383, %v1381
  %v1706 = vpack.c.b16 %v1384, %v1382
  %v1707 = vpack.c.b16 %v1387, %v1385
  %v1708 = vpack.c.b16 %v1388, %v1386
  %2029 = vmatprep.subr.bf16.mxu0 %v1404
  %2030 = vmatpush1.bf16.msra.mxu0 %v1403
  %2031 = vmatprep.subr.bf16.mxu0 %v1402
  %2032 = vmatpush1.bf16.msra.mxu0 %v1401
  %2033 = vmatprep.subr.bf16.mxu0 %v1400
  %2034 = vmatpush1.bf16.msra.mxu0 %v1399
  %2035 = vmatprep.subr.bf16.mxu0 %v1398
  %2036 = vmatpush1.bf16.msra.mxu0 %v1397
  %2037 = vmatprep.subr.bf16.mxu0 %v1396
  %2038 = vmatpush1.bf16.msra.mxu0 %v1395
  %2039 = vmatprep.subr.bf16.mxu0 %v1394
  %2040 = vmatpush1.bf16.msra.mxu0 %v1393
  %2041 = vmatprep.subr.bf16.mxu0 %v1392
  %2042 = vmatpush1.bf16.msra.mxu0 %v1391
  %2043 = vmatprep.subr.bf16.mxu0 %v1390
  %2044 = vmatpush1.bf16.msra.mxu0 %v1389
  %2045 = vmatprep.subr.bf16.mxu0 %v1420
  %2046 = vmatpush2.bf16.msra.mxu0 %v1419
  %2047 = vmatprep.subr.bf16.mxu0 %v1418
  %2048 = vmatpush2.bf16.msra.mxu0 %v1417
  %2049 = vmatprep.subr.bf16.mxu0 %v1416
  %2050 = vmatpush2.bf16.msra.mxu0 %v1415
  %2051 = vmatprep.subr.bf16.mxu0 %v1414
  %2052 = vmatpush2.bf16.msra.mxu0 %v1413
  %2053 = vmatprep.subr.bf16.mxu0 %v1412
  %2054 = vmatpush2.bf16.msra.mxu0 %v1411
  %2055 = vmatprep.subr.bf16.mxu0 %v1410
  %2056 = vmatpush2.bf16.msra.mxu0 %v1409
  %2057 = vmatprep.subr.bf16.mxu0 %v1408
  %2058 = vmatpush2.bf16.msra.mxu0 %v1407
  %2059 = vmatprep.subr.bf16.mxu0 %v1406
  %2060 = vmatpush2.bf16.msra.mxu0 %v1405
  %2061 = vmatprep.mubr.bf16.mxu0 %v390
  %2062 = vmatmul.mubr.bf16.gmra.mxu0 %v389
  %v2063 = vpop.f32.mrf.mxu0
  %v2064 = vadd.f32 %v352, %v2063
  %v2065 = vpop.f32.mrf.mxu0
  %v2066 = vadd.f32 %v356, %v2065
  %v2067 = vpop.f32.mrf.mxu0
  %v2068 = vpop.f32.mrf.mxu0
  %2069 = vdwg.mxu0
  %2070 = vmatprep.subr.bf16.mxu0 %v1436
  %2071 = vmatpush1.bf16.msra.mxu0 %v1435
  %2072 = vmatprep.subr.bf16.mxu0 %v1434
  %2073 = vmatpush1.bf16.msra.mxu0 %v1433
  %2074 = vmatprep.subr.bf16.mxu0 %v1432
  %2075 = vmatpush1.bf16.msra.mxu0 %v1431
  %2076 = vmatprep.subr.bf16.mxu0 %v1430
  %2077 = vmatpush1.bf16.msra.mxu0 %v1429
  %2078 = vmatprep.subr.bf16.mxu0 %v1428
  %2079 = vmatpush1.bf16.msra.mxu0 %v1427
  %2080 = vmatprep.subr.bf16.mxu0 %v1426
  %2081 = vmatpush1.bf16.msra.mxu0 %v1425
  %2082 = vmatprep.subr.bf16.mxu0 %v1424
  %2083 = vmatpush1.bf16.msra.mxu0 %v1423
  %2084 = vmatprep.subr.bf16.mxu0 %v1422
  %2085 = vmatpush1.bf16.msra.mxu0 %v1421
  %2086 = vmatprep.subr.bf16.mxu0 %v1452
  %2087 = vmatpush2.bf16.msra.mxu0 %v1451
  %2088 = vmatprep.subr.bf16.mxu0 %v1450
  %2089 = vmatpush2.bf16.msra.mxu0 %v1449
  %2090 = vmatprep.subr.bf16.mxu0 %v1448
  %2091 = vmatpush2.bf16.msra.mxu0 %v1447
  %2092 = vmatprep.subr.bf16.mxu0 %v1446
  %2093 = vmatpush2.bf16.msra.mxu0 %v1445
  %2094 = vmatprep.subr.bf16.mxu0 %v1444
  %2095 = vmatpush2.bf16.msra.mxu0 %v1443
  %2096 = vmatprep.subr.bf16.mxu0 %v1442
  %2097 = vmatpush2.bf16.msra.mxu0 %v1441
  %2098 = vmatprep.subr.bf16.mxu0 %v1440
  %2099 = vmatpush2.bf16.msra.mxu0 %v1439
  %2100 = vmatprep.subr.bf16.mxu0 %v1438
  %2101 = vmatpush2.bf16.msra.mxu0 %v1437
  %2102 = vmatprep.mubr.bf16.mxu0 %v392
  %2103 = vmatmul.mubr.bf16.gmra.mxu0 %v391
  %v2104 = vpop.f32.mrf.mxu0
  %v2105 = vadd.f32 %v2064, %v2104
  %v2106 = vpop.f32.mrf.mxu0
  %v2107 = vadd.f32 %v2066, %v2106
  %v2108 = vpop.f32.mrf.mxu0
  %v2109 = vpop.f32.mrf.mxu0
  %2110 = vdwg.mxu0
  %2111 = vmatprep.subr.bf16.mxu0 %v1468
  %2112 = vmatpush1.bf16.msra.mxu0 %v1467
  %2113 = vmatprep.subr.bf16.mxu0 %v1466
  %2114 = vmatpush1.bf16.msra.mxu0 %v1465
  %2115 = vmatprep.subr.bf16.mxu0 %v1464
  %2116 = vmatpush1.bf16.msra.mxu0 %v1463
  %2117 = vmatprep.subr.bf16.mxu0 %v1462
  %2118 = vmatpush1.bf16.msra.mxu0 %v1461
  %2119 = vmatprep.subr.bf16.mxu0 %v1460
  %2120 = vmatpush1.bf16.msra.mxu0 %v1459
  %2121 = vmatprep.subr.bf16.mxu0 %v1458
  %2122 = vmatpush1.bf16.msra.mxu0 %v1457
  %2123 = vmatprep.subr.bf16.mxu0 %v1456
  %2124 = vmatpush1.bf16.msra.mxu0 %v1455
  %2125 = vmatprep.subr.bf16.mxu0 %v1454
  %2126 = vmatpush1.bf16.msra.mxu0 %v1453
  %2127 = vmatprep.subr.bf16.mxu0 %v1484
  %2128 = vmatpush2.bf16.msra.mxu0 %v1483
  %2129 = vmatprep.subr.bf16.mxu0 %v1482
  %2130 = vmatpush2.bf16.msra.mxu0 %v1481
  %2131 = vmatprep.subr.bf16.mxu0 %v1480
  %2132 = vmatpush2.bf16.msra.mxu0 %v1479
  %2133 = vmatprep.subr.bf16.mxu0 %v1478
  %2134 = vmatpush2.bf16.msra.mxu0 %v1477
  %2135 = vmatprep.subr.bf16.mxu0 %v1476
  %2136 = vmatpush2.bf16.msra.mxu0 %v1475
  %2137 = vmatprep.subr.bf16.mxu0 %v1474
  %2138 = vmatpush2.bf16.msra.mxu0 %v1473
  %2139 = vmatprep.subr.bf16.mxu0 %v1472
  %2140 = vmatpush2.bf16.msra.mxu0 %v1471
  %2141 = vmatprep.subr.bf16.mxu0 %v1470
  %2142 = vmatpush2.bf16.msra.mxu0 %v1469
  %2143 = vmatprep.mubr.bf16.mxu0 %v394
  %2144 = vmatmul.mubr.bf16.gmra.mxu0 %v393
  %v2145 = vpop.f32.mrf.mxu0
  %v2146 = vadd.f32 %v2105, %v2145
  %v2147 = vpop.f32.mrf.mxu0
  %v2148 = vadd.f32 %v2107, %v2147
  %v2149 = vpop.f32.mrf.mxu0
  %v2150 = vpop.f32.mrf.mxu0
  %2151 = vdwg.mxu0
  %2152 = vmatprep.subr.bf16.mxu0 %v1500
  %2153 = vmatpush1.bf16.msra.mxu0 %v1499
  %2154 = vmatprep.subr.bf16.mxu0 %v1498
  %2155 = vmatpush1.bf16.msra.mxu0 %v1497
  %2156 = vmatprep.subr.bf16.mxu0 %v1496
  %2157 = vmatpush1.bf16.msra.mxu0 %v1495
  %2158 = vmatprep.subr.bf16.mxu0 %v1494
  %2159 = vmatpush1.bf16.msra.mxu0 %v1493
  %2160 = vmatprep.subr.bf16.mxu0 %v1492
  %2161 = vmatpush1.bf16.msra.mxu0 %v1491
  %2162 = vmatprep.subr.bf16.mxu0 %v1490
  %2163 = vmatpush1.bf16.msra.mxu0 %v1489
  %2164 = vmatprep.subr.bf16.mxu0 %v1488
  %2165 = vmatpush1.bf16.msra.mxu0 %v1487
  %2166 = vmatprep.subr.bf16.mxu0 %v1486
  %2167 = vmatpush1.bf16.msra.mxu0 %v1485
  %2168 = vmatprep.subr.bf16.mxu0 %v1516
  %2169 = vmatpush2.bf16.msra.mxu0 %v1515
  %2170 = vmatprep.subr.bf16.mxu0 %v1514
  %2171 = vmatpush2.bf16.msra.mxu0 %v1513
  %2172 = vmatprep.subr.bf16.mxu0 %v1512
  %2173 = vmatpush2.bf16.msra.mxu0 %v1511
  %2174 = vmatprep.subr.bf16.mxu0 %v1510
  %2175 = vmatpush2.bf16.msra.mxu0 %v1509
  %2176 = vmatprep.subr.bf16.mxu0 %v1508
  %2177 = vmatpush2.bf16.msra.mxu0 %v1507
  %2178 = vmatprep.subr.bf16.mxu0 %v1506
  %2179 = vmatpush2.bf16.msra.mxu0 %v1505
  %2180 = vmatprep.subr.bf16.mxu0 %v1504
  %2181 = vmatpush2.bf16.msra.mxu0 %v1503
  %2182 = vmatprep.subr.bf16.mxu0 %v1502
  %2183 = vmatpush2.bf16.msra.mxu0 %v1501
  %2184 = vmatprep.mubr.bf16.mxu0 %v396
  %2185 = vmatmul.mubr.bf16.gmra.mxu0 %v395
  %v2186 = vpop.f32.mrf.mxu0
  %v2187 = vadd.f32 %v2146, %v2186
  %v2188 = vpop.f32.mrf.mxu0
  %v2189 = vadd.f32 %v2148, %v2188
  %v2190 = vpop.f32.mrf.mxu0
  %v2191 = vpop.f32.mrf.mxu0
  %2192 = vdwg.mxu0
  %2193 = vmatprep.subr.bf16.mxu0 %v1532
  %2194 = vmatpush1.bf16.msra.mxu0 %v1531
  %2195 = vmatprep.subr.bf16.mxu0 %v1530
  %2196 = vmatpush1.bf16.msra.mxu0 %v1529
  %2197 = vmatprep.subr.bf16.mxu0 %v1528
  %2198 = vmatpush1.bf16.msra.mxu0 %v1527
  %2199 = vmatprep.subr.bf16.mxu0 %v1526
  %2200 = vmatpush1.bf16.msra.mxu0 %v1525
  %2201 = vmatprep.subr.bf16.mxu0 %v1524
  %2202 = vmatpush1.bf16.msra.mxu0 %v1523
  %2203 = vmatprep.subr.bf16.mxu0 %v1522
  %2204 = vmatpush1.bf16.msra.mxu0 %v1521
  %2205 = vmatprep.subr.bf16.mxu0 %v1520
  %2206 = vmatpush1.bf16.msra.mxu0 %v1519
  %2207 = vmatprep.subr.bf16.mxu0 %v1518
  %2208 = vmatpush1.bf16.msra.mxu0 %v1517
  %2209 = vmatprep.subr.bf16.mxu0 %v1548
  %2210 = vmatpush2.bf16.msra.mxu0 %v1547
  %2211 = vmatprep.subr.bf16.mxu0 %v1546
  %2212 = vmatpush2.bf16.msra.mxu0 %v1545
  %2213 = vmatprep.subr.bf16.mxu0 %v1544
  %2214 = vmatpush2.bf16.msra.mxu0 %v1543
  %2215 = vmatprep.subr.bf16.mxu0 %v1542
  %2216 = vmatpush2.bf16.msra.mxu0 %v1541
  %2217 = vmatprep.subr.bf16.mxu0 %v1540
  %2218 = vmatpush2.bf16.msra.mxu0 %v1539
  %2219 = vmatprep.subr.bf16.mxu0 %v1538
  %2220 = vmatpush2.bf16.msra.mxu0 %v1537
  %2221 = vmatprep.subr.bf16.mxu0 %v1536
  %2222 = vmatpush2.bf16.msra.mxu0 %v1535
  %2223 = vmatprep.subr.bf16.mxu0 %v1534
  %2224 = vmatpush2.bf16.msra.mxu0 %v1533
  %2225 = vmatprep.mubr.bf16.mxu0 %v398
  %2226 = vmatmul.mubr.bf16.gmra.mxu0 %v397
  %v2227 = vpop.f32.mrf.mxu0
  %v2228 = vadd.f32 %v2187, %v2227
  %v2229 = vpop.f32.mrf.mxu0
  %v2230 = vadd.f32 %v2189, %v2229
  %v2231 = vpop.f32.mrf.mxu0
  %v2232 = vpop.f32.mrf.mxu0
  %2233 = vdwg.mxu0
  %2234 = vmatprep.subr.bf16.mxu0 %v1564
  %2235 = vmatpush1.bf16.msra.mxu0 %v1563
  %2236 = vmatprep.subr.bf16.mxu0 %v1562
  %2237 = vmatpush1.bf16.msra.mxu0 %v1561
  %2238 = vmatprep.subr.bf16.mxu0 %v1560
  %2239 = vmatpush1.bf16.msra.mxu0 %v1559
  %2240 = vmatprep.subr.bf16.mxu0 %v1558
  %2241 = vmatpush1.bf16.msra.mxu0 %v1557
  %2242 = vmatprep.subr.bf16.mxu0 %v1556
  %2243 = vmatpush1.bf16.msra.mxu0 %v1555
  %2244 = vmatprep.subr.bf16.mxu0 %v1554
  %2245 = vmatpush1.bf16.msra.mxu0 %v1553
  %2246 = vmatprep.subr.bf16.mxu0 %v1552
  %2247 = vmatpush1.bf16.msra.mxu0 %v1551
  %2248 = vmatprep.subr.bf16.mxu0 %v1550
  %2249 = vmatpush1.bf16.msra.mxu0 %v1549
  %2250 = vmatprep.subr.bf16.mxu0 %v1580
  %2251 = vmatpush2.bf16.msra.mxu0 %v1579
  %2252 = vmatprep.subr.bf16.mxu0 %v1578
  %2253 = vmatpush2.bf16.msra.mxu0 %v1577
  %2254 = vmatprep.subr.bf16.mxu0 %v1576
  %2255 = vmatpush2.bf16.msra.mxu0 %v1575
  %2256 = vmatprep.subr.bf16.mxu0 %v1574
  %2257 = vmatpush2.bf16.msra.mxu0 %v1573
  %2258 = vmatprep.subr.bf16.mxu0 %v1572
  %2259 = vmatpush2.bf16.msra.mxu0 %v1571
  %2260 = vmatprep.subr.bf16.mxu0 %v1570
  %2261 = vmatpush2.bf16.msra.mxu0 %v1569
  %2262 = vmatprep.subr.bf16.mxu0 %v1568
  %2263 = vmatpush2.bf16.msra.mxu0 %v1567
  %2264 = vmatprep.subr.bf16.mxu0 %v1566
  %2265 = vmatpush2.bf16.msra.mxu0 %v1565
  %2266 = vmatprep.mubr.bf16.mxu0 %v400
  %2267 = vmatmul.mubr.bf16.gmra.mxu0 %v399
  %v2268 = vpop.f32.mrf.mxu0
  %v2269 = vadd.f32 %v2228, %v2268
  %v2270 = vpop.f32.mrf.mxu0
  %v2271 = vadd.f32 %v2230, %v2270
  %v2272 = vpop.f32.mrf.mxu0
  %v2273 = vpop.f32.mrf.mxu0
  %2274 = vdwg.mxu0
  %2275 = vmatprep.subr.bf16.mxu0 %v1596
  %2276 = vmatpush1.bf16.msra.mxu0 %v1595
  %2277 = vmatprep.subr.bf16.mxu0 %v1594
  %2278 = vmatpush1.bf16.msra.mxu0 %v1593
  %2279 = vmatprep.subr.bf16.mxu0 %v1592
  %2280 = vmatpush1.bf16.msra.mxu0 %v1591
  %2281 = vmatprep.subr.bf16.mxu0 %v1590
  %2282 = vmatpush1.bf16.msra.mxu0 %v1589
  %2283 = vmatprep.subr.bf16.mxu0 %v1588
  %2284 = vmatpush1.bf16.msra.mxu0 %v1587
  %2285 = vmatprep.subr.bf16.mxu0 %v1586
  %2286 = vmatpush1.bf16.msra.mxu0 %v1585
  %2287 = vmatprep.subr.bf16.mxu0 %v1584
  %2288 = vmatpush1.bf16.msra.mxu0 %v1583
  %2289 = vmatprep.subr.bf16.mxu0 %v1582
  %2290 = vmatpush1.bf16.msra.mxu0 %v1581
  %2291 = vmatprep.subr.bf16.mxu0 %v1612
  %2292 = vmatpush2.bf16.msra.mxu0 %v1611
  %2293 = vmatprep.subr.bf16.mxu0 %v1610
  %2294 = vmatpush2.bf16.msra.mxu0 %v1609
  %2295 = vmatprep.subr.bf16.mxu0 %v1608
  %2296 = vmatpush2.bf16.msra.mxu0 %v1607
  %2297 = vmatprep.subr.bf16.mxu0 %v1606
  %2298 = vmatpush2.bf16.msra.mxu0 %v1605
  %2299 = vmatprep.subr.bf16.mxu0 %v1604
  %2300 = vmatpush2.bf16.msra.mxu0 %v1603
  %2301 = vmatprep.subr.bf16.mxu0 %v1602
  %2302 = vmatpush2.bf16.msra.mxu0 %v1601
  %2303 = vmatprep.subr.bf16.mxu0 %v1600
  %2304 = vmatpush2.bf16.msra.mxu0 %v1599
  %2305 = vmatprep.subr.bf16.mxu0 %v1598
  %2306 = vmatpush2.bf16.msra.mxu0 %v1597
  %2307 = vmatprep.mubr.bf16.mxu0 %v402
  %2308 = vmatmul.mubr.bf16.gmra.mxu0 %v401
  %v2309 = vpop.f32.mrf.mxu0
  %v2310 = vadd.f32 %v2269, %v2309
  %v2311 = vpop.f32.mrf.mxu0
  %v2312 = vadd.f32 %v2271, %v2311
  %v2313 = vpop.f32.mrf.mxu0
  %v2314 = vpop.f32.mrf.mxu0
  %2315 = vdwg.mxu0
  %2316 = vmatprep.subr.bf16.mxu0 %v1628
  %2317 = vmatpush1.bf16.msra.mxu0 %v1627
  %2318 = vmatprep.subr.bf16.mxu0 %v1626
  %2319 = vmatpush1.bf16.msra.mxu0 %v1625
  %2320 = vmatprep.subr.bf16.mxu0 %v1624
  %2321 = vmatpush1.bf16.msra.mxu0 %v1623
  %2322 = vmatprep.subr.bf16.mxu0 %v1622
  %2323 = vmatpush1.bf16.msra.mxu0 %v1621
  %2324 = vmatprep.subr.bf16.mxu0 %v1620
  %2325 = vmatpush1.bf16.msra.mxu0 %v1619
  %2326 = vmatprep.subr.bf16.mxu0 %v1618
  %2327 = vmatpush1.bf16.msra.mxu0 %v1617
  %2328 = vmatprep.subr.bf16.mxu0 %v1616
  %2329 = vmatpush1.bf16.msra.mxu0 %v1615
  %2330 = vmatprep.subr.bf16.mxu0 %v1614
  %2331 = vmatpush1.bf16.msra.mxu0 %v1613
  %2332 = vmatprep.subr.bf16.mxu0 %v1644
  %2333 = vmatpush2.bf16.msra.mxu0 %v1643
  %2334 = vmatprep.subr.bf16.mxu0 %v1642
  %2335 = vmatpush2.bf16.msra.mxu0 %v1641
  %2336 = vmatprep.subr.bf16.mxu0 %v1640
  %2337 = vmatpush2.bf16.msra.mxu0 %v1639
  %2338 = vmatprep.subr.bf16.mxu0 %v1638
  %2339 = vmatpush2.bf16.msra.mxu0 %v1637
  %2340 = vmatprep.subr.bf16.mxu0 %v1636
  %2341 = vmatpush2.bf16.msra.mxu0 %v1635
  %2342 = vmatprep.subr.bf16.mxu0 %v1634
  %2343 = vmatpush2.bf16.msra.mxu0 %v1633
  %2344 = vmatprep.subr.bf16.mxu0 %v1632
  %2345 = vmatpush2.bf16.msra.mxu0 %v1631
  %2346 = vmatprep.subr.bf16.mxu0 %v1630
  %2347 = vmatpush2.bf16.msra.mxu0 %v1629
  %2348 = vmatprep.mubr.bf16.mxu0 %v404
  %2349 = vmatmul.mubr.bf16.gmra.mxu0 %v403
  %v2350 = vpop.f32.mrf.mxu0
  %v2351 = vadd.f32 %v2310, %v2350
  %v2352 = vpop.f32.mrf.mxu0
  %v2353 = vadd.f32 %v2312, %v2352
  %v2354 = vpop.f32.mrf.mxu0
  %v2355 = vpop.f32.mrf.mxu0
  %2356 = vdwg.mxu0
  %2357 = vmatprep.subr.bf16.mxu0 %v1660
  %2358 = vmatpush1.bf16.msra.mxu0 %v1659
  %2359 = vmatprep.subr.bf16.mxu0 %v1658
  %2360 = vmatpush1.bf16.msra.mxu0 %v1657
  %2361 = vmatprep.subr.bf16.mxu0 %v1656
  %2362 = vmatpush1.bf16.msra.mxu0 %v1655
  %2363 = vmatprep.subr.bf16.mxu0 %v1654
  %2364 = vmatpush1.bf16.msra.mxu0 %v1653
  %2365 = vmatprep.subr.bf16.mxu0 %v1652
  %2366 = vmatpush1.bf16.msra.mxu0 %v1651
  %2367 = vmatprep.subr.bf16.mxu0 %v1650
  %2368 = vmatpush1.bf16.msra.mxu0 %v1649
  %2369 = vmatprep.subr.bf16.mxu0 %v1648
  %2370 = vmatpush1.bf16.msra.mxu0 %v1647
  %2371 = vmatprep.subr.bf16.mxu0 %v1646
  %2372 = vmatpush1.bf16.msra.mxu0 %v1645
  %2373 = vmatprep.subr.bf16.mxu0 %v1676
  %2374 = vmatpush2.bf16.msra.mxu0 %v1675
  %2375 = vmatprep.subr.bf16.mxu0 %v1674
  %2376 = vmatpush2.bf16.msra.mxu0 %v1673
  %2377 = vmatprep.subr.bf16.mxu0 %v1672
  %2378 = vmatpush2.bf16.msra.mxu0 %v1671
  %2379 = vmatprep.subr.bf16.mxu0 %v1670
  %2380 = vmatpush2.bf16.msra.mxu0 %v1669
  %2381 = vmatprep.subr.bf16.mxu0 %v1668
  %2382 = vmatpush2.bf16.msra.mxu0 %v1667
  %2383 = vmatprep.subr.bf16.mxu0 %v1666
  %2384 = vmatpush2.bf16.msra.mxu0 %v1665
  %2385 = vmatprep.subr.bf16.mxu0 %v1664
  %2386 = vmatpush2.bf16.msra.mxu0 %v1663
  %2387 = vmatprep.subr.bf16.mxu0 %v1662
  %2388 = vmatpush2.bf16.msra.mxu0 %v1661
  %2389 = vmatprep.mubr.bf16.mxu0 %v406
  %2390 = vmatmul.mubr.bf16.gmra.mxu0 %v405
  %v2391 = vpop.f32.mrf.mxu0
  %v2392 = vadd.f32 %v2351, %v2391
  %v2393 = vpop.f32.mrf.mxu0
  %v2394 = vadd.f32 %v2353, %v2393
  %v2395 = vpop.f32.mrf.mxu0
  %v2396 = vpop.f32.mrf.mxu0
  %2397 = vdwg.mxu0
  %2398 = vmatprep.subr.bf16.mxu0 %v1692
  %2399 = vmatpush1.bf16.msra.mxu0 %v1691
  %2400 = vmatprep.subr.bf16.mxu0 %v1690
  %2401 = vmatpush1.bf16.msra.mxu0 %v1689
  %2402 = vmatprep.subr.bf16.mxu0 %v1688
  %2403 = vmatpush1.bf16.msra.mxu0 %v1687
  %2404 = vmatprep.subr.bf16.mxu0 %v1686
  %2405 = vmatpush1.bf16.msra.mxu0 %v1685
  %2406 = vmatprep.subr.bf16.mxu0 %v1684
  %2407 = vmatpush1.bf16.msra.mxu0 %v1683
  %2408 = vmatprep.subr.bf16.mxu0 %v1682
  %2409 = vmatpush1.bf16.msra.mxu0 %v1681
  %2410 = vmatprep.subr.bf16.mxu0 %v1680
  %2411 = vmatpush1.bf16.msra.mxu0 %v1679
  %2412 = vmatprep.subr.bf16.mxu0 %v1678
  %2413 = vmatpush1.bf16.msra.mxu0 %v1677
  %2414 = vmatprep.subr.bf16.mxu0 %v1708
  %2415 = vmatpush2.bf16.msra.mxu0 %v1707
  %2416 = vmatprep.subr.bf16.mxu0 %v1706
  %2417 = vmatpush2.bf16.msra.mxu0 %v1705
  %2418 = vmatprep.subr.bf16.mxu0 %v1704
  %2419 = vmatpush2.bf16.msra.mxu0 %v1703
  %2420 = vmatprep.subr.bf16.mxu0 %v1702
  %2421 = vmatpush2.bf16.msra.mxu0 %v1701
  %2422 = vmatprep.subr.bf16.mxu0 %v1700
  %2423 = vmatpush2.bf16.msra.mxu0 %v1699
  %2424 = vmatprep.subr.bf16.mxu0 %v1698
  %2425 = vmatpush2.bf16.msra.mxu0 %v1697
  %2426 = vmatprep.subr.bf16.mxu0 %v1696
  %2427 = vmatpush2.bf16.msra.mxu0 %v1695
  %2428 = vmatprep.subr.bf16.mxu0 %v1694
  %2429 = vmatpush2.bf16.msra.mxu0 %v1693
  %2430 = vmatprep.mubr.bf16.mxu0 %v408
  %2431 = vmatmul.mubr.bf16.gmra.mxu0 %v407
  %v2432 = vpop.f32.mrf.mxu0
  %v2433 = vadd.f32 %v2392, %v2432
  %v2434 = vpop.f32.mrf.mxu0
  %v2435 = vadd.f32 %v2394, %v2434
  %v2436 = vpop.f32.mrf.mxu0
  %v2437 = vpop.f32.mrf.mxu0
  %2438 = vdwg.mxu0
  %v2439 = vld [vmem:[%s3] sm:$0xff]
  %v2440 = vld [vmem:[%s3 + $0x8] sm:$0xff]
  %v2441 = vadd.f32 %v2433, %v2439
  %v2442 = vadd.f32 %v2435, %v2440
  %vm2443 = vcmp.ge.f32.partialorder %v2441, 0.0
  %vm2444 = vcmp.ge.f32.partialorder %v2442, 0.0
  %v2445 = vmul.f32 %v2441, 0.2
  %v2446 = vmul.f32 %v2442, 0.2
  %v2447 = vsel %vm2443, %v2441, %v2445
  %v2448 = vsel %vm2444, %v2442, %v2446
  %2449 = vst [vmem:[%s4] sm:$0xff] %v2447
  %2450 = vst [vmem:[%s4 + $0x8] sm:$0xff] %v2448
  // Predicated region
  $region18: #{jcu_discriminator_forward.10} parent=0 // pred_check
    _
  $region19: #{jcu_discriminator_forward.10} parent=0 // pred_check_branch
    %2452 = sbr.rel (0) target = $region21
  $region20: #{jcu_discriminator_forward.10} parent=0 // pred_region
    _
  $region21: #{jcu_discriminator_forward.10} parent=0 // pred_fallthru
    _
  // Predicated region
  $region22: #{jcu_discriminator_forward.10} parent=0 // pred_check
    _
  $region23: #{jcu_discriminator_forward.10} parent=0 // pred_check_branch
    %2454 = sbr.rel (0) target = $region25
  $region24: #{jcu_discriminator_forward.10} parent=0 // pred_region
    _
  $region25: #{jcu_discriminator_forward.10} parent=0 // pred_fallthru
    _

// kernel: jcu_discriminator_forward.11
$region0: #{jcu_discriminator_forward.11}
  #allocation0 [shape = 'u32[]', space=smem, size = 0x4, offset = 0x4, fixed_abs, tag = 'smem constant byte address 0x4 - core index']
  #allocation1 [shape = 'u32[144,128]{1,0:T(1,128)}', space=vmem, size = 0x12000, scoped, tag = 'internal scratch']
  %s0 = inlined_call_operand.vmem [shape: bf16[8,384], index: 0, kind: input, shape index: {}]
  %s1 = inlined_call_operand.vmem [shape: bf16[384,2], index: 1, kind: input, shape index: {}]
  %s2 = inlined_call_operand.vmem [shape: f32[1,2], index: 2, kind: input, shape index: {}]
  %s3 = inlined_call_operand.vmem [shape: f32[8,2], index: 3, kind: output, shape index: {}]
  %s4 = sld [smem:[#allocation0]]
  $region22: #{jcu_discriminator_forward.11} parent=0
    _
  %s6 = ssub.s32 1, %s4
  %s7 = scalar_select 0, %s6, %s4
  // Predicated region
  $region2: #{jcu_discriminator_forward.11} parent=0 // pred_check
    _
  $region3: #{jcu_discriminator_forward.11} parent=0 // pred_check_branch
    %9 = sbr.rel (0) target = $region5
  $region4: #{jcu_discriminator_forward.11} parent=0 // pred_region
    _
  $region5: #{jcu_discriminator_forward.11} parent=0 // pred_fallthru
    _
  // Predicated region
  $region6: #{jcu_discriminator_forward.11} parent=0 // pred_check
    _
  $region7: #{jcu_discriminator_forward.11} parent=0 // pred_check_branch
    %11 = sbr.rel (0) target = $region9
  $region8: #{jcu_discriminator_forward.11} parent=0 // pred_region
    _
  $region9: #{jcu_discriminator_forward.11} parent=0 // pred_fallthru
    _
  // Predicated region
  $region10: #{jcu_discriminator_forward.11} parent=0 // pred_check
    _
  $region11: #{jcu_discriminator_forward.11} parent=0 // pred_check_branch
    %13 = sbr.rel (0) target = $region13
  $region12: #{jcu_discriminator_forward.11} parent=0 // pred_region
    _
  $region13: #{jcu_discriminator_forward.11} parent=0 // pred_fallthru
    _
  %v15 = vld [vmem:[%s0] sm:$0xff]
  %v16 = vld [vmem:[%s0 + $0x8] sm:$0xf]
  %v17 = vld [vmem:[%s1] sm:$0xf]
  %v18 = vld [vmem:[%s1 + $0x4] sm:$0xf]
  %v19 = vld [vmem:[%s1 + $0x8] sm:$0xf]
  %v20 = vld [vmem:[%s1 + $0xc] sm:$0xf]
  %v21 = vld [vmem:[%s1 + $0x10] sm:$0xf]
  %v22 = vld [vmem:[%s1 + $0x14] sm:$0xf]
  %v23 = vld [vmem:[%s1 + $0x18] sm:$0xf]
  %v24 = vld [vmem:[%s1 + $0x1c] sm:$0xf]
  %v25 = vld [vmem:[%s1 + $0x20] sm:$0xf]
  %v26 = vld [vmem:[%s1 + $0x24] sm:$0xf]
  %v27 = vld [vmem:[%s1 + $0x28] sm:$0xf]
  %v28 = vld [vmem:[%s1 + $0x2c] sm:$0xf]
  %v29 = vld [vmem:[%s1 + $0x30] sm:$0xf]
  %v30 = vld [vmem:[%s1 + $0x34] sm:$0xf]
  %v31 = vld [vmem:[%s1 + $0x38] sm:$0xf]
  %v32 = vld [vmem:[%s1 + $0x3c] sm:$0xf]
  %v33 = vld [vmem:[%s1 + $0x40] sm:$0xf]
  %v34 = vld [vmem:[%s1 + $0x44] sm:$0xf]
  %v35 = vld [vmem:[%s1 + $0x48] sm:$0xf]
  %v36 = vld [vmem:[%s1 + $0x4c] sm:$0xf]
  %v37 = vld [vmem:[%s1 + $0x50] sm:$0xf]
  %v38 = vld [vmem:[%s1 + $0x54] sm:$0xf]
  %v39 = vld [vmem:[%s1 + $0x58] sm:$0xf]
  %v40 = vld [vmem:[%s1 + $0x5c] sm:$0xf]
  %v41 = vld [vmem:[%s1 + $0x60] sm:$0xf]
  %v42 = vld [vmem:[%s1 + $0x64] sm:$0xf]
  %v43 = vld [vmem:[%s1 + $0x68] sm:$0xf]
  %v44 = vld [vmem:[%s1 + $0x6c] sm:$0xf]
  %v45 = vld [vmem:[%s1 + $0x70] sm:$0xf]
  %v46 = vld [vmem:[%s1 + $0x74] sm:$0xf]
  %v47 = vld [vmem:[%s1 + $0x78] sm:$0xf]
  %v48 = vld [vmem:[%s1 + $0x7c] sm:$0xf]
  %v49 = vld [vmem:[%s1 + $0x80] sm:$0xf]
  %v50 = vld [vmem:[%s1 + $0x84] sm:$0xf]
  %v51 = vld [vmem:[%s1 + $0x88] sm:$0xf]
  %v52 = vld [vmem:[%s1 + $0x8c] sm:$0xf]
  %v53 = vld [vmem:[%s1 + $0x90] sm:$0xf]
  %v54 = vld [vmem:[%s1 + $0x94] sm:$0xf]
  %v55 = vld [vmem:[%s1 + $0x98] sm:$0xf]
  %v56 = vld [vmem:[%s1 + $0x9c] sm:$0xf]
  %v57 = vld [vmem:[%s1 + $0xa0] sm:$0xf]
  %v58 = vld [vmem:[%s1 + $0xa4] sm:$0xf]
  %v59 = vld [vmem:[%s1 + $0xa8] sm:$0xf]
  %v60 = vld [vmem:[%s1 + $0xac] sm:$0xf]
  %v61 = vld [vmem:[%s1 + $0xb0] sm:$0xf]
  %v62 = vld [vmem:[%s1 + $0xb4] sm:$0xf]
  %v63 = vld [vmem:[%s1 + $0xb8] sm:$0xf]
  %v64 = vld [vmem:[%s1 + $0xbc] sm:$0xf]
  %v65 = vld [vmem:[%s2] sm:$0x1]
  %v67 = vlaneseq
  %v68 = vshrl.u32 %v67, 7
  %v69 = vsub.s32 0, %v68
  %v70 = vrot.slane %v65, %v69
  %v74 = vunpack.c.l.b16 %v15
  %v75 = vunpack.c.h.b16 %v15
  %v76 = vunpack.c.l.b16 %v16
  %v77 = vpack.c.b16 %v74, %v74
  %v78 = vpack.c.b16 %v75, %v75
  %v79 = vpack.c.b16 %v76, %v76
  %v131 = vunpack.c.l.b16 %v17
  %v132 = vunpack.c.l.b16 %v18
  %v133 = vunpack.c.l.b16 %v19
  %v134 = vunpack.c.l.b16 %v20
  %v135 = vunpack.c.l.b16 %v21
  %v136 = vunpack.c.l.b16 %v22
  %v137 = vunpack.c.l.b16 %v23
  %v138 = vunpack.c.l.b16 %v24
  %v139 = vunpack.c.l.b16 %v25
  %v140 = vunpack.c.l.b16 %v26
  %v141 = vunpack.c.l.b16 %v27
  %v142 = vunpack.c.l.b16 %v28
  %v143 = vunpack.c.l.b16 %v29
  %v144 = vunpack.c.l.b16 %v30
  %v145 = vunpack.c.l.b16 %v31
  %v146 = vunpack.c.l.b16 %v32
  %v147 = vunpack.c.l.b16 %v33
  %v148 = vunpack.c.l.b16 %v34
  %v149 = vunpack.c.l.b16 %v35
  %v150 = vunpack.c.l.b16 %v36
  %v151 = vunpack.c.l.b16 %v37
  %v152 = vunpack.c.l.b16 %v38
  %v153 = vunpack.c.l.b16 %v39
  %v154 = vunpack.c.l.b16 %v40
  %v155 = vunpack.c.l.b16 %v41
  %v156 = vunpack.c.l.b16 %v42
  %v157 = vunpack.c.l.b16 %v43
  %v158 = vunpack.c.l.b16 %v44
  %v159 = vunpack.c.l.b16 %v45
  %v160 = vunpack.c.l.b16 %v46
  %v161 = vunpack.c.l.b16 %v47
  %v162 = vunpack.c.l.b16 %v48
  %v163 = vunpack.c.l.b16 %v49
  %v164 = vunpack.c.l.b16 %v50
  %v165 = vunpack.c.l.b16 %v51
  %v166 = vunpack.c.l.b16 %v52
  %v167 = vunpack.c.l.b16 %v53
  %v168 = vunpack.c.l.b16 %v54
  %v169 = vunpack.c.l.b16 %v55
  %v170 = vunpack.c.l.b16 %v56
  %v171 = vunpack.c.l.b16 %v57
  %v172 = vunpack.c.l.b16 %v58
  %v173 = vunpack.c.l.b16 %v59
  %v174 = vunpack.c.l.b16 %v60
  %v175 = vunpack.c.l.b16 %v61
  %v176 = vunpack.c.l.b16 %v62
  %v177 = vunpack.c.l.b16 %v63
  %v178 = vunpack.c.l.b16 %v64
  %v179 = vpack.c.b16 %v132, %v131
  %v180 = vpack.c.b16 %v134, %v133
  %v181 = vpack.c.b16 %v136, %v135
  %v182 = vpack.c.b16 %v138, %v137
  %v183 = vpack.c.b16 %v140, %v139
  %v184 = vpack.c.b16 %v142, %v141
  %v185 = vpack.c.b16 %v144, %v143
  %v186 = vpack.c.b16 %v146, %v145
  %v187 = vpack.c.b16 %v148, %v147
  %v188 = vpack.c.b16 %v150, %v149
  %v189 = vpack.c.b16 %v152, %v151
  %v190 = vpack.c.b16 %v154, %v153
  %v191 = vpack.c.b16 %v156, %v155
  %v192 = vpack.c.b16 %v158, %v157
  %v193 = vpack.c.b16 %v160, %v159
  %v194 = vpack.c.b16 %v162, %v161
  %v195 = vpack.c.b16 %v164, %v163
  %v196 = vpack.c.b16 %v166, %v165
  %v197 = vpack.c.b16 %v168, %v167
  %v198 = vpack.c.b16 %v170, %v169
  %v199 = vpack.c.b16 %v172, %v171
  %v200 = vpack.c.b16 %v174, %v173
  %v201 = vpack.c.b16 %v176, %v175
  %v202 = vpack.c.b16 %v178, %v177
  %227 = vmatprep.subr.bf16.mxu0 0
  %228 = vmatpush1.bf16.msra.mxu0 %v186
  %229 = vmatprep.subr.bf16.mxu0 0
  %230 = vmatpush1.bf16.msra.mxu0 %v185
  %231 = vmatprep.subr.bf16.mxu0 0
  %232 = vmatpush1.bf16.msra.mxu0 %v184
  %233 = vmatprep.subr.bf16.mxu0 0
  %234 = vmatpush1.bf16.msra.mxu0 %v183
  %235 = vmatprep.subr.bf16.mxu0 0
  %236 = vmatpush1.bf16.msra.mxu0 %v182
  %237 = vmatprep.subr.bf16.mxu0 0
  %238 = vmatpush1.bf16.msra.mxu0 %v181
  %239 = vmatprep.subr.bf16.mxu0 0
  %240 = vmatpush1.bf16.msra.mxu0 %v180
  %241 = vmatprep.subr.bf16.mxu0 0
  %242 = vmatpush1.bf16.msra.mxu0 %v179
  %243 = vmatprep.subr.bf16.mxu0 0
  %244 = vmatpush2.bf16.msra.mxu0 %v194
  %245 = vmatprep.subr.bf16.mxu0 0
  %246 = vmatpush2.bf16.msra.mxu0 %v193
  %247 = vmatprep.subr.bf16.mxu0 0
  %248 = vmatpush2.bf16.msra.mxu0 %v192
  %249 = vmatprep.subr.bf16.mxu0 0
  %250 = vmatpush2.bf16.msra.mxu0 %v191
  %251 = vmatprep.subr.bf16.mxu0 0
  %252 = vmatpush2.bf16.msra.mxu0 %v190
  %253 = vmatprep.subr.bf16.mxu0 0
  %254 = vmatpush2.bf16.msra.mxu0 %v189
  %255 = vmatprep.subr.bf16.mxu0 0
  %256 = vmatpush2.bf16.msra.mxu0 %v188
  %257 = vmatprep.subr.bf16.mxu0 0
  %258 = vmatpush2.bf16.msra.mxu0 %v187
  %259 = vmatprep.mubr.bf16.mxu0 %v78
  %260 = vmatmul.mubr.bf16.gmra.mxu0 %v77
  %v261 = vpop.f32.mrf.mxu0
  %v262 = vadd.f32 %v70, %v261
  %v263 = vpop.f32.mrf.mxu0
  %v264 = vpop.f32.mrf.mxu0
  %v265 = vpop.f32.mrf.mxu0
  %266 = vdwg.mxu0
  %267 = vmatprep.subr.bf16.mxu0 0
  %268 = vmatpush1.bf16.msra.mxu0 %v202
  %269 = vmatprep.subr.bf16.mxu0 0
  %270 = vmatpush1.bf16.msra.mxu0 %v201
  %271 = vmatprep.subr.bf16.mxu0 0
  %272 = vmatpush1.bf16.msra.mxu0 %v200
  %273 = vmatprep.subr.bf16.mxu0 0
  %274 = vmatpush1.bf16.msra.mxu0 %v199
  %275 = vmatprep.subr.bf16.mxu0 0
  %276 = vmatpush1.bf16.msra.mxu0 %v198
  %277 = vmatprep.subr.bf16.mxu0 0
  %278 = vmatpush1.bf16.msra.mxu0 %v197
  %279 = vmatprep.subr.bf16.mxu0 0
  %280 = vmatpush1.bf16.msra.mxu0 %v196
  %281 = vmatprep.subr.bf16.mxu0 0
  %282 = vmatpush1.bf16.msra.mxu0 %v195
  %283 = vmatprep.subr.bf16.mxu0 0
  %284 = vmatpush2.bf16.msra.mxu0 0
  %285 = vmatprep.subr.bf16.mxu0 0
  %286 = vmatpush2.bf16.msra.mxu0 0
  %287 = vmatprep.subr.bf16.mxu0 0
  %288 = vmatpush2.bf16.msra.mxu0 0
  %289 = vmatprep.subr.bf16.mxu0 0
  %290 = vmatpush2.bf16.msra.mxu0 0
  %291 = vmatprep.subr.bf16.mxu0 0
  %292 = vmatpush2.bf16.msra.mxu0 0
  %293 = vmatprep.subr.bf16.mxu0 0
  %294 = vmatpush2.bf16.msra.mxu0 0
  %295 = vmatprep.subr.bf16.mxu0 0
  %296 = vmatpush2.bf16.msra.mxu0 0
  %297 = vmatprep.subr.bf16.mxu0 0
  %298 = vmatpush2.bf16.msra.mxu0 0
  %299 = vmatprep.mubr.bf16.mxu0 0
  %300 = vmatmul.mubr.bf16.gmra.mxu0 %v79
  %v301 = vpop.f32.mrf.mxu0
  %v302 = vadd.f32 %v262, %v301
  %v303 = vpop.f32.mrf.mxu0
  %v304 = vpop.f32.mrf.mxu0
  %v305 = vpop.f32.mrf.mxu0
  %306 = vdwg.mxu0
  %vm307 = vcmp.ge.f32.partialorder %v302, 0.0
  %v308 = vmul.f32 %v302, 0.2
  %v309 = vsel %vm307, %v302, %v308
  %vm310 = vcmask 15360
  %311 = vst.msk [vmem:[%s3] sm:$0xff] %vm310, %v309
  // Predicated region
  $region14: #{jcu_discriminator_forward.11} parent=0 // pred_check
    _
  $region15: #{jcu_discriminator_forward.11} parent=0 // pred_check_branch
    %313 = sbr.rel (0) target = $region17
  $region16: #{jcu_discriminator_forward.11} parent=0 // pred_region
    _
  $region17: #{jcu_discriminator_forward.11} parent=0 // pred_fallthru
    _
  // Predicated region
  $region18: #{jcu_discriminator_forward.11} parent=0 // pred_check
    _
  $region19: #{jcu_discriminator_forward.11} parent=0 // pred_check_branch
    %315 = sbr.rel (0) target = $region21
  $region20: #{jcu_discriminator_forward.11} parent=0 // pred_region
    _
  $region21: #{jcu_discriminator_forward.11} parent=0 // pred_fallthru
    _

</llo_original>
